<compile_context>
chip_gen: v6e
topology: v6e:2x2x1
jax: 0.10.0
libtpu: 0.0.40
codegen_flags: <defaults>
</compile_context>

<pallas_src>
import functools

import jax
import jax.numpy as jnp
from jax.experimental import pallas as pl
from jax.experimental.pallas import tpu as pltpu

KERNEL_SIZE = 4
PADDING = 1
STRIDE = 2
NEG_SLOPE = 0.2
IN_EPS = 1e-5


# ---------------------------------------------------------------------------
# Tile-size selection
# ---------------------------------------------------------------------------
def _pick_ct(cout, max_ct=256):
    """Output-channel tile: full Cout if small, else a multiple of 128."""
    if cout <= max_ct:
        return cout
    for t in (256, 128):
        if cout % t == 0:
            return t
    return cout


def _pick_bt(batch, rows_per_sample, x_bytes_per_sample,
             target_rows=1024, max_x_bytes=4 << 20):
    """How many whole samples to pack into one M block (~1024 rows target,
    VMEM-capped so double-buffered inputs stay well under the scoped limit)."""
    bt = min(batch,
             max(1, target_rows // max(rows_per_sample, 1)),
             max(1, max_x_bytes // max(x_bytes_per_sample, 1)))
    bt = max(1, bt)
    while batch % bt:
        bt -= 1
    return bt


# ---------------------------------------------------------------------------
# Pallas kernels
# ---------------------------------------------------------------------------
def _conv_block_kernel(x_ref, w_ref, o_ref, *, bt, ho_wo, tap_offsets, use_in):
    """Fused stride-2 4x4 conv (2 tap-matmuls) + InstanceNorm2d + LeakyReLU.

    x_ref: (Bt, R, Kw)   bf16  row-major s2d input rows (Kw = 8*Cin)
    w_ref: (2, Kw, Ct)   bf16  per-row-tap weight matrices
    o_ref: (Bt, HoWo, Ct) bf16
    """
    kw = x_ref.shape[-1]
    ct = o_ref.shape[-1]
    o0, o1 = tap_offsets

    # Tap 0: direct assignment (no zero-fill), tap 1: accumulate.  bf16 x bf16
    # -> f32 on the MXU; the slice offsets and Ho*Wo are sublane(8)-aligned so
    # the (Bt, HoWo, Kw) -> (Bt*HoWo, Kw) collapse is layout-free.
    lhs0 = x_ref[:, o0:o0 + ho_wo, :].reshape(bt * ho_wo, kw)
    acc = jnp.dot(lhs0, w_ref[0], preferred_element_type=jnp.float32)
    lhs1 = x_ref[:, o1:o1 + ho_wo, :].reshape(bt * ho_wo, kw)
    acc = acc + jnp.dot(lhs1, w_ref[1], preferred_element_type=jnp.float32)

    acc = acc.reshape(bt, ho_wo, ct)
    if use_in:
        # InstanceNorm2d (affine=False): per (sample, channel) over spatial,
        # vectorized across the Bt packed samples; centered (two-pass) var.
        mean = jnp.mean(acc, axis=1, keepdims=True)
        xc = acc - mean
        var = jnp.mean(xc * xc, axis=1, keepdims=True)
        acc = xc * jax.lax.rsqrt(var + IN_EPS)
    acc = jnp.where(acc >= 0.0, acc, NEG_SLOPE * acc)      # LeakyReLU(0.2)
    o_ref[...] = acc.astype(o_ref.dtype)


def _proj_kernel(x_ref, w_ref, b_ref, o_ref):
    """Final projection as a VPU lane reduction: (B,F) * (1,F) -> (B,1)."""
    x = x_ref[...].astype(jnp.float32)
    w = w_ref[...].astype(jnp.float32)
    o_ref[...] = jnp.sum(x * w, axis=1, keepdims=True) + b_ref[...]


# ---------------------------------------------------------------------------
# Pallas wrappers
# ---------------------------------------------------------------------------
def conv_block_pallas(x_rows, w_taps, *, ho, wo, tap_offsets, use_in):
    """x_rows: (B, R, Kw) bf16; w_taps: (2, Kw, Cout) bf16 -> (B, Ho*Wo, Cout)."""
    batch, rows, kw = x_rows.shape
    cout = w_taps.shape[-1]
    ho_wo = ho * wo
    ct = _pick_ct(cout)
    bt = _pick_bt(batch, ho_wo, rows * kw * 2)
    grid = (batch // bt, cout // ct)

    kernel = functools.partial(_conv_block_kernel, bt=bt, ho_wo=ho_wo,
                               tap_offsets=tap_offsets, use_in=use_in)
    cost = pl.CostEstimate(
        flops=2 * batch * ho_wo * (2 * kw) * cout,
        transcendentals=0,
        bytes_accessed=int(batch * rows * kw * 2 * (cout // ct)
                           + 2 * kw * cout * 2 * (batch // bt)
                           + batch * ho_wo * cout * 2),
    )
    return pl.pallas_call(
        kernel,
        out_shape=jax.ShapeDtypeStruct((batch, ho_wo, cout), jnp.bfloat16),
        grid=grid,
        in_specs=[
            pl.BlockSpec((bt, rows, kw), lambda m, c: (m, 0, 0)),
            pl.BlockSpec((2, kw, ct), lambda m, c: (0, 0, c)),
        ],
        out_specs=pl.BlockSpec((bt, ho_wo, ct), lambda m, c: (m, 0, c)),
        compiler_params=pltpu.CompilerParams(
            dimension_semantics=("parallel", "parallel"),
            vmem_limit_bytes=32 * 1024 * 1024),
        cost_estimate=cost,
    )(x_rows, w_taps)


def proj_pallas(x_flat, w_row, bias):
    """x_flat: (B, F) bf16; w_row: (1, F) bf16; bias: (1, 1) f32 -> (B, 1) f32."""
    b, f = x_flat.shape
    cost = pl.CostEstimate(flops=2 * b * f, transcendentals=0,
                           bytes_accessed=int(b * f * 2 + f * 2 + b * 4))
    return pl.pallas_call(
        _proj_kernel,
        out_shape=jax.ShapeDtypeStruct((b, 1), jnp.float32),
        cost_estimate=cost,
    )(x_flat, w_row, bias)


# ---------------------------------------------------------------------------
# JAX-side layout passes (pure data movement, fused by XLA)
# ---------------------------------------------------------------------------
def conv_input_rows(x_nhwc):
    """NHWC -> row-major space-to-depth tap layout for the fused conv kernel.

    Returns (x_rows (B, R, 8*Cin) bf16, ho, wo, tap_row_offsets).
    x_rows row (i*wo + j) holds [x_pad[2i+r, 2(j+bb)+s, c] for bb,r,s,c], so the
    conv reduces to 2 row-tap matmuls with contraction K = 8*Cin each.
    """
    b, h, w, c = x_nhwc.shape
    ho, wo = h // 2, w // 2
    hs, ws = ho + 1, wo + 1
    xp = jnp.pad(x_nhwc, ((0, 0), (1, 1), (1, 1), (0, 0)))
    # space-to-depth: x_s[b, i, j, (r, s, c)] = xp[b, 2i+r, 2j+s, c]
    x_s = (xp.reshape(b, hs, 2, ws, 2, c)
             .transpose(0, 1, 3, 2, 4, 5)
             .reshape(b, hs, ws, 4 * c))
    # fold the two kernel-column taps into the lane dim -> (bb, r, s, c) order
    x_w = jnp.concatenate([x_s[:, :, :wo, :], x_s[:, :, 1:wo + 1, :]], axis=-1)
    if wo % 8 == 0:
        # overlapped layout: tap a reads rows [a*wo, a*wo + ho*wo) (8-aligned)
        x_rows = x_w.reshape(b, hs * wo, 8 * c)
        tap_offsets = (0, wo)
    else:
        # tiny spatial (e.g. 4x4): duplicate the two row-tap windows so both
        # in-kernel slices stay sublane(8)-aligned (negligible extra bytes).
        x_rows = jnp.concatenate([x_w[:, 0:ho], x_w[:, 1:ho + 1]],
                                 axis=1).reshape(b, 2 * ho * wo, 8 * c)
        tap_offsets = (0, ho * wo)
    return x_rows, ho, wo, tap_offsets


def prepare_critic_params(params):
    """One-off weight repack (hoisted out of the per-step forward)."""
    prepared = {}
    for i in range(4):
        w = params[f"conv{i}"]                        # (Cout, Cin, 4, 4) f32
        cout, cin = w.shape[0], w.shape[1]
        wt = jnp.transpose(w, (2, 3, 1, 0))           # (ki, kj, cin, cout)
        wt = (wt.reshape(2, 2, 2, 2, cin, cout)       # (a, r, bb, s, cin, cout)
                .transpose(0, 2, 1, 3, 4, 5)          # (a, bb, r, s, cin, cout)
                .reshape(2, 8 * cin, cout))
        prepared[f"conv{i}_taps"] = wt.astype(jnp.bfloat16)
    # Linear weight: PyTorch flattens NCHW (c, h, w); kernel activations are
    # flattened (h*w, c) -> fold the permutation into the weight once.
    c_last = params["conv3"].shape[0]
    wp = params["proj_w"].reshape(1, c_last, 4 * 4)
    wp = jnp.transpose(wp, (0, 2, 1)).reshape(1, c_last * 16)
    prepared["proj_w"] = wp.astype(jnp.bfloat16)
    prepared["proj_b"] = params["proj_b"].reshape(1, 1).astype(jnp.float32)
    return prepared


# ---------------------------------------------------------------------------
# Critic forward
# ---------------------------------------------------------------------------
def init_critic_params(key, im_channels=3, hidden_dim=128):
    chans = [im_channels, hidden_dim, hidden_dim * 2, hidden_dim * 4,
             hidden_dim * 8]
    keys = jax.random.split(key, 6)
    params = {}
    for i in range(4):
        # PyTorch conv weight layout (Cout, Cin, kH, kW), bias=False.
        params[f"conv{i}"] = 0.05 * jax.random.normal(
            keys[i], (chans[i + 1], chans[i], KERNEL_SIZE, KERNEL_SIZE),
            dtype=jnp.float32)
    feat = hidden_dim * 8 * 4 * 4
    params["proj_w"] = 0.02 * jax.random.normal(keys[4], (1, feat),
                                                dtype=jnp.float32)
    params["proj_b"] = 0.01 * jax.random.normal(keys[5], (1,),
                                                dtype=jnp.float32)
    return params


def critic_forward(prepared, x_nchw):
    x = jnp.transpose(x_nchw, (0, 2, 3, 1)).astype(jnp.bfloat16)    # NHWC bf16
    for i in range(4):
        x_rows, ho, wo, offs = conv_input_rows(x)
        y = conv_block_pallas(x_rows, prepared[f"conv{i}_taps"],
                              ho=ho, wo=wo, tap_offsets=offs,
                              use_in=(i != 0))                       # (B,HoWo,C)
        x = y.reshape(y.shape[0], ho, wo, y.shape[-1])               # NHWC
    b = x.shape[0]
    x_flat = x.reshape(b, -1)                                        # (B, 16*C)
    return proj_pallas(x_flat, prepared["proj_w"], prepared["proj_b"])


# ---------------------------------------------------------------------------
# Pure-JAX reference (same bf16 storage / f32 accumulation model)
# ---------------------------------------------------------------------------
def critic_forward_reference(params, x_nchw):
    x = jnp.transpose(x_nchw, (0, 2, 3, 1)).astype(jnp.bfloat16)
    for i in range(4):
        w = params[f"conv{i}"].astype(jnp.bfloat16)
        w_hwio = jnp.transpose(w, (2, 3, 1, 0))
        y = jax.lax.conv_general_dilated(
            x, w_hwio, window_strides=(STRIDE, STRIDE),
            padding=((PADDING, PADDING), (PADDING, PADDING)),
            dimension_numbers=("NHWC", "HWIO", "NHWC"),
            preferred_element_type=jnp.float32)
        if i != 0:
            mean = jnp.mean(y, axis=(1, 2), keepdims=True)
            var = jnp.mean(jnp.square(y - mean), axis=(1, 2), keepdims=True)
            y = (y - mean) * jax.lax.rsqrt(var + IN_EPS)
        y = jnp.where(y >= 0.0, y, NEG_SLOPE * y)
        x = y.astype(jnp.bfloat16)
    b = x.shape[0]
    xf = jnp.transpose(x, (0, 3, 1, 2)).reshape(b, -1).astype(jnp.float32)
    wp = params["proj_w"].astype(jnp.bfloat16).astype(jnp.float32)
    return jnp.sum(xf * wp, axis=1, keepdims=True) + params["proj_b"][None, :]


# ---------------------------------------------------------------------------
if __name__ == "__main__":
    # 4 stride-2 convs feeding Linear(hidden*8*4*4, 1) imply a 64x64 input;
    # small batch / hidden_dim keep the test fast.
    B, IM_CHANNELS, HIDDEN_DIM, H, W = 2, 3, 16, 64, 64

    key = jax.random.PRNGKey(0)
    k_x, k_p = jax.random.split(key)
    x = jax.random.normal(k_x, (B, IM_CHANNELS, H, W), dtype=jnp.float32)
    params = init_critic_params(k_p, im_channels=IM_CHANNELS,
                                hidden_dim=HIDDEN_DIM)
    prepared = prepare_critic_params(params)     # hoisted one-off weight prep

    fwd = jax.jit(critic_forward)
    out = jax.block_until_ready(fwd(prepared, x))
    assert out.shape == (B, 1), out.shape
    assert bool(jnp.all(jnp.isfinite(out)))

    ref = jax.block_until_ready(jax.jit(critic_forward_reference)(params, x))
    max_err = float(jnp.max(jnp.abs(out - ref)))
    assert max_err < 5e-2, f"mismatch vs reference: max|diff|={max_err}"

    print("KERNEL_OK")
</pallas_src>

<mosaic_0001>
module attributes {stable_mosaic.version = 11 : i64} {
  func.func @_conv_block_kernel(%arg0: i32, %arg1: i32, %arg2: memref<1x1056x24xbf16, #tpu.memory_space<vmem>>, %arg3: memref<2x24x16xbf16, #tpu.memory_space<vmem>>, %arg4: memref<1x1024x16xbf16, #tpu.memory_space<vmem>>) attributes {dimension_semantics = [#tpu.dimension_semantics<parallel>, #tpu.dimension_semantics<parallel>], iteration_bounds = array<i64: 2, 1>, scalar_prefetch = 0 : i64, scratch_operands = 0 : i64, tpu.core_type = #tpu.core_type<tc>, window_params = [{transform_indices = @transform_0, window_bounds = array<i64: 1, 1056, 24>}, {transform_indices = @transform_1, window_bounds = array<i64: 2, 24, 16>}, {transform_indices = @transform_2, window_bounds = array<i64: 1, 1024, 16>}]} {
    %c0 = arith.constant 0 : index
    %c0_0 = arith.constant 0 : index
    %c0_1 = arith.constant 0 : index
    %0 = vector.load %arg2[%c0, %c0_0, %c0_1] : memref<1x1056x24xbf16, #tpu.memory_space<vmem>>, vector<1x1024x24xbf16>
    %1 = vector.shape_cast %0 : vector<1x1024x24xbf16> to vector<1024x24xbf16>
    %c0_2 = arith.constant 0 : index
    %c0_3 = arith.constant 0 : index
    %c0_4 = arith.constant 0 : index
    %2 = vector.load %arg3[%c0_2, %c0_3, %c0_4] : memref<2x24x16xbf16, #tpu.memory_space<vmem>>, vector<1x24x16xbf16>
    %3 = vector.shape_cast %2 : vector<1x24x16xbf16> to vector<24x16xbf16>
    %cst = arith.constant dense<0.000000e+00> : vector<1024x16xf32>
    %4 = tpu.matmul %1, %3, %cst {dimension_numbers = #tpu.dot_dimension_numbers<[1], [0], [0], [1], [0, 0, 1, 1], [], []>} : vector<1024x24xbf16>, vector<24x16xbf16>, vector<1024x16xf32> -> vector<1024x16xf32>
    %c0_5 = arith.constant 0 : index
    %c32 = arith.constant 32 : index
    %c0_6 = arith.constant 0 : index
    %5 = vector.load %arg2[%c0_5, %c32, %c0_6] : memref<1x1056x24xbf16, #tpu.memory_space<vmem>>, vector<1x1024x24xbf16>
    %6 = vector.shape_cast %5 : vector<1x1024x24xbf16> to vector<1024x24xbf16>
    %c1 = arith.constant 1 : index
    %c0_7 = arith.constant 0 : index
    %c0_8 = arith.constant 0 : index
    %7 = vector.load %arg3[%c1, %c0_7, %c0_8] : memref<2x24x16xbf16, #tpu.memory_space<vmem>>, vector<1x24x16xbf16>
    %8 = vector.shape_cast %7 : vector<1x24x16xbf16> to vector<24x16xbf16>
    %cst_9 = arith.constant dense<0.000000e+00> : vector<1024x16xf32>
    %9 = tpu.matmul %6, %8, %cst_9 {dimension_numbers = #tpu.dot_dimension_numbers<[1], [0], [0], [1], [0, 0, 1, 1], [], []>} : vector<1024x24xbf16>, vector<24x16xbf16>, vector<1024x16xf32> -> vector<1024x16xf32>
    %10 = arith.addf %4, %9 : vector<1024x16xf32>
    %11 = vector.shape_cast %10 : vector<1024x16xf32> to vector<1x1024x16xf32>
    %cst_10 = arith.constant 0.000000e+00 : f32
    %12 = vector.broadcast %cst_10 : f32 to vector<1x1024x16xf32>
    %13 = arith.cmpf oge, %11, %12 : vector<1x1024x16xf32>
    %cst_11 = arith.constant 2.000000e-01 : f32
    %14 = vector.broadcast %cst_11 : f32 to vector<1x1024x16xf32>
    %15 = arith.mulf %14, %11 : vector<1x1024x16xf32>
    %16 = arith.select %13, %11, %15 : vector<1x1024x16xi1>, vector<1x1024x16xf32>
    %17 = arith.truncf %16 : vector<1x1024x16xf32> to vector<1x1024x16xbf16>
    %c0_12 = arith.constant 0 : index
    %c0_13 = arith.constant 0 : index
    %c0_14 = arith.constant 0 : index
    %18 = vector.load %arg4[%c0_12, %c0_13, %c0_14] : memref<1x1024x16xbf16, #tpu.memory_space<vmem>>, vector<1x1024x16xbf16>
    tpu.vector_store %arg4[%c0_12, %c0_13, %c0_14], %17 {strides = array<i32>} : memref<1x1024x16xbf16, #tpu.memory_space<vmem>>, vector<1x1024x16xbf16>,
    return
  }
  func.func @transform_0(%arg0: i32, %arg1: i32) -> (i32, i32, i32) {
    %c0_i32 = arith.constant 0 : i32
    %c0_i32_0 = arith.constant 0 : i32
    %c0_i32_1 = arith.constant 0 : i32
    return %arg0, %c0_i32, %c0_i32_0 : i32, i32, i32
  }
  func.func @transform_1(%arg0: i32, %arg1: i32) -> (i32, i32, i32) {
    %c0_i32 = arith.constant 0 : i32
    %c0_i32_0 = arith.constant 0 : i32
    %c0_i32_1 = arith.constant 0 : i32
    return %c0_i32, %c0_i32_0, %arg1 : i32, i32, i32
  }
  func.func @transform_2(%arg0: i32, %arg1: i32) -> (i32, i32, i32) {
    %c0_i32 = arith.constant 0 : i32
    %c0_i32_0 = arith.constant 0 : i32
    return %arg0, %c0_i32, %arg1 : i32, i32, i32
  }
}

module attributes {stable_mosaic.version = 11 : i64} {
  func.func @_conv_block_kernel(%arg0: i32, %arg1: i32, %arg2: memref<2x272x128xbf16, #tpu.memory_space<vmem>>, %arg3: memref<2x128x32xbf16, #tpu.memory_space<vmem>>, %arg4: memref<2x256x32xbf16, #tpu.memory_space<vmem>>) attributes {dimension_semantics = [#tpu.dimension_semantics<parallel>, #tpu.dimension_semantics<parallel>], iteration_bounds = array<i64: 1, 1>, scalar_prefetch = 0 : i64, scratch_operands = 0 : i64, tpu.core_type = #tpu.core_type<tc>, window_params = [{transform_indices = @transform_0, window_bounds = array<i64: 2, 272, 128>}, {transform_indices = @transform_1, window_bounds = array<i64: 2, 128, 32>}, {transform_indices = @transform_2, window_bounds = array<i64: 2, 256, 32>}]} {
    %c0 = arith.constant 0 : index
    %c0_0 = arith.constant 0 : index
    %c0_1 = arith.constant 0 : index
    %0 = vector.load %arg2[%c0, %c0_0, %c0_1] : memref<2x272x128xbf16, #tpu.memory_space<vmem>>, vector<2x256x128xbf16>
    %1 = vector.shape_cast %0 : vector<2x256x128xbf16> to vector<512x128xbf16>
    %c0_2 = arith.constant 0 : index
    %c0_3 = arith.constant 0 : index
    %c0_4 = arith.constant 0 : index
    %2 = vector.load %arg3[%c0_2, %c0_3, %c0_4] : memref<2x128x32xbf16, #tpu.memory_space<vmem>>, vector<1x128x32xbf16>
    %3 = vector.shape_cast %2 : vector<1x128x32xbf16> to vector<128x32xbf16>
    %cst = arith.constant dense<0.000000e+00> : vector<512x32xf32>
    %4 = tpu.matmul %1, %3, %cst {dimension_numbers = #tpu.dot_dimension_numbers<[1], [0], [0], [1], [0, 0, 1, 1], [], []>} : vector<512x128xbf16>, vector<128x32xbf16>, vector<512x32xf32> -> vector<512x32xf32>
    %c0_5 = arith.constant 0 : index
    %c16 = arith.constant 16 : index
    %c0_6 = arith.constant 0 : index
    %5 = vector.load %arg2[%c0_5, %c16, %c0_6] : memref<2x272x128xbf16, #tpu.memory_space<vmem>>, vector<2x256x128xbf16>
    %6 = vector.shape_cast %5 : vector<2x256x128xbf16> to vector<512x128xbf16>
    %c1 = arith.constant 1 : index
    %c0_7 = arith.constant 0 : index
    %c0_8 = arith.constant 0 : index
    %7 = vector.load %arg3[%c1, %c0_7, %c0_8] : memref<2x128x32xbf16, #tpu.memory_space<vmem>>, vector<1x128x32xbf16>
    %8 = vector.shape_cast %7 : vector<1x128x32xbf16> to vector<128x32xbf16>
    %cst_9 = arith.constant dense<0.000000e+00> : vector<512x32xf32>
    %9 = tpu.matmul %6, %8, %cst_9 {dimension_numbers = #tpu.dot_dimension_numbers<[1], [0], [0], [1], [0, 0, 1, 1], [], []>} : vector<512x128xbf16>, vector<128x32xbf16>, vector<512x32xf32> -> vector<512x32xf32>
    %10 = arith.addf %4, %9 : vector<512x32xf32>
    %11 = vector.shape_cast %10 : vector<512x32xf32> to vector<2x256x32xf32>
    %cst_10 = arith.constant dense<0.000000e+00> : vector<2x32xf32>
    %12 = vector.multi_reduction <add>, %11, %cst_10 [1] : vector<2x256x32xf32> to vector<2x32xf32>
    %13 = vector.shape_cast %12 : vector<2x32xf32> to vector<2x1x32xf32>
    %cst_11 = arith.constant 2.560000e+02 : f32
    %14 = vector.broadcast %cst_11 : f32 to vector<2x1x32xf32>
    %15 = arith.divf %13, %14 : vector<2x1x32xf32>
    %16 = vector.broadcast %15 : vector<2x1x32xf32> to vector<2x256x32xf32>
    %17 = arith.subf %11, %16 : vector<2x256x32xf32>
    %18 = arith.mulf %17, %17 : vector<2x256x32xf32>
    %cst_12 = arith.constant dense<0.000000e+00> : vector<2x32xf32>
    %19 = vector.multi_reduction <add>, %18, %cst_12 [1] : vector<2x256x32xf32> to vector<2x32xf32>
    %20 = vector.shape_cast %19 : vector<2x32xf32> to vector<2x1x32xf32>
    %cst_13 = arith.constant 2.560000e+02 : f32
    %21 = vector.broadcast %cst_13 : f32 to vector<2x1x32xf32>
    %22 = arith.divf %20, %21 : vector<2x1x32xf32>
    %cst_14 = arith.constant 9.99999974E-6 : f32
    %23 = vector.broadcast %cst_14 : f32 to vector<2x1x32xf32>
    %24 = arith.addf %22, %23 : vector<2x1x32xf32>
    %25 = math.rsqrt %24 : vector<2x1x32xf32>
    %26 = vector.broadcast %25 : vector<2x1x32xf32> to vector<2x256x32xf32>
    %27 = arith.mulf %17, %26 : vector<2x256x32xf32>
    %cst_15 = arith.constant 0.000000e+00 : f32
    %28 = vector.broadcast %cst_15 : f32 to vector<2x256x32xf32>
    %29 = arith.cmpf oge, %27, %28 : vector<2x256x32xf32>
    %cst_16 = arith.constant 2.000000e-01 : f32
    %30 = vector.broadcast %cst_16 : f32 to vector<2x256x32xf32>
    %31 = arith.mulf %30, %27 : vector<2x256x32xf32>
    %32 = arith.select %29, %27, %31 : vector<2x256x32xi1>, vector<2x256x32xf32>
    %33 = arith.truncf %32 : vector<2x256x32xf32> to vector<2x256x32xbf16>
    %c0_17 = arith.constant 0 : index
    %c0_18 = arith.constant 0 : index
    %c0_19 = arith.constant 0 : index
    %34 = vector.load %arg4[%c0_17, %c0_18, %c0_19] : memref<2x256x32xbf16, #tpu.memory_space<vmem>>, vector<2x256x32xbf16>
    tpu.vector_store %arg4[%c0_17, %c0_18, %c0_19], %33 {strides = array<i32>} : memref<2x256x32xbf16, #tpu.memory_space<vmem>>, vector<2x256x32xbf16>,
    return
  }
  func.func @transform_0(%arg0: i32, %arg1: i32) -> (i32, i32, i32) {
    %c0_i32 = arith.constant 0 : i32
    %c0_i32_0 = arith.constant 0 : i32
    %c0_i32_1 = arith.constant 0 : i32
    return %arg0, %c0_i32, %c0_i32_0 : i32, i32, i32
  }
  func.func @transform_1(%arg0: i32, %arg1: i32) -> (i32, i32, i32) {
    %c0_i32 = arith.constant 0 : i32
    %c0_i32_0 = arith.constant 0 : i32
    %c0_i32_1 = arith.constant 0 : i32
    return %c0_i32, %c0_i32_0, %arg1 : i32, i32, i32
  }
  func.func @transform_2(%arg0: i32, %arg1: i32) -> (i32, i32, i32) {
    %c0_i32 = arith.constant 0 : i32
    %c0_i32_0 = arith.constant 0 : i32
    return %arg0, %c0_i32, %arg1 : i32, i32, i32
  }
}

module attributes {stable_mosaic.version = 11 : i64} {
  func.func @_conv_block_kernel(%arg0: i32, %arg1: i32, %arg2: memref<2x72x256xbf16, #tpu.memory_space<vmem>>, %arg3: memref<2x256x64xbf16, #tpu.memory_space<vmem>>, %arg4: memref<2x64x64xbf16, #tpu.memory_space<vmem>>) attributes {dimension_semantics = [#tpu.dimension_semantics<parallel>, #tpu.dimension_semantics<parallel>], iteration_bounds = array<i64: 1, 1>, scalar_prefetch = 0 : i64, scratch_operands = 0 : i64, tpu.core_type = #tpu.core_type<tc>, window_params = [{transform_indices = @transform_0, window_bounds = array<i64: 2, 72, 256>}, {transform_indices = @transform_1, window_bounds = array<i64: 2, 256, 64>}, {transform_indices = @transform_2, window_bounds = array<i64: 2, 64, 64>}]} {
    %c0 = arith.constant 0 : index
    %c0_0 = arith.constant 0 : index
    %c0_1 = arith.constant 0 : index
    %0 = vector.load %arg2[%c0, %c0_0, %c0_1] : memref<2x72x256xbf16, #tpu.memory_space<vmem>>, vector<2x64x256xbf16>
    %1 = vector.shape_cast %0 : vector<2x64x256xbf16> to vector<128x256xbf16>
    %c0_2 = arith.constant 0 : index
    %c0_3 = arith.constant 0 : index
    %c0_4 = arith.constant 0 : index
    %2 = vector.load %arg3[%c0_2, %c0_3, %c0_4] : memref<2x256x64xbf16, #tpu.memory_space<vmem>>, vector<1x256x64xbf16>
    %3 = vector.shape_cast %2 : vector<1x256x64xbf16> to vector<256x64xbf16>
    %cst = arith.constant dense<0.000000e+00> : vector<128x64xf32>
    %4 = tpu.matmul %1, %3, %cst {dimension_numbers = #tpu.dot_dimension_numbers<[1], [0], [0], [1], [0, 0, 1, 1], [], []>} : vector<128x256xbf16>, vector<256x64xbf16>, vector<128x64xf32> -> vector<128x64xf32>
    %c0_5 = arith.constant 0 : index
    %c8 = arith.constant 8 : index
    %c0_6 = arith.constant 0 : index
    %5 = vector.load %arg2[%c0_5, %c8, %c0_6] : memref<2x72x256xbf16, #tpu.memory_space<vmem>>, vector<2x64x256xbf16>
    %6 = vector.shape_cast %5 : vector<2x64x256xbf16> to vector<128x256xbf16>
    %c1 = arith.constant 1 : index
    %c0_7 = arith.constant 0 : index
    %c0_8 = arith.constant 0 : index
    %7 = vector.load %arg3[%c1, %c0_7, %c0_8] : memref<2x256x64xbf16, #tpu.memory_space<vmem>>, vector<1x256x64xbf16>
    %8 = vector.shape_cast %7 : vector<1x256x64xbf16> to vector<256x64xbf16>
    %cst_9 = arith.constant dense<0.000000e+00> : vector<128x64xf32>
    %9 = tpu.matmul %6, %8, %cst_9 {dimension_numbers = #tpu.dot_dimension_numbers<[1], [0], [0], [1], [0, 0, 1, 1], [], []>} : vector<128x256xbf16>, vector<256x64xbf16>, vector<128x64xf32> -> vector<128x64xf32>
    %10 = arith.addf %4, %9 : vector<128x64xf32>
    %11 = vector.shape_cast %10 : vector<128x64xf32> to vector<2x64x64xf32>
    %cst_10 = arith.constant dense<0.000000e+00> : vector<2x64xf32>
    %12 = vector.multi_reduction <add>, %11, %cst_10 [1] : vector<2x64x64xf32> to vector<2x64xf32>
    %13 = vector.shape_cast %12 : vector<2x64xf32> to vector<2x1x64xf32>
    %cst_11 = arith.constant 6.400000e+01 : f32
    %14 = vector.broadcast %cst_11 : f32 to vector<2x1x64xf32>
    %15 = arith.divf %13, %14 : vector<2x1x64xf32>
    %16 = vector.broadcast %15 : vector<2x1x64xf32> to vector<2x64x64xf32>
    %17 = arith.subf %11, %16 : vector<2x64x64xf32>
    %18 = arith.mulf %17, %17 : vector<2x64x64xf32>
    %cst_12 = arith.constant dense<0.000000e+00> : vector<2x64xf32>
    %19 = vector.multi_reduction <add>, %18, %cst_12 [1] : vector<2x64x64xf32> to vector<2x64xf32>
    %20 = vector.shape_cast %19 : vector<2x64xf32> to vector<2x1x64xf32>
    %cst_13 = arith.constant 6.400000e+01 : f32
    %21 = vector.broadcast %cst_13 : f32 to vector<2x1x64xf32>
    %22 = arith.divf %20, %21 : vector<2x1x64xf32>
    %cst_14 = arith.constant 9.99999974E-6 : f32
    %23 = vector.broadcast %cst_14 : f32 to vector<2x1x64xf32>
    %24 = arith.addf %22, %23 : vector<2x1x64xf32>
    %25 = math.rsqrt %24 : vector<2x1x64xf32>
    %26 = vector.broadcast %25 : vector<2x1x64xf32> to vector<2x64x64xf32>
    %27 = arith.mulf %17, %26 : vector<2x64x64xf32>
    %cst_15 = arith.constant 0.000000e+00 : f32
    %28 = vector.broadcast %cst_15 : f32 to vector<2x64x64xf32>
    %29 = arith.cmpf oge, %27, %28 : vector<2x64x64xf32>
    %cst_16 = arith.constant 2.000000e-01 : f32
    %30 = vector.broadcast %cst_16 : f32 to vector<2x64x64xf32>
    %31 = arith.mulf %30, %27 : vector<2x64x64xf32>
    %32 = arith.select %29, %27, %31 : vector<2x64x64xi1>, vector<2x64x64xf32>
    %33 = arith.truncf %32 : vector<2x64x64xf32> to vector<2x64x64xbf16>
    %c0_17 = arith.constant 0 : index
    %c0_18 = arith.constant 0 : index
    %c0_19 = arith.constant 0 : index
    %34 = vector.load %arg4[%c0_17, %c0_18, %c0_19] : memref<2x64x64xbf16, #tpu.memory_space<vmem>>, vector<2x64x64xbf16>
    tpu.vector_store %arg4[%c0_17, %c0_18, %c0_19], %33 {strides = array<i32>} : memref<2x64x64xbf16, #tpu.memory_space<vmem>>, vector<2x64x64xbf16>,
    return
  }
  func.func @transform_0(%arg0: i32, %arg1: i32) -> (i32, i32, i32) {
    %c0_i32 = arith.constant 0 : i32
    %c0_i32_0 = arith.constant 0 : i32
    %c0_i32_1 = arith.constant 0 : i32
    return %arg0, %c0_i32, %c0_i32_0 : i32, i32, i32
  }
  func.func @transform_1(%arg0: i32, %arg1: i32) -> (i32, i32, i32) {
    %c0_i32 = arith.constant 0 : i32
    %c0_i32_0 = arith.constant 0 : i32
    %c0_i32_1 = arith.constant 0 : i32
    return %c0_i32, %c0_i32_0, %arg1 : i32, i32, i32
  }
  func.func @transform_2(%arg0: i32, %arg1: i32) -> (i32, i32, i32) {
    %c0_i32 = arith.constant 0 : i32
    %c0_i32_0 = arith.constant 0 : i32
    return %arg0, %c0_i32, %arg1 : i32, i32, i32
  }
}

module attributes {stable_mosaic.version = 11 : i64} {
  func.func @_conv_block_kernel(%arg0: i32, %arg1: i32, %arg2: memref<2x32x512xbf16, #tpu.memory_space<vmem>>, %arg3: memref<2x512x128xbf16, #tpu.memory_space<vmem>>, %arg4: memref<2x16x128xbf16, #tpu.memory_space<vmem>>) attributes {dimension_semantics = [#tpu.dimension_semantics<parallel>, #tpu.dimension_semantics<parallel>], iteration_bounds = array<i64: 1, 1>, scalar_prefetch = 0 : i64, scratch_operands = 0 : i64, tpu.core_type = #tpu.core_type<tc>, window_params = [{transform_indices = @transform_0, window_bounds = array<i64: 2, 32, 512>}, {transform_indices = @transform_1, window_bounds = array<i64: 2, 512, 128>}, {transform_indices = @transform_2, window_bounds = array<i64: 2, 16, 128>}]} {
    %c0 = arith.constant 0 : index
    %c0_0 = arith.constant 0 : index
    %c0_1 = arith.constant 0 : index
    %0 = vector.load %arg2[%c0, %c0_0, %c0_1] : memref<2x32x512xbf16, #tpu.memory_space<vmem>>, vector<2x16x512xbf16>
    %1 = vector.shape_cast %0 : vector<2x16x512xbf16> to vector<32x512xbf16>
    %c0_2 = arith.constant 0 : index
    %c0_3 = arith.constant 0 : index
    %c0_4 = arith.constant 0 : index
    %2 = vector.load %arg3[%c0_2, %c0_3, %c0_4] : memref<2x512x128xbf16, #tpu.memory_space<vmem>>, vector<1x512x128xbf16>
    %3 = vector.shape_cast %2 : vector<1x512x128xbf16> to vector<512x128xbf16>
    %cst = arith.constant dense<0.000000e+00> : vector<32x128xf32>
    %4 = tpu.matmul %1, %3, %cst {dimension_numbers = #tpu.dot_dimension_numbers<[1], [0], [0], [1], [0, 0, 1, 1], [], []>} : vector<32x512xbf16>, vector<512x128xbf16>, vector<32x128xf32> -> vector<32x128xf32>
    %c0_5 = arith.constant 0 : index
    %c16 = arith.constant 16 : index
    %c0_6 = arith.constant 0 : index
    %5 = vector.load %arg2[%c0_5, %c16, %c0_6] : memref<2x32x512xbf16, #tpu.memory_space<vmem>>, vector<2x16x512xbf16>
    %6 = vector.shape_cast %5 : vector<2x16x512xbf16> to vector<32x512xbf16>
    %c1 = arith.constant 1 : index
    %c0_7 = arith.constant 0 : index
    %c0_8 = arith.constant 0 : index
    %7 = vector.load %arg3[%c1, %c0_7, %c0_8] : memref<2x512x128xbf16, #tpu.memory_space<vmem>>, vector<1x512x128xbf16>
    %8 = vector.shape_cast %7 : vector<1x512x128xbf16> to vector<512x128xbf16>
    %cst_9 = arith.constant dense<0.000000e+00> : vector<32x128xf32>
    %9 = tpu.matmul %6, %8, %cst_9 {dimension_numbers = #tpu.dot_dimension_numbers<[1], [0], [0], [1], [0, 0, 1, 1], [], []>} : vector<32x512xbf16>, vector<512x128xbf16>, vector<32x128xf32> -> vector<32x128xf32>
    %10 = arith.addf %4, %9 : vector<32x128xf32>
    %11 = vector.shape_cast %10 : vector<32x128xf32> to vector<2x16x128xf32>
    %cst_10 = arith.constant dense<0.000000e+00> : vector<2x128xf32>
    %12 = vector.multi_reduction <add>, %11, %cst_10 [1] : vector<2x16x128xf32> to vector<2x128xf32>
    %13 = vector.shape_cast %12 : vector<2x128xf32> to vector<2x1x128xf32>
    %cst_11 = arith.constant 1.600000e+01 : f32
    %14 = vector.broadcast %cst_11 : f32 to vector<2x1x128xf32>
    %15 = arith.divf %13, %14 : vector<2x1x128xf32>
    %16 = vector.broadcast %15 : vector<2x1x128xf32> to vector<2x16x128xf32>
    %17 = arith.subf %11, %16 : vector<2x16x128xf32>
    %18 = arith.mulf %17, %17 : vector<2x16x128xf32>
    %cst_12 = arith.constant dense<0.000000e+00> : vector<2x128xf32>
    %19 = vector.multi_reduction <add>, %18, %cst_12 [1] : vector<2x16x128xf32> to vector<2x128xf32>
    %20 = vector.shape_cast %19 : vector<2x128xf32> to vector<2x1x128xf32>
    %cst_13 = arith.constant 1.600000e+01 : f32
    %21 = vector.broadcast %cst_13 : f32 to vector<2x1x128xf32>
    %22 = arith.divf %20, %21 : vector<2x1x128xf32>
    %cst_14 = arith.constant 9.99999974E-6 : f32
    %23 = vector.broadcast %cst_14 : f32 to vector<2x1x128xf32>
    %24 = arith.addf %22, %23 : vector<2x1x128xf32>
    %25 = math.rsqrt %24 : vector<2x1x128xf32>
    %26 = vector.broadcast %25 : vector<2x1x128xf32> to vector<2x16x128xf32>
    %27 = arith.mulf %17, %26 : vector<2x16x128xf32>
    %cst_15 = arith.constant 0.000000e+00 : f32
    %28 = vector.broadcast %cst_15 : f32 to vector<2x16x128xf32>
    %29 = arith.cmpf oge, %27, %28 : vector<2x16x128xf32>
    %cst_16 = arith.constant 2.000000e-01 : f32
    %30 = vector.broadcast %cst_16 : f32 to vector<2x16x128xf32>
    %31 = arith.mulf %30, %27 : vector<2x16x128xf32>
    %32 = arith.select %29, %27, %31 : vector<2x16x128xi1>, vector<2x16x128xf32>
    %33 = arith.truncf %32 : vector<2x16x128xf32> to vector<2x16x128xbf16>
    %c0_17 = arith.constant 0 : index
    %c0_18 = arith.constant 0 : index
    %c0_19 = arith.constant 0 : index
    %34 = vector.load %arg4[%c0_17, %c0_18, %c0_19] : memref<2x16x128xbf16, #tpu.memory_space<vmem>>, vector<2x16x128xbf16>
    tpu.vector_store %arg4[%c0_17, %c0_18, %c0_19], %33 {strides = array<i32>} : memref<2x16x128xbf16, #tpu.memory_space<vmem>>, vector<2x16x128xbf16>,
    return
  }
  func.func @transform_0(%arg0: i32, %arg1: i32) -> (i32, i32, i32) {
    %c0_i32 = arith.constant 0 : i32
    %c0_i32_0 = arith.constant 0 : i32
    %c0_i32_1 = arith.constant 0 : i32
    return %arg0, %c0_i32, %c0_i32_0 : i32, i32, i32
  }
  func.func @transform_1(%arg0: i32, %arg1: i32) -> (i32, i32, i32) {
    %c0_i32 = arith.constant 0 : i32
    %c0_i32_0 = arith.constant 0 : i32
    %c0_i32_1 = arith.constant 0 : i32
    return %c0_i32, %c0_i32_0, %arg1 : i32, i32, i32
  }
  func.func @transform_2(%arg0: i32, %arg1: i32) -> (i32, i32, i32) {
    %c0_i32 = arith.constant 0 : i32
    %c0_i32_0 = arith.constant 0 : i32
    return %arg0, %c0_i32, %arg1 : i32, i32, i32
  }
}

module attributes {stable_mosaic.version = 11 : i64} {
  func.func @_proj_kernel(%arg0: memref<2x2048xbf16, #tpu.memory_space<vmem>>, %arg1: memref<1x2048xbf16, #tpu.memory_space<vmem>>, %arg2: memref<1x1xf32, #tpu.memory_space<vmem>>, %arg3: memref<2x1xf32, #tpu.memory_space<vmem>>) attributes {dimension_semantics = [], scalar_prefetch = 0 : i64, scratch_operands = 0 : i64, tpu.core_type = #tpu.core_type<tc>} {
    %c0 = arith.constant 0 : index
    %c0_0 = arith.constant 0 : index
    %0 = vector.load %arg0[%c0, %c0_0] : memref<2x2048xbf16, #tpu.memory_space<vmem>>, vector<2x2048xbf16>
    %1 = arith.extf %0 : vector<2x2048xbf16> to vector<2x2048xf32>
    %c0_1 = arith.constant 0 : index
    %c0_2 = arith.constant 0 : index
    %2 = vector.load %arg1[%c0_1, %c0_2] : memref<1x2048xbf16, #tpu.memory_space<vmem>>, vector<1x2048xbf16>
    %3 = arith.extf %2 : vector<1x2048xbf16> to vector<1x2048xf32>
    %4 = vector.broadcast %3 : vector<1x2048xf32> to vector<2x2048xf32>
    %5 = arith.mulf %1, %4 : vector<2x2048xf32>
    %cst = arith.constant dense<0.000000e+00> : vector<2xf32>
    %6 = vector.multi_reduction <add>, %5, %cst [1] : vector<2x2048xf32> to vector<2xf32>
    %7 = vector.shape_cast %6 : vector<2xf32> to vector<2x1xf32>
    %c0_3 = arith.constant 0 : index
    %c0_4 = arith.constant 0 : index
    %8 = vector.load %arg2[%c0_3, %c0_4] : memref<1x1xf32, #tpu.memory_space<vmem>>, vector<1x1xf32>
    %9 = vector.broadcast %8 : vector<1x1xf32> to vector<2x1xf32>
    %10 = arith.addf %7, %9 : vector<2x1xf32>
    %c0_5 = arith.constant 0 : index
    %c0_6 = arith.constant 0 : index
    %11 = vector.load %arg3[%c0_5, %c0_6] : memref<2x1xf32, #tpu.memory_space<vmem>>, vector<2x1xf32>
    tpu.vector_store %arg3[%c0_5, %c0_6], %10 {strides = array<i32>} : memref<2x1xf32, #tpu.memory_space<vmem>>, vector<2x1xf32>,
    return
  }
}

</mosaic_0001>

<llo_original>
// kernel: critic_forward.5
$region0: #{critic_forward.5}
  #allocation0 [shape = 'u32[]', space=smem, size = 0x4, offset = 0x4, fixed_abs, tag = 'smem constant byte address 0x4 - core index']
  #allocation1 [shape = 'u32[144,128]{1,0:T(1,128)}', space=vmem, size = 0x12000, scoped, tag = 'internal scratch']
  %s0 = inlined_call_operand.vmem [shape: bf16[2,1056,24], index: 0, kind: input, shape index: {}]
  %s1 = inlined_call_operand.vmem [shape: bf16[2,24,16], index: 1, kind: input, shape index: {}]
  %s2 = inlined_call_operand.vmem [shape: bf16[2,1024,16], index: 2, kind: output, shape index: {}]
  %s3 = sld [smem:[#allocation0]]
  $region41: #{critic_forward.5} parent=0
    _
  %s5 = ssub.s32 1, %s3
  %s6 = scalar_select 0, %s5, %s3
  loop: start=0, step=1, limit=4
  $region2: #{critic_forward.5} parent=0 // loop_pre_header
    _
  $region3: #{critic_forward.5} parent=0 // loop_header
    %s8 = sphi 0, %s12
    %p9 = scmp.ge.s32.totalorder %s8, 4
    %s15 = sphi 0, %s27
    %s16 = sphi 0, %s23
    %s17 = sphi 0, %s15
    %s18 = sphi 0, %s16
    %s19 = sphi 0, %s17
    %s20 = sphi 0, %s18
    %s30 = sphi 0, %s32
    %s33 = sphi 0, %s30
    %s34 = sphi 0, %s33
    %s50 = sphi 0, %s34
    %s56 = sphi 0, %s58
    %s59 = sphi 0, %s56
    %s60 = sphi 0, %s59
    %s76 = sphi 0, %s60
    %s84 = sphi 0, %s86
    %s87 = sphi 0, %s84
    %s88 = sphi 0, %s87
    %s104 = sphi 0, %s88
  $region4: #{critic_forward.5} parent=0 // loop_header_branch
    %11 = sbr.rel (%p9) target = $region8
  $region5: #{critic_forward.5} parent=0 // loop_body
    %s13 = ssub.s32 %s8, 1
    %s14 = ssub.s32 %s8, 2
    %s21 = sadd.s32 1, %s16
    %p22 = scmp.ge.s32.totalorder %s21, 1
    %s23 = scalar_select %p22, 0, %s21
    %s24 = sadd.s32 1, %s15
    %s25 = scalar_select %p22, %s24, %s15
    %p26 = scmp.ge.s32.totalorder %s25, 2
    %s27 = scalar_select %p26, 0, %s25
    %s28 = ssub.s32 %s15, %s27
    %p29 = scmp.eq.s32.totalorder %s28, 0
    %s31 = sadd.s32 %s30, 1
    %s32 = scalar_select %p29, %s30, %s31
    %p35 = pneg %p29
    %p36 = scmp.eq.s32.totalorder %s8, 1
    %p37 = por %p35, %p36
    %p38 = scmp.ne.s32.totalorder %s30, %s33
    %p39 = scmp.eq.s32.totalorder %s8, 0
    %p40 = por %p38, %p39
    %p41 = scmp.ne.s32.totalorder %s30, %s33
    %p42 = scmp.eq.s32.totalorder %s13, 1
    %p43 = por %p41, %p42
    %p44 = scmp.ne.s32.totalorder %s33, %s34
    %p45 = scmp.eq.s32.totalorder %s13, 0
    %p46 = por %p44, %p45
    %p47 = scmp.ne.s32.totalorder %s33, %s34
    %p48 = scmp.eq.s32.totalorder %s14, 1
    %p49 = por %p47, %p48
    %p51 = scmp.ne.s32.totalorder %s34, %s50
    %p52 = scmp.eq.s32.totalorder %s14, 0
    %p53 = por %p51, %p52
    %s54 = ssub.s32 %s16, %s23
    %p55 = scmp.eq.s32.totalorder %s54, 0
    %s57 = sadd.s32 %s56, 1
    %s58 = scalar_select %p55, %s56, %s57
    %p61 = pneg %p55
    %p62 = scmp.eq.s32.totalorder %s8, 1
    %p63 = por %p61, %p62
    %p64 = scmp.ne.s32.totalorder %s56, %s59
    %p65 = scmp.eq.s32.totalorder %s8, 0
    %p66 = por %p64, %p65
    %p67 = scmp.ne.s32.totalorder %s56, %s59
    %p68 = scmp.eq.s32.totalorder %s13, 1
    %p69 = por %p67, %p68
    %p70 = scmp.ne.s32.totalorder %s59, %s60
    %p71 = scmp.eq.s32.totalorder %s13, 0
    %p72 = por %p70, %p71
    %p73 = scmp.ne.s32.totalorder %s59, %s60
    %p74 = scmp.eq.s32.totalorder %s14, 1
    %p75 = por %p73, %p74
    %p77 = scmp.ne.s32.totalorder %s60, %s76
    %p78 = scmp.eq.s32.totalorder %s14, 0
    %p79 = por %p77, %p78
    %s80 = ssub.s32 %s15, %s27
    %s81 = ssub.s32 %s16, %s23
    %s82 = sor.u32 %s80, %s81
    %p83 = scmp.eq.s32.totalorder %s82, 0
    %s85 = sadd.s32 %s84, 1
    %s86 = scalar_select %p83, %s84, %s85
    %p89 = pneg %p83
    %p90 = scmp.eq.s32.totalorder %s8, 1
    %p91 = por %p89, %p90
    %p92 = scmp.ne.s32.totalorder %s84, %s87
    %p93 = scmp.eq.s32.totalorder %s8, 0
    %p94 = por %p92, %p93
    %p95 = scmp.ne.s32.totalorder %s84, %s87
    %p96 = scmp.eq.s32.totalorder %s13, 1
    %p97 = por %p95, %p96
    %p98 = scmp.ne.s32.totalorder %s87, %s88
    %p99 = scmp.eq.s32.totalorder %s13, 0
    %p100 = por %p98, %p99
    %p101 = scmp.ne.s32.totalorder %s87, %s88
    %p102 = scmp.eq.s32.totalorder %s14, 1
    %p103 = por %p101, %p102
    %p105 = scmp.ne.s32.totalorder %s88, %s104
    %p106 = scmp.eq.s32.totalorder %s14, 0
    %p107 = por %p105, %p106
    %p108 = scmp.le.s32.totalorder 1, %s8
    %p109 = scmp.lt.s32.totalorder %s8, 3
    %p110 = pnand %p108, %p109
    %p111 = pneg %p110
    // Predicated region
    $region9: #{critic_forward.5} parent=5 // pred_check
      _
    $region10: #{critic_forward.5} parent=5 // pred_check_branch
      %113 = sbr.rel (%p110) target = $region12
    $region11: #{critic_forward.5} parent=5 // pred_region
      %s114 = ssub.s32 %s8, 1
      // Predicated region
      $region13: #{critic_forward.5} parent=11 // pred_check
        %p115 = pneg %p72
      $region14: #{critic_forward.5} parent=11 // pred_check_branch
        %117 = sbr.rel (%p115) target = $region16
      $region15: #{critic_forward.5} parent=11 // pred_region
        %p118 = scmp.lt.s32.totalorder %s18, 0
        %s119 = scalar_select %p118, %s18, 0
        %s120 = smul.addr %s119, 4
        %s121 = scalar_lea.vmem %s1, %s120
      $region16: #{critic_forward.5} parent=11 // pred_fallthru
        _
    $region12: #{critic_forward.5} parent=5 // pred_fallthru
      _
    %p122 = scmp.lt.s32.totalorder %s8, 2
    // Predicated region
    $region17: #{critic_forward.5} parent=5 // pred_check
      %p123 = pneg %p122
    $region18: #{critic_forward.5} parent=5 // pred_check_branch
      %125 = sbr.rel (%p123) target = $region20
    $region19: #{critic_forward.5} parent=5 // pred_region
      // Predicated region
      $region21: #{critic_forward.5} parent=19 // pred_check
        %p126 = pneg %p40
      $region22: #{critic_forward.5} parent=19 // pred_check_branch
        %128 = sbr.rel (%p126) target = $region24
      $region23: #{critic_forward.5} parent=19 // pred_region
        %p129 = scmp.lt.s32.totalorder %s15, 1
        %s130 = scalar_select %p129, %s15, 1
        %s131 = smul.addr %s130, 132
        %s132 = smul.addr %s131, 4
        %s133 = scalar_lea.vmem %s0, %s132
      $region24: #{critic_forward.5} parent=19 // pred_fallthru
        _
    $region20: #{critic_forward.5} parent=5 // pred_fallthru
      _
    %p134 = scmp.le.s32.totalorder 1, %s8
    %p135 = scmp.lt.s32.totalorder %s8, 3
    %p136 = pnand %p134, %p135
    %p137 = pneg %p136
    // Predicated region
    $region25: #{critic_forward.5} parent=5 // pred_check
      _
    $region26: #{critic_forward.5} parent=5 // pred_check_branch
      %139 = sbr.rel (%p136) target = $region28
    $region27: #{critic_forward.5} parent=5 // pred_region
      %s140 = ssub.s32 %s8, 1
      %p141 = scmp.lt.s32.totalorder %s17, 1
      %s142 = scalar_select %p141, %s17, 1
      %s143 = smul.addr %s142, 132
      %s144 = smul.addr %s143, 4
      %s145 = scalar_lea.vmem %s0, %s144
      %p146 = pneg %p46
      %p147 = pneg %p43
      %p148 = scmp.lt.s32.totalorder %s18, 0
      %s149 = scalar_select %p148, %s18, 0
      %s150 = smul.addr %s149, 4
      %s151 = scalar_lea.vmem %s1, %s150
      %p152 = pneg %p72
      %p153 = pneg %p69
      %p154 = pneg %p100
      %p155 = pneg %p97
      %p156 = scmp.lt.s32.totalorder %s17, 1
      %s157 = scalar_select %p156, %s17, 1
      %p158 = scmp.lt.s32.totalorder %s18, 0
      %s159 = scalar_select %p158, %s18, 0
      %s160 = smul.addr %s157, 128
      %s161 = sadd.s32 %s159, %s160
      %s162 = smul.addr %s161, 4
      %s163 = scalar_lea.vmem %s2, %s162
      %p164 = scmp.lt.s32.totalorder %s17, 1
      %s165 = scalar_select %p164, %s17, 1
      %s166 = smul.addr %s165, 132
      %s167 = smul.addr %s166, 4
      %s168 = scalar_lea.vmem %s0, %s167
      %p169 = scmp.lt.s32.totalorder %s18, 0
      %s170 = scalar_select %p169, %s18, 0
      %s171 = smul.addr %s170, 4
      %s172 = scalar_lea.vmem %s1, %s171
      %p173 = scmp.lt.s32.totalorder %s17, 1
      %s174 = scalar_select %p173, %s17, 1
      %p175 = scmp.lt.s32.totalorder %s18, 0
      %s176 = scalar_select %p175, %s18, 0
      %s177 = smul.addr %s174, 128
      %s178 = sadd.s32 %s176, %s177
      %s179 = smul.addr %s178, 4
      %s180 = scalar_lea.vmem %s2, %s179
      %v182 = vld [vmem:[%s168] sm:$0xf]
      %v183 = vld [vmem:[%s168 + $0x4] sm:$0xf]
      %v184 = vld [vmem:[%s168 + $0x8] sm:$0xf]
      %v185 = vld [vmem:[%s168 + $0xc] sm:$0xf]
      %v186 = vld [vmem:[%s168 + $0x10] sm:$0xf]
      %v187 = vld [vmem:[%s168 + $0x14] sm:$0xf]
      %v188 = vld [vmem:[%s168 + $0x18] sm:$0xf]
      %v189 = vld [vmem:[%s168 + $0x1c] sm:$0xf]
      %v190 = vld [vmem:[%s168 + $0x20] sm:$0xf]
      %v191 = vld [vmem:[%s168 + $0x24] sm:$0xf]
      %v192 = vld [vmem:[%s168 + $0x28] sm:$0xf]
      %v193 = vld [vmem:[%s168 + $0x2c] sm:$0xf]
      %v194 = vld [vmem:[%s168 + $0x30] sm:$0xf]
      %v195 = vld [vmem:[%s168 + $0x34] sm:$0xf]
      %v196 = vld [vmem:[%s168 + $0x38] sm:$0xf]
      %v197 = vld [vmem:[%s168 + $0x3c] sm:$0xf]
      %v198 = vld [vmem:[%s168 + $0x40] sm:$0xf]
      %v199 = vld [vmem:[%s168 + $0x44] sm:$0xf]
      %v200 = vld [vmem:[%s168 + $0x48] sm:$0xf]
      %v201 = vld [vmem:[%s168 + $0x4c] sm:$0xf]
      %v202 = vld [vmem:[%s168 + $0x50] sm:$0xf]
      %v203 = vld [vmem:[%s168 + $0x54] sm:$0xf]
      %v204 = vld [vmem:[%s168 + $0x58] sm:$0xf]
      %v205 = vld [vmem:[%s168 + $0x5c] sm:$0xf]
      %v206 = vld [vmem:[%s168 + $0x60] sm:$0xf]
      %v207 = vld [vmem:[%s168 + $0x64] sm:$0xf]
      %v208 = vld [vmem:[%s168 + $0x68] sm:$0xf]
      %v209 = vld [vmem:[%s168 + $0x6c] sm:$0xf]
      %v210 = vld [vmem:[%s168 + $0x70] sm:$0xf]
      %v211 = vld [vmem:[%s168 + $0x74] sm:$0xf]
      %v212 = vld [vmem:[%s168 + $0x78] sm:$0xf]
      %v213 = vld [vmem:[%s168 + $0x7c] sm:$0xf]
      %v214 = vld [vmem:[%s168 + $0x80] sm:$0xf]
      %v215 = vld [vmem:[%s168 + $0x84] sm:$0xf]
      %v216 = vld [vmem:[%s168 + $0x88] sm:$0xf]
      %v217 = vld [vmem:[%s168 + $0x8c] sm:$0xf]
      %v218 = vld [vmem:[%s168 + $0x90] sm:$0xf]
      %v219 = vld [vmem:[%s168 + $0x94] sm:$0xf]
      %v220 = vld [vmem:[%s168 + $0x98] sm:$0xf]
      %v221 = vld [vmem:[%s168 + $0x9c] sm:$0xf]
      %v222 = vld [vmem:[%s168 + $0xa0] sm:$0xf]
      %v223 = vld [vmem:[%s168 + $0xa4] sm:$0xf]
      %v224 = vld [vmem:[%s168 + $0xa8] sm:$0xf]
      %v225 = vld [vmem:[%s168 + $0xac] sm:$0xf]
      %v226 = vld [vmem:[%s168 + $0xb0] sm:$0xf]
      %v227 = vld [vmem:[%s168 + $0xb4] sm:$0xf]
      %v228 = vld [vmem:[%s168 + $0xb8] sm:$0xf]
      %v229 = vld [vmem:[%s168 + $0xbc] sm:$0xf]
      %v230 = vld [vmem:[%s168 + $0xc0] sm:$0xf]
      %v231 = vld [vmem:[%s168 + $0xc4] sm:$0xf]
      %v232 = vld [vmem:[%s168 + $0xc8] sm:$0xf]
      %v233 = vld [vmem:[%s168 + $0xcc] sm:$0xf]
      %v234 = vld [vmem:[%s168 + $0xd0] sm:$0xf]
      %v235 = vld [vmem:[%s168 + $0xd4] sm:$0xf]
      %v236 = vld [vmem:[%s168 + $0xd8] sm:$0xf]
      %v237 = vld [vmem:[%s168 + $0xdc] sm:$0xf]
      %v238 = vld [vmem:[%s168 + $0xe0] sm:$0xf]
      %v239 = vld [vmem:[%s168 + $0xe4] sm:$0xf]
      %v240 = vld [vmem:[%s168 + $0xe8] sm:$0xf]
      %v241 = vld [vmem:[%s168 + $0xec] sm:$0xf]
      %v242 = vld [vmem:[%s168 + $0xf0] sm:$0xf]
      %v243 = vld [vmem:[%s168 + $0xf4] sm:$0xf]
      %v244 = vld [vmem:[%s168 + $0xf8] sm:$0xf]
      %v245 = vld [vmem:[%s168 + $0xfc] sm:$0xf]
      %v246 = vld [vmem:[%s168 + $0x100] sm:$0xf]
      %v247 = vld [vmem:[%s168 + $0x104] sm:$0xf]
      %v248 = vld [vmem:[%s168 + $0x108] sm:$0xf]
      %v249 = vld [vmem:[%s168 + $0x10c] sm:$0xf]
      %v250 = vld [vmem:[%s168 + $0x110] sm:$0xf]
      %v251 = vld [vmem:[%s168 + $0x114] sm:$0xf]
      %v252 = vld [vmem:[%s168 + $0x118] sm:$0xf]
      %v253 = vld [vmem:[%s168 + $0x11c] sm:$0xf]
      %v254 = vld [vmem:[%s168 + $0x120] sm:$0xf]
      %v255 = vld [vmem:[%s168 + $0x124] sm:$0xf]
      %v256 = vld [vmem:[%s168 + $0x128] sm:$0xf]
      %v257 = vld [vmem:[%s168 + $0x12c] sm:$0xf]
      %v258 = vld [vmem:[%s168 + $0x130] sm:$0xf]
      %v259 = vld [vmem:[%s168 + $0x134] sm:$0xf]
      %v260 = vld [vmem:[%s168 + $0x138] sm:$0xf]
      %v261 = vld [vmem:[%s168 + $0x13c] sm:$0xf]
      %v262 = vld [vmem:[%s168 + $0x140] sm:$0xf]
      %v263 = vld [vmem:[%s168 + $0x144] sm:$0xf]
      %v264 = vld [vmem:[%s168 + $0x148] sm:$0xf]
      %v265 = vld [vmem:[%s168 + $0x14c] sm:$0xf]
      %v266 = vld [vmem:[%s168 + $0x150] sm:$0xf]
      %v267 = vld [vmem:[%s168 + $0x154] sm:$0xf]
      %v268 = vld [vmem:[%s168 + $0x158] sm:$0xf]
      %v269 = vld [vmem:[%s168 + $0x15c] sm:$0xf]
      %v270 = vld [vmem:[%s168 + $0x160] sm:$0xf]
      %v271 = vld [vmem:[%s168 + $0x164] sm:$0xf]
      %v272 = vld [vmem:[%s168 + $0x168] sm:$0xf]
      %v273 = vld [vmem:[%s168 + $0x16c] sm:$0xf]
      %v274 = vld [vmem:[%s168 + $0x170] sm:$0xf]
      %v275 = vld [vmem:[%s168 + $0x174] sm:$0xf]
      %v276 = vld [vmem:[%s168 + $0x178] sm:$0xf]
      %v277 = vld [vmem:[%s168 + $0x17c] sm:$0xf]
      %v278 = vld [vmem:[%s168 + $0x180] sm:$0xf]
      %v279 = vld [vmem:[%s168 + $0x184] sm:$0xf]
      %v280 = vld [vmem:[%s168 + $0x188] sm:$0xf]
      %v281 = vld [vmem:[%s168 + $0x18c] sm:$0xf]
      %v282 = vld [vmem:[%s168 + $0x190] sm:$0xf]
      %v283 = vld [vmem:[%s168 + $0x194] sm:$0xf]
      %v284 = vld [vmem:[%s168 + $0x198] sm:$0xf]
      %v285 = vld [vmem:[%s168 + $0x19c] sm:$0xf]
      %v286 = vld [vmem:[%s168 + $0x1a0] sm:$0xf]
      %v287 = vld [vmem:[%s168 + $0x1a4] sm:$0xf]
      %v288 = vld [vmem:[%s168 + $0x1a8] sm:$0xf]
      %v289 = vld [vmem:[%s168 + $0x1ac] sm:$0xf]
      %v290 = vld [vmem:[%s168 + $0x1b0] sm:$0xf]
      %v291 = vld [vmem:[%s168 + $0x1b4] sm:$0xf]
      %v292 = vld [vmem:[%s168 + $0x1b8] sm:$0xf]
      %v293 = vld [vmem:[%s168 + $0x1bc] sm:$0xf]
      %v294 = vld [vmem:[%s168 + $0x1c0] sm:$0xf]
      %v295 = vld [vmem:[%s168 + $0x1c4] sm:$0xf]
      %v296 = vld [vmem:[%s168 + $0x1c8] sm:$0xf]
      %v297 = vld [vmem:[%s168 + $0x1cc] sm:$0xf]
      %v298 = vld [vmem:[%s168 + $0x1d0] sm:$0xf]
      %v299 = vld [vmem:[%s168 + $0x1d4] sm:$0xf]
      %v300 = vld [vmem:[%s168 + $0x1d8] sm:$0xf]
      %v301 = vld [vmem:[%s168 + $0x1dc] sm:$0xf]
      %v302 = vld [vmem:[%s168 + $0x1e0] sm:$0xf]
      %v303 = vld [vmem:[%s168 + $0x1e4] sm:$0xf]
      %v304 = vld [vmem:[%s168 + $0x1e8] sm:$0xf]
      %v305 = vld [vmem:[%s168 + $0x1ec] sm:$0xf]
      %v306 = vld [vmem:[%s168 + $0x1f0] sm:$0xf]
      %v307 = vld [vmem:[%s168 + $0x1f4] sm:$0xf]
      %v308 = vld [vmem:[%s168 + $0x1f8] sm:$0xf]
      %v309 = vld [vmem:[%s168 + $0x1fc] sm:$0xf]
      %v310 = vld [vmem:[%s172] sm:$0xf]
      %v311 = vld [vmem:[%s172 + $0x4] sm:$0xf]
      %v312 = vld [vmem:[%s172 + $0x8] sm:$0xf]
      %v313 = vld [vmem:[%s168 + $0x200] sm:$0xf]
      %v314 = vld [vmem:[%s168 + $0x204] sm:$0xf]
      %v315 = vld [vmem:[%s168 + $0x208] sm:$0xf]
      %v316 = vld [vmem:[%s168 + $0x20c] sm:$0xf]
      %s317 = scalar_lea.vmem %s172, 12
      %v318 = vld [vmem:[%s317] sm:$0xf]
      %v319 = vld [vmem:[%s317 + $0x4] sm:$0xf]
      %v320 = vld [vmem:[%s317 + $0x8] sm:$0xf]
      %v449 = vunpack.c.l.b16 %v186
      %v450 = vunpack.c.l.b16 %v187
      %v451 = vunpack.c.l.b16 %v188
      %v452 = vunpack.c.l.b16 %v189
      %v453 = vunpack.c.l.b16 %v190
      %v454 = vunpack.c.l.b16 %v191
      %v455 = vunpack.c.l.b16 %v192
      %v456 = vunpack.c.l.b16 %v193
      %v457 = vunpack.c.l.b16 %v194
      %v458 = vunpack.c.l.b16 %v195
      %v459 = vunpack.c.l.b16 %v196
      %v460 = vunpack.c.l.b16 %v197
      %v461 = vunpack.c.l.b16 %v198
      %v462 = vunpack.c.l.b16 %v199
      %v463 = vunpack.c.l.b16 %v200
      %v464 = vunpack.c.l.b16 %v201
      %v465 = vunpack.c.l.b16 %v202
      %v466 = vunpack.c.l.b16 %v203
      %v467 = vunpack.c.l.b16 %v204
      %v468 = vunpack.c.l.b16 %v205
      %v469 = vunpack.c.l.b16 %v206
      %v470 = vunpack.c.l.b16 %v207
      %v471 = vunpack.c.l.b16 %v208
      %v472 = vunpack.c.l.b16 %v209
      %v473 = vunpack.c.l.b16 %v210
      %v474 = vunpack.c.l.b16 %v211
      %v475 = vunpack.c.l.b16 %v212
      %v476 = vunpack.c.l.b16 %v213
      %v477 = vunpack.c.l.b16 %v214
      %v478 = vunpack.c.l.b16 %v215
      %v479 = vunpack.c.l.b16 %v216
      %v480 = vunpack.c.l.b16 %v217
      %v481 = vunpack.c.l.b16 %v218
      %v482 = vunpack.c.l.b16 %v219
      %v483 = vunpack.c.l.b16 %v220
      %v484 = vunpack.c.l.b16 %v221
      %v485 = vunpack.c.l.b16 %v222
      %v486 = vunpack.c.l.b16 %v223
      %v487 = vunpack.c.l.b16 %v224
      %v488 = vunpack.c.l.b16 %v225
      %v489 = vunpack.c.l.b16 %v226
      %v490 = vunpack.c.l.b16 %v227
      %v491 = vunpack.c.l.b16 %v228
      %v492 = vunpack.c.l.b16 %v229
      %v493 = vunpack.c.l.b16 %v230
      %v494 = vunpack.c.l.b16 %v231
      %v495 = vunpack.c.l.b16 %v232
      %v496 = vunpack.c.l.b16 %v233
      %v497 = vunpack.c.l.b16 %v234
      %v498 = vunpack.c.l.b16 %v235
      %v499 = vunpack.c.l.b16 %v236
      %v500 = vunpack.c.l.b16 %v237
      %v501 = vunpack.c.l.b16 %v238
      %v502 = vunpack.c.l.b16 %v239
      %v503 = vunpack.c.l.b16 %v240
      %v504 = vunpack.c.l.b16 %v241
      %v505 = vunpack.c.l.b16 %v242
      %v506 = vunpack.c.l.b16 %v243
      %v507 = vunpack.c.l.b16 %v244
      %v508 = vunpack.c.l.b16 %v245
      %v509 = vunpack.c.l.b16 %v246
      %v510 = vunpack.c.l.b16 %v247
      %v511 = vunpack.c.l.b16 %v248
      %v512 = vunpack.c.l.b16 %v249
      %v513 = vunpack.c.l.b16 %v250
      %v514 = vunpack.c.l.b16 %v251
      %v515 = vunpack.c.l.b16 %v252
      %v516 = vunpack.c.l.b16 %v253
      %v517 = vunpack.c.l.b16 %v254
      %v518 = vunpack.c.l.b16 %v255
      %v519 = vunpack.c.l.b16 %v256
      %v520 = vunpack.c.l.b16 %v257
      %v521 = vunpack.c.l.b16 %v258
      %v522 = vunpack.c.l.b16 %v259
      %v523 = vunpack.c.l.b16 %v260
      %v524 = vunpack.c.l.b16 %v261
      %v525 = vunpack.c.l.b16 %v262
      %v526 = vunpack.c.l.b16 %v263
      %v527 = vunpack.c.l.b16 %v264
      %v528 = vunpack.c.l.b16 %v265
      %v529 = vunpack.c.l.b16 %v266
      %v530 = vunpack.c.l.b16 %v267
      %v531 = vunpack.c.l.b16 %v268
      %v532 = vunpack.c.l.b16 %v269
      %v533 = vunpack.c.l.b16 %v270
      %v534 = vunpack.c.l.b16 %v271
      %v535 = vunpack.c.l.b16 %v272
      %v536 = vunpack.c.l.b16 %v273
      %v537 = vunpack.c.l.b16 %v274
      %v538 = vunpack.c.l.b16 %v275
      %v539 = vunpack.c.l.b16 %v276
      %v540 = vunpack.c.l.b16 %v277
      %v541 = vunpack.c.l.b16 %v278
      %v542 = vunpack.c.l.b16 %v279
      %v543 = vunpack.c.l.b16 %v280
      %v544 = vunpack.c.l.b16 %v281
      %v545 = vunpack.c.l.b16 %v282
      %v546 = vunpack.c.l.b16 %v283
      %v547 = vunpack.c.l.b16 %v284
      %v548 = vunpack.c.l.b16 %v285
      %v549 = vunpack.c.l.b16 %v286
      %v550 = vunpack.c.l.b16 %v287
      %v551 = vunpack.c.l.b16 %v288
      %v552 = vunpack.c.l.b16 %v289
      %v553 = vunpack.c.l.b16 %v290
      %v554 = vunpack.c.l.b16 %v291
      %v555 = vunpack.c.l.b16 %v292
      %v556 = vunpack.c.l.b16 %v293
      %v557 = vunpack.c.l.b16 %v294
      %v558 = vunpack.c.l.b16 %v295
      %v559 = vunpack.c.l.b16 %v296
      %v560 = vunpack.c.l.b16 %v297
      %v561 = vunpack.c.l.b16 %v298
      %v562 = vunpack.c.l.b16 %v299
      %v563 = vunpack.c.l.b16 %v300
      %v564 = vunpack.c.l.b16 %v301
      %v565 = vunpack.c.l.b16 %v302
      %v566 = vunpack.c.l.b16 %v303
      %v567 = vunpack.c.l.b16 %v304
      %v568 = vunpack.c.l.b16 %v305
      %v569 = vunpack.c.l.b16 %v306
      %v570 = vunpack.c.l.b16 %v307
      %v571 = vunpack.c.l.b16 %v308
      %v572 = vunpack.c.l.b16 %v309
      %v573 = vunpack.c.l.b16 %v313
      %v574 = vunpack.c.l.b16 %v314
      %v575 = vunpack.c.l.b16 %v315
      %v576 = vunpack.c.l.b16 %v316
      %v577 = vpack.c.b16 %v450, %v449
      %v578 = vpack.c.b16 %v452, %v451
      %v579 = vpack.c.b16 %v454, %v453
      %v580 = vpack.c.b16 %v456, %v455
      %v581 = vpack.c.b16 %v458, %v457
      %v582 = vpack.c.b16 %v460, %v459
      %v583 = vpack.c.b16 %v462, %v461
      %v584 = vpack.c.b16 %v464, %v463
      %v585 = vpack.c.b16 %v466, %v465
      %v586 = vpack.c.b16 %v468, %v467
      %v587 = vpack.c.b16 %v470, %v469
      %v588 = vpack.c.b16 %v472, %v471
      %v589 = vpack.c.b16 %v474, %v473
      %v590 = vpack.c.b16 %v476, %v475
      %v591 = vpack.c.b16 %v478, %v477
      %v592 = vpack.c.b16 %v480, %v479
      %v593 = vpack.c.b16 %v482, %v481
      %v594 = vpack.c.b16 %v484, %v483
      %v595 = vpack.c.b16 %v486, %v485
      %v596 = vpack.c.b16 %v488, %v487
      %v597 = vpack.c.b16 %v490, %v489
      %v598 = vpack.c.b16 %v492, %v491
      %v599 = vpack.c.b16 %v494, %v493
      %v600 = vpack.c.b16 %v496, %v495
      %v601 = vpack.c.b16 %v498, %v497
      %v602 = vpack.c.b16 %v500, %v499
      %v603 = vpack.c.b16 %v502, %v501
      %v604 = vpack.c.b16 %v504, %v503
      %v605 = vpack.c.b16 %v506, %v505
      %v606 = vpack.c.b16 %v508, %v507
      %v607 = vpack.c.b16 %v510, %v509
      %v608 = vpack.c.b16 %v512, %v511
      %v609 = vpack.c.b16 %v514, %v513
      %v610 = vpack.c.b16 %v516, %v515
      %v611 = vpack.c.b16 %v518, %v517
      %v612 = vpack.c.b16 %v520, %v519
      %v613 = vpack.c.b16 %v522, %v521
      %v614 = vpack.c.b16 %v524, %v523
      %v615 = vpack.c.b16 %v526, %v525
      %v616 = vpack.c.b16 %v528, %v527
      %v617 = vpack.c.b16 %v530, %v529
      %v618 = vpack.c.b16 %v532, %v531
      %v619 = vpack.c.b16 %v534, %v533
      %v620 = vpack.c.b16 %v536, %v535
      %v621 = vpack.c.b16 %v538, %v537
      %v622 = vpack.c.b16 %v540, %v539
      %v623 = vpack.c.b16 %v542, %v541
      %v624 = vpack.c.b16 %v544, %v543
      %v625 = vpack.c.b16 %v546, %v545
      %v626 = vpack.c.b16 %v548, %v547
      %v627 = vpack.c.b16 %v550, %v549
      %v628 = vpack.c.b16 %v552, %v551
      %v629 = vpack.c.b16 %v554, %v553
      %v630 = vpack.c.b16 %v556, %v555
      %v631 = vpack.c.b16 %v558, %v557
      %v632 = vpack.c.b16 %v560, %v559
      %v633 = vpack.c.b16 %v562, %v561
      %v634 = vpack.c.b16 %v564, %v563
      %v635 = vpack.c.b16 %v566, %v565
      %v636 = vpack.c.b16 %v568, %v567
      %v637 = vpack.c.b16 %v570, %v569
      %v638 = vpack.c.b16 %v572, %v571
      %v639 = vpack.c.b16 %v574, %v573
      %v640 = vpack.c.b16 %v576, %v575
      %v644 = vunpack.c.l.b16 %v318
      %v645 = vunpack.c.l.b16 %v319
      %v646 = vunpack.c.l.b16 %v320
      %v647 = vpack.c.b16 %v645, %v644
      %v648 = vpack.c.b16 %v646, %v646
      %vm650 = vcmask 195584
      %v652 = vsel %vm650, %v577, 0
      %v655 = vsel %vm650, %v578, 0
      %v658 = vsel %vm650, %v579, 0
      %v661 = vsel %vm650, %v580, 0
      %v664 = vsel %vm650, %v581, 0
      %v667 = vsel %vm650, %v582, 0
      %v670 = vsel %vm650, %v583, 0
      %v673 = vsel %vm650, %v584, 0
      %v676 = vsel %vm650, %v585, 0
      %v679 = vsel %vm650, %v586, 0
      %v682 = vsel %vm650, %v587, 0
      %v685 = vsel %vm650, %v588, 0
      %v688 = vsel %vm650, %v589, 0
      %v691 = vsel %vm650, %v590, 0
      %v694 = vsel %vm650, %v591, 0
      %v697 = vsel %vm650, %v592, 0
      %v700 = vsel %vm650, %v593, 0
      %v703 = vsel %vm650, %v594, 0
      %v706 = vsel %vm650, %v595, 0
      %v709 = vsel %vm650, %v596, 0
      %v712 = vsel %vm650, %v597, 0
      %v715 = vsel %vm650, %v598, 0
      %v718 = vsel %vm650, %v599, 0
      %v721 = vsel %vm650, %v600, 0
      %v724 = vsel %vm650, %v601, 0
      %v727 = vsel %vm650, %v602, 0
      %v730 = vsel %vm650, %v603, 0
      %v733 = vsel %vm650, %v604, 0
      %v736 = vsel %vm650, %v605, 0
      %v739 = vsel %vm650, %v606, 0
      %v742 = vsel %vm650, %v607, 0
      %v745 = vsel %vm650, %v608, 0
      %v748 = vsel %vm650, %v609, 0
      %v751 = vsel %vm650, %v610, 0
      %v754 = vsel %vm650, %v611, 0
      %v757 = vsel %vm650, %v612, 0
      %v760 = vsel %vm650, %v613, 0
      %v763 = vsel %vm650, %v614, 0
      %v766 = vsel %vm650, %v615, 0
      %v769 = vsel %vm650, %v616, 0
      %v772 = vsel %vm650, %v617, 0
      %v775 = vsel %vm650, %v618, 0
      %v778 = vsel %vm650, %v619, 0
      %v781 = vsel %vm650, %v620, 0
      %v784 = vsel %vm650, %v621, 0
      %v787 = vsel %vm650, %v622, 0
      %v790 = vsel %vm650, %v623, 0
      %v793 = vsel %vm650, %v624, 0
      %v796 = vsel %vm650, %v625, 0
      %v799 = vsel %vm650, %v626, 0
      %v802 = vsel %vm650, %v627, 0
      %v805 = vsel %vm650, %v628, 0
      %v808 = vsel %vm650, %v629, 0
      %v811 = vsel %vm650, %v630, 0
      %v814 = vsel %vm650, %v631, 0
      %v817 = vsel %vm650, %v632, 0
      %v820 = vsel %vm650, %v633, 0
      %v823 = vsel %vm650, %v634, 0
      %v826 = vsel %vm650, %v635, 0
      %v829 = vsel %vm650, %v636, 0
      %v832 = vsel %vm650, %v637, 0
      %v835 = vsel %vm650, %v638, 0
      %v838 = vsel %vm650, %v639, 0
      %v841 = vsel %vm650, %v640, 0
      %vm843 = vcmask 1043456
      %v845 = vsel %vm843, %v648, 0
      %847 = vmatprep.subr.bf16.mxu0 0
      %848 = vmatpush1.bf16.msra.mxu0 0
      %849 = vmatprep.subr.bf16.mxu0 0
      %850 = vmatpush1.bf16.msra.mxu0 0
      %851 = vmatprep.subr.bf16.mxu0 0
      %852 = vmatpush1.bf16.msra.mxu0 0
      %853 = vmatprep.subr.bf16.mxu0 0
      %854 = vmatpush1.bf16.msra.mxu0 0
      %855 = vmatprep.subr.bf16.mxu0 0
      %856 = vmatpush1.bf16.msra.mxu0 0
      %857 = vmatprep.subr.bf16.mxu0 0
      %858 = vmatpush1.bf16.msra.mxu0 0
      %859 = vmatprep.subr.bf16.mxu0 0
      %860 = vmatpush1.bf16.msra.mxu0 %v845
      %861 = vmatprep.subr.bf16.mxu0 0
      %862 = vmatpush1.bf16.msra.mxu0 %v647
      %863 = vmatprep.subr.bf16.mxu0 0
      %864 = vmatpush2.bf16.msra.mxu0 0
      %865 = vmatprep.subr.bf16.mxu0 0
      %866 = vmatpush2.bf16.msra.mxu0 0
      %867 = vmatprep.subr.bf16.mxu0 0
      %868 = vmatpush2.bf16.msra.mxu0 0
      %869 = vmatprep.subr.bf16.mxu0 0
      %870 = vmatpush2.bf16.msra.mxu0 0
      %871 = vmatprep.subr.bf16.mxu0 0
      %872 = vmatpush2.bf16.msra.mxu0 0
      %873 = vmatprep.subr.bf16.mxu0 0
      %874 = vmatpush2.bf16.msra.mxu0 0
      %875 = vmatprep.subr.bf16.mxu0 0
      %876 = vmatpush2.bf16.msra.mxu0 0
      %877 = vmatprep.subr.bf16.mxu0 0
      %878 = vmatpush2.bf16.msra.mxu0 0
      %879 = vmatprep.mubr.bf16.mxu0 0
      %880 = vmatmul.mubr.bf16.gmra.mxu0 %v652
      %v881 = vpop.f32.mrf.mxu0
      %v882 = vadd.f32 0.0, %v881
      %v883 = vpop.f32.mrf.mxu0
      %v884 = vpop.f32.mrf.mxu0
      %v885 = vadd.f32 0.0, %v884
      %v886 = vpop.f32.mrf.mxu0
      %887 = vmatprep.mubr.bf16.mxu0 0
      %888 = vmatmul.mubr.bf16.gmra.mxu0 %v655
      %v889 = vpop.f32.mrf.mxu0
      %v890 = vadd.f32 0.0, %v889
      %v891 = vpop.f32.mrf.mxu0
      %v892 = vpop.f32.mrf.mxu0
      %v893 = vadd.f32 0.0, %v892
      %v894 = vpop.f32.mrf.mxu0
      %895 = vmatprep.mubr.bf16.mxu0 0
      %896 = vmatmul.mubr.bf16.gmra.mxu0 %v658
      %v897 = vpop.f32.mrf.mxu0
      %v898 = vadd.f32 0.0, %v897
      %v899 = vpop.f32.mrf.mxu0
      %v900 = vpop.f32.mrf.mxu0
      %v901 = vadd.f32 0.0, %v900
      %v902 = vpop.f32.mrf.mxu0
      %903 = vmatprep.mubr.bf16.mxu0 0
      %904 = vmatmul.mubr.bf16.gmra.mxu0 %v661
      %v905 = vpop.f32.mrf.mxu0
      %v906 = vadd.f32 0.0, %v905
      %v907 = vpop.f32.mrf.mxu0
      %v908 = vpop.f32.mrf.mxu0
      %v909 = vadd.f32 0.0, %v908
      %v910 = vpop.f32.mrf.mxu0
      %911 = vmatprep.mubr.bf16.mxu0 0
      %912 = vmatmul.mubr.bf16.gmra.mxu0 %v664
      %v913 = vpop.f32.mrf.mxu0
      %v914 = vadd.f32 0.0, %v913
      %v915 = vpop.f32.mrf.mxu0
      %v916 = vpop.f32.mrf.mxu0
      %v917 = vadd.f32 0.0, %v916
      %v918 = vpop.f32.mrf.mxu0
      %919 = vmatprep.mubr.bf16.mxu0 0
      %920 = vmatmul.mubr.bf16.gmra.mxu0 %v667
      %v921 = vpop.f32.mrf.mxu0
      %v922 = vadd.f32 0.0, %v921
      %v923 = vpop.f32.mrf.mxu0
      %v924 = vpop.f32.mrf.mxu0
      %v925 = vadd.f32 0.0, %v924
      %v926 = vpop.f32.mrf.mxu0
      %927 = vmatprep.mubr.bf16.mxu0 0
      %928 = vmatmul.mubr.bf16.gmra.mxu0 %v670
      %v929 = vpop.f32.mrf.mxu0
      %v930 = vadd.f32 0.0, %v929
      %v931 = vpop.f32.mrf.mxu0
      %v932 = vpop.f32.mrf.mxu0
      %v933 = vadd.f32 0.0, %v932
      %v934 = vpop.f32.mrf.mxu0
      %935 = vmatprep.mubr.bf16.mxu0 0
      %936 = vmatmul.mubr.bf16.gmra.mxu0 %v673
      %v937 = vpop.f32.mrf.mxu0
      %v938 = vadd.f32 0.0, %v937
      %v939 = vpop.f32.mrf.mxu0
      %v940 = vpop.f32.mrf.mxu0
      %v941 = vadd.f32 0.0, %v940
      %v942 = vpop.f32.mrf.mxu0
      %943 = vmatprep.mubr.bf16.mxu0 0
      %944 = vmatmul.mubr.bf16.gmra.mxu0 %v676
      %v945 = vpop.f32.mrf.mxu0
      %v946 = vadd.f32 0.0, %v945
      %v947 = vpop.f32.mrf.mxu0
      %v948 = vpop.f32.mrf.mxu0
      %v949 = vadd.f32 0.0, %v948
      %v950 = vpop.f32.mrf.mxu0
      %951 = vmatprep.mubr.bf16.mxu0 0
      %952 = vmatmul.mubr.bf16.gmra.mxu0 %v679
      %v953 = vpop.f32.mrf.mxu0
      %v954 = vadd.f32 0.0, %v953
      %v955 = vpop.f32.mrf.mxu0
      %v956 = vpop.f32.mrf.mxu0
      %v957 = vadd.f32 0.0, %v956
      %v958 = vpop.f32.mrf.mxu0
      %959 = vmatprep.mubr.bf16.mxu0 0
      %960 = vmatmul.mubr.bf16.gmra.mxu0 %v682
      %v961 = vpop.f32.mrf.mxu0
      %v962 = vadd.f32 0.0, %v961
      %v963 = vpop.f32.mrf.mxu0
      %v964 = vpop.f32.mrf.mxu0
      %v965 = vadd.f32 0.0, %v964
      %v966 = vpop.f32.mrf.mxu0
      %967 = vmatprep.mubr.bf16.mxu0 0
      %968 = vmatmul.mubr.bf16.gmra.mxu0 %v685
      %v969 = vpop.f32.mrf.mxu0
      %v970 = vadd.f32 0.0, %v969
      %v971 = vpop.f32.mrf.mxu0
      %v972 = vpop.f32.mrf.mxu0
      %v973 = vadd.f32 0.0, %v972
      %v974 = vpop.f32.mrf.mxu0
      %975 = vmatprep.mubr.bf16.mxu0 0
      %976 = vmatmul.mubr.bf16.gmra.mxu0 %v688
      %v977 = vpop.f32.mrf.mxu0
      %v978 = vadd.f32 0.0, %v977
      %v979 = vpop.f32.mrf.mxu0
      %v980 = vpop.f32.mrf.mxu0
      %v981 = vadd.f32 0.0, %v980
      %v982 = vpop.f32.mrf.mxu0
      %983 = vmatprep.mubr.bf16.mxu0 0
      %984 = vmatmul.mubr.bf16.gmra.mxu0 %v691
      %v985 = vpop.f32.mrf.mxu0
      %v986 = vadd.f32 0.0, %v985
      %v987 = vpop.f32.mrf.mxu0
      %v988 = vpop.f32.mrf.mxu0
      %v989 = vadd.f32 0.0, %v988
      %v990 = vpop.f32.mrf.mxu0
      %991 = vmatprep.mubr.bf16.mxu0 0
      %992 = vmatmul.mubr.bf16.gmra.mxu0 %v694
      %v993 = vpop.f32.mrf.mxu0
      %v994 = vadd.f32 0.0, %v993
      %v995 = vpop.f32.mrf.mxu0
      %v996 = vpop.f32.mrf.mxu0
      %v997 = vadd.f32 0.0, %v996
      %v998 = vpop.f32.mrf.mxu0
      %999 = vmatprep.mubr.bf16.mxu0 0
      %1000 = vmatmul.mubr.bf16.gmra.mxu0 %v697
      %v1001 = vpop.f32.mrf.mxu0
      %v1002 = vadd.f32 0.0, %v1001
      %v1003 = vpop.f32.mrf.mxu0
      %v1004 = vpop.f32.mrf.mxu0
      %v1005 = vadd.f32 0.0, %v1004
      %v1006 = vpop.f32.mrf.mxu0
      %1007 = vmatprep.mubr.bf16.mxu0 0
      %1008 = vmatmul.mubr.bf16.gmra.mxu0 %v700
      %v1009 = vpop.f32.mrf.mxu0
      %v1010 = vadd.f32 0.0, %v1009
      %v1011 = vpop.f32.mrf.mxu0
      %v1012 = vpop.f32.mrf.mxu0
      %v1013 = vadd.f32 0.0, %v1012
      %v1014 = vpop.f32.mrf.mxu0
      %1015 = vmatprep.mubr.bf16.mxu0 0
      %1016 = vmatmul.mubr.bf16.gmra.mxu0 %v703
      %v1017 = vpop.f32.mrf.mxu0
      %v1018 = vadd.f32 0.0, %v1017
      %v1019 = vpop.f32.mrf.mxu0
      %v1020 = vpop.f32.mrf.mxu0
      %v1021 = vadd.f32 0.0, %v1020
      %v1022 = vpop.f32.mrf.mxu0
      %1023 = vmatprep.mubr.bf16.mxu0 0
      %1024 = vmatmul.mubr.bf16.gmra.mxu0 %v706
      %v1025 = vpop.f32.mrf.mxu0
      %v1026 = vadd.f32 0.0, %v1025
      %v1027 = vpop.f32.mrf.mxu0
      %v1028 = vpop.f32.mrf.mxu0
      %v1029 = vadd.f32 0.0, %v1028
      %v1030 = vpop.f32.mrf.mxu0
      %1031 = vmatprep.mubr.bf16.mxu0 0
      %1032 = vmatmul.mubr.bf16.gmra.mxu0 %v709
      %v1033 = vpop.f32.mrf.mxu0
      %v1034 = vadd.f32 0.0, %v1033
      %v1035 = vpop.f32.mrf.mxu0
      %v1036 = vpop.f32.mrf.mxu0
      %v1037 = vadd.f32 0.0, %v1036
      %v1038 = vpop.f32.mrf.mxu0
      %1039 = vmatprep.mubr.bf16.mxu0 0
      %1040 = vmatmul.mubr.bf16.gmra.mxu0 %v712
      %v1041 = vpop.f32.mrf.mxu0
      %v1042 = vadd.f32 0.0, %v1041
      %v1043 = vpop.f32.mrf.mxu0
      %v1044 = vpop.f32.mrf.mxu0
      %v1045 = vadd.f32 0.0, %v1044
      %v1046 = vpop.f32.mrf.mxu0
      %1047 = vmatprep.mubr.bf16.mxu0 0
      %1048 = vmatmul.mubr.bf16.gmra.mxu0 %v715
      %v1049 = vpop.f32.mrf.mxu0
      %v1050 = vadd.f32 0.0, %v1049
      %v1051 = vpop.f32.mrf.mxu0
      %v1052 = vpop.f32.mrf.mxu0
      %v1053 = vadd.f32 0.0, %v1052
      %v1054 = vpop.f32.mrf.mxu0
      %1055 = vmatprep.mubr.bf16.mxu0 0
      %1056 = vmatmul.mubr.bf16.gmra.mxu0 %v718
      %v1057 = vpop.f32.mrf.mxu0
      %v1058 = vadd.f32 0.0, %v1057
      %v1059 = vpop.f32.mrf.mxu0
      %v1060 = vpop.f32.mrf.mxu0
      %v1061 = vadd.f32 0.0, %v1060
      %v1062 = vpop.f32.mrf.mxu0
      %1063 = vmatprep.mubr.bf16.mxu0 0
      %1064 = vmatmul.mubr.bf16.gmra.mxu0 %v721
      %v1065 = vpop.f32.mrf.mxu0
      %v1066 = vadd.f32 0.0, %v1065
      %v1067 = vpop.f32.mrf.mxu0
      %v1068 = vpop.f32.mrf.mxu0
      %v1069 = vadd.f32 0.0, %v1068
      %v1070 = vpop.f32.mrf.mxu0
      %1071 = vmatprep.mubr.bf16.mxu0 0
      %1072 = vmatmul.mubr.bf16.gmra.mxu0 %v724
      %v1073 = vpop.f32.mrf.mxu0
      %v1074 = vadd.f32 0.0, %v1073
      %v1075 = vpop.f32.mrf.mxu0
      %v1076 = vpop.f32.mrf.mxu0
      %v1077 = vadd.f32 0.0, %v1076
      %v1078 = vpop.f32.mrf.mxu0
      %1079 = vmatprep.mubr.bf16.mxu0 0
      %1080 = vmatmul.mubr.bf16.gmra.mxu0 %v727
      %v1081 = vpop.f32.mrf.mxu0
      %v1082 = vadd.f32 0.0, %v1081
      %v1083 = vpop.f32.mrf.mxu0
      %v1084 = vpop.f32.mrf.mxu0
      %v1085 = vadd.f32 0.0, %v1084
      %v1086 = vpop.f32.mrf.mxu0
      %1087 = vmatprep.mubr.bf16.mxu0 0
      %1088 = vmatmul.mubr.bf16.gmra.mxu0 %v730
      %v1089 = vpop.f32.mrf.mxu0
      %v1090 = vadd.f32 0.0, %v1089
      %v1091 = vpop.f32.mrf.mxu0
      %v1092 = vpop.f32.mrf.mxu0
      %v1093 = vadd.f32 0.0, %v1092
      %v1094 = vpop.f32.mrf.mxu0
      %1095 = vmatprep.mubr.bf16.mxu0 0
      %1096 = vmatmul.mubr.bf16.gmra.mxu0 %v733
      %v1097 = vpop.f32.mrf.mxu0
      %v1098 = vadd.f32 0.0, %v1097
      %v1099 = vpop.f32.mrf.mxu0
      %v1100 = vpop.f32.mrf.mxu0
      %v1101 = vadd.f32 0.0, %v1100
      %v1102 = vpop.f32.mrf.mxu0
      %1103 = vmatprep.mubr.bf16.mxu0 0
      %1104 = vmatmul.mubr.bf16.gmra.mxu0 %v736
      %v1105 = vpop.f32.mrf.mxu0
      %v1106 = vadd.f32 0.0, %v1105
      %v1107 = vpop.f32.mrf.mxu0
      %v1108 = vpop.f32.mrf.mxu0
      %v1109 = vadd.f32 0.0, %v1108
      %v1110 = vpop.f32.mrf.mxu0
      %1111 = vmatprep.mubr.bf16.mxu0 0
      %1112 = vmatmul.mubr.bf16.gmra.mxu0 %v739
      %v1113 = vpop.f32.mrf.mxu0
      %v1114 = vadd.f32 0.0, %v1113
      %v1115 = vpop.f32.mrf.mxu0
      %v1116 = vpop.f32.mrf.mxu0
      %v1117 = vadd.f32 0.0, %v1116
      %v1118 = vpop.f32.mrf.mxu0
      %1119 = vmatprep.mubr.bf16.mxu0 0
      %1120 = vmatmul.mubr.bf16.gmra.mxu0 %v742
      %v1121 = vpop.f32.mrf.mxu0
      %v1122 = vadd.f32 0.0, %v1121
      %v1123 = vpop.f32.mrf.mxu0
      %v1124 = vpop.f32.mrf.mxu0
      %v1125 = vadd.f32 0.0, %v1124
      %v1126 = vpop.f32.mrf.mxu0
      %1127 = vmatprep.mubr.bf16.mxu0 0
      %1128 = vmatmul.mubr.bf16.gmra.mxu0 %v745
      %v1129 = vpop.f32.mrf.mxu0
      %v1130 = vadd.f32 0.0, %v1129
      %v1131 = vpop.f32.mrf.mxu0
      %v1132 = vpop.f32.mrf.mxu0
      %v1133 = vadd.f32 0.0, %v1132
      %v1134 = vpop.f32.mrf.mxu0
      %1135 = vmatprep.mubr.bf16.mxu0 0
      %1136 = vmatmul.mubr.bf16.gmra.mxu0 %v748
      %v1137 = vpop.f32.mrf.mxu0
      %v1138 = vadd.f32 0.0, %v1137
      %v1139 = vpop.f32.mrf.mxu0
      %v1140 = vpop.f32.mrf.mxu0
      %v1141 = vadd.f32 0.0, %v1140
      %v1142 = vpop.f32.mrf.mxu0
      %1143 = vmatprep.mubr.bf16.mxu0 0
      %1144 = vmatmul.mubr.bf16.gmra.mxu0 %v751
      %v1145 = vpop.f32.mrf.mxu0
      %v1146 = vadd.f32 0.0, %v1145
      %v1147 = vpop.f32.mrf.mxu0
      %v1148 = vpop.f32.mrf.mxu0
      %v1149 = vadd.f32 0.0, %v1148
      %v1150 = vpop.f32.mrf.mxu0
      %1151 = vmatprep.mubr.bf16.mxu0 0
      %1152 = vmatmul.mubr.bf16.gmra.mxu0 %v754
      %v1153 = vpop.f32.mrf.mxu0
      %v1154 = vadd.f32 0.0, %v1153
      %v1155 = vpop.f32.mrf.mxu0
      %v1156 = vpop.f32.mrf.mxu0
      %v1157 = vadd.f32 0.0, %v1156
      %v1158 = vpop.f32.mrf.mxu0
      %1159 = vmatprep.mubr.bf16.mxu0 0
      %1160 = vmatmul.mubr.bf16.gmra.mxu0 %v757
      %v1161 = vpop.f32.mrf.mxu0
      %v1162 = vadd.f32 0.0, %v1161
      %v1163 = vpop.f32.mrf.mxu0
      %v1164 = vpop.f32.mrf.mxu0
      %v1165 = vadd.f32 0.0, %v1164
      %v1166 = vpop.f32.mrf.mxu0
      %1167 = vmatprep.mubr.bf16.mxu0 0
      %1168 = vmatmul.mubr.bf16.gmra.mxu0 %v760
      %v1169 = vpop.f32.mrf.mxu0
      %v1170 = vadd.f32 0.0, %v1169
      %v1171 = vpop.f32.mrf.mxu0
      %v1172 = vpop.f32.mrf.mxu0
      %v1173 = vadd.f32 0.0, %v1172
      %v1174 = vpop.f32.mrf.mxu0
      %1175 = vmatprep.mubr.bf16.mxu0 0
      %1176 = vmatmul.mubr.bf16.gmra.mxu0 %v763
      %v1177 = vpop.f32.mrf.mxu0
      %v1178 = vadd.f32 0.0, %v1177
      %v1179 = vpop.f32.mrf.mxu0
      %v1180 = vpop.f32.mrf.mxu0
      %v1181 = vadd.f32 0.0, %v1180
      %v1182 = vpop.f32.mrf.mxu0
      %1183 = vmatprep.mubr.bf16.mxu0 0
      %1184 = vmatmul.mubr.bf16.gmra.mxu0 %v766
      %v1185 = vpop.f32.mrf.mxu0
      %v1186 = vadd.f32 0.0, %v1185
      %v1187 = vpop.f32.mrf.mxu0
      %v1188 = vpop.f32.mrf.mxu0
      %v1189 = vadd.f32 0.0, %v1188
      %v1190 = vpop.f32.mrf.mxu0
      %1191 = vmatprep.mubr.bf16.mxu0 0
      %1192 = vmatmul.mubr.bf16.gmra.mxu0 %v769
      %v1193 = vpop.f32.mrf.mxu0
      %v1194 = vadd.f32 0.0, %v1193
      %v1195 = vpop.f32.mrf.mxu0
      %v1196 = vpop.f32.mrf.mxu0
      %v1197 = vadd.f32 0.0, %v1196
      %v1198 = vpop.f32.mrf.mxu0
      %1199 = vmatprep.mubr.bf16.mxu0 0
      %1200 = vmatmul.mubr.bf16.gmra.mxu0 %v772
      %v1201 = vpop.f32.mrf.mxu0
      %v1202 = vadd.f32 0.0, %v1201
      %v1203 = vpop.f32.mrf.mxu0
      %v1204 = vpop.f32.mrf.mxu0
      %v1205 = vadd.f32 0.0, %v1204
      %v1206 = vpop.f32.mrf.mxu0
      %1207 = vmatprep.mubr.bf16.mxu0 0
      %1208 = vmatmul.mubr.bf16.gmra.mxu0 %v775
      %v1209 = vpop.f32.mrf.mxu0
      %v1210 = vadd.f32 0.0, %v1209
      %v1211 = vpop.f32.mrf.mxu0
      %v1212 = vpop.f32.mrf.mxu0
      %v1213 = vadd.f32 0.0, %v1212
      %v1214 = vpop.f32.mrf.mxu0
      %1215 = vmatprep.mubr.bf16.mxu0 0
      %1216 = vmatmul.mubr.bf16.gmra.mxu0 %v778
      %v1217 = vpop.f32.mrf.mxu0
      %v1218 = vadd.f32 0.0, %v1217
      %v1219 = vpop.f32.mrf.mxu0
      %v1220 = vpop.f32.mrf.mxu0
      %v1221 = vadd.f32 0.0, %v1220
      %v1222 = vpop.f32.mrf.mxu0
      %1223 = vmatprep.mubr.bf16.mxu0 0
      %1224 = vmatmul.mubr.bf16.gmra.mxu0 %v781
      %v1225 = vpop.f32.mrf.mxu0
      %v1226 = vadd.f32 0.0, %v1225
      %v1227 = vpop.f32.mrf.mxu0
      %v1228 = vpop.f32.mrf.mxu0
      %v1229 = vadd.f32 0.0, %v1228
      %v1230 = vpop.f32.mrf.mxu0
      %1231 = vmatprep.mubr.bf16.mxu0 0
      %1232 = vmatmul.mubr.bf16.gmra.mxu0 %v784
      %v1233 = vpop.f32.mrf.mxu0
      %v1234 = vadd.f32 0.0, %v1233
      %v1235 = vpop.f32.mrf.mxu0
      %v1236 = vpop.f32.mrf.mxu0
      %v1237 = vadd.f32 0.0, %v1236
      %v1238 = vpop.f32.mrf.mxu0
      %1239 = vmatprep.mubr.bf16.mxu0 0
      %1240 = vmatmul.mubr.bf16.gmra.mxu0 %v787
      %v1241 = vpop.f32.mrf.mxu0
      %v1242 = vadd.f32 0.0, %v1241
      %v1243 = vpop.f32.mrf.mxu0
      %v1244 = vpop.f32.mrf.mxu0
      %v1245 = vadd.f32 0.0, %v1244
      %v1246 = vpop.f32.mrf.mxu0
      %1247 = vmatprep.mubr.bf16.mxu0 0
      %1248 = vmatmul.mubr.bf16.gmra.mxu0 %v790
      %v1249 = vpop.f32.mrf.mxu0
      %v1250 = vadd.f32 0.0, %v1249
      %v1251 = vpop.f32.mrf.mxu0
      %v1252 = vpop.f32.mrf.mxu0
      %v1253 = vadd.f32 0.0, %v1252
      %v1254 = vpop.f32.mrf.mxu0
      %1255 = vmatprep.mubr.bf16.mxu0 0
      %1256 = vmatmul.mubr.bf16.gmra.mxu0 %v793
      %v1257 = vpop.f32.mrf.mxu0
      %v1258 = vadd.f32 0.0, %v1257
      %v1259 = vpop.f32.mrf.mxu0
      %v1260 = vpop.f32.mrf.mxu0
      %v1261 = vadd.f32 0.0, %v1260
      %v1262 = vpop.f32.mrf.mxu0
      %1263 = vmatprep.mubr.bf16.mxu0 0
      %1264 = vmatmul.mubr.bf16.gmra.mxu0 %v796
      %v1265 = vpop.f32.mrf.mxu0
      %v1266 = vadd.f32 0.0, %v1265
      %v1267 = vpop.f32.mrf.mxu0
      %v1268 = vpop.f32.mrf.mxu0
      %v1269 = vadd.f32 0.0, %v1268
      %v1270 = vpop.f32.mrf.mxu0
      %1271 = vmatprep.mubr.bf16.mxu0 0
      %1272 = vmatmul.mubr.bf16.gmra.mxu0 %v799
      %v1273 = vpop.f32.mrf.mxu0
      %v1274 = vadd.f32 0.0, %v1273
      %v1275 = vpop.f32.mrf.mxu0
      %v1276 = vpop.f32.mrf.mxu0
      %v1277 = vadd.f32 0.0, %v1276
      %v1278 = vpop.f32.mrf.mxu0
      %1279 = vmatprep.mubr.bf16.mxu0 0
      %1280 = vmatmul.mubr.bf16.gmra.mxu0 %v802
      %v1281 = vpop.f32.mrf.mxu0
      %v1282 = vadd.f32 0.0, %v1281
      %v1283 = vpop.f32.mrf.mxu0
      %v1284 = vpop.f32.mrf.mxu0
      %v1285 = vadd.f32 0.0, %v1284
      %v1286 = vpop.f32.mrf.mxu0
      %1287 = vmatprep.mubr.bf16.mxu0 0
      %1288 = vmatmul.mubr.bf16.gmra.mxu0 %v805
      %v1289 = vpop.f32.mrf.mxu0
      %v1290 = vadd.f32 0.0, %v1289
      %v1291 = vpop.f32.mrf.mxu0
      %v1292 = vpop.f32.mrf.mxu0
      %v1293 = vadd.f32 0.0, %v1292
      %v1294 = vpop.f32.mrf.mxu0
      %1295 = vmatprep.mubr.bf16.mxu0 0
      %1296 = vmatmul.mubr.bf16.gmra.mxu0 %v808
      %v1297 = vpop.f32.mrf.mxu0
      %v1298 = vadd.f32 0.0, %v1297
      %v1299 = vpop.f32.mrf.mxu0
      %v1300 = vpop.f32.mrf.mxu0
      %v1301 = vadd.f32 0.0, %v1300
      %v1302 = vpop.f32.mrf.mxu0
      %1303 = vmatprep.mubr.bf16.mxu0 0
      %1304 = vmatmul.mubr.bf16.gmra.mxu0 %v811
      %v1305 = vpop.f32.mrf.mxu0
      %v1306 = vadd.f32 0.0, %v1305
      %v1307 = vpop.f32.mrf.mxu0
      %v1308 = vpop.f32.mrf.mxu0
      %v1309 = vadd.f32 0.0, %v1308
      %v1310 = vpop.f32.mrf.mxu0
      %1311 = vmatprep.mubr.bf16.mxu0 0
      %1312 = vmatmul.mubr.bf16.gmra.mxu0 %v814
      %v1313 = vpop.f32.mrf.mxu0
      %v1314 = vadd.f32 0.0, %v1313
      %v1315 = vpop.f32.mrf.mxu0
      %v1316 = vpop.f32.mrf.mxu0
      %v1317 = vadd.f32 0.0, %v1316
      %v1318 = vpop.f32.mrf.mxu0
      %1319 = vmatprep.mubr.bf16.mxu0 0
      %1320 = vmatmul.mubr.bf16.gmra.mxu0 %v817
      %v1321 = vpop.f32.mrf.mxu0
      %v1322 = vadd.f32 0.0, %v1321
      %v1323 = vpop.f32.mrf.mxu0
      %v1324 = vpop.f32.mrf.mxu0
      %v1325 = vadd.f32 0.0, %v1324
      %v1326 = vpop.f32.mrf.mxu0
      %1327 = vmatprep.mubr.bf16.mxu0 0
      %1328 = vmatmul.mubr.bf16.gmra.mxu0 %v820
      %v1329 = vpop.f32.mrf.mxu0
      %v1330 = vadd.f32 0.0, %v1329
      %v1331 = vpop.f32.mrf.mxu0
      %v1332 = vpop.f32.mrf.mxu0
      %v1333 = vadd.f32 0.0, %v1332
      %v1334 = vpop.f32.mrf.mxu0
      %1335 = vmatprep.mubr.bf16.mxu0 0
      %1336 = vmatmul.mubr.bf16.gmra.mxu0 %v823
      %v1337 = vpop.f32.mrf.mxu0
      %v1338 = vadd.f32 0.0, %v1337
      %v1339 = vpop.f32.mrf.mxu0
      %v1340 = vpop.f32.mrf.mxu0
      %v1341 = vadd.f32 0.0, %v1340
      %v1342 = vpop.f32.mrf.mxu0
      %1343 = vmatprep.mubr.bf16.mxu0 0
      %1344 = vmatmul.mubr.bf16.gmra.mxu0 %v826
      %v1345 = vpop.f32.mrf.mxu0
      %v1346 = vadd.f32 0.0, %v1345
      %v1347 = vpop.f32.mrf.mxu0
      %v1348 = vpop.f32.mrf.mxu0
      %v1349 = vadd.f32 0.0, %v1348
      %v1350 = vpop.f32.mrf.mxu0
      %1351 = vmatprep.mubr.bf16.mxu0 0
      %1352 = vmatmul.mubr.bf16.gmra.mxu0 %v829
      %v1353 = vpop.f32.mrf.mxu0
      %v1354 = vadd.f32 0.0, %v1353
      %v1355 = vpop.f32.mrf.mxu0
      %v1356 = vpop.f32.mrf.mxu0
      %v1357 = vadd.f32 0.0, %v1356
      %v1358 = vpop.f32.mrf.mxu0
      %1359 = vmatprep.mubr.bf16.mxu0 0
      %1360 = vmatmul.mubr.bf16.gmra.mxu0 %v832
      %v1361 = vpop.f32.mrf.mxu0
      %v1362 = vadd.f32 0.0, %v1361
      %v1363 = vpop.f32.mrf.mxu0
      %v1364 = vpop.f32.mrf.mxu0
      %v1365 = vadd.f32 0.0, %v1364
      %v1366 = vpop.f32.mrf.mxu0
      %1367 = vmatprep.mubr.bf16.mxu0 0
      %1368 = vmatmul.mubr.bf16.gmra.mxu0 %v835
      %v1369 = vpop.f32.mrf.mxu0
      %v1370 = vadd.f32 0.0, %v1369
      %v1371 = vpop.f32.mrf.mxu0
      %v1372 = vpop.f32.mrf.mxu0
      %v1373 = vadd.f32 0.0, %v1372
      %v1374 = vpop.f32.mrf.mxu0
      %1375 = vmatprep.mubr.bf16.mxu0 0
      %1376 = vmatmul.mubr.bf16.gmra.mxu0 %v838
      %v1377 = vpop.f32.mrf.mxu0
      %v1378 = vadd.f32 0.0, %v1377
      %v1379 = vpop.f32.mrf.mxu0
      %v1380 = vpop.f32.mrf.mxu0
      %v1381 = vadd.f32 0.0, %v1380
      %v1382 = vpop.f32.mrf.mxu0
      %1383 = vmatprep.mubr.bf16.mxu0 0
      %1384 = vmatmul.mubr.bf16.gmra.mxu0 %v841
      %v1385 = vpop.f32.mrf.mxu0
      %v1386 = vadd.f32 0.0, %v1385
      %v1387 = vpop.f32.mrf.mxu0
      %v1388 = vpop.f32.mrf.mxu0
      %v1389 = vadd.f32 0.0, %v1388
      %v1390 = vpop.f32.mrf.mxu0
      %1391 = vdwg.mxu0
      %v1396 = vunpack.c.l.b16 %v182
      %v1397 = vunpack.c.l.b16 %v183
      %v1398 = vunpack.c.l.b16 %v184
      %v1399 = vunpack.c.l.b16 %v185
      %v1400 = vpack.c.b16 %v1397, %v1396
      %v1401 = vpack.c.b16 %v1399, %v1398
      %v1405 = vunpack.c.l.b16 %v310
      %v1406 = vunpack.c.l.b16 %v311
      %v1407 = vunpack.c.l.b16 %v312
      %v1408 = vpack.c.b16 %v1406, %v1405
      %v1409 = vpack.c.b16 %v1407, %v1407
      %v1412 = vsel %vm650, %v1400, 0
      %v1415 = vsel %vm650, %v1401, 0
      %v1418 = vsel %vm843, %v1409, 0
      %1420 = vmatprep.subr.bf16.mxu0 0
      %1421 = vmatpush1.bf16.msra.mxu0 0
      %1422 = vmatprep.subr.bf16.mxu0 0
      %1423 = vmatpush1.bf16.msra.mxu0 0
      %1424 = vmatprep.subr.bf16.mxu0 0
      %1425 = vmatpush1.bf16.msra.mxu0 0
      %1426 = vmatprep.subr.bf16.mxu0 0
      %1427 = vmatpush1.bf16.msra.mxu0 0
      %1428 = vmatprep.subr.bf16.mxu0 0
      %1429 = vmatpush1.bf16.msra.mxu0 0
      %1430 = vmatprep.subr.bf16.mxu0 0
      %1431 = vmatpush1.bf16.msra.mxu0 0
      %1432 = vmatprep.subr.bf16.mxu0 0
      %1433 = vmatpush1.bf16.msra.mxu0 %v1418
      %1434 = vmatprep.subr.bf16.mxu0 0
      %1435 = vmatpush1.bf16.msra.mxu0 %v1408
      %1436 = vmatprep.subr.bf16.mxu0 0
      %1437 = vmatpush2.bf16.msra.mxu0 0
      %1438 = vmatprep.subr.bf16.mxu0 0
      %1439 = vmatpush2.bf16.msra.mxu0 0
      %1440 = vmatprep.subr.bf16.mxu0 0
      %1441 = vmatpush2.bf16.msra.mxu0 0
      %1442 = vmatprep.subr.bf16.mxu0 0
      %1443 = vmatpush2.bf16.msra.mxu0 0
      %1444 = vmatprep.subr.bf16.mxu0 0
      %1445 = vmatpush2.bf16.msra.mxu0 0
      %1446 = vmatprep.subr.bf16.mxu0 0
      %1447 = vmatpush2.bf16.msra.mxu0 0
      %1448 = vmatprep.subr.bf16.mxu0 0
      %1449 = vmatpush2.bf16.msra.mxu0 0
      %1450 = vmatprep.subr.bf16.mxu0 0
      %1451 = vmatpush2.bf16.msra.mxu0 0
      %1452 = vmatprep.mubr.bf16.mxu0 0
      %1453 = vmatmul.mubr.bf16.gmra.mxu0 %v1412
      %v1454 = vpop.f32.mrf.mxu0
      %v1455 = vadd.f32 %v882, %v1454
      %v1456 = vpop.f32.mrf.mxu0
      %v1457 = vpop.f32.mrf.mxu0
      %v1458 = vadd.f32 %v885, %v1457
      %v1459 = vpop.f32.mrf.mxu0
      %1460 = vmatprep.mubr.bf16.mxu0 0
      %1461 = vmatmul.mubr.bf16.gmra.mxu0 %v1415
      %v1462 = vpop.f32.mrf.mxu0
      %v1463 = vadd.f32 %v890, %v1462
      %v1464 = vpop.f32.mrf.mxu0
      %v1465 = vpop.f32.mrf.mxu0
      %v1466 = vadd.f32 %v893, %v1465
      %v1467 = vpop.f32.mrf.mxu0
      %1468 = vmatprep.mubr.bf16.mxu0 0
      %1469 = vmatmul.mubr.bf16.gmra.mxu0 %v652
      %v1470 = vpop.f32.mrf.mxu0
      %v1471 = vadd.f32 %v898, %v1470
      %v1472 = vpop.f32.mrf.mxu0
      %v1473 = vpop.f32.mrf.mxu0
      %v1474 = vadd.f32 %v901, %v1473
      %v1475 = vpop.f32.mrf.mxu0
      %1476 = vmatprep.mubr.bf16.mxu0 0
      %1477 = vmatmul.mubr.bf16.gmra.mxu0 %v655
      %v1478 = vpop.f32.mrf.mxu0
      %v1479 = vadd.f32 %v906, %v1478
      %v1480 = vpop.f32.mrf.mxu0
      %v1481 = vpop.f32.mrf.mxu0
      %v1482 = vadd.f32 %v909, %v1481
      %v1483 = vpop.f32.mrf.mxu0
      %1484 = vmatprep.mubr.bf16.mxu0 0
      %1485 = vmatmul.mubr.bf16.gmra.mxu0 %v658
      %v1486 = vpop.f32.mrf.mxu0
      %v1487 = vadd.f32 %v914, %v1486
      %v1488 = vpop.f32.mrf.mxu0
      %v1489 = vpop.f32.mrf.mxu0
      %v1490 = vadd.f32 %v917, %v1489
      %v1491 = vpop.f32.mrf.mxu0
      %1492 = vmatprep.mubr.bf16.mxu0 0
      %1493 = vmatmul.mubr.bf16.gmra.mxu0 %v661
      %v1494 = vpop.f32.mrf.mxu0
      %v1495 = vadd.f32 %v922, %v1494
      %v1496 = vpop.f32.mrf.mxu0
      %v1497 = vpop.f32.mrf.mxu0
      %v1498 = vadd.f32 %v925, %v1497
      %v1499 = vpop.f32.mrf.mxu0
      %1500 = vmatprep.mubr.bf16.mxu0 0
      %1501 = vmatmul.mubr.bf16.gmra.mxu0 %v664
      %v1502 = vpop.f32.mrf.mxu0
      %v1503 = vadd.f32 %v930, %v1502
      %v1504 = vpop.f32.mrf.mxu0
      %v1505 = vpop.f32.mrf.mxu0
      %v1506 = vadd.f32 %v933, %v1505
      %v1507 = vpop.f32.mrf.mxu0
      %1508 = vmatprep.mubr.bf16.mxu0 0
      %1509 = vmatmul.mubr.bf16.gmra.mxu0 %v667
      %v1510 = vpop.f32.mrf.mxu0
      %v1511 = vadd.f32 %v938, %v1510
      %v1512 = vpop.f32.mrf.mxu0
      %v1513 = vpop.f32.mrf.mxu0
      %v1514 = vadd.f32 %v941, %v1513
      %v1515 = vpop.f32.mrf.mxu0
      %1516 = vmatprep.mubr.bf16.mxu0 0
      %1517 = vmatmul.mubr.bf16.gmra.mxu0 %v670
      %v1518 = vpop.f32.mrf.mxu0
      %v1519 = vadd.f32 %v946, %v1518
      %v1520 = vpop.f32.mrf.mxu0
      %v1521 = vpop.f32.mrf.mxu0
      %v1522 = vadd.f32 %v949, %v1521
      %v1523 = vpop.f32.mrf.mxu0
      %1524 = vmatprep.mubr.bf16.mxu0 0
      %1525 = vmatmul.mubr.bf16.gmra.mxu0 %v673
      %v1526 = vpop.f32.mrf.mxu0
      %v1527 = vadd.f32 %v954, %v1526
      %v1528 = vpop.f32.mrf.mxu0
      %v1529 = vpop.f32.mrf.mxu0
      %v1530 = vadd.f32 %v957, %v1529
      %v1531 = vpop.f32.mrf.mxu0
      %1532 = vmatprep.mubr.bf16.mxu0 0
      %1533 = vmatmul.mubr.bf16.gmra.mxu0 %v676
      %v1534 = vpop.f32.mrf.mxu0
      %v1535 = vadd.f32 %v962, %v1534
      %v1536 = vpop.f32.mrf.mxu0
      %v1537 = vpop.f32.mrf.mxu0
      %v1538 = vadd.f32 %v965, %v1537
      %v1539 = vpop.f32.mrf.mxu0
      %1540 = vmatprep.mubr.bf16.mxu0 0
      %1541 = vmatmul.mubr.bf16.gmra.mxu0 %v679
      %v1542 = vpop.f32.mrf.mxu0
      %v1543 = vadd.f32 %v970, %v1542
      %v1544 = vpop.f32.mrf.mxu0
      %v1545 = vpop.f32.mrf.mxu0
      %v1546 = vadd.f32 %v973, %v1545
      %v1547 = vpop.f32.mrf.mxu0
      %1548 = vmatprep.mubr.bf16.mxu0 0
      %1549 = vmatmul.mubr.bf16.gmra.mxu0 %v682
      %v1550 = vpop.f32.mrf.mxu0
      %v1551 = vadd.f32 %v978, %v1550
      %v1552 = vpop.f32.mrf.mxu0
      %v1553 = vpop.f32.mrf.mxu0
      %v1554 = vadd.f32 %v981, %v1553
      %v1555 = vpop.f32.mrf.mxu0
      %1556 = vmatprep.mubr.bf16.mxu0 0
      %1557 = vmatmul.mubr.bf16.gmra.mxu0 %v685
      %v1558 = vpop.f32.mrf.mxu0
      %v1559 = vadd.f32 %v986, %v1558
      %v1560 = vpop.f32.mrf.mxu0
      %v1561 = vpop.f32.mrf.mxu0
      %v1562 = vadd.f32 %v989, %v1561
      %v1563 = vpop.f32.mrf.mxu0
      %1564 = vmatprep.mubr.bf16.mxu0 0
      %1565 = vmatmul.mubr.bf16.gmra.mxu0 %v688
      %v1566 = vpop.f32.mrf.mxu0
      %v1567 = vadd.f32 %v994, %v1566
      %v1568 = vpop.f32.mrf.mxu0
      %v1569 = vpop.f32.mrf.mxu0
      %v1570 = vadd.f32 %v997, %v1569
      %v1571 = vpop.f32.mrf.mxu0
      %1572 = vmatprep.mubr.bf16.mxu0 0
      %1573 = vmatmul.mubr.bf16.gmra.mxu0 %v691
      %v1574 = vpop.f32.mrf.mxu0
      %v1575 = vadd.f32 %v1002, %v1574
      %v1576 = vpop.f32.mrf.mxu0
      %v1577 = vpop.f32.mrf.mxu0
      %v1578 = vadd.f32 %v1005, %v1577
      %v1579 = vpop.f32.mrf.mxu0
      %1580 = vmatprep.mubr.bf16.mxu0 0
      %1581 = vmatmul.mubr.bf16.gmra.mxu0 %v694
      %v1582 = vpop.f32.mrf.mxu0
      %v1583 = vadd.f32 %v1010, %v1582
      %v1584 = vpop.f32.mrf.mxu0
      %v1585 = vpop.f32.mrf.mxu0
      %v1586 = vadd.f32 %v1013, %v1585
      %v1587 = vpop.f32.mrf.mxu0
      %1588 = vmatprep.mubr.bf16.mxu0 0
      %1589 = vmatmul.mubr.bf16.gmra.mxu0 %v697
      %v1590 = vpop.f32.mrf.mxu0
      %v1591 = vadd.f32 %v1018, %v1590
      %v1592 = vpop.f32.mrf.mxu0
      %v1593 = vpop.f32.mrf.mxu0
      %v1594 = vadd.f32 %v1021, %v1593
      %v1595 = vpop.f32.mrf.mxu0
      %1596 = vmatprep.mubr.bf16.mxu0 0
      %1597 = vmatmul.mubr.bf16.gmra.mxu0 %v700
      %v1598 = vpop.f32.mrf.mxu0
      %v1599 = vadd.f32 %v1026, %v1598
      %v1600 = vpop.f32.mrf.mxu0
      %v1601 = vpop.f32.mrf.mxu0
      %v1602 = vadd.f32 %v1029, %v1601
      %v1603 = vpop.f32.mrf.mxu0
      %1604 = vmatprep.mubr.bf16.mxu0 0
      %1605 = vmatmul.mubr.bf16.gmra.mxu0 %v703
      %v1606 = vpop.f32.mrf.mxu0
      %v1607 = vadd.f32 %v1034, %v1606
      %v1608 = vpop.f32.mrf.mxu0
      %v1609 = vpop.f32.mrf.mxu0
      %v1610 = vadd.f32 %v1037, %v1609
      %v1611 = vpop.f32.mrf.mxu0
      %1612 = vmatprep.mubr.bf16.mxu0 0
      %1613 = vmatmul.mubr.bf16.gmra.mxu0 %v706
      %v1614 = vpop.f32.mrf.mxu0
      %v1615 = vadd.f32 %v1042, %v1614
      %v1616 = vpop.f32.mrf.mxu0
      %v1617 = vpop.f32.mrf.mxu0
      %v1618 = vadd.f32 %v1045, %v1617
      %v1619 = vpop.f32.mrf.mxu0
      %1620 = vmatprep.mubr.bf16.mxu0 0
      %1621 = vmatmul.mubr.bf16.gmra.mxu0 %v709
      %v1622 = vpop.f32.mrf.mxu0
      %v1623 = vadd.f32 %v1050, %v1622
      %v1624 = vpop.f32.mrf.mxu0
      %v1625 = vpop.f32.mrf.mxu0
      %v1626 = vadd.f32 %v1053, %v1625
      %v1627 = vpop.f32.mrf.mxu0
      %1628 = vmatprep.mubr.bf16.mxu0 0
      %1629 = vmatmul.mubr.bf16.gmra.mxu0 %v712
      %v1630 = vpop.f32.mrf.mxu0
      %v1631 = vadd.f32 %v1058, %v1630
      %v1632 = vpop.f32.mrf.mxu0
      %v1633 = vpop.f32.mrf.mxu0
      %v1634 = vadd.f32 %v1061, %v1633
      %v1635 = vpop.f32.mrf.mxu0
      %1636 = vmatprep.mubr.bf16.mxu0 0
      %1637 = vmatmul.mubr.bf16.gmra.mxu0 %v715
      %v1638 = vpop.f32.mrf.mxu0
      %v1639 = vadd.f32 %v1066, %v1638
      %v1640 = vpop.f32.mrf.mxu0
      %v1641 = vpop.f32.mrf.mxu0
      %v1642 = vadd.f32 %v1069, %v1641
      %v1643 = vpop.f32.mrf.mxu0
      %1644 = vmatprep.mubr.bf16.mxu0 0
      %1645 = vmatmul.mubr.bf16.gmra.mxu0 %v718
      %v1646 = vpop.f32.mrf.mxu0
      %v1647 = vadd.f32 %v1074, %v1646
      %v1648 = vpop.f32.mrf.mxu0
      %v1649 = vpop.f32.mrf.mxu0
      %v1650 = vadd.f32 %v1077, %v1649
      %v1651 = vpop.f32.mrf.mxu0
      %1652 = vmatprep.mubr.bf16.mxu0 0
      %1653 = vmatmul.mubr.bf16.gmra.mxu0 %v721
      %v1654 = vpop.f32.mrf.mxu0
      %v1655 = vadd.f32 %v1082, %v1654
      %v1656 = vpop.f32.mrf.mxu0
      %v1657 = vpop.f32.mrf.mxu0
      %v1658 = vadd.f32 %v1085, %v1657
      %v1659 = vpop.f32.mrf.mxu0
      %1660 = vmatprep.mubr.bf16.mxu0 0
      %1661 = vmatmul.mubr.bf16.gmra.mxu0 %v724
      %v1662 = vpop.f32.mrf.mxu0
      %v1663 = vadd.f32 %v1090, %v1662
      %v1664 = vpop.f32.mrf.mxu0
      %v1665 = vpop.f32.mrf.mxu0
      %v1666 = vadd.f32 %v1093, %v1665
      %v1667 = vpop.f32.mrf.mxu0
      %1668 = vmatprep.mubr.bf16.mxu0 0
      %1669 = vmatmul.mubr.bf16.gmra.mxu0 %v727
      %v1670 = vpop.f32.mrf.mxu0
      %v1671 = vadd.f32 %v1098, %v1670
      %v1672 = vpop.f32.mrf.mxu0
      %v1673 = vpop.f32.mrf.mxu0
      %v1674 = vadd.f32 %v1101, %v1673
      %v1675 = vpop.f32.mrf.mxu0
      %1676 = vmatprep.mubr.bf16.mxu0 0
      %1677 = vmatmul.mubr.bf16.gmra.mxu0 %v730
      %v1678 = vpop.f32.mrf.mxu0
      %v1679 = vadd.f32 %v1106, %v1678
      %v1680 = vpop.f32.mrf.mxu0
      %v1681 = vpop.f32.mrf.mxu0
      %v1682 = vadd.f32 %v1109, %v1681
      %v1683 = vpop.f32.mrf.mxu0
      %1684 = vmatprep.mubr.bf16.mxu0 0
      %1685 = vmatmul.mubr.bf16.gmra.mxu0 %v733
      %v1686 = vpop.f32.mrf.mxu0
      %v1687 = vadd.f32 %v1114, %v1686
      %v1688 = vpop.f32.mrf.mxu0
      %v1689 = vpop.f32.mrf.mxu0
      %v1690 = vadd.f32 %v1117, %v1689
      %v1691 = vpop.f32.mrf.mxu0
      %1692 = vmatprep.mubr.bf16.mxu0 0
      %1693 = vmatmul.mubr.bf16.gmra.mxu0 %v736
      %v1694 = vpop.f32.mrf.mxu0
      %v1695 = vadd.f32 %v1122, %v1694
      %v1696 = vpop.f32.mrf.mxu0
      %v1697 = vpop.f32.mrf.mxu0
      %v1698 = vadd.f32 %v1125, %v1697
      %v1699 = vpop.f32.mrf.mxu0
      %1700 = vmatprep.mubr.bf16.mxu0 0
      %1701 = vmatmul.mubr.bf16.gmra.mxu0 %v739
      %v1702 = vpop.f32.mrf.mxu0
      %v1703 = vadd.f32 %v1130, %v1702
      %v1704 = vpop.f32.mrf.mxu0
      %v1705 = vpop.f32.mrf.mxu0
      %v1706 = vadd.f32 %v1133, %v1705
      %v1707 = vpop.f32.mrf.mxu0
      %1708 = vmatprep.mubr.bf16.mxu0 0
      %1709 = vmatmul.mubr.bf16.gmra.mxu0 %v742
      %v1710 = vpop.f32.mrf.mxu0
      %v1711 = vadd.f32 %v1138, %v1710
      %v1712 = vpop.f32.mrf.mxu0
      %v1713 = vpop.f32.mrf.mxu0
      %v1714 = vadd.f32 %v1141, %v1713
      %v1715 = vpop.f32.mrf.mxu0
      %1716 = vmatprep.mubr.bf16.mxu0 0
      %1717 = vmatmul.mubr.bf16.gmra.mxu0 %v745
      %v1718 = vpop.f32.mrf.mxu0
      %v1719 = vadd.f32 %v1146, %v1718
      %v1720 = vpop.f32.mrf.mxu0
      %v1721 = vpop.f32.mrf.mxu0
      %v1722 = vadd.f32 %v1149, %v1721
      %v1723 = vpop.f32.mrf.mxu0
      %1724 = vmatprep.mubr.bf16.mxu0 0
      %1725 = vmatmul.mubr.bf16.gmra.mxu0 %v748
      %v1726 = vpop.f32.mrf.mxu0
      %v1727 = vadd.f32 %v1154, %v1726
      %v1728 = vpop.f32.mrf.mxu0
      %v1729 = vpop.f32.mrf.mxu0
      %v1730 = vadd.f32 %v1157, %v1729
      %v1731 = vpop.f32.mrf.mxu0
      %1732 = vmatprep.mubr.bf16.mxu0 0
      %1733 = vmatmul.mubr.bf16.gmra.mxu0 %v751
      %v1734 = vpop.f32.mrf.mxu0
      %v1735 = vadd.f32 %v1162, %v1734
      %v1736 = vpop.f32.mrf.mxu0
      %v1737 = vpop.f32.mrf.mxu0
      %v1738 = vadd.f32 %v1165, %v1737
      %v1739 = vpop.f32.mrf.mxu0
      %1740 = vmatprep.mubr.bf16.mxu0 0
      %1741 = vmatmul.mubr.bf16.gmra.mxu0 %v754
      %v1742 = vpop.f32.mrf.mxu0
      %v1743 = vadd.f32 %v1170, %v1742
      %v1744 = vpop.f32.mrf.mxu0
      %v1745 = vpop.f32.mrf.mxu0
      %v1746 = vadd.f32 %v1173, %v1745
      %v1747 = vpop.f32.mrf.mxu0
      %1748 = vmatprep.mubr.bf16.mxu0 0
      %1749 = vmatmul.mubr.bf16.gmra.mxu0 %v757
      %v1750 = vpop.f32.mrf.mxu0
      %v1751 = vadd.f32 %v1178, %v1750
      %v1752 = vpop.f32.mrf.mxu0
      %v1753 = vpop.f32.mrf.mxu0
      %v1754 = vadd.f32 %v1181, %v1753
      %v1755 = vpop.f32.mrf.mxu0
      %1756 = vmatprep.mubr.bf16.mxu0 0
      %1757 = vmatmul.mubr.bf16.gmra.mxu0 %v760
      %v1758 = vpop.f32.mrf.mxu0
      %v1759 = vadd.f32 %v1186, %v1758
      %v1760 = vpop.f32.mrf.mxu0
      %v1761 = vpop.f32.mrf.mxu0
      %v1762 = vadd.f32 %v1189, %v1761
      %v1763 = vpop.f32.mrf.mxu0
      %1764 = vmatprep.mubr.bf16.mxu0 0
      %1765 = vmatmul.mubr.bf16.gmra.mxu0 %v763
      %v1766 = vpop.f32.mrf.mxu0
      %v1767 = vadd.f32 %v1194, %v1766
      %v1768 = vpop.f32.mrf.mxu0
      %v1769 = vpop.f32.mrf.mxu0
      %v1770 = vadd.f32 %v1197, %v1769
      %v1771 = vpop.f32.mrf.mxu0
      %1772 = vmatprep.mubr.bf16.mxu0 0
      %1773 = vmatmul.mubr.bf16.gmra.mxu0 %v766
      %v1774 = vpop.f32.mrf.mxu0
      %v1775 = vadd.f32 %v1202, %v1774
      %v1776 = vpop.f32.mrf.mxu0
      %v1777 = vpop.f32.mrf.mxu0
      %v1778 = vadd.f32 %v1205, %v1777
      %v1779 = vpop.f32.mrf.mxu0
      %1780 = vmatprep.mubr.bf16.mxu0 0
      %1781 = vmatmul.mubr.bf16.gmra.mxu0 %v769
      %v1782 = vpop.f32.mrf.mxu0
      %v1783 = vadd.f32 %v1210, %v1782
      %v1784 = vpop.f32.mrf.mxu0
      %v1785 = vpop.f32.mrf.mxu0
      %v1786 = vadd.f32 %v1213, %v1785
      %v1787 = vpop.f32.mrf.mxu0
      %1788 = vmatprep.mubr.bf16.mxu0 0
      %1789 = vmatmul.mubr.bf16.gmra.mxu0 %v772
      %v1790 = vpop.f32.mrf.mxu0
      %v1791 = vadd.f32 %v1218, %v1790
      %v1792 = vpop.f32.mrf.mxu0
      %v1793 = vpop.f32.mrf.mxu0
      %v1794 = vadd.f32 %v1221, %v1793
      %v1795 = vpop.f32.mrf.mxu0
      %1796 = vmatprep.mubr.bf16.mxu0 0
      %1797 = vmatmul.mubr.bf16.gmra.mxu0 %v775
      %v1798 = vpop.f32.mrf.mxu0
      %v1799 = vadd.f32 %v1226, %v1798
      %v1800 = vpop.f32.mrf.mxu0
      %v1801 = vpop.f32.mrf.mxu0
      %v1802 = vadd.f32 %v1229, %v1801
      %v1803 = vpop.f32.mrf.mxu0
      %1804 = vmatprep.mubr.bf16.mxu0 0
      %1805 = vmatmul.mubr.bf16.gmra.mxu0 %v778
      %v1806 = vpop.f32.mrf.mxu0
      %v1807 = vadd.f32 %v1234, %v1806
      %v1808 = vpop.f32.mrf.mxu0
      %v1809 = vpop.f32.mrf.mxu0
      %v1810 = vadd.f32 %v1237, %v1809
      %v1811 = vpop.f32.mrf.mxu0
      %1812 = vmatprep.mubr.bf16.mxu0 0
      %1813 = vmatmul.mubr.bf16.gmra.mxu0 %v781
      %v1814 = vpop.f32.mrf.mxu0
      %v1815 = vadd.f32 %v1242, %v1814
      %v1816 = vpop.f32.mrf.mxu0
      %v1817 = vpop.f32.mrf.mxu0
      %v1818 = vadd.f32 %v1245, %v1817
      %v1819 = vpop.f32.mrf.mxu0
      %1820 = vmatprep.mubr.bf16.mxu0 0
      %1821 = vmatmul.mubr.bf16.gmra.mxu0 %v784
      %v1822 = vpop.f32.mrf.mxu0
      %v1823 = vadd.f32 %v1250, %v1822
      %v1824 = vpop.f32.mrf.mxu0
      %v1825 = vpop.f32.mrf.mxu0
      %v1826 = vadd.f32 %v1253, %v1825
      %v1827 = vpop.f32.mrf.mxu0
      %1828 = vmatprep.mubr.bf16.mxu0 0
      %1829 = vmatmul.mubr.bf16.gmra.mxu0 %v787
      %v1830 = vpop.f32.mrf.mxu0
      %v1831 = vadd.f32 %v1258, %v1830
      %v1832 = vpop.f32.mrf.mxu0
      %v1833 = vpop.f32.mrf.mxu0
      %v1834 = vadd.f32 %v1261, %v1833
      %v1835 = vpop.f32.mrf.mxu0
      %1836 = vmatprep.mubr.bf16.mxu0 0
      %1837 = vmatmul.mubr.bf16.gmra.mxu0 %v790
      %v1838 = vpop.f32.mrf.mxu0
      %v1839 = vadd.f32 %v1266, %v1838
      %v1840 = vpop.f32.mrf.mxu0
      %v1841 = vpop.f32.mrf.mxu0
      %v1842 = vadd.f32 %v1269, %v1841
      %v1843 = vpop.f32.mrf.mxu0
      %1844 = vmatprep.mubr.bf16.mxu0 0
      %1845 = vmatmul.mubr.bf16.gmra.mxu0 %v793
      %v1846 = vpop.f32.mrf.mxu0
      %v1847 = vadd.f32 %v1274, %v1846
      %v1848 = vpop.f32.mrf.mxu0
      %v1849 = vpop.f32.mrf.mxu0
      %v1850 = vadd.f32 %v1277, %v1849
      %v1851 = vpop.f32.mrf.mxu0
      %1852 = vmatprep.mubr.bf16.mxu0 0
      %1853 = vmatmul.mubr.bf16.gmra.mxu0 %v796
      %v1854 = vpop.f32.mrf.mxu0
      %v1855 = vadd.f32 %v1282, %v1854
      %v1856 = vpop.f32.mrf.mxu0
      %v1857 = vpop.f32.mrf.mxu0
      %v1858 = vadd.f32 %v1285, %v1857
      %v1859 = vpop.f32.mrf.mxu0
      %1860 = vmatprep.mubr.bf16.mxu0 0
      %1861 = vmatmul.mubr.bf16.gmra.mxu0 %v799
      %v1862 = vpop.f32.mrf.mxu0
      %v1863 = vadd.f32 %v1290, %v1862
      %v1864 = vpop.f32.mrf.mxu0
      %v1865 = vpop.f32.mrf.mxu0
      %v1866 = vadd.f32 %v1293, %v1865
      %v1867 = vpop.f32.mrf.mxu0
      %1868 = vmatprep.mubr.bf16.mxu0 0
      %1869 = vmatmul.mubr.bf16.gmra.mxu0 %v802
      %v1870 = vpop.f32.mrf.mxu0
      %v1871 = vadd.f32 %v1298, %v1870
      %v1872 = vpop.f32.mrf.mxu0
      %v1873 = vpop.f32.mrf.mxu0
      %v1874 = vadd.f32 %v1301, %v1873
      %v1875 = vpop.f32.mrf.mxu0
      %1876 = vmatprep.mubr.bf16.mxu0 0
      %1877 = vmatmul.mubr.bf16.gmra.mxu0 %v805
      %v1878 = vpop.f32.mrf.mxu0
      %v1879 = vadd.f32 %v1306, %v1878
      %v1880 = vpop.f32.mrf.mxu0
      %v1881 = vpop.f32.mrf.mxu0
      %v1882 = vadd.f32 %v1309, %v1881
      %v1883 = vpop.f32.mrf.mxu0
      %1884 = vmatprep.mubr.bf16.mxu0 0
      %1885 = vmatmul.mubr.bf16.gmra.mxu0 %v808
      %v1886 = vpop.f32.mrf.mxu0
      %v1887 = vadd.f32 %v1314, %v1886
      %v1888 = vpop.f32.mrf.mxu0
      %v1889 = vpop.f32.mrf.mxu0
      %v1890 = vadd.f32 %v1317, %v1889
      %v1891 = vpop.f32.mrf.mxu0
      %1892 = vmatprep.mubr.bf16.mxu0 0
      %1893 = vmatmul.mubr.bf16.gmra.mxu0 %v811
      %v1894 = vpop.f32.mrf.mxu0
      %v1895 = vadd.f32 %v1322, %v1894
      %v1896 = vpop.f32.mrf.mxu0
      %v1897 = vpop.f32.mrf.mxu0
      %v1898 = vadd.f32 %v1325, %v1897
      %v1899 = vpop.f32.mrf.mxu0
      %1900 = vmatprep.mubr.bf16.mxu0 0
      %1901 = vmatmul.mubr.bf16.gmra.mxu0 %v814
      %v1902 = vpop.f32.mrf.mxu0
      %v1903 = vadd.f32 %v1330, %v1902
      %v1904 = vpop.f32.mrf.mxu0
      %v1905 = vpop.f32.mrf.mxu0
      %v1906 = vadd.f32 %v1333, %v1905
      %v1907 = vpop.f32.mrf.mxu0
      %1908 = vmatprep.mubr.bf16.mxu0 0
      %1909 = vmatmul.mubr.bf16.gmra.mxu0 %v817
      %v1910 = vpop.f32.mrf.mxu0
      %v1911 = vadd.f32 %v1338, %v1910
      %v1912 = vpop.f32.mrf.mxu0
      %v1913 = vpop.f32.mrf.mxu0
      %v1914 = vadd.f32 %v1341, %v1913
      %v1915 = vpop.f32.mrf.mxu0
      %1916 = vmatprep.mubr.bf16.mxu0 0
      %1917 = vmatmul.mubr.bf16.gmra.mxu0 %v820
      %v1918 = vpop.f32.mrf.mxu0
      %v1919 = vadd.f32 %v1346, %v1918
      %v1920 = vpop.f32.mrf.mxu0
      %v1921 = vpop.f32.mrf.mxu0
      %v1922 = vadd.f32 %v1349, %v1921
      %v1923 = vpop.f32.mrf.mxu0
      %1924 = vmatprep.mubr.bf16.mxu0 0
      %1925 = vmatmul.mubr.bf16.gmra.mxu0 %v823
      %v1926 = vpop.f32.mrf.mxu0
      %v1927 = vadd.f32 %v1354, %v1926
      %v1928 = vpop.f32.mrf.mxu0
      %v1929 = vpop.f32.mrf.mxu0
      %v1930 = vadd.f32 %v1357, %v1929
      %v1931 = vpop.f32.mrf.mxu0
      %1932 = vmatprep.mubr.bf16.mxu0 0
      %1933 = vmatmul.mubr.bf16.gmra.mxu0 %v826
      %v1934 = vpop.f32.mrf.mxu0
      %v1935 = vadd.f32 %v1362, %v1934
      %v1936 = vpop.f32.mrf.mxu0
      %v1937 = vpop.f32.mrf.mxu0
      %v1938 = vadd.f32 %v1365, %v1937
      %v1939 = vpop.f32.mrf.mxu0
      %1940 = vmatprep.mubr.bf16.mxu0 0
      %1941 = vmatmul.mubr.bf16.gmra.mxu0 %v829
      %v1942 = vpop.f32.mrf.mxu0
      %v1943 = vadd.f32 %v1370, %v1942
      %v1944 = vpop.f32.mrf.mxu0
      %v1945 = vpop.f32.mrf.mxu0
      %v1946 = vadd.f32 %v1373, %v1945
      %v1947 = vpop.f32.mrf.mxu0
      %1948 = vmatprep.mubr.bf16.mxu0 0
      %1949 = vmatmul.mubr.bf16.gmra.mxu0 %v832
      %v1950 = vpop.f32.mrf.mxu0
      %v1951 = vadd.f32 %v1378, %v1950
      %v1952 = vpop.f32.mrf.mxu0
      %v1953 = vpop.f32.mrf.mxu0
      %v1954 = vadd.f32 %v1381, %v1953
      %v1955 = vpop.f32.mrf.mxu0
      %1956 = vmatprep.mubr.bf16.mxu0 0
      %1957 = vmatmul.mubr.bf16.gmra.mxu0 %v835
      %v1958 = vpop.f32.mrf.mxu0
      %v1959 = vadd.f32 %v1386, %v1958
      %v1960 = vpop.f32.mrf.mxu0
      %v1961 = vpop.f32.mrf.mxu0
      %v1962 = vadd.f32 %v1389, %v1961
      %v1963 = vpop.f32.mrf.mxu0
      %1964 = vdwg.mxu0
      %vm1965 = vcmp.ge.f32.partialorder %v1455, 0.0
      %vm1966 = vcmp.ge.f32.partialorder %v1458, 0.0
      %vm1967 = vcmp.ge.f32.partialorder %v1463, 0.0
      %vm1968 = vcmp.ge.f32.partialorder %v1466, 0.0
      %vm1969 = vcmp.ge.f32.partialorder %v1471, 0.0
      %vm1970 = vcmp.ge.f32.partialorder %v1474, 0.0
      %vm1971 = vcmp.ge.f32.partialorder %v1479, 0.0
      %vm1972 = vcmp.ge.f32.partialorder %v1482, 0.0
      %vm1973 = vcmp.ge.f32.partialorder %v1487, 0.0
      %vm1974 = vcmp.ge.f32.partialorder %v1490, 0.0
      %vm1975 = vcmp.ge.f32.partialorder %v1495, 0.0
      %vm1976 = vcmp.ge.f32.partialorder %v1498, 0.0
      %vm1977 = vcmp.ge.f32.partialorder %v1503, 0.0
      %vm1978 = vcmp.ge.f32.partialorder %v1506, 0.0
      %vm1979 = vcmp.ge.f32.partialorder %v1511, 0.0
      %vm1980 = vcmp.ge.f32.partialorder %v1514, 0.0
      %vm1981 = vcmp.ge.f32.partialorder %v1519, 0.0
      %vm1982 = vcmp.ge.f32.partialorder %v1522, 0.0
      %vm1983 = vcmp.ge.f32.partialorder %v1527, 0.0
      %vm1984 = vcmp.ge.f32.partialorder %v1530, 0.0
      %vm1985 = vcmp.ge.f32.partialorder %v1535, 0.0
      %vm1986 = vcmp.ge.f32.partialorder %v1538, 0.0
      %vm1987 = vcmp.ge.f32.partialorder %v1543, 0.0
      %vm1988 = vcmp.ge.f32.partialorder %v1546, 0.0
      %vm1989 = vcmp.ge.f32.partialorder %v1551, 0.0
      %vm1990 = vcmp.ge.f32.partialorder %v1554, 0.0
      %vm1991 = vcmp.ge.f32.partialorder %v1559, 0.0
      %vm1992 = vcmp.ge.f32.partialorder %v1562, 0.0
      %vm1993 = vcmp.ge.f32.partialorder %v1567, 0.0
      %vm1994 = vcmp.ge.f32.partialorder %v1570, 0.0
      %vm1995 = vcmp.ge.f32.partialorder %v1575, 0.0
      %vm1996 = vcmp.ge.f32.partialorder %v1578, 0.0
      %vm1997 = vcmp.ge.f32.partialorder %v1583, 0.0
      %vm1998 = vcmp.ge.f32.partialorder %v1586, 0.0
      %vm1999 = vcmp.ge.f32.partialorder %v1591, 0.0
      %vm2000 = vcmp.ge.f32.partialorder %v1594, 0.0
      %vm2001 = vcmp.ge.f32.partialorder %v1599, 0.0
      %vm2002 = vcmp.ge.f32.partialorder %v1602, 0.0
      %vm2003 = vcmp.ge.f32.partialorder %v1607, 0.0
      %vm2004 = vcmp.ge.f32.partialorder %v1610, 0.0
      %vm2005 = vcmp.ge.f32.partialorder %v1615, 0.0
      %vm2006 = vcmp.ge.f32.partialorder %v1618, 0.0
      %vm2007 = vcmp.ge.f32.partialorder %v1623, 0.0
      %vm2008 = vcmp.ge.f32.partialorder %v1626, 0.0
      %vm2009 = vcmp.ge.f32.partialorder %v1631, 0.0
      %vm2010 = vcmp.ge.f32.partialorder %v1634, 0.0
      %vm2011 = vcmp.ge.f32.partialorder %v1639, 0.0
      %vm2012 = vcmp.ge.f32.partialorder %v1642, 0.0
      %vm2013 = vcmp.ge.f32.partialorder %v1647, 0.0
      %vm2014 = vcmp.ge.f32.partialorder %v1650, 0.0
      %vm2015 = vcmp.ge.f32.partialorder %v1655, 0.0
      %vm2016 = vcmp.ge.f32.partialorder %v1658, 0.0
      %vm2017 = vcmp.ge.f32.partialorder %v1663, 0.0
      %vm2018 = vcmp.ge.f32.partialorder %v1666, 0.0
      %vm2019 = vcmp.ge.f32.partialorder %v1671, 0.0
      %vm2020 = vcmp.ge.f32.partialorder %v1674, 0.0
      %vm2021 = vcmp.ge.f32.partialorder %v1679, 0.0
      %vm2022 = vcmp.ge.f32.partialorder %v1682, 0.0
      %vm2023 = vcmp.ge.f32.partialorder %v1687, 0.0
      %vm2024 = vcmp.ge.f32.partialorder %v1690, 0.0
      %vm2025 = vcmp.ge.f32.partialorder %v1695, 0.0
      %vm2026 = vcmp.ge.f32.partialorder %v1698, 0.0
      %vm2027 = vcmp.ge.f32.partialorder %v1703, 0.0
      %vm2028 = vcmp.ge.f32.partialorder %v1706, 0.0
      %vm2029 = vcmp.ge.f32.partialorder %v1711, 0.0
      %vm2030 = vcmp.ge.f32.partialorder %v1714, 0.0
      %vm2031 = vcmp.ge.f32.partialorder %v1719, 0.0
      %vm2032 = vcmp.ge.f32.partialorder %v1722, 0.0
      %vm2033 = vcmp.ge.f32.partialorder %v1727, 0.0
      %vm2034 = vcmp.ge.f32.partialorder %v1730, 0.0
      %vm2035 = vcmp.ge.f32.partialorder %v1735, 0.0
      %vm2036 = vcmp.ge.f32.partialorder %v1738, 0.0
      %vm2037 = vcmp.ge.f32.partialorder %v1743, 0.0
      %vm2038 = vcmp.ge.f32.partialorder %v1746, 0.0
      %vm2039 = vcmp.ge.f32.partialorder %v1751, 0.0
      %vm2040 = vcmp.ge.f32.partialorder %v1754, 0.0
      %vm2041 = vcmp.ge.f32.partialorder %v1759, 0.0
      %vm2042 = vcmp.ge.f32.partialorder %v1762, 0.0
      %vm2043 = vcmp.ge.f32.partialorder %v1767, 0.0
      %vm2044 = vcmp.ge.f32.partialorder %v1770, 0.0
      %vm2045 = vcmp.ge.f32.partialorder %v1775, 0.0
      %vm2046 = vcmp.ge.f32.partialorder %v1778, 0.0
      %vm2047 = vcmp.ge.f32.partialorder %v1783, 0.0
      %vm2048 = vcmp.ge.f32.partialorder %v1786, 0.0
      %vm2049 = vcmp.ge.f32.partialorder %v1791, 0.0
      %vm2050 = vcmp.ge.f32.partialorder %v1794, 0.0
      %vm2051 = vcmp.ge.f32.partialorder %v1799, 0.0
      %vm2052 = vcmp.ge.f32.partialorder %v1802, 0.0
      %vm2053 = vcmp.ge.f32.partialorder %v1807, 0.0
      %vm2054 = vcmp.ge.f32.partialorder %v1810, 0.0
      %vm2055 = vcmp.ge.f32.partialorder %v1815, 0.0
      %vm2056 = vcmp.ge.f32.partialorder %v1818, 0.0
      %vm2057 = vcmp.ge.f32.partialorder %v1823, 0.0
      %vm2058 = vcmp.ge.f32.partialorder %v1826, 0.0
      %vm2059 = vcmp.ge.f32.partialorder %v1831, 0.0
      %vm2060 = vcmp.ge.f32.partialorder %v1834, 0.0
      %vm2061 = vcmp.ge.f32.partialorder %v1839, 0.0
      %vm2062 = vcmp.ge.f32.partialorder %v1842, 0.0
      %vm2063 = vcmp.ge.f32.partialorder %v1847, 0.0
      %vm2064 = vcmp.ge.f32.partialorder %v1850, 0.0
      %vm2065 = vcmp.ge.f32.partialorder %v1855, 0.0
      %vm2066 = vcmp.ge.f32.partialorder %v1858, 0.0
      %vm2067 = vcmp.ge.f32.partialorder %v1863, 0.0
      %vm2068 = vcmp.ge.f32.partialorder %v1866, 0.0
      %vm2069 = vcmp.ge.f32.partialorder %v1871, 0.0
      %vm2070 = vcmp.ge.f32.partialorder %v1874, 0.0
      %vm2071 = vcmp.ge.f32.partialorder %v1879, 0.0
      %vm2072 = vcmp.ge.f32.partialorder %v1882, 0.0
      %vm2073 = vcmp.ge.f32.partialorder %v1887, 0.0
      %vm2074 = vcmp.ge.f32.partialorder %v1890, 0.0
      %vm2075 = vcmp.ge.f32.partialorder %v1895, 0.0
      %vm2076 = vcmp.ge.f32.partialorder %v1898, 0.0
      %vm2077 = vcmp.ge.f32.partialorder %v1903, 0.0
      %vm2078 = vcmp.ge.f32.partialorder %v1906, 0.0
      %vm2079 = vcmp.ge.f32.partialorder %v1911, 0.0
      %vm2080 = vcmp.ge.f32.partialorder %v1914, 0.0
      %vm2081 = vcmp.ge.f32.partialorder %v1919, 0.0
      %vm2082 = vcmp.ge.f32.partialorder %v1922, 0.0
      %vm2083 = vcmp.ge.f32.partialorder %v1927, 0.0
      %vm2084 = vcmp.ge.f32.partialorder %v1930, 0.0
      %vm2085 = vcmp.ge.f32.partialorder %v1935, 0.0
      %vm2086 = vcmp.ge.f32.partialorder %v1938, 0.0
      %vm2087 = vcmp.ge.f32.partialorder %v1943, 0.0
      %vm2088 = vcmp.ge.f32.partialorder %v1946, 0.0
      %vm2089 = vcmp.ge.f32.partialorder %v1951, 0.0
      %vm2090 = vcmp.ge.f32.partialorder %v1954, 0.0
      %vm2091 = vcmp.ge.f32.partialorder %v1959, 0.0
      %vm2092 = vcmp.ge.f32.partialorder %v1962, 0.0
      %v2093 = vmul.f32 %v1455, 0.2
      %v2094 = vmul.f32 %v1458, 0.2
      %v2095 = vmul.f32 %v1463, 0.2
      %v2096 = vmul.f32 %v1466, 0.2
      %v2097 = vmul.f32 %v1471, 0.2
      %v2098 = vmul.f32 %v1474, 0.2
      %v2099 = vmul.f32 %v1479, 0.2
      %v2100 = vmul.f32 %v1482, 0.2
      %v2101 = vmul.f32 %v1487, 0.2
      %v2102 = vmul.f32 %v1490, 0.2
      %v2103 = vmul.f32 %v1495, 0.2
      %v2104 = vmul.f32 %v1498, 0.2
      %v2105 = vmul.f32 %v1503, 0.2
      %v2106 = vmul.f32 %v1506, 0.2
      %v2107 = vmul.f32 %v1511, 0.2
      %v2108 = vmul.f32 %v1514, 0.2
      %v2109 = vmul.f32 %v1519, 0.2
      %v2110 = vmul.f32 %v1522, 0.2
      %v2111 = vmul.f32 %v1527, 0.2
      %v2112 = vmul.f32 %v1530, 0.2
      %v2113 = vmul.f32 %v1535, 0.2
      %v2114 = vmul.f32 %v1538, 0.2
      %v2115 = vmul.f32 %v1543, 0.2
      %v2116 = vmul.f32 %v1546, 0.2
      %v2117 = vmul.f32 %v1551, 0.2
      %v2118 = vmul.f32 %v1554, 0.2
      %v2119 = vmul.f32 %v1559, 0.2
      %v2120 = vmul.f32 %v1562, 0.2
      %v2121 = vmul.f32 %v1567, 0.2
      %v2122 = vmul.f32 %v1570, 0.2
      %v2123 = vmul.f32 %v1575, 0.2
      %v2124 = vmul.f32 %v1578, 0.2
      %v2125 = vmul.f32 %v1583, 0.2
      %v2126 = vmul.f32 %v1586, 0.2
      %v2127 = vmul.f32 %v1591, 0.2
      %v2128 = vmul.f32 %v1594, 0.2
      %v2129 = vmul.f32 %v1599, 0.2
      %v2130 = vmul.f32 %v1602, 0.2
      %v2131 = vmul.f32 %v1607, 0.2
      %v2132 = vmul.f32 %v1610, 0.2
      %v2133 = vmul.f32 %v1615, 0.2
      %v2134 = vmul.f32 %v1618, 0.2
      %v2135 = vmul.f32 %v1623, 0.2
      %v2136 = vmul.f32 %v1626, 0.2
      %v2137 = vmul.f32 %v1631, 0.2
      %v2138 = vmul.f32 %v1634, 0.2
      %v2139 = vmul.f32 %v1639, 0.2
      %v2140 = vmul.f32 %v1642, 0.2
      %v2141 = vmul.f32 %v1647, 0.2
      %v2142 = vmul.f32 %v1650, 0.2
      %v2143 = vmul.f32 %v1655, 0.2
      %v2144 = vmul.f32 %v1658, 0.2
      %v2145 = vmul.f32 %v1663, 0.2
      %v2146 = vmul.f32 %v1666, 0.2
      %v2147 = vmul.f32 %v1671, 0.2
      %v2148 = vmul.f32 %v1674, 0.2
      %v2149 = vmul.f32 %v1679, 0.2
      %v2150 = vmul.f32 %v1682, 0.2
      %v2151 = vmul.f32 %v1687, 0.2
      %v2152 = vmul.f32 %v1690, 0.2
      %v2153 = vmul.f32 %v1695, 0.2
      %v2154 = vmul.f32 %v1698, 0.2
      %v2155 = vmul.f32 %v1703, 0.2
      %v2156 = vmul.f32 %v1706, 0.2
      %v2157 = vmul.f32 %v1711, 0.2
      %v2158 = vmul.f32 %v1714, 0.2
      %v2159 = vmul.f32 %v1719, 0.2
      %v2160 = vmul.f32 %v1722, 0.2
      %v2161 = vmul.f32 %v1727, 0.2
      %v2162 = vmul.f32 %v1730, 0.2
      %v2163 = vmul.f32 %v1735, 0.2
      %v2164 = vmul.f32 %v1738, 0.2
      %v2165 = vmul.f32 %v1743, 0.2
      %v2166 = vmul.f32 %v1746, 0.2
      %v2167 = vmul.f32 %v1751, 0.2
      %v2168 = vmul.f32 %v1754, 0.2
      %v2169 = vmul.f32 %v1759, 0.2
      %v2170 = vmul.f32 %v1762, 0.2
      %v2171 = vmul.f32 %v1767, 0.2
      %v2172 = vmul.f32 %v1770, 0.2
      %v2173 = vmul.f32 %v1775, 0.2
      %v2174 = vmul.f32 %v1778, 0.2
      %v2175 = vmul.f32 %v1783, 0.2
      %v2176 = vmul.f32 %v1786, 0.2
      %v2177 = vmul.f32 %v1791, 0.2
      %v2178 = vmul.f32 %v1794, 0.2
      %v2179 = vmul.f32 %v1799, 0.2
      %v2180 = vmul.f32 %v1802, 0.2
      %v2181 = vmul.f32 %v1807, 0.2
      %v2182 = vmul.f32 %v1810, 0.2
      %v2183 = vmul.f32 %v1815, 0.2
      %v2184 = vmul.f32 %v1818, 0.2
      %v2185 = vmul.f32 %v1823, 0.2
      %v2186 = vmul.f32 %v1826, 0.2
      %v2187 = vmul.f32 %v1831, 0.2
      %v2188 = vmul.f32 %v1834, 0.2
      %v2189 = vmul.f32 %v1839, 0.2
      %v2190 = vmul.f32 %v1842, 0.2
      %v2191 = vmul.f32 %v1847, 0.2
      %v2192 = vmul.f32 %v1850, 0.2
      %v2193 = vmul.f32 %v1855, 0.2
      %v2194 = vmul.f32 %v1858, 0.2
      %v2195 = vmul.f32 %v1863, 0.2
      %v2196 = vmul.f32 %v1866, 0.2
      %v2197 = vmul.f32 %v1871, 0.2
      %v2198 = vmul.f32 %v1874, 0.2
      %v2199 = vmul.f32 %v1879, 0.2
      %v2200 = vmul.f32 %v1882, 0.2
      %v2201 = vmul.f32 %v1887, 0.2
      %v2202 = vmul.f32 %v1890, 0.2
      %v2203 = vmul.f32 %v1895, 0.2
      %v2204 = vmul.f32 %v1898, 0.2
      %v2205 = vmul.f32 %v1903, 0.2
      %v2206 = vmul.f32 %v1906, 0.2
      %v2207 = vmul.f32 %v1911, 0.2
      %v2208 = vmul.f32 %v1914, 0.2
      %v2209 = vmul.f32 %v1919, 0.2
      %v2210 = vmul.f32 %v1922, 0.2
      %v2211 = vmul.f32 %v1927, 0.2
      %v2212 = vmul.f32 %v1930, 0.2
      %v2213 = vmul.f32 %v1935, 0.2
      %v2214 = vmul.f32 %v1938, 0.2
      %v2215 = vmul.f32 %v1943, 0.2
      %v2216 = vmul.f32 %v1946, 0.2
      %v2217 = vmul.f32 %v1951, 0.2
      %v2218 = vmul.f32 %v1954, 0.2
      %v2219 = vmul.f32 %v1959, 0.2
      %v2220 = vmul.f32 %v1962, 0.2
      %v2221 = vsel %vm1965, %v1455, %v2093
      %v2222 = vsel %vm1966, %v1458, %v2094
      %v2223 = vsel %vm1967, %v1463, %v2095
      %v2224 = vsel %vm1968, %v1466, %v2096
      %v2225 = vsel %vm1969, %v1471, %v2097
      %v2226 = vsel %vm1970, %v1474, %v2098
      %v2227 = vsel %vm1971, %v1479, %v2099
      %v2228 = vsel %vm1972, %v1482, %v2100
      %v2229 = vsel %vm1973, %v1487, %v2101
      %v2230 = vsel %vm1974, %v1490, %v2102
      %v2231 = vsel %vm1975, %v1495, %v2103
      %v2232 = vsel %vm1976, %v1498, %v2104
      %v2233 = vsel %vm1977, %v1503, %v2105
      %v2234 = vsel %vm1978, %v1506, %v2106
      %v2235 = vsel %vm1979, %v1511, %v2107
      %v2236 = vsel %vm1980, %v1514, %v2108
      %v2237 = vsel %vm1981, %v1519, %v2109
      %v2238 = vsel %vm1982, %v1522, %v2110
      %v2239 = vsel %vm1983, %v1527, %v2111
      %v2240 = vsel %vm1984, %v1530, %v2112
      %v2241 = vsel %vm1985, %v1535, %v2113
      %v2242 = vsel %vm1986, %v1538, %v2114
      %v2243 = vsel %vm1987, %v1543, %v2115
      %v2244 = vsel %vm1988, %v1546, %v2116
      %v2245 = vsel %vm1989, %v1551, %v2117
      %v2246 = vsel %vm1990, %v1554, %v2118
      %v2247 = vsel %vm1991, %v1559, %v2119
      %v2248 = vsel %vm1992, %v1562, %v2120
      %v2249 = vsel %vm1993, %v1567, %v2121
      %v2250 = vsel %vm1994, %v1570, %v2122
      %v2251 = vsel %vm1995, %v1575, %v2123
      %v2252 = vsel %vm1996, %v1578, %v2124
      %v2253 = vsel %vm1997, %v1583, %v2125
      %v2254 = vsel %vm1998, %v1586, %v2126
      %v2255 = vsel %vm1999, %v1591, %v2127
      %v2256 = vsel %vm2000, %v1594, %v2128
      %v2257 = vsel %vm2001, %v1599, %v2129
      %v2258 = vsel %vm2002, %v1602, %v2130
      %v2259 = vsel %vm2003, %v1607, %v2131
      %v2260 = vsel %vm2004, %v1610, %v2132
      %v2261 = vsel %vm2005, %v1615, %v2133
      %v2262 = vsel %vm2006, %v1618, %v2134
      %v2263 = vsel %vm2007, %v1623, %v2135
      %v2264 = vsel %vm2008, %v1626, %v2136
      %v2265 = vsel %vm2009, %v1631, %v2137
      %v2266 = vsel %vm2010, %v1634, %v2138
      %v2267 = vsel %vm2011, %v1639, %v2139
      %v2268 = vsel %vm2012, %v1642, %v2140
      %v2269 = vsel %vm2013, %v1647, %v2141
      %v2270 = vsel %vm2014, %v1650, %v2142
      %v2271 = vsel %vm2015, %v1655, %v2143
      %v2272 = vsel %vm2016, %v1658, %v2144
      %v2273 = vsel %vm2017, %v1663, %v2145
      %v2274 = vsel %vm2018, %v1666, %v2146
      %v2275 = vsel %vm2019, %v1671, %v2147
      %v2276 = vsel %vm2020, %v1674, %v2148
      %v2277 = vsel %vm2021, %v1679, %v2149
      %v2278 = vsel %vm2022, %v1682, %v2150
      %v2279 = vsel %vm2023, %v1687, %v2151
      %v2280 = vsel %vm2024, %v1690, %v2152
      %v2281 = vsel %vm2025, %v1695, %v2153
      %v2282 = vsel %vm2026, %v1698, %v2154
      %v2283 = vsel %vm2027, %v1703, %v2155
      %v2284 = vsel %vm2028, %v1706, %v2156
      %v2285 = vsel %vm2029, %v1711, %v2157
      %v2286 = vsel %vm2030, %v1714, %v2158
      %v2287 = vsel %vm2031, %v1719, %v2159
      %v2288 = vsel %vm2032, %v1722, %v2160
      %v2289 = vsel %vm2033, %v1727, %v2161
      %v2290 = vsel %vm2034, %v1730, %v2162
      %v2291 = vsel %vm2035, %v1735, %v2163
      %v2292 = vsel %vm2036, %v1738, %v2164
      %v2293 = vsel %vm2037, %v1743, %v2165
      %v2294 = vsel %vm2038, %v1746, %v2166
      %v2295 = vsel %vm2039, %v1751, %v2167
      %v2296 = vsel %vm2040, %v1754, %v2168
      %v2297 = vsel %vm2041, %v1759, %v2169
      %v2298 = vsel %vm2042, %v1762, %v2170
      %v2299 = vsel %vm2043, %v1767, %v2171
      %v2300 = vsel %vm2044, %v1770, %v2172
      %v2301 = vsel %vm2045, %v1775, %v2173
      %v2302 = vsel %vm2046, %v1778, %v2174
      %v2303 = vsel %vm2047, %v1783, %v2175
      %v2304 = vsel %vm2048, %v1786, %v2176
      %v2305 = vsel %vm2049, %v1791, %v2177
      %v2306 = vsel %vm2050, %v1794, %v2178
      %v2307 = vsel %vm2051, %v1799, %v2179
      %v2308 = vsel %vm2052, %v1802, %v2180
      %v2309 = vsel %vm2053, %v1807, %v2181
      %v2310 = vsel %vm2054, %v1810, %v2182
      %v2311 = vsel %vm2055, %v1815, %v2183
      %v2312 = vsel %vm2056, %v1818, %v2184
      %v2313 = vsel %vm2057, %v1823, %v2185
      %v2314 = vsel %vm2058, %v1826, %v2186
      %v2315 = vsel %vm2059, %v1831, %v2187
      %v2316 = vsel %vm2060, %v1834, %v2188
      %v2317 = vsel %vm2061, %v1839, %v2189
      %v2318 = vsel %vm2062, %v1842, %v2190
      %v2319 = vsel %vm2063, %v1847, %v2191
      %v2320 = vsel %vm2064, %v1850, %v2192
      %v2321 = vsel %vm2065, %v1855, %v2193
      %v2322 = vsel %vm2066, %v1858, %v2194
      %v2323 = vsel %vm2067, %v1863, %v2195
      %v2324 = vsel %vm2068, %v1866, %v2196
      %v2325 = vsel %vm2069, %v1871, %v2197
      %v2326 = vsel %vm2070, %v1874, %v2198
      %v2327 = vsel %vm2071, %v1879, %v2199
      %v2328 = vsel %vm2072, %v1882, %v2200
      %v2329 = vsel %vm2073, %v1887, %v2201
      %v2330 = vsel %vm2074, %v1890, %v2202
      %v2331 = vsel %vm2075, %v1895, %v2203
      %v2332 = vsel %vm2076, %v1898, %v2204
      %v2333 = vsel %vm2077, %v1903, %v2205
      %v2334 = vsel %vm2078, %v1906, %v2206
      %v2335 = vsel %vm2079, %v1911, %v2207
      %v2336 = vsel %vm2080, %v1914, %v2208
      %v2337 = vsel %vm2081, %v1919, %v2209
      %v2338 = vsel %vm2082, %v1922, %v2210
      %v2339 = vsel %vm2083, %v1927, %v2211
      %v2340 = vsel %vm2084, %v1930, %v2212
      %v2341 = vsel %vm2085, %v1935, %v2213
      %v2342 = vsel %vm2086, %v1938, %v2214
      %v2343 = vsel %vm2087, %v1943, %v2215
      %v2344 = vsel %vm2088, %v1946, %v2216
      %v2345 = vsel %vm2089, %v1951, %v2217
      %v2346 = vsel %vm2090, %v1954, %v2218
      %v2347 = vsel %vm2091, %v1959, %v2219
      %v2348 = vsel %vm2092, %v1962, %v2220
      %v2349 = vpack.c.bf16 %v2222, %v2221
      %v2350 = vpack.c.bf16 %v2224, %v2223
      %v2351 = vpack.c.bf16 %v2226, %v2225
      %v2352 = vpack.c.bf16 %v2228, %v2227
      %v2353 = vpack.c.bf16 %v2230, %v2229
      %v2354 = vpack.c.bf16 %v2232, %v2231
      %v2355 = vpack.c.bf16 %v2234, %v2233
      %v2356 = vpack.c.bf16 %v2236, %v2235
      %v2357 = vpack.c.bf16 %v2238, %v2237
      %v2358 = vpack.c.bf16 %v2240, %v2239
      %v2359 = vpack.c.bf16 %v2242, %v2241
      %v2360 = vpack.c.bf16 %v2244, %v2243
      %v2361 = vpack.c.bf16 %v2246, %v2245
      %v2362 = vpack.c.bf16 %v2248, %v2247
      %v2363 = vpack.c.bf16 %v2250, %v2249
      %v2364 = vpack.c.bf16 %v2252, %v2251
      %v2365 = vpack.c.bf16 %v2254, %v2253
      %v2366 = vpack.c.bf16 %v2256, %v2255
      %v2367 = vpack.c.bf16 %v2258, %v2257
      %v2368 = vpack.c.bf16 %v2260, %v2259
      %v2369 = vpack.c.bf16 %v2262, %v2261
      %v2370 = vpack.c.bf16 %v2264, %v2263
      %v2371 = vpack.c.bf16 %v2266, %v2265
      %v2372 = vpack.c.bf16 %v2268, %v2267
      %v2373 = vpack.c.bf16 %v2270, %v2269
      %v2374 = vpack.c.bf16 %v2272, %v2271
      %v2375 = vpack.c.bf16 %v2274, %v2273
      %v2376 = vpack.c.bf16 %v2276, %v2275
      %v2377 = vpack.c.bf16 %v2278, %v2277
      %v2378 = vpack.c.bf16 %v2280, %v2279
      %v2379 = vpack.c.bf16 %v2282, %v2281
      %v2380 = vpack.c.bf16 %v2284, %v2283
      %v2381 = vpack.c.bf16 %v2286, %v2285
      %v2382 = vpack.c.bf16 %v2288, %v2287
      %v2383 = vpack.c.bf16 %v2290, %v2289
      %v2384 = vpack.c.bf16 %v2292, %v2291
      %v2385 = vpack.c.bf16 %v2294, %v2293
      %v2386 = vpack.c.bf16 %v2296, %v2295
      %v2387 = vpack.c.bf16 %v2298, %v2297
      %v2388 = vpack.c.bf16 %v2300, %v2299
      %v2389 = vpack.c.bf16 %v2302, %v2301
      %v2390 = vpack.c.bf16 %v2304, %v2303
      %v2391 = vpack.c.bf16 %v2306, %v2305
      %v2392 = vpack.c.bf16 %v2308, %v2307
      %v2393 = vpack.c.bf16 %v2310, %v2309
      %v2394 = vpack.c.bf16 %v2312, %v2311
      %v2395 = vpack.c.bf16 %v2314, %v2313
      %v2396 = vpack.c.bf16 %v2316, %v2315
      %v2397 = vpack.c.bf16 %v2318, %v2317
      %v2398 = vpack.c.bf16 %v2320, %v2319
      %v2399 = vpack.c.bf16 %v2322, %v2321
      %v2400 = vpack.c.bf16 %v2324, %v2323
      %v2401 = vpack.c.bf16 %v2326, %v2325
      %v2402 = vpack.c.bf16 %v2328, %v2327
      %v2403 = vpack.c.bf16 %v2330, %v2329
      %v2404 = vpack.c.bf16 %v2332, %v2331
      %v2405 = vpack.c.bf16 %v2334, %v2333
      %v2406 = vpack.c.bf16 %v2336, %v2335
      %v2407 = vpack.c.bf16 %v2338, %v2337
      %v2408 = vpack.c.bf16 %v2340, %v2339
      %v2409 = vpack.c.bf16 %v2342, %v2341
      %v2410 = vpack.c.bf16 %v2344, %v2343
      %v2411 = vpack.c.bf16 %v2346, %v2345
      %v2412 = vpack.c.bf16 %v2348, %v2347
      %v2477 = vunpack.c.l.b16 %v2349
      %v2478 = vunpack.c.h.b16 %v2349
      %v2479 = vunpack.c.l.b16 %v2350
      %v2480 = vunpack.c.h.b16 %v2350
      %v2481 = vunpack.c.l.b16 %v2351
      %v2482 = vunpack.c.h.b16 %v2351
      %v2483 = vunpack.c.l.b16 %v2352
      %v2484 = vunpack.c.h.b16 %v2352
      %v2485 = vunpack.c.l.b16 %v2353
      %v2486 = vunpack.c.h.b16 %v2353
      %v2487 = vunpack.c.l.b16 %v2354
      %v2488 = vunpack.c.h.b16 %v2354
      %v2489 = vunpack.c.l.b16 %v2355
      %v2490 = vunpack.c.h.b16 %v2355
      %v2491 = vunpack.c.l.b16 %v2356
      %v2492 = vunpack.c.h.b16 %v2356
      %v2493 = vunpack.c.l.b16 %v2357
      %v2494 = vunpack.c.h.b16 %v2357
      %v2495 = vunpack.c.l.b16 %v2358
      %v2496 = vunpack.c.h.b16 %v2358
      %v2497 = vunpack.c.l.b16 %v2359
      %v2498 = vunpack.c.h.b16 %v2359
      %v2499 = vunpack.c.l.b16 %v2360
      %v2500 = vunpack.c.h.b16 %v2360
      %v2501 = vunpack.c.l.b16 %v2361
      %v2502 = vunpack.c.h.b16 %v2361
      %v2503 = vunpack.c.l.b16 %v2362
      %v2504 = vunpack.c.h.b16 %v2362
      %v2505 = vunpack.c.l.b16 %v2363
      %v2506 = vunpack.c.h.b16 %v2363
      %v2507 = vunpack.c.l.b16 %v2364
      %v2508 = vunpack.c.h.b16 %v2364
      %v2509 = vunpack.c.l.b16 %v2365
      %v2510 = vunpack.c.h.b16 %v2365
      %v2511 = vunpack.c.l.b16 %v2366
      %v2512 = vunpack.c.h.b16 %v2366
      %v2513 = vunpack.c.l.b16 %v2367
      %v2514 = vunpack.c.h.b16 %v2367
      %v2515 = vunpack.c.l.b16 %v2368
      %v2516 = vunpack.c.h.b16 %v2368
      %v2517 = vunpack.c.l.b16 %v2369
      %v2518 = vunpack.c.h.b16 %v2369
      %v2519 = vunpack.c.l.b16 %v2370
      %v2520 = vunpack.c.h.b16 %v2370
      %v2521 = vunpack.c.l.b16 %v2371
      %v2522 = vunpack.c.h.b16 %v2371
      %v2523 = vunpack.c.l.b16 %v2372
      %v2524 = vunpack.c.h.b16 %v2372
      %v2525 = vunpack.c.l.b16 %v2373
      %v2526 = vunpack.c.h.b16 %v2373
      %v2527 = vunpack.c.l.b16 %v2374
      %v2528 = vunpack.c.h.b16 %v2374
      %v2529 = vunpack.c.l.b16 %v2375
      %v2530 = vunpack.c.h.b16 %v2375
      %v2531 = vunpack.c.l.b16 %v2376
      %v2532 = vunpack.c.h.b16 %v2376
      %v2533 = vunpack.c.l.b16 %v2377
      %v2534 = vunpack.c.h.b16 %v2377
      %v2535 = vunpack.c.l.b16 %v2378
      %v2536 = vunpack.c.h.b16 %v2378
      %v2537 = vunpack.c.l.b16 %v2379
      %v2538 = vunpack.c.h.b16 %v2379
      %v2539 = vunpack.c.l.b16 %v2380
      %v2540 = vunpack.c.h.b16 %v2380
      %v2541 = vunpack.c.l.b16 %v2381
      %v2542 = vunpack.c.h.b16 %v2381
      %v2543 = vunpack.c.l.b16 %v2382
      %v2544 = vunpack.c.h.b16 %v2382
      %v2545 = vunpack.c.l.b16 %v2383
      %v2546 = vunpack.c.h.b16 %v2383
      %v2547 = vunpack.c.l.b16 %v2384
      %v2548 = vunpack.c.h.b16 %v2384
      %v2549 = vunpack.c.l.b16 %v2385
      %v2550 = vunpack.c.h.b16 %v2385
      %v2551 = vunpack.c.l.b16 %v2386
      %v2552 = vunpack.c.h.b16 %v2386
      %v2553 = vunpack.c.l.b16 %v2387
      %v2554 = vunpack.c.h.b16 %v2387
      %v2555 = vunpack.c.l.b16 %v2388
      %v2556 = vunpack.c.h.b16 %v2388
      %v2557 = vunpack.c.l.b16 %v2389
      %v2558 = vunpack.c.h.b16 %v2389
      %v2559 = vunpack.c.l.b16 %v2390
      %v2560 = vunpack.c.h.b16 %v2390
      %v2561 = vunpack.c.l.b16 %v2391
      %v2562 = vunpack.c.h.b16 %v2391
      %v2563 = vunpack.c.l.b16 %v2392
      %v2564 = vunpack.c.h.b16 %v2392
      %v2565 = vunpack.c.l.b16 %v2393
      %v2566 = vunpack.c.h.b16 %v2393
      %v2567 = vunpack.c.l.b16 %v2394
      %v2568 = vunpack.c.h.b16 %v2394
      %v2569 = vunpack.c.l.b16 %v2395
      %v2570 = vunpack.c.h.b16 %v2395
      %v2571 = vunpack.c.l.b16 %v2396
      %v2572 = vunpack.c.h.b16 %v2396
      %v2573 = vunpack.c.l.b16 %v2397
      %v2574 = vunpack.c.h.b16 %v2397
      %v2575 = vunpack.c.l.b16 %v2398
      %v2576 = vunpack.c.h.b16 %v2398
      %v2577 = vunpack.c.l.b16 %v2399
      %v2578 = vunpack.c.h.b16 %v2399
      %v2579 = vunpack.c.l.b16 %v2400
      %v2580 = vunpack.c.h.b16 %v2400
      %v2581 = vunpack.c.l.b16 %v2401
      %v2582 = vunpack.c.h.b16 %v2401
      %v2583 = vunpack.c.l.b16 %v2402
      %v2584 = vunpack.c.h.b16 %v2402
      %v2585 = vunpack.c.l.b16 %v2403
      %v2586 = vunpack.c.h.b16 %v2403
      %v2587 = vunpack.c.l.b16 %v2404
      %v2588 = vunpack.c.h.b16 %v2404
      %v2589 = vunpack.c.l.b16 %v2405
      %v2590 = vunpack.c.h.b16 %v2405
      %v2591 = vunpack.c.l.b16 %v2406
      %v2592 = vunpack.c.h.b16 %v2406
      %v2593 = vunpack.c.l.b16 %v2407
      %v2594 = vunpack.c.h.b16 %v2407
      %v2595 = vunpack.c.l.b16 %v2408
      %v2596 = vunpack.c.h.b16 %v2408
      %v2597 = vunpack.c.l.b16 %v2409
      %v2598 = vunpack.c.h.b16 %v2409
      %v2599 = vunpack.c.l.b16 %v2410
      %v2600 = vunpack.c.h.b16 %v2410
      %v2601 = vunpack.c.l.b16 %v2411
      %v2602 = vunpack.c.h.b16 %v2411
      %v2603 = vunpack.c.l.b16 %v2412
      %v2604 = vunpack.c.h.b16 %v2412
      %v2605 = vpack.c.b16 %v2477, %v2477
      %v2606 = vpack.c.b16 %v2478, %v2478
      %v2607 = vpack.c.b16 %v2479, %v2479
      %v2608 = vpack.c.b16 %v2480, %v2480
      %v2609 = vpack.c.b16 %v2481, %v2481
      %v2610 = vpack.c.b16 %v2482, %v2482
      %v2611 = vpack.c.b16 %v2483, %v2483
      %v2612 = vpack.c.b16 %v2484, %v2484
      %v2613 = vpack.c.b16 %v2485, %v2485
      %v2614 = vpack.c.b16 %v2486, %v2486
      %v2615 = vpack.c.b16 %v2487, %v2487
      %v2616 = vpack.c.b16 %v2488, %v2488
      %v2617 = vpack.c.b16 %v2489, %v2489
      %v2618 = vpack.c.b16 %v2490, %v2490
      %v2619 = vpack.c.b16 %v2491, %v2491
      %v2620 = vpack.c.b16 %v2492, %v2492
      %v2621 = vpack.c.b16 %v2493, %v2493
      %v2622 = vpack.c.b16 %v2494, %v2494
      %v2623 = vpack.c.b16 %v2495, %v2495
      %v2624 = vpack.c.b16 %v2496, %v2496
      %v2625 = vpack.c.b16 %v2497, %v2497
      %v2626 = vpack.c.b16 %v2498, %v2498
      %v2627 = vpack.c.b16 %v2499, %v2499
      %v2628 = vpack.c.b16 %v2500, %v2500
      %v2629 = vpack.c.b16 %v2501, %v2501
      %v2630 = vpack.c.b16 %v2502, %v2502
      %v2631 = vpack.c.b16 %v2503, %v2503
      %v2632 = vpack.c.b16 %v2504, %v2504
      %v2633 = vpack.c.b16 %v2505, %v2505
      %v2634 = vpack.c.b16 %v2506, %v2506
      %v2635 = vpack.c.b16 %v2507, %v2507
      %v2636 = vpack.c.b16 %v2508, %v2508
      %v2637 = vpack.c.b16 %v2509, %v2509
      %v2638 = vpack.c.b16 %v2510, %v2510
      %v2639 = vpack.c.b16 %v2511, %v2511
      %v2640 = vpack.c.b16 %v2512, %v2512
      %v2641 = vpack.c.b16 %v2513, %v2513
      %v2642 = vpack.c.b16 %v2514, %v2514
      %v2643 = vpack.c.b16 %v2515, %v2515
      %v2644 = vpack.c.b16 %v2516, %v2516
      %v2645 = vpack.c.b16 %v2517, %v2517
      %v2646 = vpack.c.b16 %v2518, %v2518
      %v2647 = vpack.c.b16 %v2519, %v2519
      %v2648 = vpack.c.b16 %v2520, %v2520
      %v2649 = vpack.c.b16 %v2521, %v2521
      %v2650 = vpack.c.b16 %v2522, %v2522
      %v2651 = vpack.c.b16 %v2523, %v2523
      %v2652 = vpack.c.b16 %v2524, %v2524
      %v2653 = vpack.c.b16 %v2525, %v2525
      %v2654 = vpack.c.b16 %v2526, %v2526
      %v2655 = vpack.c.b16 %v2527, %v2527
      %v2656 = vpack.c.b16 %v2528, %v2528
      %v2657 = vpack.c.b16 %v2529, %v2529
      %v2658 = vpack.c.b16 %v2530, %v2530
      %v2659 = vpack.c.b16 %v2531, %v2531
      %v2660 = vpack.c.b16 %v2532, %v2532
      %v2661 = vpack.c.b16 %v2533, %v2533
      %v2662 = vpack.c.b16 %v2534, %v2534
      %v2663 = vpack.c.b16 %v2535, %v2535
      %v2664 = vpack.c.b16 %v2536, %v2536
      %v2665 = vpack.c.b16 %v2537, %v2537
      %v2666 = vpack.c.b16 %v2538, %v2538
      %v2667 = vpack.c.b16 %v2539, %v2539
      %v2668 = vpack.c.b16 %v2540, %v2540
      %v2669 = vpack.c.b16 %v2541, %v2541
      %v2670 = vpack.c.b16 %v2542, %v2542
      %v2671 = vpack.c.b16 %v2543, %v2543
      %v2672 = vpack.c.b16 %v2544, %v2544
      %v2673 = vpack.c.b16 %v2545, %v2545
      %v2674 = vpack.c.b16 %v2546, %v2546
      %v2675 = vpack.c.b16 %v2547, %v2547
      %v2676 = vpack.c.b16 %v2548, %v2548
      %v2677 = vpack.c.b16 %v2549, %v2549
      %v2678 = vpack.c.b16 %v2550, %v2550
      %v2679 = vpack.c.b16 %v2551, %v2551
      %v2680 = vpack.c.b16 %v2552, %v2552
      %v2681 = vpack.c.b16 %v2553, %v2553
      %v2682 = vpack.c.b16 %v2554, %v2554
      %v2683 = vpack.c.b16 %v2555, %v2555
      %v2684 = vpack.c.b16 %v2556, %v2556
      %v2685 = vpack.c.b16 %v2557, %v2557
      %v2686 = vpack.c.b16 %v2558, %v2558
      %v2687 = vpack.c.b16 %v2559, %v2559
      %v2688 = vpack.c.b16 %v2560, %v2560
      %v2689 = vpack.c.b16 %v2561, %v2561
      %v2690 = vpack.c.b16 %v2562, %v2562
      %v2691 = vpack.c.b16 %v2563, %v2563
      %v2692 = vpack.c.b16 %v2564, %v2564
      %v2693 = vpack.c.b16 %v2565, %v2565
      %v2694 = vpack.c.b16 %v2566, %v2566
      %v2695 = vpack.c.b16 %v2567, %v2567
      %v2696 = vpack.c.b16 %v2568, %v2568
      %v2697 = vpack.c.b16 %v2569, %v2569
      %v2698 = vpack.c.b16 %v2570, %v2570
      %v2699 = vpack.c.b16 %v2571, %v2571
      %v2700 = vpack.c.b16 %v2572, %v2572
      %v2701 = vpack.c.b16 %v2573, %v2573
      %v2702 = vpack.c.b16 %v2574, %v2574
      %v2703 = vpack.c.b16 %v2575, %v2575
      %v2704 = vpack.c.b16 %v2576, %v2576
      %v2705 = vpack.c.b16 %v2577, %v2577
      %v2706 = vpack.c.b16 %v2578, %v2578
      %v2707 = vpack.c.b16 %v2579, %v2579
      %v2708 = vpack.c.b16 %v2580, %v2580
      %v2709 = vpack.c.b16 %v2581, %v2581
      %v2710 = vpack.c.b16 %v2582, %v2582
      %v2711 = vpack.c.b16 %v2583, %v2583
      %v2712 = vpack.c.b16 %v2584, %v2584
      %v2713 = vpack.c.b16 %v2585, %v2585
      %v2714 = vpack.c.b16 %v2586, %v2586
      %v2715 = vpack.c.b16 %v2587, %v2587
      %v2716 = vpack.c.b16 %v2588, %v2588
      %v2717 = vpack.c.b16 %v2589, %v2589
      %v2718 = vpack.c.b16 %v2590, %v2590
      %v2719 = vpack.c.b16 %v2591, %v2591
      %v2720 = vpack.c.b16 %v2592, %v2592
      %v2721 = vpack.c.b16 %v2593, %v2593
      %v2722 = vpack.c.b16 %v2594, %v2594
      %v2723 = vpack.c.b16 %v2595, %v2595
      %v2724 = vpack.c.b16 %v2596, %v2596
      %v2725 = vpack.c.b16 %v2597, %v2597
      %v2726 = vpack.c.b16 %v2598, %v2598
      %v2727 = vpack.c.b16 %v2599, %v2599
      %v2728 = vpack.c.b16 %v2600, %v2600
      %v2729 = vpack.c.b16 %v2601, %v2601
      %v2730 = vpack.c.b16 %v2602, %v2602
      %v2731 = vpack.c.b16 %v2603, %v2603
      %v2732 = vpack.c.b16 %v2604, %v2604
      %vm2861 = vcmask 125952
      %2862 = vst.msk [vmem:[%s180] sm:$0xf] %vm2861, %v2605
      %2863 = vst.msk [vmem:[%s180 + $0x4] sm:$0xf] %vm2861, %v2606
      %2864 = vst.msk [vmem:[%s180 + $0x8] sm:$0xf] %vm2861, %v2607
      %2865 = vst.msk [vmem:[%s180 + $0xc] sm:$0xf] %vm2861, %v2608
      %2866 = vst.msk [vmem:[%s180 + $0x10] sm:$0xf] %vm2861, %v2609
      %2867 = vst.msk [vmem:[%s180 + $0x14] sm:$0xf] %vm2861, %v2610
      %2868 = vst.msk [vmem:[%s180 + $0x18] sm:$0xf] %vm2861, %v2611
      %2869 = vst.msk [vmem:[%s180 + $0x1c] sm:$0xf] %vm2861, %v2612
      %2870 = vst.msk [vmem:[%s180 + $0x20] sm:$0xf] %vm2861, %v2613
      %2871 = vst.msk [vmem:[%s180 + $0x24] sm:$0xf] %vm2861, %v2614
      %2872 = vst.msk [vmem:[%s180 + $0x28] sm:$0xf] %vm2861, %v2615
      %2873 = vst.msk [vmem:[%s180 + $0x2c] sm:$0xf] %vm2861, %v2616
      %2874 = vst.msk [vmem:[%s180 + $0x30] sm:$0xf] %vm2861, %v2617
      %2875 = vst.msk [vmem:[%s180 + $0x34] sm:$0xf] %vm2861, %v2618
      %2876 = vst.msk [vmem:[%s180 + $0x38] sm:$0xf] %vm2861, %v2619
      %2877 = vst.msk [vmem:[%s180 + $0x3c] sm:$0xf] %vm2861, %v2620
      %2878 = vst.msk [vmem:[%s180 + $0x40] sm:$0xf] %vm2861, %v2621
      %2879 = vst.msk [vmem:[%s180 + $0x44] sm:$0xf] %vm2861, %v2622
      %2880 = vst.msk [vmem:[%s180 + $0x48] sm:$0xf] %vm2861, %v2623
      %2881 = vst.msk [vmem:[%s180 + $0x4c] sm:$0xf] %vm2861, %v2624
      %2882 = vst.msk [vmem:[%s180 + $0x50] sm:$0xf] %vm2861, %v2625
      %2883 = vst.msk [vmem:[%s180 + $0x54] sm:$0xf] %vm2861, %v2626
      %2884 = vst.msk [vmem:[%s180 + $0x58] sm:$0xf] %vm2861, %v2627
      %2885 = vst.msk [vmem:[%s180 + $0x5c] sm:$0xf] %vm2861, %v2628
      %2886 = vst.msk [vmem:[%s180 + $0x60] sm:$0xf] %vm2861, %v2629
      %2887 = vst.msk [vmem:[%s180 + $0x64] sm:$0xf] %vm2861, %v2630
      %2888 = vst.msk [vmem:[%s180 + $0x68] sm:$0xf] %vm2861, %v2631
      %2889 = vst.msk [vmem:[%s180 + $0x6c] sm:$0xf] %vm2861, %v2632
      %2890 = vst.msk [vmem:[%s180 + $0x70] sm:$0xf] %vm2861, %v2633
      %2891 = vst.msk [vmem:[%s180 + $0x74] sm:$0xf] %vm2861, %v2634
      %2892 = vst.msk [vmem:[%s180 + $0x78] sm:$0xf] %vm2861, %v2635
      %2893 = vst.msk [vmem:[%s180 + $0x7c] sm:$0xf] %vm2861, %v2636
      %2894 = vst.msk [vmem:[%s180 + $0x80] sm:$0xf] %vm2861, %v2637
      %2895 = vst.msk [vmem:[%s180 + $0x84] sm:$0xf] %vm2861, %v2638
      %2896 = vst.msk [vmem:[%s180 + $0x88] sm:$0xf] %vm2861, %v2639
      %2897 = vst.msk [vmem:[%s180 + $0x8c] sm:$0xf] %vm2861, %v2640
      %2898 = vst.msk [vmem:[%s180 + $0x90] sm:$0xf] %vm2861, %v2641
      %2899 = vst.msk [vmem:[%s180 + $0x94] sm:$0xf] %vm2861, %v2642
      %2900 = vst.msk [vmem:[%s180 + $0x98] sm:$0xf] %vm2861, %v2643
      %2901 = vst.msk [vmem:[%s180 + $0x9c] sm:$0xf] %vm2861, %v2644
      %2902 = vst.msk [vmem:[%s180 + $0xa0] sm:$0xf] %vm2861, %v2645
      %2903 = vst.msk [vmem:[%s180 + $0xa4] sm:$0xf] %vm2861, %v2646
      %2904 = vst.msk [vmem:[%s180 + $0xa8] sm:$0xf] %vm2861, %v2647
      %2905 = vst.msk [vmem:[%s180 + $0xac] sm:$0xf] %vm2861, %v2648
      %2906 = vst.msk [vmem:[%s180 + $0xb0] sm:$0xf] %vm2861, %v2649
      %2907 = vst.msk [vmem:[%s180 + $0xb4] sm:$0xf] %vm2861, %v2650
      %2908 = vst.msk [vmem:[%s180 + $0xb8] sm:$0xf] %vm2861, %v2651
      %2909 = vst.msk [vmem:[%s180 + $0xbc] sm:$0xf] %vm2861, %v2652
      %2910 = vst.msk [vmem:[%s180 + $0xc0] sm:$0xf] %vm2861, %v2653
      %2911 = vst.msk [vmem:[%s180 + $0xc4] sm:$0xf] %vm2861, %v2654
      %2912 = vst.msk [vmem:[%s180 + $0xc8] sm:$0xf] %vm2861, %v2655
      %2913 = vst.msk [vmem:[%s180 + $0xcc] sm:$0xf] %vm2861, %v2656
      %2914 = vst.msk [vmem:[%s180 + $0xd0] sm:$0xf] %vm2861, %v2657
      %2915 = vst.msk [vmem:[%s180 + $0xd4] sm:$0xf] %vm2861, %v2658
      %2916 = vst.msk [vmem:[%s180 + $0xd8] sm:$0xf] %vm2861, %v2659
      %2917 = vst.msk [vmem:[%s180 + $0xdc] sm:$0xf] %vm2861, %v2660
      %2918 = vst.msk [vmem:[%s180 + $0xe0] sm:$0xf] %vm2861, %v2661
      %2919 = vst.msk [vmem:[%s180 + $0xe4] sm:$0xf] %vm2861, %v2662
      %2920 = vst.msk [vmem:[%s180 + $0xe8] sm:$0xf] %vm2861, %v2663
      %2921 = vst.msk [vmem:[%s180 + $0xec] sm:$0xf] %vm2861, %v2664
      %2922 = vst.msk [vmem:[%s180 + $0xf0] sm:$0xf] %vm2861, %v2665
      %2923 = vst.msk [vmem:[%s180 + $0xf4] sm:$0xf] %vm2861, %v2666
      %2924 = vst.msk [vmem:[%s180 + $0xf8] sm:$0xf] %vm2861, %v2667
      %2925 = vst.msk [vmem:[%s180 + $0xfc] sm:$0xf] %vm2861, %v2668
      %2926 = vst.msk [vmem:[%s180 + $0x100] sm:$0xf] %vm2861, %v2669
      %2927 = vst.msk [vmem:[%s180 + $0x104] sm:$0xf] %vm2861, %v2670
      %2928 = vst.msk [vmem:[%s180 + $0x108] sm:$0xf] %vm2861, %v2671
      %2929 = vst.msk [vmem:[%s180 + $0x10c] sm:$0xf] %vm2861, %v2672
      %2930 = vst.msk [vmem:[%s180 + $0x110] sm:$0xf] %vm2861, %v2673
      %2931 = vst.msk [vmem:[%s180 + $0x114] sm:$0xf] %vm2861, %v2674
      %2932 = vst.msk [vmem:[%s180 + $0x118] sm:$0xf] %vm2861, %v2675
      %2933 = vst.msk [vmem:[%s180 + $0x11c] sm:$0xf] %vm2861, %v2676
      %2934 = vst.msk [vmem:[%s180 + $0x120] sm:$0xf] %vm2861, %v2677
      %2935 = vst.msk [vmem:[%s180 + $0x124] sm:$0xf] %vm2861, %v2678
      %2936 = vst.msk [vmem:[%s180 + $0x128] sm:$0xf] %vm2861, %v2679
      %2937 = vst.msk [vmem:[%s180 + $0x12c] sm:$0xf] %vm2861, %v2680
      %2938 = vst.msk [vmem:[%s180 + $0x130] sm:$0xf] %vm2861, %v2681
      %2939 = vst.msk [vmem:[%s180 + $0x134] sm:$0xf] %vm2861, %v2682
      %2940 = vst.msk [vmem:[%s180 + $0x138] sm:$0xf] %vm2861, %v2683
      %2941 = vst.msk [vmem:[%s180 + $0x13c] sm:$0xf] %vm2861, %v2684
      %2942 = vst.msk [vmem:[%s180 + $0x140] sm:$0xf] %vm2861, %v2685
      %2943 = vst.msk [vmem:[%s180 + $0x144] sm:$0xf] %vm2861, %v2686
      %2944 = vst.msk [vmem:[%s180 + $0x148] sm:$0xf] %vm2861, %v2687
      %2945 = vst.msk [vmem:[%s180 + $0x14c] sm:$0xf] %vm2861, %v2688
      %2946 = vst.msk [vmem:[%s180 + $0x150] sm:$0xf] %vm2861, %v2689
      %2947 = vst.msk [vmem:[%s180 + $0x154] sm:$0xf] %vm2861, %v2690
      %2948 = vst.msk [vmem:[%s180 + $0x158] sm:$0xf] %vm2861, %v2691
      %2949 = vst.msk [vmem:[%s180 + $0x15c] sm:$0xf] %vm2861, %v2692
      %2950 = vst.msk [vmem:[%s180 + $0x160] sm:$0xf] %vm2861, %v2693
      %2951 = vst.msk [vmem:[%s180 + $0x164] sm:$0xf] %vm2861, %v2694
      %2952 = vst.msk [vmem:[%s180 + $0x168] sm:$0xf] %vm2861, %v2695
      %2953 = vst.msk [vmem:[%s180 + $0x16c] sm:$0xf] %vm2861, %v2696
      %2954 = vst.msk [vmem:[%s180 + $0x170] sm:$0xf] %vm2861, %v2697
      %2955 = vst.msk [vmem:[%s180 + $0x174] sm:$0xf] %vm2861, %v2698
      %2956 = vst.msk [vmem:[%s180 + $0x178] sm:$0xf] %vm2861, %v2699
      %2957 = vst.msk [vmem:[%s180 + $0x17c] sm:$0xf] %vm2861, %v2700
      %2958 = vst.msk [vmem:[%s180 + $0x180] sm:$0xf] %vm2861, %v2701
      %2959 = vst.msk [vmem:[%s180 + $0x184] sm:$0xf] %vm2861, %v2702
      %2960 = vst.msk [vmem:[%s180 + $0x188] sm:$0xf] %vm2861, %v2703
      %2961 = vst.msk [vmem:[%s180 + $0x18c] sm:$0xf] %vm2861, %v2704
      %2962 = vst.msk [vmem:[%s180 + $0x190] sm:$0xf] %vm2861, %v2705
      %2963 = vst.msk [vmem:[%s180 + $0x194] sm:$0xf] %vm2861, %v2706
      %2964 = vst.msk [vmem:[%s180 + $0x198] sm:$0xf] %vm2861, %v2707
      %2965 = vst.msk [vmem:[%s180 + $0x19c] sm:$0xf] %vm2861, %v2708
      %2966 = vst.msk [vmem:[%s180 + $0x1a0] sm:$0xf] %vm2861, %v2709
      %2967 = vst.msk [vmem:[%s180 + $0x1a4] sm:$0xf] %vm2861, %v2710
      %2968 = vst.msk [vmem:[%s180 + $0x1a8] sm:$0xf] %vm2861, %v2711
      %2969 = vst.msk [vmem:[%s180 + $0x1ac] sm:$0xf] %vm2861, %v2712
      %2970 = vst.msk [vmem:[%s180 + $0x1b0] sm:$0xf] %vm2861, %v2713
      %2971 = vst.msk [vmem:[%s180 + $0x1b4] sm:$0xf] %vm2861, %v2714
      %2972 = vst.msk [vmem:[%s180 + $0x1b8] sm:$0xf] %vm2861, %v2715
      %2973 = vst.msk [vmem:[%s180 + $0x1bc] sm:$0xf] %vm2861, %v2716
      %2974 = vst.msk [vmem:[%s180 + $0x1c0] sm:$0xf] %vm2861, %v2717
      %2975 = vst.msk [vmem:[%s180 + $0x1c4] sm:$0xf] %vm2861, %v2718
      %2976 = vst.msk [vmem:[%s180 + $0x1c8] sm:$0xf] %vm2861, %v2719
      %2977 = vst.msk [vmem:[%s180 + $0x1cc] sm:$0xf] %vm2861, %v2720
      %2978 = vst.msk [vmem:[%s180 + $0x1d0] sm:$0xf] %vm2861, %v2721
      %2979 = vst.msk [vmem:[%s180 + $0x1d4] sm:$0xf] %vm2861, %v2722
      %2980 = vst.msk [vmem:[%s180 + $0x1d8] sm:$0xf] %vm2861, %v2723
      %2981 = vst.msk [vmem:[%s180 + $0x1dc] sm:$0xf] %vm2861, %v2724
      %2982 = vst.msk [vmem:[%s180 + $0x1e0] sm:$0xf] %vm2861, %v2725
      %2983 = vst.msk [vmem:[%s180 + $0x1e4] sm:$0xf] %vm2861, %v2726
      %2984 = vst.msk [vmem:[%s180 + $0x1e8] sm:$0xf] %vm2861, %v2727
      %2985 = vst.msk [vmem:[%s180 + $0x1ec] sm:$0xf] %vm2861, %v2728
      %2986 = vst.msk [vmem:[%s180 + $0x1f0] sm:$0xf] %vm2861, %v2729
      %2987 = vst.msk [vmem:[%s180 + $0x1f4] sm:$0xf] %vm2861, %v2730
      %2988 = vst.msk [vmem:[%s180 + $0x1f8] sm:$0xf] %vm2861, %v2731
      %2989 = vst.msk [vmem:[%s180 + $0x1fc] sm:$0xf] %vm2861, %v2732
      %p2990 = scmp.lt.s32.totalorder %s17, 1
      %s2991 = scalar_select %p2990, %s17, 1
      %p2992 = scmp.lt.s32.totalorder %s18, 0
      %s2993 = scalar_select %p2992, %s18, 0
      %s2994 = smul.addr %s2991, 128
      %s2995 = sadd.s32 %s2993, %s2994
      %s2996 = smul.addr %s2995, 4
      %s2997 = scalar_lea.vmem %s2, %s2996
      // Predicated region
      $region29: #{critic_forward.5} parent=27 // pred_check
        %p2998 = pneg %p97
      $region30: #{critic_forward.5} parent=27 // pred_check_branch
        %3000 = sbr.rel (%p2998) target = $region32
      $region31: #{critic_forward.5} parent=27 // pred_region
        _
      $region32: #{critic_forward.5} parent=27 // pred_fallthru
        _
    $region28: #{critic_forward.5} parent=5 // pred_fallthru
      _
    %p3001 = scmp.le.s32.totalorder 2, %s8
    // Predicated region
    $region33: #{critic_forward.5} parent=5 // pred_check
      %p3002 = pneg %p3001
    $region34: #{critic_forward.5} parent=5 // pred_check_branch
      %3004 = sbr.rel (%p3002) target = $region36
    $region35: #{critic_forward.5} parent=5 // pred_region
      %s3005 = ssub.s32 %s8, 2
      // Predicated region
      $region37: #{critic_forward.5} parent=35 // pred_check
        %p3006 = pneg %p103
      $region38: #{critic_forward.5} parent=35 // pred_check_branch
        %3008 = sbr.rel (%p3006) target = $region40
      $region39: #{critic_forward.5} parent=35 // pred_region
        %p3009 = scmp.lt.s32.totalorder %s19, 1
        %s3010 = scalar_select %p3009, %s19, 1
        %p3011 = scmp.lt.s32.totalorder %s20, 0
        %s3012 = scalar_select %p3011, %s20, 0
        %s3013 = smul.addr %s3010, 128
        %s3014 = sadd.s32 %s3012, %s3013
        %s3015 = smul.addr %s3014, 4
        %s3016 = scalar_lea.vmem %s2, %s3015
      $region40: #{critic_forward.5} parent=35 // pred_fallthru
        _
    $region36: #{critic_forward.5} parent=5 // pred_fallthru
      _
  $region6: #{critic_forward.5} parent=0 // loop_footer
    %s12 = sadd.s32 1, %s8
  $region7: #{critic_forward.5} parent=0 // loop_footer_branch
    %7 = sbr.rel target = $region3
  $region8: #{critic_forward.5} parent=0 // loop_exit
    _

// kernel: critic_forward.6
$region0: #{critic_forward.6}
  #allocation0 [shape = 'u32[]', space=smem, size = 0x4, offset = 0x4, fixed_abs, tag = 'smem constant byte address 0x4 - core index']
  #allocation1 [shape = 'u32[144,128]{1,0:T(1,128)}', space=vmem, size = 0x12000, scoped, tag = 'internal scratch']
  %s0 = inlined_call_operand.vmem [shape: bf16[2,272,128], index: 0, kind: input, shape index: {}]
  %s1 = inlined_call_operand.vmem [shape: bf16[2,128,32], index: 1, kind: input, shape index: {}]
  %s2 = inlined_call_operand.vmem [shape: bf16[2,256,32], index: 2, kind: output, shape index: {}]
  %s3 = sld [smem:[#allocation0]]
  $region18: #{critic_forward.6} parent=0
    _
  %s5 = ssub.s32 1, %s3
  %s6 = scalar_select 0, %s5, %s3
  // Predicated region
  $region2: #{critic_forward.6} parent=0 // pred_check
    _
  $region3: #{critic_forward.6} parent=0 // pred_check_branch
    %8 = sbr.rel (0) target = $region5
  $region4: #{critic_forward.6} parent=0 // pred_region
    _
  $region5: #{critic_forward.6} parent=0 // pred_fallthru
    _
  // Predicated region
  $region6: #{critic_forward.6} parent=0 // pred_check
    _
  $region7: #{critic_forward.6} parent=0 // pred_check_branch
    %10 = sbr.rel (0) target = $region9
  $region8: #{critic_forward.6} parent=0 // pred_region
    _
  $region9: #{critic_forward.6} parent=0 // pred_fallthru
    _
  %v12 = vld [vmem:[%s0] sm:$0xf]
  %v13 = vld [vmem:[%s0 + $0x4] sm:$0xf]
  %v14 = vld [vmem:[%s0 + $0x8] sm:$0xf]
  %v15 = vld [vmem:[%s0 + $0xc] sm:$0xf]
  %v16 = vld [vmem:[%s0 + $0x10] sm:$0xf]
  %v17 = vld [vmem:[%s0 + $0x14] sm:$0xf]
  %v18 = vld [vmem:[%s0 + $0x18] sm:$0xf]
  %v19 = vld [vmem:[%s0 + $0x1c] sm:$0xf]
  %v20 = vld [vmem:[%s0 + $0x20] sm:$0xf]
  %v21 = vld [vmem:[%s0 + $0x24] sm:$0xf]
  %v22 = vld [vmem:[%s0 + $0x28] sm:$0xf]
  %v23 = vld [vmem:[%s0 + $0x2c] sm:$0xf]
  %v24 = vld [vmem:[%s0 + $0x30] sm:$0xf]
  %v25 = vld [vmem:[%s0 + $0x34] sm:$0xf]
  %v26 = vld [vmem:[%s0 + $0x38] sm:$0xf]
  %v27 = vld [vmem:[%s0 + $0x3c] sm:$0xf]
  %v28 = vld [vmem:[%s0 + $0x40] sm:$0xf]
  %v29 = vld [vmem:[%s0 + $0x44] sm:$0xf]
  %v30 = vld [vmem:[%s0 + $0x48] sm:$0xf]
  %v31 = vld [vmem:[%s0 + $0x4c] sm:$0xf]
  %v32 = vld [vmem:[%s0 + $0x50] sm:$0xf]
  %v33 = vld [vmem:[%s0 + $0x54] sm:$0xf]
  %v34 = vld [vmem:[%s0 + $0x58] sm:$0xf]
  %v35 = vld [vmem:[%s0 + $0x5c] sm:$0xf]
  %v36 = vld [vmem:[%s0 + $0x60] sm:$0xf]
  %v37 = vld [vmem:[%s0 + $0x64] sm:$0xf]
  %v38 = vld [vmem:[%s0 + $0x68] sm:$0xf]
  %v39 = vld [vmem:[%s0 + $0x6c] sm:$0xf]
  %v40 = vld [vmem:[%s0 + $0x70] sm:$0xf]
  %v41 = vld [vmem:[%s0 + $0x74] sm:$0xf]
  %v42 = vld [vmem:[%s0 + $0x78] sm:$0xf]
  %v43 = vld [vmem:[%s0 + $0x7c] sm:$0xf]
  %v44 = vld [vmem:[%s0 + $0x88] sm:$0xf]
  %v45 = vld [vmem:[%s0 + $0x8c] sm:$0xf]
  %v46 = vld [vmem:[%s0 + $0x90] sm:$0xf]
  %v47 = vld [vmem:[%s0 + $0x94] sm:$0xf]
  %v48 = vld [vmem:[%s0 + $0x98] sm:$0xf]
  %v49 = vld [vmem:[%s0 + $0x9c] sm:$0xf]
  %v50 = vld [vmem:[%s0 + $0xa0] sm:$0xf]
  %v51 = vld [vmem:[%s0 + $0xa4] sm:$0xf]
  %v52 = vld [vmem:[%s0 + $0xa8] sm:$0xf]
  %v53 = vld [vmem:[%s0 + $0xac] sm:$0xf]
  %v54 = vld [vmem:[%s0 + $0xb0] sm:$0xf]
  %v55 = vld [vmem:[%s0 + $0xb4] sm:$0xf]
  %v56 = vld [vmem:[%s0 + $0xb8] sm:$0xf]
  %v57 = vld [vmem:[%s0 + $0xbc] sm:$0xf]
  %v58 = vld [vmem:[%s0 + $0xc0] sm:$0xf]
  %v59 = vld [vmem:[%s0 + $0xc4] sm:$0xf]
  %v60 = vld [vmem:[%s0 + $0xc8] sm:$0xf]
  %v61 = vld [vmem:[%s0 + $0xcc] sm:$0xf]
  %v62 = vld [vmem:[%s0 + $0xd0] sm:$0xf]
  %v63 = vld [vmem:[%s0 + $0xd4] sm:$0xf]
  %v64 = vld [vmem:[%s0 + $0xd8] sm:$0xf]
  %v65 = vld [vmem:[%s0 + $0xdc] sm:$0xf]
  %v66 = vld [vmem:[%s0 + $0xe0] sm:$0xf]
  %v67 = vld [vmem:[%s0 + $0xe4] sm:$0xf]
  %v68 = vld [vmem:[%s0 + $0xe8] sm:$0xf]
  %v69 = vld [vmem:[%s0 + $0xec] sm:$0xf]
  %v70 = vld [vmem:[%s0 + $0xf0] sm:$0xf]
  %v71 = vld [vmem:[%s0 + $0xf4] sm:$0xf]
  %v72 = vld [vmem:[%s0 + $0xf8] sm:$0xf]
  %v73 = vld [vmem:[%s0 + $0xfc] sm:$0xf]
  %v74 = vld [vmem:[%s0 + $0x100] sm:$0xf]
  %v75 = vld [vmem:[%s0 + $0x104] sm:$0xf]
  %v76 = vld [vmem:[%s1] sm:$0xf]
  %v77 = vld [vmem:[%s1 + $0x4] sm:$0xf]
  %v78 = vld [vmem:[%s1 + $0x8] sm:$0xf]
  %v79 = vld [vmem:[%s1 + $0xc] sm:$0xf]
  %v80 = vld [vmem:[%s1 + $0x10] sm:$0xf]
  %v81 = vld [vmem:[%s1 + $0x14] sm:$0xf]
  %v82 = vld [vmem:[%s1 + $0x18] sm:$0xf]
  %v83 = vld [vmem:[%s1 + $0x1c] sm:$0xf]
  %v84 = vld [vmem:[%s1 + $0x20] sm:$0xf]
  %v85 = vld [vmem:[%s1 + $0x24] sm:$0xf]
  %v86 = vld [vmem:[%s1 + $0x28] sm:$0xf]
  %v87 = vld [vmem:[%s1 + $0x2c] sm:$0xf]
  %v88 = vld [vmem:[%s1 + $0x30] sm:$0xf]
  %v89 = vld [vmem:[%s1 + $0x34] sm:$0xf]
  %v90 = vld [vmem:[%s1 + $0x38] sm:$0xf]
  %v91 = vld [vmem:[%s1 + $0x3c] sm:$0xf]
  %v92 = vld [vmem:[%s0 + $0x8] sm:$0xf]
  %v93 = vld [vmem:[%s0 + $0xc] sm:$0xf]
  %v94 = vld [vmem:[%s0 + $0x10] sm:$0xf]
  %v95 = vld [vmem:[%s0 + $0x14] sm:$0xf]
  %v96 = vld [vmem:[%s0 + $0x18] sm:$0xf]
  %v97 = vld [vmem:[%s0 + $0x1c] sm:$0xf]
  %v98 = vld [vmem:[%s0 + $0x20] sm:$0xf]
  %v99 = vld [vmem:[%s0 + $0x24] sm:$0xf]
  %v100 = vld [vmem:[%s0 + $0x28] sm:$0xf]
  %v101 = vld [vmem:[%s0 + $0x2c] sm:$0xf]
  %v102 = vld [vmem:[%s0 + $0x30] sm:$0xf]
  %v103 = vld [vmem:[%s0 + $0x34] sm:$0xf]
  %v104 = vld [vmem:[%s0 + $0x38] sm:$0xf]
  %v105 = vld [vmem:[%s0 + $0x3c] sm:$0xf]
  %v106 = vld [vmem:[%s0 + $0x40] sm:$0xf]
  %v107 = vld [vmem:[%s0 + $0x44] sm:$0xf]
  %v108 = vld [vmem:[%s0 + $0x48] sm:$0xf]
  %v109 = vld [vmem:[%s0 + $0x4c] sm:$0xf]
  %v110 = vld [vmem:[%s0 + $0x50] sm:$0xf]
  %v111 = vld [vmem:[%s0 + $0x54] sm:$0xf]
  %v112 = vld [vmem:[%s0 + $0x58] sm:$0xf]
  %v113 = vld [vmem:[%s0 + $0x5c] sm:$0xf]
  %v114 = vld [vmem:[%s0 + $0x60] sm:$0xf]
  %v115 = vld [vmem:[%s0 + $0x64] sm:$0xf]
  %v116 = vld [vmem:[%s0 + $0x68] sm:$0xf]
  %v117 = vld [vmem:[%s0 + $0x6c] sm:$0xf]
  %v118 = vld [vmem:[%s0 + $0x70] sm:$0xf]
  %v119 = vld [vmem:[%s0 + $0x74] sm:$0xf]
  %v120 = vld [vmem:[%s0 + $0x78] sm:$0xf]
  %v121 = vld [vmem:[%s0 + $0x7c] sm:$0xf]
  %v122 = vld [vmem:[%s0 + $0x80] sm:$0xf]
  %v123 = vld [vmem:[%s0 + $0x84] sm:$0xf]
  %v124 = vld [vmem:[%s0 + $0x90] sm:$0xf]
  %v125 = vld [vmem:[%s0 + $0x94] sm:$0xf]
  %v126 = vld [vmem:[%s0 + $0x98] sm:$0xf]
  %v127 = vld [vmem:[%s0 + $0x9c] sm:$0xf]
  %v128 = vld [vmem:[%s0 + $0xa0] sm:$0xf]
  %v129 = vld [vmem:[%s0 + $0xa4] sm:$0xf]
  %v130 = vld [vmem:[%s0 + $0xa8] sm:$0xf]
  %v131 = vld [vmem:[%s0 + $0xac] sm:$0xf]
  %v132 = vld [vmem:[%s0 + $0xb0] sm:$0xf]
  %v133 = vld [vmem:[%s0 + $0xb4] sm:$0xf]
  %v134 = vld [vmem:[%s0 + $0xb8] sm:$0xf]
  %v135 = vld [vmem:[%s0 + $0xbc] sm:$0xf]
  %v136 = vld [vmem:[%s0 + $0xc0] sm:$0xf]
  %v137 = vld [vmem:[%s0 + $0xc4] sm:$0xf]
  %v138 = vld [vmem:[%s0 + $0xc8] sm:$0xf]
  %v139 = vld [vmem:[%s0 + $0xcc] sm:$0xf]
  %v140 = vld [vmem:[%s0 + $0xd0] sm:$0xf]
  %v141 = vld [vmem:[%s0 + $0xd4] sm:$0xf]
  %v142 = vld [vmem:[%s0 + $0xd8] sm:$0xf]
  %v143 = vld [vmem:[%s0 + $0xdc] sm:$0xf]
  %v144 = vld [vmem:[%s0 + $0xe0] sm:$0xf]
  %v145 = vld [vmem:[%s0 + $0xe4] sm:$0xf]
  %v146 = vld [vmem:[%s0 + $0xe8] sm:$0xf]
  %v147 = vld [vmem:[%s0 + $0xec] sm:$0xf]
  %v148 = vld [vmem:[%s0 + $0xf0] sm:$0xf]
  %v149 = vld [vmem:[%s0 + $0xf4] sm:$0xf]
  %v150 = vld [vmem:[%s0 + $0xf8] sm:$0xf]
  %v151 = vld [vmem:[%s0 + $0xfc] sm:$0xf]
  %v152 = vld [vmem:[%s0 + $0x100] sm:$0xf]
  %v153 = vld [vmem:[%s0 + $0x104] sm:$0xf]
  %v154 = vld [vmem:[%s0 + $0x108] sm:$0xf]
  %v155 = vld [vmem:[%s0 + $0x10c] sm:$0xf]
  %s156 = scalar_lea.vmem %s1, 64
  %v157 = vld [vmem:[%s156] sm:$0xf]
  %v158 = vld [vmem:[%s156 + $0x4] sm:$0xf]
  %v159 = vld [vmem:[%s156 + $0x8] sm:$0xf]
  %v160 = vld [vmem:[%s156 + $0xc] sm:$0xf]
  %v161 = vld [vmem:[%s156 + $0x10] sm:$0xf]
  %v162 = vld [vmem:[%s156 + $0x14] sm:$0xf]
  %v163 = vld [vmem:[%s156 + $0x18] sm:$0xf]
  %v164 = vld [vmem:[%s156 + $0x1c] sm:$0xf]
  %v165 = vld [vmem:[%s156 + $0x20] sm:$0xf]
  %v166 = vld [vmem:[%s156 + $0x24] sm:$0xf]
  %v167 = vld [vmem:[%s156 + $0x28] sm:$0xf]
  %v168 = vld [vmem:[%s156 + $0x2c] sm:$0xf]
  %v169 = vld [vmem:[%s156 + $0x30] sm:$0xf]
  %v170 = vld [vmem:[%s156 + $0x34] sm:$0xf]
  %v171 = vld [vmem:[%s156 + $0x38] sm:$0xf]
  %v172 = vld [vmem:[%s156 + $0x3c] sm:$0xf]
  %v237 = vunpack.c.l.b16 %v92
  %v238 = vunpack.c.l.b16 %v93
  %v239 = vunpack.c.l.b16 %v94
  %v240 = vunpack.c.l.b16 %v95
  %v241 = vunpack.c.l.b16 %v96
  %v242 = vunpack.c.l.b16 %v97
  %v243 = vunpack.c.l.b16 %v98
  %v244 = vunpack.c.l.b16 %v99
  %v245 = vunpack.c.l.b16 %v100
  %v246 = vunpack.c.l.b16 %v101
  %v247 = vunpack.c.l.b16 %v102
  %v248 = vunpack.c.l.b16 %v103
  %v249 = vunpack.c.l.b16 %v104
  %v250 = vunpack.c.l.b16 %v105
  %v251 = vunpack.c.l.b16 %v106
  %v252 = vunpack.c.l.b16 %v107
  %v253 = vunpack.c.l.b16 %v108
  %v254 = vunpack.c.l.b16 %v109
  %v255 = vunpack.c.l.b16 %v110
  %v256 = vunpack.c.l.b16 %v111
  %v257 = vunpack.c.l.b16 %v112
  %v258 = vunpack.c.l.b16 %v113
  %v259 = vunpack.c.l.b16 %v114
  %v260 = vunpack.c.l.b16 %v115
  %v261 = vunpack.c.l.b16 %v116
  %v262 = vunpack.c.l.b16 %v117
  %v263 = vunpack.c.l.b16 %v118
  %v264 = vunpack.c.l.b16 %v119
  %v265 = vunpack.c.l.b16 %v120
  %v266 = vunpack.c.l.b16 %v121
  %v267 = vunpack.c.l.b16 %v122
  %v268 = vunpack.c.l.b16 %v123
  %v269 = vunpack.c.l.b16 %v124
  %v270 = vunpack.c.l.b16 %v125
  %v271 = vunpack.c.l.b16 %v126
  %v272 = vunpack.c.l.b16 %v127
  %v273 = vunpack.c.l.b16 %v128
  %v274 = vunpack.c.l.b16 %v129
  %v275 = vunpack.c.l.b16 %v130
  %v276 = vunpack.c.l.b16 %v131
  %v277 = vunpack.c.l.b16 %v132
  %v278 = vunpack.c.l.b16 %v133
  %v279 = vunpack.c.l.b16 %v134
  %v280 = vunpack.c.l.b16 %v135
  %v281 = vunpack.c.l.b16 %v136
  %v282 = vunpack.c.l.b16 %v137
  %v283 = vunpack.c.l.b16 %v138
  %v284 = vunpack.c.l.b16 %v139
  %v285 = vunpack.c.l.b16 %v140
  %v286 = vunpack.c.l.b16 %v141
  %v287 = vunpack.c.l.b16 %v142
  %v288 = vunpack.c.l.b16 %v143
  %v289 = vunpack.c.l.b16 %v144
  %v290 = vunpack.c.l.b16 %v145
  %v291 = vunpack.c.l.b16 %v146
  %v292 = vunpack.c.l.b16 %v147
  %v293 = vunpack.c.l.b16 %v148
  %v294 = vunpack.c.l.b16 %v149
  %v295 = vunpack.c.l.b16 %v150
  %v296 = vunpack.c.l.b16 %v151
  %v297 = vunpack.c.l.b16 %v152
  %v298 = vunpack.c.l.b16 %v153
  %v299 = vunpack.c.l.b16 %v154
  %v300 = vunpack.c.l.b16 %v155
  %v301 = vpack.c.b16 %v238, %v237
  %v302 = vpack.c.b16 %v240, %v239
  %v303 = vpack.c.b16 %v242, %v241
  %v304 = vpack.c.b16 %v244, %v243
  %v305 = vpack.c.b16 %v246, %v245
  %v306 = vpack.c.b16 %v248, %v247
  %v307 = vpack.c.b16 %v250, %v249
  %v308 = vpack.c.b16 %v252, %v251
  %v309 = vpack.c.b16 %v254, %v253
  %v310 = vpack.c.b16 %v256, %v255
  %v311 = vpack.c.b16 %v258, %v257
  %v312 = vpack.c.b16 %v260, %v259
  %v313 = vpack.c.b16 %v262, %v261
  %v314 = vpack.c.b16 %v264, %v263
  %v315 = vpack.c.b16 %v266, %v265
  %v316 = vpack.c.b16 %v268, %v267
  %v317 = vpack.c.b16 %v270, %v269
  %v318 = vpack.c.b16 %v272, %v271
  %v319 = vpack.c.b16 %v274, %v273
  %v320 = vpack.c.b16 %v276, %v275
  %v321 = vpack.c.b16 %v278, %v277
  %v322 = vpack.c.b16 %v280, %v279
  %v323 = vpack.c.b16 %v282, %v281
  %v324 = vpack.c.b16 %v284, %v283
  %v325 = vpack.c.b16 %v286, %v285
  %v326 = vpack.c.b16 %v288, %v287
  %v327 = vpack.c.b16 %v290, %v289
  %v328 = vpack.c.b16 %v292, %v291
  %v329 = vpack.c.b16 %v294, %v293
  %v330 = vpack.c.b16 %v296, %v295
  %v331 = vpack.c.b16 %v298, %v297
  %v332 = vpack.c.b16 %v300, %v299
  %v381 = vunpack.c.l.b16 %v157
  %v382 = vunpack.c.l.b16 %v158
  %v383 = vunpack.c.l.b16 %v159
  %v384 = vunpack.c.l.b16 %v160
  %v385 = vunpack.c.l.b16 %v161
  %v386 = vunpack.c.l.b16 %v162
  %v387 = vunpack.c.l.b16 %v163
  %v388 = vunpack.c.l.b16 %v164
  %v389 = vunpack.c.l.b16 %v165
  %v390 = vunpack.c.l.b16 %v166
  %v391 = vunpack.c.l.b16 %v167
  %v392 = vunpack.c.l.b16 %v168
  %v393 = vunpack.c.l.b16 %v169
  %v394 = vunpack.c.l.b16 %v170
  %v395 = vunpack.c.l.b16 %v171
  %v396 = vunpack.c.l.b16 %v172
  %v397 = vpack.c.b16 %v382, %v381
  %v398 = vpack.c.b16 %v384, %v383
  %v399 = vpack.c.b16 %v386, %v385
  %v400 = vpack.c.b16 %v388, %v387
  %v401 = vpack.c.b16 %v390, %v389
  %v402 = vpack.c.b16 %v392, %v391
  %v403 = vpack.c.b16 %v394, %v393
  %v404 = vpack.c.b16 %v396, %v395
  %413 = vmatprep.subr.bf16.mxu0 0
  %414 = vmatpush1.bf16.msra.mxu0 %v404
  %415 = vmatprep.subr.bf16.mxu0 0
  %416 = vmatpush1.bf16.msra.mxu0 %v403
  %417 = vmatprep.subr.bf16.mxu0 0
  %418 = vmatpush1.bf16.msra.mxu0 %v402
  %419 = vmatprep.subr.bf16.mxu0 0
  %420 = vmatpush1.bf16.msra.mxu0 %v401
  %421 = vmatprep.subr.bf16.mxu0 0
  %422 = vmatpush1.bf16.msra.mxu0 %v400
  %423 = vmatprep.subr.bf16.mxu0 0
  %424 = vmatpush1.bf16.msra.mxu0 %v399
  %425 = vmatprep.subr.bf16.mxu0 0
  %426 = vmatpush1.bf16.msra.mxu0 %v398
  %427 = vmatprep.subr.bf16.mxu0 0
  %428 = vmatpush1.bf16.msra.mxu0 %v397
  %429 = vmatprep.subr.bf16.mxu0 0
  %430 = vmatpush2.bf16.msra.mxu0 0
  %431 = vmatprep.subr.bf16.mxu0 0
  %432 = vmatpush2.bf16.msra.mxu0 0
  %433 = vmatprep.subr.bf16.mxu0 0
  %434 = vmatpush2.bf16.msra.mxu0 0
  %435 = vmatprep.subr.bf16.mxu0 0
  %436 = vmatpush2.bf16.msra.mxu0 0
  %437 = vmatprep.subr.bf16.mxu0 0
  %438 = vmatpush2.bf16.msra.mxu0 0
  %439 = vmatprep.subr.bf16.mxu0 0
  %440 = vmatpush2.bf16.msra.mxu0 0
  %441 = vmatprep.subr.bf16.mxu0 0
  %442 = vmatpush2.bf16.msra.mxu0 0
  %443 = vmatprep.subr.bf16.mxu0 0
  %444 = vmatpush2.bf16.msra.mxu0 0
  %445 = vmatprep.mubr.bf16.mxu0 0
  %446 = vmatmul.mubr.bf16.gmra.mxu0 %v301
  %v447 = vpop.f32.mrf.mxu0
  %v448 = vadd.f32 0.0, %v447
  %v449 = vpop.f32.mrf.mxu0
  %v450 = vpop.f32.mrf.mxu0
  %v451 = vadd.f32 0.0, %v450
  %v452 = vpop.f32.mrf.mxu0
  %453 = vmatprep.mubr.bf16.mxu0 0
  %454 = vmatmul.mubr.bf16.gmra.mxu0 %v302
  %v455 = vpop.f32.mrf.mxu0
  %v456 = vadd.f32 0.0, %v455
  %v457 = vpop.f32.mrf.mxu0
  %v458 = vpop.f32.mrf.mxu0
  %v459 = vadd.f32 0.0, %v458
  %v460 = vpop.f32.mrf.mxu0
  %461 = vmatprep.mubr.bf16.mxu0 0
  %462 = vmatmul.mubr.bf16.gmra.mxu0 %v303
  %v463 = vpop.f32.mrf.mxu0
  %v464 = vadd.f32 0.0, %v463
  %v465 = vpop.f32.mrf.mxu0
  %v466 = vpop.f32.mrf.mxu0
  %v467 = vadd.f32 0.0, %v466
  %v468 = vpop.f32.mrf.mxu0
  %469 = vmatprep.mubr.bf16.mxu0 0
  %470 = vmatmul.mubr.bf16.gmra.mxu0 %v304
  %v471 = vpop.f32.mrf.mxu0
  %v472 = vadd.f32 0.0, %v471
  %v473 = vpop.f32.mrf.mxu0
  %v474 = vpop.f32.mrf.mxu0
  %v475 = vadd.f32 0.0, %v474
  %v476 = vpop.f32.mrf.mxu0
  %477 = vmatprep.mubr.bf16.mxu0 0
  %478 = vmatmul.mubr.bf16.gmra.mxu0 %v305
  %v479 = vpop.f32.mrf.mxu0
  %v480 = vadd.f32 0.0, %v479
  %v481 = vpop.f32.mrf.mxu0
  %v482 = vpop.f32.mrf.mxu0
  %v483 = vadd.f32 0.0, %v482
  %v484 = vpop.f32.mrf.mxu0
  %485 = vmatprep.mubr.bf16.mxu0 0
  %486 = vmatmul.mubr.bf16.gmra.mxu0 %v306
  %v487 = vpop.f32.mrf.mxu0
  %v488 = vadd.f32 0.0, %v487
  %v489 = vpop.f32.mrf.mxu0
  %v490 = vpop.f32.mrf.mxu0
  %v491 = vadd.f32 0.0, %v490
  %v492 = vpop.f32.mrf.mxu0
  %493 = vmatprep.mubr.bf16.mxu0 0
  %494 = vmatmul.mubr.bf16.gmra.mxu0 %v307
  %v495 = vpop.f32.mrf.mxu0
  %v496 = vadd.f32 0.0, %v495
  %v497 = vpop.f32.mrf.mxu0
  %v498 = vpop.f32.mrf.mxu0
  %v499 = vadd.f32 0.0, %v498
  %v500 = vpop.f32.mrf.mxu0
  %501 = vmatprep.mubr.bf16.mxu0 0
  %502 = vmatmul.mubr.bf16.gmra.mxu0 %v308
  %v503 = vpop.f32.mrf.mxu0
  %v504 = vadd.f32 0.0, %v503
  %v505 = vpop.f32.mrf.mxu0
  %v506 = vpop.f32.mrf.mxu0
  %v507 = vadd.f32 0.0, %v506
  %v508 = vpop.f32.mrf.mxu0
  %509 = vmatprep.mubr.bf16.mxu0 0
  %510 = vmatmul.mubr.bf16.gmra.mxu0 %v309
  %v511 = vpop.f32.mrf.mxu0
  %v512 = vadd.f32 0.0, %v511
  %v513 = vpop.f32.mrf.mxu0
  %v514 = vpop.f32.mrf.mxu0
  %v515 = vadd.f32 0.0, %v514
  %v516 = vpop.f32.mrf.mxu0
  %517 = vmatprep.mubr.bf16.mxu0 0
  %518 = vmatmul.mubr.bf16.gmra.mxu0 %v310
  %v519 = vpop.f32.mrf.mxu0
  %v520 = vadd.f32 0.0, %v519
  %v521 = vpop.f32.mrf.mxu0
  %v522 = vpop.f32.mrf.mxu0
  %v523 = vadd.f32 0.0, %v522
  %v524 = vpop.f32.mrf.mxu0
  %525 = vmatprep.mubr.bf16.mxu0 0
  %526 = vmatmul.mubr.bf16.gmra.mxu0 %v311
  %v527 = vpop.f32.mrf.mxu0
  %v528 = vadd.f32 0.0, %v527
  %v529 = vpop.f32.mrf.mxu0
  %v530 = vpop.f32.mrf.mxu0
  %v531 = vadd.f32 0.0, %v530
  %v532 = vpop.f32.mrf.mxu0
  %533 = vmatprep.mubr.bf16.mxu0 0
  %534 = vmatmul.mubr.bf16.gmra.mxu0 %v312
  %v535 = vpop.f32.mrf.mxu0
  %v536 = vadd.f32 0.0, %v535
  %v537 = vpop.f32.mrf.mxu0
  %v538 = vpop.f32.mrf.mxu0
  %v539 = vadd.f32 0.0, %v538
  %v540 = vpop.f32.mrf.mxu0
  %541 = vmatprep.mubr.bf16.mxu0 0
  %542 = vmatmul.mubr.bf16.gmra.mxu0 %v313
  %v543 = vpop.f32.mrf.mxu0
  %v544 = vadd.f32 0.0, %v543
  %v545 = vpop.f32.mrf.mxu0
  %v546 = vpop.f32.mrf.mxu0
  %v547 = vadd.f32 0.0, %v546
  %v548 = vpop.f32.mrf.mxu0
  %549 = vmatprep.mubr.bf16.mxu0 0
  %550 = vmatmul.mubr.bf16.gmra.mxu0 %v314
  %v551 = vpop.f32.mrf.mxu0
  %v552 = vadd.f32 0.0, %v551
  %v553 = vpop.f32.mrf.mxu0
  %v554 = vpop.f32.mrf.mxu0
  %v555 = vadd.f32 0.0, %v554
  %v556 = vpop.f32.mrf.mxu0
  %557 = vmatprep.mubr.bf16.mxu0 0
  %558 = vmatmul.mubr.bf16.gmra.mxu0 %v315
  %v559 = vpop.f32.mrf.mxu0
  %v560 = vadd.f32 0.0, %v559
  %v561 = vpop.f32.mrf.mxu0
  %v562 = vpop.f32.mrf.mxu0
  %v563 = vadd.f32 0.0, %v562
  %v564 = vpop.f32.mrf.mxu0
  %565 = vmatprep.mubr.bf16.mxu0 0
  %566 = vmatmul.mubr.bf16.gmra.mxu0 %v316
  %v567 = vpop.f32.mrf.mxu0
  %v568 = vadd.f32 0.0, %v567
  %v569 = vpop.f32.mrf.mxu0
  %v570 = vpop.f32.mrf.mxu0
  %v571 = vadd.f32 0.0, %v570
  %v572 = vpop.f32.mrf.mxu0
  %573 = vmatprep.mubr.bf16.mxu0 0
  %574 = vmatmul.mubr.bf16.gmra.mxu0 %v317
  %v575 = vpop.f32.mrf.mxu0
  %v576 = vadd.f32 0.0, %v575
  %v577 = vpop.f32.mrf.mxu0
  %v578 = vpop.f32.mrf.mxu0
  %v579 = vadd.f32 0.0, %v578
  %v580 = vpop.f32.mrf.mxu0
  %581 = vmatprep.mubr.bf16.mxu0 0
  %582 = vmatmul.mubr.bf16.gmra.mxu0 %v318
  %v583 = vpop.f32.mrf.mxu0
  %v584 = vadd.f32 0.0, %v583
  %v585 = vpop.f32.mrf.mxu0
  %v586 = vpop.f32.mrf.mxu0
  %v587 = vadd.f32 0.0, %v586
  %v588 = vpop.f32.mrf.mxu0
  %589 = vmatprep.mubr.bf16.mxu0 0
  %590 = vmatmul.mubr.bf16.gmra.mxu0 %v319
  %v591 = vpop.f32.mrf.mxu0
  %v592 = vadd.f32 0.0, %v591
  %v593 = vpop.f32.mrf.mxu0
  %v594 = vpop.f32.mrf.mxu0
  %v595 = vadd.f32 0.0, %v594
  %v596 = vpop.f32.mrf.mxu0
  %597 = vmatprep.mubr.bf16.mxu0 0
  %598 = vmatmul.mubr.bf16.gmra.mxu0 %v320
  %v599 = vpop.f32.mrf.mxu0
  %v600 = vadd.f32 0.0, %v599
  %v601 = vpop.f32.mrf.mxu0
  %v602 = vpop.f32.mrf.mxu0
  %v603 = vadd.f32 0.0, %v602
  %v604 = vpop.f32.mrf.mxu0
  %605 = vmatprep.mubr.bf16.mxu0 0
  %606 = vmatmul.mubr.bf16.gmra.mxu0 %v321
  %v607 = vpop.f32.mrf.mxu0
  %v608 = vadd.f32 0.0, %v607
  %v609 = vpop.f32.mrf.mxu0
  %v610 = vpop.f32.mrf.mxu0
  %v611 = vadd.f32 0.0, %v610
  %v612 = vpop.f32.mrf.mxu0
  %613 = vmatprep.mubr.bf16.mxu0 0
  %614 = vmatmul.mubr.bf16.gmra.mxu0 %v322
  %v615 = vpop.f32.mrf.mxu0
  %v616 = vadd.f32 0.0, %v615
  %v617 = vpop.f32.mrf.mxu0
  %v618 = vpop.f32.mrf.mxu0
  %v619 = vadd.f32 0.0, %v618
  %v620 = vpop.f32.mrf.mxu0
  %621 = vmatprep.mubr.bf16.mxu0 0
  %622 = vmatmul.mubr.bf16.gmra.mxu0 %v323
  %v623 = vpop.f32.mrf.mxu0
  %v624 = vadd.f32 0.0, %v623
  %v625 = vpop.f32.mrf.mxu0
  %v626 = vpop.f32.mrf.mxu0
  %v627 = vadd.f32 0.0, %v626
  %v628 = vpop.f32.mrf.mxu0
  %629 = vmatprep.mubr.bf16.mxu0 0
  %630 = vmatmul.mubr.bf16.gmra.mxu0 %v324
  %v631 = vpop.f32.mrf.mxu0
  %v632 = vadd.f32 0.0, %v631
  %v633 = vpop.f32.mrf.mxu0
  %v634 = vpop.f32.mrf.mxu0
  %v635 = vadd.f32 0.0, %v634
  %v636 = vpop.f32.mrf.mxu0
  %637 = vmatprep.mubr.bf16.mxu0 0
  %638 = vmatmul.mubr.bf16.gmra.mxu0 %v325
  %v639 = vpop.f32.mrf.mxu0
  %v640 = vadd.f32 0.0, %v639
  %v641 = vpop.f32.mrf.mxu0
  %v642 = vpop.f32.mrf.mxu0
  %v643 = vadd.f32 0.0, %v642
  %v644 = vpop.f32.mrf.mxu0
  %645 = vmatprep.mubr.bf16.mxu0 0
  %646 = vmatmul.mubr.bf16.gmra.mxu0 %v326
  %v647 = vpop.f32.mrf.mxu0
  %v648 = vadd.f32 0.0, %v647
  %v649 = vpop.f32.mrf.mxu0
  %v650 = vpop.f32.mrf.mxu0
  %v651 = vadd.f32 0.0, %v650
  %v652 = vpop.f32.mrf.mxu0
  %653 = vmatprep.mubr.bf16.mxu0 0
  %654 = vmatmul.mubr.bf16.gmra.mxu0 %v327
  %v655 = vpop.f32.mrf.mxu0
  %v656 = vadd.f32 0.0, %v655
  %v657 = vpop.f32.mrf.mxu0
  %v658 = vpop.f32.mrf.mxu0
  %v659 = vadd.f32 0.0, %v658
  %v660 = vpop.f32.mrf.mxu0
  %661 = vmatprep.mubr.bf16.mxu0 0
  %662 = vmatmul.mubr.bf16.gmra.mxu0 %v328
  %v663 = vpop.f32.mrf.mxu0
  %v664 = vadd.f32 0.0, %v663
  %v665 = vpop.f32.mrf.mxu0
  %v666 = vpop.f32.mrf.mxu0
  %v667 = vadd.f32 0.0, %v666
  %v668 = vpop.f32.mrf.mxu0
  %669 = vmatprep.mubr.bf16.mxu0 0
  %670 = vmatmul.mubr.bf16.gmra.mxu0 %v329
  %v671 = vpop.f32.mrf.mxu0
  %v672 = vadd.f32 0.0, %v671
  %v673 = vpop.f32.mrf.mxu0
  %v674 = vpop.f32.mrf.mxu0
  %v675 = vadd.f32 0.0, %v674
  %v676 = vpop.f32.mrf.mxu0
  %677 = vmatprep.mubr.bf16.mxu0 0
  %678 = vmatmul.mubr.bf16.gmra.mxu0 %v330
  %v679 = vpop.f32.mrf.mxu0
  %v680 = vadd.f32 0.0, %v679
  %v681 = vpop.f32.mrf.mxu0
  %v682 = vpop.f32.mrf.mxu0
  %v683 = vadd.f32 0.0, %v682
  %v684 = vpop.f32.mrf.mxu0
  %685 = vmatprep.mubr.bf16.mxu0 0
  %686 = vmatmul.mubr.bf16.gmra.mxu0 %v331
  %v687 = vpop.f32.mrf.mxu0
  %v688 = vadd.f32 0.0, %v687
  %v689 = vpop.f32.mrf.mxu0
  %v690 = vpop.f32.mrf.mxu0
  %v691 = vadd.f32 0.0, %v690
  %v692 = vpop.f32.mrf.mxu0
  %693 = vmatprep.mubr.bf16.mxu0 0
  %694 = vmatmul.mubr.bf16.gmra.mxu0 %v332
  %v695 = vpop.f32.mrf.mxu0
  %v696 = vadd.f32 0.0, %v695
  %v697 = vpop.f32.mrf.mxu0
  %v698 = vpop.f32.mrf.mxu0
  %v699 = vadd.f32 0.0, %v698
  %v700 = vpop.f32.mrf.mxu0
  %701 = vdwg.mxu0
  %v766 = vunpack.c.l.b16 %v12
  %v767 = vunpack.c.l.b16 %v13
  %v768 = vunpack.c.l.b16 %v14
  %v769 = vunpack.c.l.b16 %v15
  %v770 = vunpack.c.l.b16 %v16
  %v771 = vunpack.c.l.b16 %v17
  %v772 = vunpack.c.l.b16 %v18
  %v773 = vunpack.c.l.b16 %v19
  %v774 = vunpack.c.l.b16 %v20
  %v775 = vunpack.c.l.b16 %v21
  %v776 = vunpack.c.l.b16 %v22
  %v777 = vunpack.c.l.b16 %v23
  %v778 = vunpack.c.l.b16 %v24
  %v779 = vunpack.c.l.b16 %v25
  %v780 = vunpack.c.l.b16 %v26
  %v781 = vunpack.c.l.b16 %v27
  %v782 = vunpack.c.l.b16 %v28
  %v783 = vunpack.c.l.b16 %v29
  %v784 = vunpack.c.l.b16 %v30
  %v785 = vunpack.c.l.b16 %v31
  %v786 = vunpack.c.l.b16 %v32
  %v787 = vunpack.c.l.b16 %v33
  %v788 = vunpack.c.l.b16 %v34
  %v789 = vunpack.c.l.b16 %v35
  %v790 = vunpack.c.l.b16 %v36
  %v791 = vunpack.c.l.b16 %v37
  %v792 = vunpack.c.l.b16 %v38
  %v793 = vunpack.c.l.b16 %v39
  %v794 = vunpack.c.l.b16 %v40
  %v795 = vunpack.c.l.b16 %v41
  %v796 = vunpack.c.l.b16 %v42
  %v797 = vunpack.c.l.b16 %v43
  %v798 = vunpack.c.l.b16 %v44
  %v799 = vunpack.c.l.b16 %v45
  %v800 = vunpack.c.l.b16 %v46
  %v801 = vunpack.c.l.b16 %v47
  %v802 = vunpack.c.l.b16 %v48
  %v803 = vunpack.c.l.b16 %v49
  %v804 = vunpack.c.l.b16 %v50
  %v805 = vunpack.c.l.b16 %v51
  %v806 = vunpack.c.l.b16 %v52
  %v807 = vunpack.c.l.b16 %v53
  %v808 = vunpack.c.l.b16 %v54
  %v809 = vunpack.c.l.b16 %v55
  %v810 = vunpack.c.l.b16 %v56
  %v811 = vunpack.c.l.b16 %v57
  %v812 = vunpack.c.l.b16 %v58
  %v813 = vunpack.c.l.b16 %v59
  %v814 = vunpack.c.l.b16 %v60
  %v815 = vunpack.c.l.b16 %v61
  %v816 = vunpack.c.l.b16 %v62
  %v817 = vunpack.c.l.b16 %v63
  %v818 = vunpack.c.l.b16 %v64
  %v819 = vunpack.c.l.b16 %v65
  %v820 = vunpack.c.l.b16 %v66
  %v821 = vunpack.c.l.b16 %v67
  %v822 = vunpack.c.l.b16 %v68
  %v823 = vunpack.c.l.b16 %v69
  %v824 = vunpack.c.l.b16 %v70
  %v825 = vunpack.c.l.b16 %v71
  %v826 = vunpack.c.l.b16 %v72
  %v827 = vunpack.c.l.b16 %v73
  %v828 = vunpack.c.l.b16 %v74
  %v829 = vunpack.c.l.b16 %v75
  %v830 = vpack.c.b16 %v767, %v766
  %v831 = vpack.c.b16 %v769, %v768
  %v832 = vpack.c.b16 %v771, %v770
  %v833 = vpack.c.b16 %v773, %v772
  %v834 = vpack.c.b16 %v775, %v774
  %v835 = vpack.c.b16 %v777, %v776
  %v836 = vpack.c.b16 %v779, %v778
  %v837 = vpack.c.b16 %v781, %v780
  %v838 = vpack.c.b16 %v783, %v782
  %v839 = vpack.c.b16 %v785, %v784
  %v840 = vpack.c.b16 %v787, %v786
  %v841 = vpack.c.b16 %v789, %v788
  %v842 = vpack.c.b16 %v791, %v790
  %v843 = vpack.c.b16 %v793, %v792
  %v844 = vpack.c.b16 %v795, %v794
  %v845 = vpack.c.b16 %v797, %v796
  %v846 = vpack.c.b16 %v799, %v798
  %v847 = vpack.c.b16 %v801, %v800
  %v848 = vpack.c.b16 %v803, %v802
  %v849 = vpack.c.b16 %v805, %v804
  %v850 = vpack.c.b16 %v807, %v806
  %v851 = vpack.c.b16 %v809, %v808
  %v852 = vpack.c.b16 %v811, %v810
  %v853 = vpack.c.b16 %v813, %v812
  %v854 = vpack.c.b16 %v815, %v814
  %v855 = vpack.c.b16 %v817, %v816
  %v856 = vpack.c.b16 %v819, %v818
  %v857 = vpack.c.b16 %v821, %v820
  %v858 = vpack.c.b16 %v823, %v822
  %v859 = vpack.c.b16 %v825, %v824
  %v860 = vpack.c.b16 %v827, %v826
  %v861 = vpack.c.b16 %v829, %v828
  %v910 = vunpack.c.l.b16 %v76
  %v911 = vunpack.c.l.b16 %v77
  %v912 = vunpack.c.l.b16 %v78
  %v913 = vunpack.c.l.b16 %v79
  %v914 = vunpack.c.l.b16 %v80
  %v915 = vunpack.c.l.b16 %v81
  %v916 = vunpack.c.l.b16 %v82
  %v917 = vunpack.c.l.b16 %v83
  %v918 = vunpack.c.l.b16 %v84
  %v919 = vunpack.c.l.b16 %v85
  %v920 = vunpack.c.l.b16 %v86
  %v921 = vunpack.c.l.b16 %v87
  %v922 = vunpack.c.l.b16 %v88
  %v923 = vunpack.c.l.b16 %v89
  %v924 = vunpack.c.l.b16 %v90
  %v925 = vunpack.c.l.b16 %v91
  %v926 = vpack.c.b16 %v911, %v910
  %v927 = vpack.c.b16 %v913, %v912
  %v928 = vpack.c.b16 %v915, %v914
  %v929 = vpack.c.b16 %v917, %v916
  %v930 = vpack.c.b16 %v919, %v918
  %v931 = vpack.c.b16 %v921, %v920
  %v932 = vpack.c.b16 %v923, %v922
  %v933 = vpack.c.b16 %v925, %v924
  %942 = vmatprep.subr.bf16.mxu0 0
  %943 = vmatpush1.bf16.msra.mxu0 %v933
  %944 = vmatprep.subr.bf16.mxu0 0
  %945 = vmatpush1.bf16.msra.mxu0 %v932
  %946 = vmatprep.subr.bf16.mxu0 0
  %947 = vmatpush1.bf16.msra.mxu0 %v931
  %948 = vmatprep.subr.bf16.mxu0 0
  %949 = vmatpush1.bf16.msra.mxu0 %v930
  %950 = vmatprep.subr.bf16.mxu0 0
  %951 = vmatpush1.bf16.msra.mxu0 %v929
  %952 = vmatprep.subr.bf16.mxu0 0
  %953 = vmatpush1.bf16.msra.mxu0 %v928
  %954 = vmatprep.subr.bf16.mxu0 0
  %955 = vmatpush1.bf16.msra.mxu0 %v927
  %956 = vmatprep.subr.bf16.mxu0 0
  %957 = vmatpush1.bf16.msra.mxu0 %v926
  %958 = vmatprep.subr.bf16.mxu0 0
  %959 = vmatpush2.bf16.msra.mxu0 0
  %960 = vmatprep.subr.bf16.mxu0 0
  %961 = vmatpush2.bf16.msra.mxu0 0
  %962 = vmatprep.subr.bf16.mxu0 0
  %963 = vmatpush2.bf16.msra.mxu0 0
  %964 = vmatprep.subr.bf16.mxu0 0
  %965 = vmatpush2.bf16.msra.mxu0 0
  %966 = vmatprep.subr.bf16.mxu0 0
  %967 = vmatpush2.bf16.msra.mxu0 0
  %968 = vmatprep.subr.bf16.mxu0 0
  %969 = vmatpush2.bf16.msra.mxu0 0
  %970 = vmatprep.subr.bf16.mxu0 0
  %971 = vmatpush2.bf16.msra.mxu0 0
  %972 = vmatprep.subr.bf16.mxu0 0
  %973 = vmatpush2.bf16.msra.mxu0 0
  %974 = vmatprep.mubr.bf16.mxu0 0
  %975 = vmatmul.mubr.bf16.gmra.mxu0 %v830
  %v976 = vpop.f32.mrf.mxu0
  %v977 = vadd.f32 %v448, %v976
  %v978 = vpop.f32.mrf.mxu0
  %v979 = vpop.f32.mrf.mxu0
  %v980 = vadd.f32 %v451, %v979
  %v981 = vpop.f32.mrf.mxu0
  %982 = vmatprep.mubr.bf16.mxu0 0
  %983 = vmatmul.mubr.bf16.gmra.mxu0 %v831
  %v984 = vpop.f32.mrf.mxu0
  %v985 = vadd.f32 %v456, %v984
  %v986 = vpop.f32.mrf.mxu0
  %v987 = vpop.f32.mrf.mxu0
  %v988 = vadd.f32 %v459, %v987
  %v989 = vpop.f32.mrf.mxu0
  %990 = vmatprep.mubr.bf16.mxu0 0
  %991 = vmatmul.mubr.bf16.gmra.mxu0 %v832
  %v992 = vpop.f32.mrf.mxu0
  %v993 = vadd.f32 %v464, %v992
  %v994 = vpop.f32.mrf.mxu0
  %v995 = vpop.f32.mrf.mxu0
  %v996 = vadd.f32 %v467, %v995
  %v997 = vpop.f32.mrf.mxu0
  %998 = vmatprep.mubr.bf16.mxu0 0
  %999 = vmatmul.mubr.bf16.gmra.mxu0 %v833
  %v1000 = vpop.f32.mrf.mxu0
  %v1001 = vadd.f32 %v472, %v1000
  %v1002 = vpop.f32.mrf.mxu0
  %v1003 = vpop.f32.mrf.mxu0
  %v1004 = vadd.f32 %v475, %v1003
  %v1005 = vpop.f32.mrf.mxu0
  %1006 = vmatprep.mubr.bf16.mxu0 0
  %1007 = vmatmul.mubr.bf16.gmra.mxu0 %v834
  %v1008 = vpop.f32.mrf.mxu0
  %v1009 = vadd.f32 %v480, %v1008
  %v1010 = vpop.f32.mrf.mxu0
  %v1011 = vpop.f32.mrf.mxu0
  %v1012 = vadd.f32 %v483, %v1011
  %v1013 = vpop.f32.mrf.mxu0
  %1014 = vmatprep.mubr.bf16.mxu0 0
  %1015 = vmatmul.mubr.bf16.gmra.mxu0 %v835
  %v1016 = vpop.f32.mrf.mxu0
  %v1017 = vadd.f32 %v488, %v1016
  %v1018 = vpop.f32.mrf.mxu0
  %v1019 = vpop.f32.mrf.mxu0
  %v1020 = vadd.f32 %v491, %v1019
  %v1021 = vpop.f32.mrf.mxu0
  %1022 = vmatprep.mubr.bf16.mxu0 0
  %1023 = vmatmul.mubr.bf16.gmra.mxu0 %v836
  %v1024 = vpop.f32.mrf.mxu0
  %v1025 = vadd.f32 %v496, %v1024
  %v1026 = vpop.f32.mrf.mxu0
  %v1027 = vpop.f32.mrf.mxu0
  %v1028 = vadd.f32 %v499, %v1027
  %v1029 = vpop.f32.mrf.mxu0
  %1030 = vmatprep.mubr.bf16.mxu0 0
  %1031 = vmatmul.mubr.bf16.gmra.mxu0 %v837
  %v1032 = vpop.f32.mrf.mxu0
  %v1033 = vadd.f32 %v504, %v1032
  %v1034 = vpop.f32.mrf.mxu0
  %v1035 = vpop.f32.mrf.mxu0
  %v1036 = vadd.f32 %v507, %v1035
  %v1037 = vpop.f32.mrf.mxu0
  %1038 = vmatprep.mubr.bf16.mxu0 0
  %1039 = vmatmul.mubr.bf16.gmra.mxu0 %v838
  %v1040 = vpop.f32.mrf.mxu0
  %v1041 = vadd.f32 %v512, %v1040
  %v1042 = vpop.f32.mrf.mxu0
  %v1043 = vpop.f32.mrf.mxu0
  %v1044 = vadd.f32 %v515, %v1043
  %v1045 = vpop.f32.mrf.mxu0
  %1046 = vmatprep.mubr.bf16.mxu0 0
  %1047 = vmatmul.mubr.bf16.gmra.mxu0 %v839
  %v1048 = vpop.f32.mrf.mxu0
  %v1049 = vadd.f32 %v520, %v1048
  %v1050 = vpop.f32.mrf.mxu0
  %v1051 = vpop.f32.mrf.mxu0
  %v1052 = vadd.f32 %v523, %v1051
  %v1053 = vpop.f32.mrf.mxu0
  %1054 = vmatprep.mubr.bf16.mxu0 0
  %1055 = vmatmul.mubr.bf16.gmra.mxu0 %v840
  %v1056 = vpop.f32.mrf.mxu0
  %v1057 = vadd.f32 %v528, %v1056
  %v1058 = vpop.f32.mrf.mxu0
  %v1059 = vpop.f32.mrf.mxu0
  %v1060 = vadd.f32 %v531, %v1059
  %v1061 = vpop.f32.mrf.mxu0
  %1062 = vmatprep.mubr.bf16.mxu0 0
  %1063 = vmatmul.mubr.bf16.gmra.mxu0 %v841
  %v1064 = vpop.f32.mrf.mxu0
  %v1065 = vadd.f32 %v536, %v1064
  %v1066 = vpop.f32.mrf.mxu0
  %v1067 = vpop.f32.mrf.mxu0
  %v1068 = vadd.f32 %v539, %v1067
  %v1069 = vpop.f32.mrf.mxu0
  %1070 = vmatprep.mubr.bf16.mxu0 0
  %1071 = vmatmul.mubr.bf16.gmra.mxu0 %v842
  %v1072 = vpop.f32.mrf.mxu0
  %v1073 = vadd.f32 %v544, %v1072
  %v1074 = vpop.f32.mrf.mxu0
  %v1075 = vpop.f32.mrf.mxu0
  %v1076 = vadd.f32 %v547, %v1075
  %v1077 = vpop.f32.mrf.mxu0
  %1078 = vmatprep.mubr.bf16.mxu0 0
  %1079 = vmatmul.mubr.bf16.gmra.mxu0 %v843
  %v1080 = vpop.f32.mrf.mxu0
  %v1081 = vadd.f32 %v552, %v1080
  %v1082 = vpop.f32.mrf.mxu0
  %v1083 = vpop.f32.mrf.mxu0
  %v1084 = vadd.f32 %v555, %v1083
  %v1085 = vpop.f32.mrf.mxu0
  %1086 = vmatprep.mubr.bf16.mxu0 0
  %1087 = vmatmul.mubr.bf16.gmra.mxu0 %v844
  %v1088 = vpop.f32.mrf.mxu0
  %v1089 = vadd.f32 %v560, %v1088
  %v1090 = vpop.f32.mrf.mxu0
  %v1091 = vpop.f32.mrf.mxu0
  %v1092 = vadd.f32 %v563, %v1091
  %v1093 = vpop.f32.mrf.mxu0
  %1094 = vmatprep.mubr.bf16.mxu0 0
  %1095 = vmatmul.mubr.bf16.gmra.mxu0 %v845
  %v1096 = vpop.f32.mrf.mxu0
  %v1097 = vadd.f32 %v568, %v1096
  %v1098 = vpop.f32.mrf.mxu0
  %v1099 = vpop.f32.mrf.mxu0
  %v1100 = vadd.f32 %v571, %v1099
  %v1101 = vpop.f32.mrf.mxu0
  %1102 = vmatprep.mubr.bf16.mxu0 0
  %1103 = vmatmul.mubr.bf16.gmra.mxu0 %v846
  %v1104 = vpop.f32.mrf.mxu0
  %v1105 = vadd.f32 %v576, %v1104
  %v1106 = vpop.f32.mrf.mxu0
  %v1107 = vpop.f32.mrf.mxu0
  %v1108 = vadd.f32 %v579, %v1107
  %v1109 = vpop.f32.mrf.mxu0
  %1110 = vmatprep.mubr.bf16.mxu0 0
  %1111 = vmatmul.mubr.bf16.gmra.mxu0 %v847
  %v1112 = vpop.f32.mrf.mxu0
  %v1113 = vadd.f32 %v584, %v1112
  %v1114 = vpop.f32.mrf.mxu0
  %v1115 = vpop.f32.mrf.mxu0
  %v1116 = vadd.f32 %v587, %v1115
  %v1117 = vpop.f32.mrf.mxu0
  %1118 = vmatprep.mubr.bf16.mxu0 0
  %1119 = vmatmul.mubr.bf16.gmra.mxu0 %v848
  %v1120 = vpop.f32.mrf.mxu0
  %v1121 = vadd.f32 %v592, %v1120
  %v1122 = vpop.f32.mrf.mxu0
  %v1123 = vpop.f32.mrf.mxu0
  %v1124 = vadd.f32 %v595, %v1123
  %v1125 = vpop.f32.mrf.mxu0
  %1126 = vmatprep.mubr.bf16.mxu0 0
  %1127 = vmatmul.mubr.bf16.gmra.mxu0 %v849
  %v1128 = vpop.f32.mrf.mxu0
  %v1129 = vadd.f32 %v600, %v1128
  %v1130 = vpop.f32.mrf.mxu0
  %v1131 = vpop.f32.mrf.mxu0
  %v1132 = vadd.f32 %v603, %v1131
  %v1133 = vpop.f32.mrf.mxu0
  %1134 = vmatprep.mubr.bf16.mxu0 0
  %1135 = vmatmul.mubr.bf16.gmra.mxu0 %v850
  %v1136 = vpop.f32.mrf.mxu0
  %v1137 = vadd.f32 %v608, %v1136
  %v1138 = vpop.f32.mrf.mxu0
  %v1139 = vpop.f32.mrf.mxu0
  %v1140 = vadd.f32 %v611, %v1139
  %v1141 = vpop.f32.mrf.mxu0
  %1142 = vmatprep.mubr.bf16.mxu0 0
  %1143 = vmatmul.mubr.bf16.gmra.mxu0 %v851
  %v1144 = vpop.f32.mrf.mxu0
  %v1145 = vadd.f32 %v616, %v1144
  %v1146 = vpop.f32.mrf.mxu0
  %v1147 = vpop.f32.mrf.mxu0
  %v1148 = vadd.f32 %v619, %v1147
  %v1149 = vpop.f32.mrf.mxu0
  %1150 = vmatprep.mubr.bf16.mxu0 0
  %1151 = vmatmul.mubr.bf16.gmra.mxu0 %v852
  %v1152 = vpop.f32.mrf.mxu0
  %v1153 = vadd.f32 %v624, %v1152
  %v1154 = vpop.f32.mrf.mxu0
  %v1155 = vpop.f32.mrf.mxu0
  %v1156 = vadd.f32 %v627, %v1155
  %v1157 = vpop.f32.mrf.mxu0
  %1158 = vmatprep.mubr.bf16.mxu0 0
  %1159 = vmatmul.mubr.bf16.gmra.mxu0 %v853
  %v1160 = vpop.f32.mrf.mxu0
  %v1161 = vadd.f32 %v632, %v1160
  %v1162 = vpop.f32.mrf.mxu0
  %v1163 = vpop.f32.mrf.mxu0
  %v1164 = vadd.f32 %v635, %v1163
  %v1165 = vpop.f32.mrf.mxu0
  %1166 = vmatprep.mubr.bf16.mxu0 0
  %1167 = vmatmul.mubr.bf16.gmra.mxu0 %v854
  %v1168 = vpop.f32.mrf.mxu0
  %v1169 = vadd.f32 %v640, %v1168
  %v1170 = vpop.f32.mrf.mxu0
  %v1171 = vpop.f32.mrf.mxu0
  %v1172 = vadd.f32 %v643, %v1171
  %v1173 = vpop.f32.mrf.mxu0
  %1174 = vmatprep.mubr.bf16.mxu0 0
  %1175 = vmatmul.mubr.bf16.gmra.mxu0 %v855
  %v1176 = vpop.f32.mrf.mxu0
  %v1177 = vadd.f32 %v648, %v1176
  %v1178 = vpop.f32.mrf.mxu0
  %v1179 = vpop.f32.mrf.mxu0
  %v1180 = vadd.f32 %v651, %v1179
  %v1181 = vpop.f32.mrf.mxu0
  %1182 = vmatprep.mubr.bf16.mxu0 0
  %1183 = vmatmul.mubr.bf16.gmra.mxu0 %v856
  %v1184 = vpop.f32.mrf.mxu0
  %v1185 = vadd.f32 %v656, %v1184
  %v1186 = vpop.f32.mrf.mxu0
  %v1187 = vpop.f32.mrf.mxu0
  %v1188 = vadd.f32 %v659, %v1187
  %v1189 = vpop.f32.mrf.mxu0
  %1190 = vmatprep.mubr.bf16.mxu0 0
  %1191 = vmatmul.mubr.bf16.gmra.mxu0 %v857
  %v1192 = vpop.f32.mrf.mxu0
  %v1193 = vadd.f32 %v664, %v1192
  %v1194 = vpop.f32.mrf.mxu0
  %v1195 = vpop.f32.mrf.mxu0
  %v1196 = vadd.f32 %v667, %v1195
  %v1197 = vpop.f32.mrf.mxu0
  %1198 = vmatprep.mubr.bf16.mxu0 0
  %1199 = vmatmul.mubr.bf16.gmra.mxu0 %v858
  %v1200 = vpop.f32.mrf.mxu0
  %v1201 = vadd.f32 %v672, %v1200
  %v1202 = vpop.f32.mrf.mxu0
  %v1203 = vpop.f32.mrf.mxu0
  %v1204 = vadd.f32 %v675, %v1203
  %v1205 = vpop.f32.mrf.mxu0
  %1206 = vmatprep.mubr.bf16.mxu0 0
  %1207 = vmatmul.mubr.bf16.gmra.mxu0 %v859
  %v1208 = vpop.f32.mrf.mxu0
  %v1209 = vadd.f32 %v680, %v1208
  %v1210 = vpop.f32.mrf.mxu0
  %v1211 = vpop.f32.mrf.mxu0
  %v1212 = vadd.f32 %v683, %v1211
  %v1213 = vpop.f32.mrf.mxu0
  %1214 = vmatprep.mubr.bf16.mxu0 0
  %1215 = vmatmul.mubr.bf16.gmra.mxu0 %v860
  %v1216 = vpop.f32.mrf.mxu0
  %v1217 = vadd.f32 %v688, %v1216
  %v1218 = vpop.f32.mrf.mxu0
  %v1219 = vpop.f32.mrf.mxu0
  %v1220 = vadd.f32 %v691, %v1219
  %v1221 = vpop.f32.mrf.mxu0
  %1222 = vmatprep.mubr.bf16.mxu0 0
  %1223 = vmatmul.mubr.bf16.gmra.mxu0 %v861
  %v1224 = vpop.f32.mrf.mxu0
  %v1225 = vadd.f32 %v696, %v1224
  %v1226 = vpop.f32.mrf.mxu0
  %v1227 = vpop.f32.mrf.mxu0
  %v1228 = vadd.f32 %v699, %v1227
  %v1229 = vpop.f32.mrf.mxu0
  %1230 = vdwg.mxu0
  %vm1231 = vcmask 261120
  %v1232 = vsel %vm1231, %v977, 0.0
  %v1233 = vsel %vm1231, %v980, 0.0
  %v1234 = vadd.f32 %v1232, %v1233
  %v1235 = vsel %vm1231, %v985, 0.0
  %v1236 = vadd.f32 %v1234, %v1235
  %v1237 = vsel %vm1231, %v988, 0.0
  %v1238 = vadd.f32 %v1236, %v1237
  %v1239 = vsel %vm1231, %v993, 0.0
  %v1240 = vadd.f32 %v1238, %v1239
  %v1241 = vsel %vm1231, %v996, 0.0
  %v1242 = vadd.f32 %v1240, %v1241
  %v1243 = vsel %vm1231, %v1001, 0.0
  %v1244 = vadd.f32 %v1242, %v1243
  %v1245 = vsel %vm1231, %v1004, 0.0
  %v1246 = vadd.f32 %v1244, %v1245
  %v1247 = vsel %vm1231, %v1009, 0.0
  %v1248 = vadd.f32 %v1246, %v1247
  %v1249 = vsel %vm1231, %v1012, 0.0
  %v1250 = vadd.f32 %v1248, %v1249
  %v1251 = vsel %vm1231, %v1017, 0.0
  %v1252 = vadd.f32 %v1250, %v1251
  %v1253 = vsel %vm1231, %v1020, 0.0
  %v1254 = vadd.f32 %v1252, %v1253
  %v1255 = vsel %vm1231, %v1025, 0.0
  %v1256 = vadd.f32 %v1254, %v1255
  %v1257 = vsel %vm1231, %v1028, 0.0
  %v1258 = vadd.f32 %v1256, %v1257
  %v1259 = vsel %vm1231, %v1033, 0.0
  %v1260 = vadd.f32 %v1258, %v1259
  %v1261 = vsel %vm1231, %v1036, 0.0
  %v1262 = vadd.f32 %v1260, %v1261
  %v1263 = vsel %vm1231, %v1041, 0.0
  %v1264 = vadd.f32 %v1262, %v1263
  %v1265 = vsel %vm1231, %v1044, 0.0
  %v1266 = vadd.f32 %v1264, %v1265
  %v1267 = vsel %vm1231, %v1049, 0.0
  %v1268 = vadd.f32 %v1266, %v1267
  %v1269 = vsel %vm1231, %v1052, 0.0
  %v1270 = vadd.f32 %v1268, %v1269
  %v1271 = vsel %vm1231, %v1057, 0.0
  %v1272 = vadd.f32 %v1270, %v1271
  %v1273 = vsel %vm1231, %v1060, 0.0
  %v1274 = vadd.f32 %v1272, %v1273
  %v1275 = vsel %vm1231, %v1065, 0.0
  %v1276 = vadd.f32 %v1274, %v1275
  %v1277 = vsel %vm1231, %v1068, 0.0
  %v1278 = vadd.f32 %v1276, %v1277
  %v1279 = vsel %vm1231, %v1073, 0.0
  %v1280 = vadd.f32 %v1278, %v1279
  %v1281 = vsel %vm1231, %v1076, 0.0
  %v1282 = vadd.f32 %v1280, %v1281
  %v1283 = vsel %vm1231, %v1081, 0.0
  %v1284 = vadd.f32 %v1282, %v1283
  %v1285 = vsel %vm1231, %v1084, 0.0
  %v1286 = vadd.f32 %v1284, %v1285
  %v1287 = vsel %vm1231, %v1089, 0.0
  %v1288 = vadd.f32 %v1286, %v1287
  %v1289 = vsel %vm1231, %v1092, 0.0
  %v1290 = vadd.f32 %v1288, %v1289
  %v1291 = vsel %vm1231, %v1097, 0.0
  %v1292 = vadd.f32 %v1290, %v1291
  %v1293 = vsel %vm1231, %v1100, 0.0
  %v1294 = vadd.f32 %v1292, %v1293
  %v1295 = vrot.slane %v1294, 4
  %v1296 = vadd.f32 %v1294, %v1295
  %v1297 = vrot.slane %v1296, 2
  %v1298 = vadd.f32 %v1296, %v1297
  %v1299 = vrot.slane %v1298, 1
  %v1300 = vadd.f32 %v1298, %v1299
  %v1301 = vsel %vm1231, %v1105, 0.0
  %v1302 = vsel %vm1231, %v1108, 0.0
  %v1303 = vadd.f32 %v1301, %v1302
  %v1304 = vsel %vm1231, %v1113, 0.0
  %v1305 = vadd.f32 %v1303, %v1304
  %v1306 = vsel %vm1231, %v1116, 0.0
  %v1307 = vadd.f32 %v1305, %v1306
  %v1308 = vsel %vm1231, %v1121, 0.0
  %v1309 = vadd.f32 %v1307, %v1308
  %v1310 = vsel %vm1231, %v1124, 0.0
  %v1311 = vadd.f32 %v1309, %v1310
  %v1312 = vsel %vm1231, %v1129, 0.0
  %v1313 = vadd.f32 %v1311, %v1312
  %v1314 = vsel %vm1231, %v1132, 0.0
  %v1315 = vadd.f32 %v1313, %v1314
  %v1316 = vsel %vm1231, %v1137, 0.0
  %v1317 = vadd.f32 %v1315, %v1316
  %v1318 = vsel %vm1231, %v1140, 0.0
  %v1319 = vadd.f32 %v1317, %v1318
  %v1320 = vsel %vm1231, %v1145, 0.0
  %v1321 = vadd.f32 %v1319, %v1320
  %v1322 = vsel %vm1231, %v1148, 0.0
  %v1323 = vadd.f32 %v1321, %v1322
  %v1324 = vsel %vm1231, %v1153, 0.0
  %v1325 = vadd.f32 %v1323, %v1324
  %v1326 = vsel %vm1231, %v1156, 0.0
  %v1327 = vadd.f32 %v1325, %v1326
  %v1328 = vsel %vm1231, %v1161, 0.0
  %v1329 = vadd.f32 %v1327, %v1328
  %v1330 = vsel %vm1231, %v1164, 0.0
  %v1331 = vadd.f32 %v1329, %v1330
  %v1332 = vsel %vm1231, %v1169, 0.0
  %v1333 = vadd.f32 %v1331, %v1332
  %v1334 = vsel %vm1231, %v1172, 0.0
  %v1335 = vadd.f32 %v1333, %v1334
  %v1336 = vsel %vm1231, %v1177, 0.0
  %v1337 = vadd.f32 %v1335, %v1336
  %v1338 = vsel %vm1231, %v1180, 0.0
  %v1339 = vadd.f32 %v1337, %v1338
  %v1340 = vsel %vm1231, %v1185, 0.0
  %v1341 = vadd.f32 %v1339, %v1340
  %v1342 = vsel %vm1231, %v1188, 0.0
  %v1343 = vadd.f32 %v1341, %v1342
  %v1344 = vsel %vm1231, %v1193, 0.0
  %v1345 = vadd.f32 %v1343, %v1344
  %v1346 = vsel %vm1231, %v1196, 0.0
  %v1347 = vadd.f32 %v1345, %v1346
  %v1348 = vsel %vm1231, %v1201, 0.0
  %v1349 = vadd.f32 %v1347, %v1348
  %v1350 = vsel %vm1231, %v1204, 0.0
  %v1351 = vadd.f32 %v1349, %v1350
  %v1352 = vsel %vm1231, %v1209, 0.0
  %v1353 = vadd.f32 %v1351, %v1352
  %v1354 = vsel %vm1231, %v1212, 0.0
  %v1355 = vadd.f32 %v1353, %v1354
  %v1356 = vsel %vm1231, %v1217, 0.0
  %v1357 = vadd.f32 %v1355, %v1356
  %v1358 = vsel %vm1231, %v1220, 0.0
  %v1359 = vadd.f32 %v1357, %v1358
  %v1360 = vsel %vm1231, %v1225, 0.0
  %v1361 = vadd.f32 %v1359, %v1360
  %v1362 = vsel %vm1231, %v1228, 0.0
  %v1363 = vadd.f32 %v1361, %v1362
  %v1364 = vrot.slane %v1363, 4
  %v1365 = vadd.f32 %v1363, %v1364
  %v1366 = vrot.slane %v1365, 2
  %v1367 = vadd.f32 %v1365, %v1366
  %v1368 = vrot.slane %v1367, 1
  %v1369 = vadd.f32 %v1367, %v1368
  %v1370 = vrcp.pop 256.0
  %v1371 = vmul.f32 %v1300, %v1370
  %v1372 = vmul.f32 %v1369, %v1370
  %v1373 = vsub.f32 %v977, %v1371
  %v1374 = vsub.f32 %v980, %v1371
  %v1375 = vsub.f32 %v985, %v1371
  %v1376 = vsub.f32 %v988, %v1371
  %v1377 = vsub.f32 %v993, %v1371
  %v1378 = vsub.f32 %v996, %v1371
  %v1379 = vsub.f32 %v1001, %v1371
  %v1380 = vsub.f32 %v1004, %v1371
  %v1381 = vsub.f32 %v1009, %v1371
  %v1382 = vsub.f32 %v1012, %v1371
  %v1383 = vsub.f32 %v1017, %v1371
  %v1384 = vsub.f32 %v1020, %v1371
  %v1385 = vsub.f32 %v1025, %v1371
  %v1386 = vsub.f32 %v1028, %v1371
  %v1387 = vsub.f32 %v1033, %v1371
  %v1388 = vsub.f32 %v1036, %v1371
  %v1389 = vsub.f32 %v1041, %v1371
  %v1390 = vsub.f32 %v1044, %v1371
  %v1391 = vsub.f32 %v1049, %v1371
  %v1392 = vsub.f32 %v1052, %v1371
  %v1393 = vsub.f32 %v1057, %v1371
  %v1394 = vsub.f32 %v1060, %v1371
  %v1395 = vsub.f32 %v1065, %v1371
  %v1396 = vsub.f32 %v1068, %v1371
  %v1397 = vsub.f32 %v1073, %v1371
  %v1398 = vsub.f32 %v1076, %v1371
  %v1399 = vsub.f32 %v1081, %v1371
  %v1400 = vsub.f32 %v1084, %v1371
  %v1401 = vsub.f32 %v1089, %v1371
  %v1402 = vsub.f32 %v1092, %v1371
  %v1403 = vsub.f32 %v1097, %v1371
  %v1404 = vsub.f32 %v1100, %v1371
  %v1405 = vsub.f32 %v1105, %v1372
  %v1406 = vsub.f32 %v1108, %v1372
  %v1407 = vsub.f32 %v1113, %v1372
  %v1408 = vsub.f32 %v1116, %v1372
  %v1409 = vsub.f32 %v1121, %v1372
  %v1410 = vsub.f32 %v1124, %v1372
  %v1411 = vsub.f32 %v1129, %v1372
  %v1412 = vsub.f32 %v1132, %v1372
  %v1413 = vsub.f32 %v1137, %v1372
  %v1414 = vsub.f32 %v1140, %v1372
  %v1415 = vsub.f32 %v1145, %v1372
  %v1416 = vsub.f32 %v1148, %v1372
  %v1417 = vsub.f32 %v1153, %v1372
  %v1418 = vsub.f32 %v1156, %v1372
  %v1419 = vsub.f32 %v1161, %v1372
  %v1420 = vsub.f32 %v1164, %v1372
  %v1421 = vsub.f32 %v1169, %v1372
  %v1422 = vsub.f32 %v1172, %v1372
  %v1423 = vsub.f32 %v1177, %v1372
  %v1424 = vsub.f32 %v1180, %v1372
  %v1425 = vsub.f32 %v1185, %v1372
  %v1426 = vsub.f32 %v1188, %v1372
  %v1427 = vsub.f32 %v1193, %v1372
  %v1428 = vsub.f32 %v1196, %v1372
  %v1429 = vsub.f32 %v1201, %v1372
  %v1430 = vsub.f32 %v1204, %v1372
  %v1431 = vsub.f32 %v1209, %v1372
  %v1432 = vsub.f32 %v1212, %v1372
  %v1433 = vsub.f32 %v1217, %v1372
  %v1434 = vsub.f32 %v1220, %v1372
  %v1435 = vsub.f32 %v1225, %v1372
  %v1436 = vsub.f32 %v1228, %v1372
  %v1437 = vmul.f32 %v1373, %v1373
  %v1438 = vmul.f32 %v1374, %v1374
  %v1439 = vmul.f32 %v1375, %v1375
  %v1440 = vmul.f32 %v1376, %v1376
  %v1441 = vmul.f32 %v1377, %v1377
  %v1442 = vmul.f32 %v1378, %v1378
  %v1443 = vmul.f32 %v1379, %v1379
  %v1444 = vmul.f32 %v1380, %v1380
  %v1445 = vmul.f32 %v1381, %v1381
  %v1446 = vmul.f32 %v1382, %v1382
  %v1447 = vmul.f32 %v1383, %v1383
  %v1448 = vmul.f32 %v1384, %v1384
  %v1449 = vmul.f32 %v1385, %v1385
  %v1450 = vmul.f32 %v1386, %v1386
  %v1451 = vmul.f32 %v1387, %v1387
  %v1452 = vmul.f32 %v1388, %v1388
  %v1453 = vmul.f32 %v1389, %v1389
  %v1454 = vmul.f32 %v1390, %v1390
  %v1455 = vmul.f32 %v1391, %v1391
  %v1456 = vmul.f32 %v1392, %v1392
  %v1457 = vmul.f32 %v1393, %v1393
  %v1458 = vmul.f32 %v1394, %v1394
  %v1459 = vmul.f32 %v1395, %v1395
  %v1460 = vmul.f32 %v1396, %v1396
  %v1461 = vmul.f32 %v1397, %v1397
  %v1462 = vmul.f32 %v1398, %v1398
  %v1463 = vmul.f32 %v1399, %v1399
  %v1464 = vmul.f32 %v1400, %v1400
  %v1465 = vmul.f32 %v1401, %v1401
  %v1466 = vmul.f32 %v1402, %v1402
  %v1467 = vmul.f32 %v1403, %v1403
  %v1468 = vmul.f32 %v1404, %v1404
  %v1469 = vmul.f32 %v1405, %v1405
  %v1470 = vmul.f32 %v1406, %v1406
  %v1471 = vmul.f32 %v1407, %v1407
  %v1472 = vmul.f32 %v1408, %v1408
  %v1473 = vmul.f32 %v1409, %v1409
  %v1474 = vmul.f32 %v1410, %v1410
  %v1475 = vmul.f32 %v1411, %v1411
  %v1476 = vmul.f32 %v1412, %v1412
  %v1477 = vmul.f32 %v1413, %v1413
  %v1478 = vmul.f32 %v1414, %v1414
  %v1479 = vmul.f32 %v1415, %v1415
  %v1480 = vmul.f32 %v1416, %v1416
  %v1481 = vmul.f32 %v1417, %v1417
  %v1482 = vmul.f32 %v1418, %v1418
  %v1483 = vmul.f32 %v1419, %v1419
  %v1484 = vmul.f32 %v1420, %v1420
  %v1485 = vmul.f32 %v1421, %v1421
  %v1486 = vmul.f32 %v1422, %v1422
  %v1487 = vmul.f32 %v1423, %v1423
  %v1488 = vmul.f32 %v1424, %v1424
  %v1489 = vmul.f32 %v1425, %v1425
  %v1490 = vmul.f32 %v1426, %v1426
  %v1491 = vmul.f32 %v1427, %v1427
  %v1492 = vmul.f32 %v1428, %v1428
  %v1493 = vmul.f32 %v1429, %v1429
  %v1494 = vmul.f32 %v1430, %v1430
  %v1495 = vmul.f32 %v1431, %v1431
  %v1496 = vmul.f32 %v1432, %v1432
  %v1497 = vmul.f32 %v1433, %v1433
  %v1498 = vmul.f32 %v1434, %v1434
  %v1499 = vmul.f32 %v1435, %v1435
  %v1500 = vmul.f32 %v1436, %v1436
  %v1501 = vsel %vm1231, %v1437, 0.0
  %v1502 = vsel %vm1231, %v1438, 0.0
  %v1503 = vadd.f32 %v1501, %v1502
  %v1504 = vsel %vm1231, %v1439, 0.0
  %v1505 = vadd.f32 %v1503, %v1504
  %v1506 = vsel %vm1231, %v1440, 0.0
  %v1507 = vadd.f32 %v1505, %v1506
  %v1508 = vsel %vm1231, %v1441, 0.0
  %v1509 = vadd.f32 %v1507, %v1508
  %v1510 = vsel %vm1231, %v1442, 0.0
  %v1511 = vadd.f32 %v1509, %v1510
  %v1512 = vsel %vm1231, %v1443, 0.0
  %v1513 = vadd.f32 %v1511, %v1512
  %v1514 = vsel %vm1231, %v1444, 0.0
  %v1515 = vadd.f32 %v1513, %v1514
  %v1516 = vsel %vm1231, %v1445, 0.0
  %v1517 = vadd.f32 %v1515, %v1516
  %v1518 = vsel %vm1231, %v1446, 0.0
  %v1519 = vadd.f32 %v1517, %v1518
  %v1520 = vsel %vm1231, %v1447, 0.0
  %v1521 = vadd.f32 %v1519, %v1520
  %v1522 = vsel %vm1231, %v1448, 0.0
  %v1523 = vadd.f32 %v1521, %v1522
  %v1524 = vsel %vm1231, %v1449, 0.0
  %v1525 = vadd.f32 %v1523, %v1524
  %v1526 = vsel %vm1231, %v1450, 0.0
  %v1527 = vadd.f32 %v1525, %v1526
  %v1528 = vsel %vm1231, %v1451, 0.0
  %v1529 = vadd.f32 %v1527, %v1528
  %v1530 = vsel %vm1231, %v1452, 0.0
  %v1531 = vadd.f32 %v1529, %v1530
  %v1532 = vsel %vm1231, %v1453, 0.0
  %v1533 = vadd.f32 %v1531, %v1532
  %v1534 = vsel %vm1231, %v1454, 0.0
  %v1535 = vadd.f32 %v1533, %v1534
  %v1536 = vsel %vm1231, %v1455, 0.0
  %v1537 = vadd.f32 %v1535, %v1536
  %v1538 = vsel %vm1231, %v1456, 0.0
  %v1539 = vadd.f32 %v1537, %v1538
  %v1540 = vsel %vm1231, %v1457, 0.0
  %v1541 = vadd.f32 %v1539, %v1540
  %v1542 = vsel %vm1231, %v1458, 0.0
  %v1543 = vadd.f32 %v1541, %v1542
  %v1544 = vsel %vm1231, %v1459, 0.0
  %v1545 = vadd.f32 %v1543, %v1544
  %v1546 = vsel %vm1231, %v1460, 0.0
  %v1547 = vadd.f32 %v1545, %v1546
  %v1548 = vsel %vm1231, %v1461, 0.0
  %v1549 = vadd.f32 %v1547, %v1548
  %v1550 = vsel %vm1231, %v1462, 0.0
  %v1551 = vadd.f32 %v1549, %v1550
  %v1552 = vsel %vm1231, %v1463, 0.0
  %v1553 = vadd.f32 %v1551, %v1552
  %v1554 = vsel %vm1231, %v1464, 0.0
  %v1555 = vadd.f32 %v1553, %v1554
  %v1556 = vsel %vm1231, %v1465, 0.0
  %v1557 = vadd.f32 %v1555, %v1556
  %v1558 = vsel %vm1231, %v1466, 0.0
  %v1559 = vadd.f32 %v1557, %v1558
  %v1560 = vsel %vm1231, %v1467, 0.0
  %v1561 = vadd.f32 %v1559, %v1560
  %v1562 = vsel %vm1231, %v1468, 0.0
  %v1563 = vadd.f32 %v1561, %v1562
  %v1564 = vrot.slane %v1563, 4
  %v1565 = vadd.f32 %v1563, %v1564
  %v1566 = vrot.slane %v1565, 2
  %v1567 = vadd.f32 %v1565, %v1566
  %v1568 = vrot.slane %v1567, 1
  %v1569 = vadd.f32 %v1567, %v1568
  %v1570 = vsel %vm1231, %v1469, 0.0
  %v1571 = vsel %vm1231, %v1470, 0.0
  %v1572 = vadd.f32 %v1570, %v1571
  %v1573 = vsel %vm1231, %v1471, 0.0
  %v1574 = vadd.f32 %v1572, %v1573
  %v1575 = vsel %vm1231, %v1472, 0.0
  %v1576 = vadd.f32 %v1574, %v1575
  %v1577 = vsel %vm1231, %v1473, 0.0
  %v1578 = vadd.f32 %v1576, %v1577
  %v1579 = vsel %vm1231, %v1474, 0.0
  %v1580 = vadd.f32 %v1578, %v1579
  %v1581 = vsel %vm1231, %v1475, 0.0
  %v1582 = vadd.f32 %v1580, %v1581
  %v1583 = vsel %vm1231, %v1476, 0.0
  %v1584 = vadd.f32 %v1582, %v1583
  %v1585 = vsel %vm1231, %v1477, 0.0
  %v1586 = vadd.f32 %v1584, %v1585
  %v1587 = vsel %vm1231, %v1478, 0.0
  %v1588 = vadd.f32 %v1586, %v1587
  %v1589 = vsel %vm1231, %v1479, 0.0
  %v1590 = vadd.f32 %v1588, %v1589
  %v1591 = vsel %vm1231, %v1480, 0.0
  %v1592 = vadd.f32 %v1590, %v1591
  %v1593 = vsel %vm1231, %v1481, 0.0
  %v1594 = vadd.f32 %v1592, %v1593
  %v1595 = vsel %vm1231, %v1482, 0.0
  %v1596 = vadd.f32 %v1594, %v1595
  %v1597 = vsel %vm1231, %v1483, 0.0
  %v1598 = vadd.f32 %v1596, %v1597
  %v1599 = vsel %vm1231, %v1484, 0.0
  %v1600 = vadd.f32 %v1598, %v1599
  %v1601 = vsel %vm1231, %v1485, 0.0
  %v1602 = vadd.f32 %v1600, %v1601
  %v1603 = vsel %vm1231, %v1486, 0.0
  %v1604 = vadd.f32 %v1602, %v1603
  %v1605 = vsel %vm1231, %v1487, 0.0
  %v1606 = vadd.f32 %v1604, %v1605
  %v1607 = vsel %vm1231, %v1488, 0.0
  %v1608 = vadd.f32 %v1606, %v1607
  %v1609 = vsel %vm1231, %v1489, 0.0
  %v1610 = vadd.f32 %v1608, %v1609
  %v1611 = vsel %vm1231, %v1490, 0.0
  %v1612 = vadd.f32 %v1610, %v1611
  %v1613 = vsel %vm1231, %v1491, 0.0
  %v1614 = vadd.f32 %v1612, %v1613
  %v1615 = vsel %vm1231, %v1492, 0.0
  %v1616 = vadd.f32 %v1614, %v1615
  %v1617 = vsel %vm1231, %v1493, 0.0
  %v1618 = vadd.f32 %v1616, %v1617
  %v1619 = vsel %vm1231, %v1494, 0.0
  %v1620 = vadd.f32 %v1618, %v1619
  %v1621 = vsel %vm1231, %v1495, 0.0
  %v1622 = vadd.f32 %v1620, %v1621
  %v1623 = vsel %vm1231, %v1496, 0.0
  %v1624 = vadd.f32 %v1622, %v1623
  %v1625 = vsel %vm1231, %v1497, 0.0
  %v1626 = vadd.f32 %v1624, %v1625
  %v1627 = vsel %vm1231, %v1498, 0.0
  %v1628 = vadd.f32 %v1626, %v1627
  %v1629 = vsel %vm1231, %v1499, 0.0
  %v1630 = vadd.f32 %v1628, %v1629
  %v1631 = vsel %vm1231, %v1500, 0.0
  %v1632 = vadd.f32 %v1630, %v1631
  %v1633 = vrot.slane %v1632, 4
  %v1634 = vadd.f32 %v1632, %v1633
  %v1635 = vrot.slane %v1634, 2
  %v1636 = vadd.f32 %v1634, %v1635
  %v1637 = vrot.slane %v1636, 1
  %v1638 = vadd.f32 %v1636, %v1637
  %v1639 = vmul.f32 %v1569, %v1370
  %v1640 = vmul.f32 %v1638, %v1370
  %v1641 = vadd.f32 %v1639, 1e-05
  %v1642 = vadd.f32 %v1640, 1e-05
  %v1643 = vrsqrt.pop %v1641
  %v1644 = vrsqrt.pop %v1642
  %v1645 = vmul.f32 %v1373, %v1643
  %v1646 = vmul.f32 %v1374, %v1643
  %v1647 = vmul.f32 %v1375, %v1643
  %v1648 = vmul.f32 %v1376, %v1643
  %v1649 = vmul.f32 %v1377, %v1643
  %v1650 = vmul.f32 %v1378, %v1643
  %v1651 = vmul.f32 %v1379, %v1643
  %v1652 = vmul.f32 %v1380, %v1643
  %v1653 = vmul.f32 %v1381, %v1643
  %v1654 = vmul.f32 %v1382, %v1643
  %v1655 = vmul.f32 %v1383, %v1643
  %v1656 = vmul.f32 %v1384, %v1643
  %v1657 = vmul.f32 %v1385, %v1643
  %v1658 = vmul.f32 %v1386, %v1643
  %v1659 = vmul.f32 %v1387, %v1643
  %v1660 = vmul.f32 %v1388, %v1643
  %v1661 = vmul.f32 %v1389, %v1643
  %v1662 = vmul.f32 %v1390, %v1643
  %v1663 = vmul.f32 %v1391, %v1643
  %v1664 = vmul.f32 %v1392, %v1643
  %v1665 = vmul.f32 %v1393, %v1643
  %v1666 = vmul.f32 %v1394, %v1643
  %v1667 = vmul.f32 %v1395, %v1643
  %v1668 = vmul.f32 %v1396, %v1643
  %v1669 = vmul.f32 %v1397, %v1643
  %v1670 = vmul.f32 %v1398, %v1643
  %v1671 = vmul.f32 %v1399, %v1643
  %v1672 = vmul.f32 %v1400, %v1643
  %v1673 = vmul.f32 %v1401, %v1643
  %v1674 = vmul.f32 %v1402, %v1643
  %v1675 = vmul.f32 %v1403, %v1643
  %v1676 = vmul.f32 %v1404, %v1643
  %v1677 = vmul.f32 %v1405, %v1644
  %v1678 = vmul.f32 %v1406, %v1644
  %v1679 = vmul.f32 %v1407, %v1644
  %v1680 = vmul.f32 %v1408, %v1644
  %v1681 = vmul.f32 %v1409, %v1644
  %v1682 = vmul.f32 %v1410, %v1644
  %v1683 = vmul.f32 %v1411, %v1644
  %v1684 = vmul.f32 %v1412, %v1644
  %v1685 = vmul.f32 %v1413, %v1644
  %v1686 = vmul.f32 %v1414, %v1644
  %v1687 = vmul.f32 %v1415, %v1644
  %v1688 = vmul.f32 %v1416, %v1644
  %v1689 = vmul.f32 %v1417, %v1644
  %v1690 = vmul.f32 %v1418, %v1644
  %v1691 = vmul.f32 %v1419, %v1644
  %v1692 = vmul.f32 %v1420, %v1644
  %v1693 = vmul.f32 %v1421, %v1644
  %v1694 = vmul.f32 %v1422, %v1644
  %v1695 = vmul.f32 %v1423, %v1644
  %v1696 = vmul.f32 %v1424, %v1644
  %v1697 = vmul.f32 %v1425, %v1644
  %v1698 = vmul.f32 %v1426, %v1644
  %v1699 = vmul.f32 %v1427, %v1644
  %v1700 = vmul.f32 %v1428, %v1644
  %v1701 = vmul.f32 %v1429, %v1644
  %v1702 = vmul.f32 %v1430, %v1644
  %v1703 = vmul.f32 %v1431, %v1644
  %v1704 = vmul.f32 %v1432, %v1644
  %v1705 = vmul.f32 %v1433, %v1644
  %v1706 = vmul.f32 %v1434, %v1644
  %v1707 = vmul.f32 %v1435, %v1644
  %v1708 = vmul.f32 %v1436, %v1644
  %vm1709 = vcmp.ge.f32.partialorder %v1645, 0.0
  %vm1710 = vcmp.ge.f32.partialorder %v1646, 0.0
  %vm1711 = vcmp.ge.f32.partialorder %v1647, 0.0
  %vm1712 = vcmp.ge.f32.partialorder %v1648, 0.0
  %vm1713 = vcmp.ge.f32.partialorder %v1649, 0.0
  %vm1714 = vcmp.ge.f32.partialorder %v1650, 0.0
  %vm1715 = vcmp.ge.f32.partialorder %v1651, 0.0
  %vm1716 = vcmp.ge.f32.partialorder %v1652, 0.0
  %vm1717 = vcmp.ge.f32.partialorder %v1653, 0.0
  %vm1718 = vcmp.ge.f32.partialorder %v1654, 0.0
  %vm1719 = vcmp.ge.f32.partialorder %v1655, 0.0
  %vm1720 = vcmp.ge.f32.partialorder %v1656, 0.0
  %vm1721 = vcmp.ge.f32.partialorder %v1657, 0.0
  %vm1722 = vcmp.ge.f32.partialorder %v1658, 0.0
  %vm1723 = vcmp.ge.f32.partialorder %v1659, 0.0
  %vm1724 = vcmp.ge.f32.partialorder %v1660, 0.0
  %vm1725 = vcmp.ge.f32.partialorder %v1661, 0.0
  %vm1726 = vcmp.ge.f32.partialorder %v1662, 0.0
  %vm1727 = vcmp.ge.f32.partialorder %v1663, 0.0
  %vm1728 = vcmp.ge.f32.partialorder %v1664, 0.0
  %vm1729 = vcmp.ge.f32.partialorder %v1665, 0.0
  %vm1730 = vcmp.ge.f32.partialorder %v1666, 0.0
  %vm1731 = vcmp.ge.f32.partialorder %v1667, 0.0
  %vm1732 = vcmp.ge.f32.partialorder %v1668, 0.0
  %vm1733 = vcmp.ge.f32.partialorder %v1669, 0.0
  %vm1734 = vcmp.ge.f32.partialorder %v1670, 0.0
  %vm1735 = vcmp.ge.f32.partialorder %v1671, 0.0
  %vm1736 = vcmp.ge.f32.partialorder %v1672, 0.0
  %vm1737 = vcmp.ge.f32.partialorder %v1673, 0.0
  %vm1738 = vcmp.ge.f32.partialorder %v1674, 0.0
  %vm1739 = vcmp.ge.f32.partialorder %v1675, 0.0
  %vm1740 = vcmp.ge.f32.partialorder %v1676, 0.0
  %vm1741 = vcmp.ge.f32.partialorder %v1677, 0.0
  %vm1742 = vcmp.ge.f32.partialorder %v1678, 0.0
  %vm1743 = vcmp.ge.f32.partialorder %v1679, 0.0
  %vm1744 = vcmp.ge.f32.partialorder %v1680, 0.0
  %vm1745 = vcmp.ge.f32.partialorder %v1681, 0.0
  %vm1746 = vcmp.ge.f32.partialorder %v1682, 0.0
  %vm1747 = vcmp.ge.f32.partialorder %v1683, 0.0
  %vm1748 = vcmp.ge.f32.partialorder %v1684, 0.0
  %vm1749 = vcmp.ge.f32.partialorder %v1685, 0.0
  %vm1750 = vcmp.ge.f32.partialorder %v1686, 0.0
  %vm1751 = vcmp.ge.f32.partialorder %v1687, 0.0
  %vm1752 = vcmp.ge.f32.partialorder %v1688, 0.0
  %vm1753 = vcmp.ge.f32.partialorder %v1689, 0.0
  %vm1754 = vcmp.ge.f32.partialorder %v1690, 0.0
  %vm1755 = vcmp.ge.f32.partialorder %v1691, 0.0
  %vm1756 = vcmp.ge.f32.partialorder %v1692, 0.0
  %vm1757 = vcmp.ge.f32.partialorder %v1693, 0.0
  %vm1758 = vcmp.ge.f32.partialorder %v1694, 0.0
  %vm1759 = vcmp.ge.f32.partialorder %v1695, 0.0
  %vm1760 = vcmp.ge.f32.partialorder %v1696, 0.0
  %vm1761 = vcmp.ge.f32.partialorder %v1697, 0.0
  %vm1762 = vcmp.ge.f32.partialorder %v1698, 0.0
  %vm1763 = vcmp.ge.f32.partialorder %v1699, 0.0
  %vm1764 = vcmp.ge.f32.partialorder %v1700, 0.0
  %vm1765 = vcmp.ge.f32.partialorder %v1701, 0.0
  %vm1766 = vcmp.ge.f32.partialorder %v1702, 0.0
  %vm1767 = vcmp.ge.f32.partialorder %v1703, 0.0
  %vm1768 = vcmp.ge.f32.partialorder %v1704, 0.0
  %vm1769 = vcmp.ge.f32.partialorder %v1705, 0.0
  %vm1770 = vcmp.ge.f32.partialorder %v1706, 0.0
  %vm1771 = vcmp.ge.f32.partialorder %v1707, 0.0
  %vm1772 = vcmp.ge.f32.partialorder %v1708, 0.0
  %v1773 = vmul.f32 %v1645, 0.2
  %v1774 = vmul.f32 %v1646, 0.2
  %v1775 = vmul.f32 %v1647, 0.2
  %v1776 = vmul.f32 %v1648, 0.2
  %v1777 = vmul.f32 %v1649, 0.2
  %v1778 = vmul.f32 %v1650, 0.2
  %v1779 = vmul.f32 %v1651, 0.2
  %v1780 = vmul.f32 %v1652, 0.2
  %v1781 = vmul.f32 %v1653, 0.2
  %v1782 = vmul.f32 %v1654, 0.2
  %v1783 = vmul.f32 %v1655, 0.2
  %v1784 = vmul.f32 %v1656, 0.2
  %v1785 = vmul.f32 %v1657, 0.2
  %v1786 = vmul.f32 %v1658, 0.2
  %v1787 = vmul.f32 %v1659, 0.2
  %v1788 = vmul.f32 %v1660, 0.2
  %v1789 = vmul.f32 %v1661, 0.2
  %v1790 = vmul.f32 %v1662, 0.2
  %v1791 = vmul.f32 %v1663, 0.2
  %v1792 = vmul.f32 %v1664, 0.2
  %v1793 = vmul.f32 %v1665, 0.2
  %v1794 = vmul.f32 %v1666, 0.2
  %v1795 = vmul.f32 %v1667, 0.2
  %v1796 = vmul.f32 %v1668, 0.2
  %v1797 = vmul.f32 %v1669, 0.2
  %v1798 = vmul.f32 %v1670, 0.2
  %v1799 = vmul.f32 %v1671, 0.2
  %v1800 = vmul.f32 %v1672, 0.2
  %v1801 = vmul.f32 %v1673, 0.2
  %v1802 = vmul.f32 %v1674, 0.2
  %v1803 = vmul.f32 %v1675, 0.2
  %v1804 = vmul.f32 %v1676, 0.2
  %v1805 = vmul.f32 %v1677, 0.2
  %v1806 = vmul.f32 %v1678, 0.2
  %v1807 = vmul.f32 %v1679, 0.2
  %v1808 = vmul.f32 %v1680, 0.2
  %v1809 = vmul.f32 %v1681, 0.2
  %v1810 = vmul.f32 %v1682, 0.2
  %v1811 = vmul.f32 %v1683, 0.2
  %v1812 = vmul.f32 %v1684, 0.2
  %v1813 = vmul.f32 %v1685, 0.2
  %v1814 = vmul.f32 %v1686, 0.2
  %v1815 = vmul.f32 %v1687, 0.2
  %v1816 = vmul.f32 %v1688, 0.2
  %v1817 = vmul.f32 %v1689, 0.2
  %v1818 = vmul.f32 %v1690, 0.2
  %v1819 = vmul.f32 %v1691, 0.2
  %v1820 = vmul.f32 %v1692, 0.2
  %v1821 = vmul.f32 %v1693, 0.2
  %v1822 = vmul.f32 %v1694, 0.2
  %v1823 = vmul.f32 %v1695, 0.2
  %v1824 = vmul.f32 %v1696, 0.2
  %v1825 = vmul.f32 %v1697, 0.2
  %v1826 = vmul.f32 %v1698, 0.2
  %v1827 = vmul.f32 %v1699, 0.2
  %v1828 = vmul.f32 %v1700, 0.2
  %v1829 = vmul.f32 %v1701, 0.2
  %v1830 = vmul.f32 %v1702, 0.2
  %v1831 = vmul.f32 %v1703, 0.2
  %v1832 = vmul.f32 %v1704, 0.2
  %v1833 = vmul.f32 %v1705, 0.2
  %v1834 = vmul.f32 %v1706, 0.2
  %v1835 = vmul.f32 %v1707, 0.2
  %v1836 = vmul.f32 %v1708, 0.2
  %v1837 = vsel %vm1709, %v1645, %v1773
  %v1838 = vsel %vm1710, %v1646, %v1774
  %v1839 = vsel %vm1711, %v1647, %v1775
  %v1840 = vsel %vm1712, %v1648, %v1776
  %v1841 = vsel %vm1713, %v1649, %v1777
  %v1842 = vsel %vm1714, %v1650, %v1778
  %v1843 = vsel %vm1715, %v1651, %v1779
  %v1844 = vsel %vm1716, %v1652, %v1780
  %v1845 = vsel %vm1717, %v1653, %v1781
  %v1846 = vsel %vm1718, %v1654, %v1782
  %v1847 = vsel %vm1719, %v1655, %v1783
  %v1848 = vsel %vm1720, %v1656, %v1784
  %v1849 = vsel %vm1721, %v1657, %v1785
  %v1850 = vsel %vm1722, %v1658, %v1786
  %v1851 = vsel %vm1723, %v1659, %v1787
  %v1852 = vsel %vm1724, %v1660, %v1788
  %v1853 = vsel %vm1725, %v1661, %v1789
  %v1854 = vsel %vm1726, %v1662, %v1790
  %v1855 = vsel %vm1727, %v1663, %v1791
  %v1856 = vsel %vm1728, %v1664, %v1792
  %v1857 = vsel %vm1729, %v1665, %v1793
  %v1858 = vsel %vm1730, %v1666, %v1794
  %v1859 = vsel %vm1731, %v1667, %v1795
  %v1860 = vsel %vm1732, %v1668, %v1796
  %v1861 = vsel %vm1733, %v1669, %v1797
  %v1862 = vsel %vm1734, %v1670, %v1798
  %v1863 = vsel %vm1735, %v1671, %v1799
  %v1864 = vsel %vm1736, %v1672, %v1800
  %v1865 = vsel %vm1737, %v1673, %v1801
  %v1866 = vsel %vm1738, %v1674, %v1802
  %v1867 = vsel %vm1739, %v1675, %v1803
  %v1868 = vsel %vm1740, %v1676, %v1804
  %v1869 = vsel %vm1741, %v1677, %v1805
  %v1870 = vsel %vm1742, %v1678, %v1806
  %v1871 = vsel %vm1743, %v1679, %v1807
  %v1872 = vsel %vm1744, %v1680, %v1808
  %v1873 = vsel %vm1745, %v1681, %v1809
  %v1874 = vsel %vm1746, %v1682, %v1810
  %v1875 = vsel %vm1747, %v1683, %v1811
  %v1876 = vsel %vm1748, %v1684, %v1812
  %v1877 = vsel %vm1749, %v1685, %v1813
  %v1878 = vsel %vm1750, %v1686, %v1814
  %v1879 = vsel %vm1751, %v1687, %v1815
  %v1880 = vsel %vm1752, %v1688, %v1816
  %v1881 = vsel %vm1753, %v1689, %v1817
  %v1882 = vsel %vm1754, %v1690, %v1818
  %v1883 = vsel %vm1755, %v1691, %v1819
  %v1884 = vsel %vm1756, %v1692, %v1820
  %v1885 = vsel %vm1757, %v1693, %v1821
  %v1886 = vsel %vm1758, %v1694, %v1822
  %v1887 = vsel %vm1759, %v1695, %v1823
  %v1888 = vsel %vm1760, %v1696, %v1824
  %v1889 = vsel %vm1761, %v1697, %v1825
  %v1890 = vsel %vm1762, %v1698, %v1826
  %v1891 = vsel %vm1763, %v1699, %v1827
  %v1892 = vsel %vm1764, %v1700, %v1828
  %v1893 = vsel %vm1765, %v1701, %v1829
  %v1894 = vsel %vm1766, %v1702, %v1830
  %v1895 = vsel %vm1767, %v1703, %v1831
  %v1896 = vsel %vm1768, %v1704, %v1832
  %v1897 = vsel %vm1769, %v1705, %v1833
  %v1898 = vsel %vm1770, %v1706, %v1834
  %v1899 = vsel %vm1771, %v1707, %v1835
  %v1900 = vsel %vm1772, %v1708, %v1836
  %v1901 = vpack.c.bf16 %v1838, %v1837
  %v1902 = vpack.c.bf16 %v1840, %v1839
  %v1903 = vpack.c.bf16 %v1842, %v1841
  %v1904 = vpack.c.bf16 %v1844, %v1843
  %v1905 = vpack.c.bf16 %v1846, %v1845
  %v1906 = vpack.c.bf16 %v1848, %v1847
  %v1907 = vpack.c.bf16 %v1850, %v1849
  %v1908 = vpack.c.bf16 %v1852, %v1851
  %v1909 = vpack.c.bf16 %v1854, %v1853
  %v1910 = vpack.c.bf16 %v1856, %v1855
  %v1911 = vpack.c.bf16 %v1858, %v1857
  %v1912 = vpack.c.bf16 %v1860, %v1859
  %v1913 = vpack.c.bf16 %v1862, %v1861
  %v1914 = vpack.c.bf16 %v1864, %v1863
  %v1915 = vpack.c.bf16 %v1866, %v1865
  %v1916 = vpack.c.bf16 %v1868, %v1867
  %v1917 = vpack.c.bf16 %v1870, %v1869
  %v1918 = vpack.c.bf16 %v1872, %v1871
  %v1919 = vpack.c.bf16 %v1874, %v1873
  %v1920 = vpack.c.bf16 %v1876, %v1875
  %v1921 = vpack.c.bf16 %v1878, %v1877
  %v1922 = vpack.c.bf16 %v1880, %v1879
  %v1923 = vpack.c.bf16 %v1882, %v1881
  %v1924 = vpack.c.bf16 %v1884, %v1883
  %v1925 = vpack.c.bf16 %v1886, %v1885
  %v1926 = vpack.c.bf16 %v1888, %v1887
  %v1927 = vpack.c.bf16 %v1890, %v1889
  %v1928 = vpack.c.bf16 %v1892, %v1891
  %v1929 = vpack.c.bf16 %v1894, %v1893
  %v1930 = vpack.c.bf16 %v1896, %v1895
  %v1931 = vpack.c.bf16 %v1898, %v1897
  %v1932 = vpack.c.bf16 %v1900, %v1899
  %v1965 = vunpack.c.l.b16 %v1901
  %v1966 = vunpack.c.h.b16 %v1901
  %v1967 = vunpack.c.l.b16 %v1902
  %v1968 = vunpack.c.h.b16 %v1902
  %v1969 = vunpack.c.l.b16 %v1903
  %v1970 = vunpack.c.h.b16 %v1903
  %v1971 = vunpack.c.l.b16 %v1904
  %v1972 = vunpack.c.h.b16 %v1904
  %v1973 = vunpack.c.l.b16 %v1905
  %v1974 = vunpack.c.h.b16 %v1905
  %v1975 = vunpack.c.l.b16 %v1906
  %v1976 = vunpack.c.h.b16 %v1906
  %v1977 = vunpack.c.l.b16 %v1907
  %v1978 = vunpack.c.h.b16 %v1907
  %v1979 = vunpack.c.l.b16 %v1908
  %v1980 = vunpack.c.h.b16 %v1908
  %v1981 = vunpack.c.l.b16 %v1909
  %v1982 = vunpack.c.h.b16 %v1909
  %v1983 = vunpack.c.l.b16 %v1910
  %v1984 = vunpack.c.h.b16 %v1910
  %v1985 = vunpack.c.l.b16 %v1911
  %v1986 = vunpack.c.h.b16 %v1911
  %v1987 = vunpack.c.l.b16 %v1912
  %v1988 = vunpack.c.h.b16 %v1912
  %v1989 = vunpack.c.l.b16 %v1913
  %v1990 = vunpack.c.h.b16 %v1913
  %v1991 = vunpack.c.l.b16 %v1914
  %v1992 = vunpack.c.h.b16 %v1914
  %v1993 = vunpack.c.l.b16 %v1915
  %v1994 = vunpack.c.h.b16 %v1915
  %v1995 = vunpack.c.l.b16 %v1916
  %v1996 = vunpack.c.h.b16 %v1916
  %v1997 = vunpack.c.l.b16 %v1917
  %v1998 = vunpack.c.h.b16 %v1917
  %v1999 = vunpack.c.l.b16 %v1918
  %v2000 = vunpack.c.h.b16 %v1918
  %v2001 = vunpack.c.l.b16 %v1919
  %v2002 = vunpack.c.h.b16 %v1919
  %v2003 = vunpack.c.l.b16 %v1920
  %v2004 = vunpack.c.h.b16 %v1920
  %v2005 = vunpack.c.l.b16 %v1921
  %v2006 = vunpack.c.h.b16 %v1921
  %v2007 = vunpack.c.l.b16 %v1922
  %v2008 = vunpack.c.h.b16 %v1922
  %v2009 = vunpack.c.l.b16 %v1923
  %v2010 = vunpack.c.h.b16 %v1923
  %v2011 = vunpack.c.l.b16 %v1924
  %v2012 = vunpack.c.h.b16 %v1924
  %v2013 = vunpack.c.l.b16 %v1925
  %v2014 = vunpack.c.h.b16 %v1925
  %v2015 = vunpack.c.l.b16 %v1926
  %v2016 = vunpack.c.h.b16 %v1926
  %v2017 = vunpack.c.l.b16 %v1927
  %v2018 = vunpack.c.h.b16 %v1927
  %v2019 = vunpack.c.l.b16 %v1928
  %v2020 = vunpack.c.h.b16 %v1928
  %v2021 = vunpack.c.l.b16 %v1929
  %v2022 = vunpack.c.h.b16 %v1929
  %v2023 = vunpack.c.l.b16 %v1930
  %v2024 = vunpack.c.h.b16 %v1930
  %v2025 = vunpack.c.l.b16 %v1931
  %v2026 = vunpack.c.h.b16 %v1931
  %v2027 = vunpack.c.l.b16 %v1932
  %v2028 = vunpack.c.h.b16 %v1932
  %v2029 = vpack.c.b16 %v1965, %v1965
  %v2030 = vpack.c.b16 %v1966, %v1966
  %v2031 = vpack.c.b16 %v1967, %v1967
  %v2032 = vpack.c.b16 %v1968, %v1968
  %v2033 = vpack.c.b16 %v1969, %v1969
  %v2034 = vpack.c.b16 %v1970, %v1970
  %v2035 = vpack.c.b16 %v1971, %v1971
  %v2036 = vpack.c.b16 %v1972, %v1972
  %v2037 = vpack.c.b16 %v1973, %v1973
  %v2038 = vpack.c.b16 %v1974, %v1974
  %v2039 = vpack.c.b16 %v1975, %v1975
  %v2040 = vpack.c.b16 %v1976, %v1976
  %v2041 = vpack.c.b16 %v1977, %v1977
  %v2042 = vpack.c.b16 %v1978, %v1978
  %v2043 = vpack.c.b16 %v1979, %v1979
  %v2044 = vpack.c.b16 %v1980, %v1980
  %v2045 = vpack.c.b16 %v1981, %v1981
  %v2046 = vpack.c.b16 %v1982, %v1982
  %v2047 = vpack.c.b16 %v1983, %v1983
  %v2048 = vpack.c.b16 %v1984, %v1984
  %v2049 = vpack.c.b16 %v1985, %v1985
  %v2050 = vpack.c.b16 %v1986, %v1986
  %v2051 = vpack.c.b16 %v1987, %v1987
  %v2052 = vpack.c.b16 %v1988, %v1988
  %v2053 = vpack.c.b16 %v1989, %v1989
  %v2054 = vpack.c.b16 %v1990, %v1990
  %v2055 = vpack.c.b16 %v1991, %v1991
  %v2056 = vpack.c.b16 %v1992, %v1992
  %v2057 = vpack.c.b16 %v1993, %v1993
  %v2058 = vpack.c.b16 %v1994, %v1994
  %v2059 = vpack.c.b16 %v1995, %v1995
  %v2060 = vpack.c.b16 %v1996, %v1996
  %v2061 = vpack.c.b16 %v1997, %v1997
  %v2062 = vpack.c.b16 %v1998, %v1998
  %v2063 = vpack.c.b16 %v1999, %v1999
  %v2064 = vpack.c.b16 %v2000, %v2000
  %v2065 = vpack.c.b16 %v2001, %v2001
  %v2066 = vpack.c.b16 %v2002, %v2002
  %v2067 = vpack.c.b16 %v2003, %v2003
  %v2068 = vpack.c.b16 %v2004, %v2004
  %v2069 = vpack.c.b16 %v2005, %v2005
  %v2070 = vpack.c.b16 %v2006, %v2006
  %v2071 = vpack.c.b16 %v2007, %v2007
  %v2072 = vpack.c.b16 %v2008, %v2008
  %v2073 = vpack.c.b16 %v2009, %v2009
  %v2074 = vpack.c.b16 %v2010, %v2010
  %v2075 = vpack.c.b16 %v2011, %v2011
  %v2076 = vpack.c.b16 %v2012, %v2012
  %v2077 = vpack.c.b16 %v2013, %v2013
  %v2078 = vpack.c.b16 %v2014, %v2014
  %v2079 = vpack.c.b16 %v2015, %v2015
  %v2080 = vpack.c.b16 %v2016, %v2016
  %v2081 = vpack.c.b16 %v2017, %v2017
  %v2082 = vpack.c.b16 %v2018, %v2018
  %v2083 = vpack.c.b16 %v2019, %v2019
  %v2084 = vpack.c.b16 %v2020, %v2020
  %v2085 = vpack.c.b16 %v2021, %v2021
  %v2086 = vpack.c.b16 %v2022, %v2022
  %v2087 = vpack.c.b16 %v2023, %v2023
  %v2088 = vpack.c.b16 %v2024, %v2024
  %v2089 = vpack.c.b16 %v2025, %v2025
  %v2090 = vpack.c.b16 %v2026, %v2026
  %v2091 = vpack.c.b16 %v2027, %v2027
  %v2092 = vpack.c.b16 %v2028, %v2028
  %vm2157 = vcmask 257024
  %2158 = vst.msk [vmem:[%s2] sm:$0xf] %vm2157, %v2029
  %2159 = vst.msk [vmem:[%s2 + $0x4] sm:$0xf] %vm2157, %v2030
  %2160 = vst.msk [vmem:[%s2 + $0x8] sm:$0xf] %vm2157, %v2031
  %2161 = vst.msk [vmem:[%s2 + $0xc] sm:$0xf] %vm2157, %v2032
  %2162 = vst.msk [vmem:[%s2 + $0x10] sm:$0xf] %vm2157, %v2033
  %2163 = vst.msk [vmem:[%s2 + $0x14] sm:$0xf] %vm2157, %v2034
  %2164 = vst.msk [vmem:[%s2 + $0x18] sm:$0xf] %vm2157, %v2035
  %2165 = vst.msk [vmem:[%s2 + $0x1c] sm:$0xf] %vm2157, %v2036
  %2166 = vst.msk [vmem:[%s2 + $0x20] sm:$0xf] %vm2157, %v2037
  %2167 = vst.msk [vmem:[%s2 + $0x24] sm:$0xf] %vm2157, %v2038
  %2168 = vst.msk [vmem:[%s2 + $0x28] sm:$0xf] %vm2157, %v2039
  %2169 = vst.msk [vmem:[%s2 + $0x2c] sm:$0xf] %vm2157, %v2040
  %2170 = vst.msk [vmem:[%s2 + $0x30] sm:$0xf] %vm2157, %v2041
  %2171 = vst.msk [vmem:[%s2 + $0x34] sm:$0xf] %vm2157, %v2042
  %2172 = vst.msk [vmem:[%s2 + $0x38] sm:$0xf] %vm2157, %v2043
  %2173 = vst.msk [vmem:[%s2 + $0x3c] sm:$0xf] %vm2157, %v2044
  %2174 = vst.msk [vmem:[%s2 + $0x40] sm:$0xf] %vm2157, %v2045
  %2175 = vst.msk [vmem:[%s2 + $0x44] sm:$0xf] %vm2157, %v2046
  %2176 = vst.msk [vmem:[%s2 + $0x48] sm:$0xf] %vm2157, %v2047
  %2177 = vst.msk [vmem:[%s2 + $0x4c] sm:$0xf] %vm2157, %v2048
  %2178 = vst.msk [vmem:[%s2 + $0x50] sm:$0xf] %vm2157, %v2049
  %2179 = vst.msk [vmem:[%s2 + $0x54] sm:$0xf] %vm2157, %v2050
  %2180 = vst.msk [vmem:[%s2 + $0x58] sm:$0xf] %vm2157, %v2051
  %2181 = vst.msk [vmem:[%s2 + $0x5c] sm:$0xf] %vm2157, %v2052
  %2182 = vst.msk [vmem:[%s2 + $0x60] sm:$0xf] %vm2157, %v2053
  %2183 = vst.msk [vmem:[%s2 + $0x64] sm:$0xf] %vm2157, %v2054
  %2184 = vst.msk [vmem:[%s2 + $0x68] sm:$0xf] %vm2157, %v2055
  %2185 = vst.msk [vmem:[%s2 + $0x6c] sm:$0xf] %vm2157, %v2056
  %2186 = vst.msk [vmem:[%s2 + $0x70] sm:$0xf] %vm2157, %v2057
  %2187 = vst.msk [vmem:[%s2 + $0x74] sm:$0xf] %vm2157, %v2058
  %2188 = vst.msk [vmem:[%s2 + $0x78] sm:$0xf] %vm2157, %v2059
  %2189 = vst.msk [vmem:[%s2 + $0x7c] sm:$0xf] %vm2157, %v2060
  %2190 = vst.msk [vmem:[%s2 + $0x80] sm:$0xf] %vm2157, %v2061
  %2191 = vst.msk [vmem:[%s2 + $0x84] sm:$0xf] %vm2157, %v2062
  %2192 = vst.msk [vmem:[%s2 + $0x88] sm:$0xf] %vm2157, %v2063
  %2193 = vst.msk [vmem:[%s2 + $0x8c] sm:$0xf] %vm2157, %v2064
  %2194 = vst.msk [vmem:[%s2 + $0x90] sm:$0xf] %vm2157, %v2065
  %2195 = vst.msk [vmem:[%s2 + $0x94] sm:$0xf] %vm2157, %v2066
  %2196 = vst.msk [vmem:[%s2 + $0x98] sm:$0xf] %vm2157, %v2067
  %2197 = vst.msk [vmem:[%s2 + $0x9c] sm:$0xf] %vm2157, %v2068
  %2198 = vst.msk [vmem:[%s2 + $0xa0] sm:$0xf] %vm2157, %v2069
  %2199 = vst.msk [vmem:[%s2 + $0xa4] sm:$0xf] %vm2157, %v2070
  %2200 = vst.msk [vmem:[%s2 + $0xa8] sm:$0xf] %vm2157, %v2071
  %2201 = vst.msk [vmem:[%s2 + $0xac] sm:$0xf] %vm2157, %v2072
  %2202 = vst.msk [vmem:[%s2 + $0xb0] sm:$0xf] %vm2157, %v2073
  %2203 = vst.msk [vmem:[%s2 + $0xb4] sm:$0xf] %vm2157, %v2074
  %2204 = vst.msk [vmem:[%s2 + $0xb8] sm:$0xf] %vm2157, %v2075
  %2205 = vst.msk [vmem:[%s2 + $0xbc] sm:$0xf] %vm2157, %v2076
  %2206 = vst.msk [vmem:[%s2 + $0xc0] sm:$0xf] %vm2157, %v2077
  %2207 = vst.msk [vmem:[%s2 + $0xc4] sm:$0xf] %vm2157, %v2078
  %2208 = vst.msk [vmem:[%s2 + $0xc8] sm:$0xf] %vm2157, %v2079
  %2209 = vst.msk [vmem:[%s2 + $0xcc] sm:$0xf] %vm2157, %v2080
  %2210 = vst.msk [vmem:[%s2 + $0xd0] sm:$0xf] %vm2157, %v2081
  %2211 = vst.msk [vmem:[%s2 + $0xd4] sm:$0xf] %vm2157, %v2082
  %2212 = vst.msk [vmem:[%s2 + $0xd8] sm:$0xf] %vm2157, %v2083
  %2213 = vst.msk [vmem:[%s2 + $0xdc] sm:$0xf] %vm2157, %v2084
  %2214 = vst.msk [vmem:[%s2 + $0xe0] sm:$0xf] %vm2157, %v2085
  %2215 = vst.msk [vmem:[%s2 + $0xe4] sm:$0xf] %vm2157, %v2086
  %2216 = vst.msk [vmem:[%s2 + $0xe8] sm:$0xf] %vm2157, %v2087
  %2217 = vst.msk [vmem:[%s2 + $0xec] sm:$0xf] %vm2157, %v2088
  %2218 = vst.msk [vmem:[%s2 + $0xf0] sm:$0xf] %vm2157, %v2089
  %2219 = vst.msk [vmem:[%s2 + $0xf4] sm:$0xf] %vm2157, %v2090
  %2220 = vst.msk [vmem:[%s2 + $0xf8] sm:$0xf] %vm2157, %v2091
  %2221 = vst.msk [vmem:[%s2 + $0xfc] sm:$0xf] %vm2157, %v2092
  // Predicated region
  $region10: #{critic_forward.6} parent=0 // pred_check
    _
  $region11: #{critic_forward.6} parent=0 // pred_check_branch
    %2223 = sbr.rel (0) target = $region13
  $region12: #{critic_forward.6} parent=0 // pred_region
    _
  $region13: #{critic_forward.6} parent=0 // pred_fallthru
    _
  // Predicated region
  $region14: #{critic_forward.6} parent=0 // pred_check
    _
  $region15: #{critic_forward.6} parent=0 // pred_check_branch
    %2225 = sbr.rel (0) target = $region17
  $region16: #{critic_forward.6} parent=0 // pred_region
    _
  $region17: #{critic_forward.6} parent=0 // pred_fallthru
    _

// kernel: critic_forward.7
$region0: #{critic_forward.7}
  #allocation0 [shape = 'u32[]', space=smem, size = 0x4, offset = 0x4, fixed_abs, tag = 'smem constant byte address 0x4 - core index']
  #allocation1 [shape = 'u32[144,128]{1,0:T(1,128)}', space=vmem, size = 0x12000, scoped, tag = 'internal scratch']
  %s0 = inlined_call_operand.vmem [shape: bf16[2,72,256], index: 0, kind: input, shape index: {}]
  %s1 = inlined_call_operand.vmem [shape: bf16[2,256,64], index: 1, kind: input, shape index: {}]
  %s2 = inlined_call_operand.vmem [shape: bf16[2,64,64], index: 2, kind: output, shape index: {}]
  %s3 = sld [smem:[#allocation0]]
  $region18: #{critic_forward.7} parent=0
    _
  %s5 = ssub.s32 1, %s3
  %s6 = scalar_select 0, %s5, %s3
  // Predicated region
  $region2: #{critic_forward.7} parent=0 // pred_check
    _
  $region3: #{critic_forward.7} parent=0 // pred_check_branch
    %8 = sbr.rel (0) target = $region5
  $region4: #{critic_forward.7} parent=0 // pred_region
    _
  $region5: #{critic_forward.7} parent=0 // pred_fallthru
    _
  // Predicated region
  $region6: #{critic_forward.7} parent=0 // pred_check
    _
  $region7: #{critic_forward.7} parent=0 // pred_check_branch
    %10 = sbr.rel (0) target = $region9
  $region8: #{critic_forward.7} parent=0 // pred_region
    _
  $region9: #{critic_forward.7} parent=0 // pred_fallthru
    _
  %v12 = vld [vmem:[%s0] sm:$0xff]
  %v13 = vld [vmem:[%s0 + $0x8] sm:$0xff]
  %v14 = vld [vmem:[%s0 + $0x10] sm:$0xff]
  %v15 = vld [vmem:[%s0 + $0x18] sm:$0xff]
  %v16 = vld [vmem:[%s0 + $0x20] sm:$0xff]
  %v17 = vld [vmem:[%s0 + $0x28] sm:$0xff]
  %v18 = vld [vmem:[%s0 + $0x30] sm:$0xff]
  %v19 = vld [vmem:[%s0 + $0x38] sm:$0xff]
  %v20 = vld [vmem:[%s0 + $0x48] sm:$0xff]
  %v21 = vld [vmem:[%s0 + $0x50] sm:$0xff]
  %v22 = vld [vmem:[%s0 + $0x58] sm:$0xff]
  %v23 = vld [vmem:[%s0 + $0x60] sm:$0xff]
  %v24 = vld [vmem:[%s0 + $0x68] sm:$0xff]
  %v25 = vld [vmem:[%s0 + $0x70] sm:$0xff]
  %v26 = vld [vmem:[%s0 + $0x78] sm:$0xff]
  %v27 = vld [vmem:[%s0 + $0x80] sm:$0xff]
  %v28 = vld [vmem:[%s1] sm:$0xf]
  %v29 = vld [vmem:[%s1 + $0x4] sm:$0xf]
  %v30 = vld [vmem:[%s1 + $0x8] sm:$0xf]
  %v31 = vld [vmem:[%s1 + $0xc] sm:$0xf]
  %v32 = vld [vmem:[%s1 + $0x10] sm:$0xf]
  %v33 = vld [vmem:[%s1 + $0x14] sm:$0xf]
  %v34 = vld [vmem:[%s1 + $0x18] sm:$0xf]
  %v35 = vld [vmem:[%s1 + $0x1c] sm:$0xf]
  %v36 = vld [vmem:[%s1 + $0x20] sm:$0xf]
  %v37 = vld [vmem:[%s1 + $0x24] sm:$0xf]
  %v38 = vld [vmem:[%s1 + $0x28] sm:$0xf]
  %v39 = vld [vmem:[%s1 + $0x2c] sm:$0xf]
  %v40 = vld [vmem:[%s1 + $0x30] sm:$0xf]
  %v41 = vld [vmem:[%s1 + $0x34] sm:$0xf]
  %v42 = vld [vmem:[%s1 + $0x38] sm:$0xf]
  %v43 = vld [vmem:[%s1 + $0x3c] sm:$0xf]
  %v44 = vld [vmem:[%s1 + $0x40] sm:$0xf]
  %v45 = vld [vmem:[%s1 + $0x44] sm:$0xf]
  %v46 = vld [vmem:[%s1 + $0x48] sm:$0xf]
  %v47 = vld [vmem:[%s1 + $0x4c] sm:$0xf]
  %v48 = vld [vmem:[%s1 + $0x50] sm:$0xf]
  %v49 = vld [vmem:[%s1 + $0x54] sm:$0xf]
  %v50 = vld [vmem:[%s1 + $0x58] sm:$0xf]
  %v51 = vld [vmem:[%s1 + $0x5c] sm:$0xf]
  %v52 = vld [vmem:[%s1 + $0x60] sm:$0xf]
  %v53 = vld [vmem:[%s1 + $0x64] sm:$0xf]
  %v54 = vld [vmem:[%s1 + $0x68] sm:$0xf]
  %v55 = vld [vmem:[%s1 + $0x6c] sm:$0xf]
  %v56 = vld [vmem:[%s1 + $0x70] sm:$0xf]
  %v57 = vld [vmem:[%s1 + $0x74] sm:$0xf]
  %v58 = vld [vmem:[%s1 + $0x78] sm:$0xf]
  %v59 = vld [vmem:[%s1 + $0x7c] sm:$0xf]
  %v60 = vld [vmem:[%s0 + $0x8] sm:$0xff]
  %v61 = vld [vmem:[%s0 + $0x10] sm:$0xff]
  %v62 = vld [vmem:[%s0 + $0x18] sm:$0xff]
  %v63 = vld [vmem:[%s0 + $0x20] sm:$0xff]
  %v64 = vld [vmem:[%s0 + $0x28] sm:$0xff]
  %v65 = vld [vmem:[%s0 + $0x30] sm:$0xff]
  %v66 = vld [vmem:[%s0 + $0x38] sm:$0xff]
  %v67 = vld [vmem:[%s0 + $0x40] sm:$0xff]
  %v68 = vld [vmem:[%s0 + $0x50] sm:$0xff]
  %v69 = vld [vmem:[%s0 + $0x58] sm:$0xff]
  %v70 = vld [vmem:[%s0 + $0x60] sm:$0xff]
  %v71 = vld [vmem:[%s0 + $0x68] sm:$0xff]
  %v72 = vld [vmem:[%s0 + $0x70] sm:$0xff]
  %v73 = vld [vmem:[%s0 + $0x78] sm:$0xff]
  %v74 = vld [vmem:[%s0 + $0x80] sm:$0xff]
  %v75 = vld [vmem:[%s0 + $0x88] sm:$0xff]
  %s76 = scalar_lea.vmem %s1, 128
  %v77 = vld [vmem:[%s76] sm:$0xf]
  %v78 = vld [vmem:[%s76 + $0x4] sm:$0xf]
  %v79 = vld [vmem:[%s76 + $0x8] sm:$0xf]
  %v80 = vld [vmem:[%s76 + $0xc] sm:$0xf]
  %v81 = vld [vmem:[%s76 + $0x10] sm:$0xf]
  %v82 = vld [vmem:[%s76 + $0x14] sm:$0xf]
  %v83 = vld [vmem:[%s76 + $0x18] sm:$0xf]
  %v84 = vld [vmem:[%s76 + $0x1c] sm:$0xf]
  %v85 = vld [vmem:[%s76 + $0x20] sm:$0xf]
  %v86 = vld [vmem:[%s76 + $0x24] sm:$0xf]
  %v87 = vld [vmem:[%s76 + $0x28] sm:$0xf]
  %v88 = vld [vmem:[%s76 + $0x2c] sm:$0xf]
  %v89 = vld [vmem:[%s76 + $0x30] sm:$0xf]
  %v90 = vld [vmem:[%s76 + $0x34] sm:$0xf]
  %v91 = vld [vmem:[%s76 + $0x38] sm:$0xf]
  %v92 = vld [vmem:[%s76 + $0x3c] sm:$0xf]
  %v93 = vld [vmem:[%s76 + $0x40] sm:$0xf]
  %v94 = vld [vmem:[%s76 + $0x44] sm:$0xf]
  %v95 = vld [vmem:[%s76 + $0x48] sm:$0xf]
  %v96 = vld [vmem:[%s76 + $0x4c] sm:$0xf]
  %v97 = vld [vmem:[%s76 + $0x50] sm:$0xf]
  %v98 = vld [vmem:[%s76 + $0x54] sm:$0xf]
  %v99 = vld [vmem:[%s76 + $0x58] sm:$0xf]
  %v100 = vld [vmem:[%s76 + $0x5c] sm:$0xf]
  %v101 = vld [vmem:[%s76 + $0x60] sm:$0xf]
  %v102 = vld [vmem:[%s76 + $0x64] sm:$0xf]
  %v103 = vld [vmem:[%s76 + $0x68] sm:$0xf]
  %v104 = vld [vmem:[%s76 + $0x6c] sm:$0xf]
  %v105 = vld [vmem:[%s76 + $0x70] sm:$0xf]
  %v106 = vld [vmem:[%s76 + $0x74] sm:$0xf]
  %v107 = vld [vmem:[%s76 + $0x78] sm:$0xf]
  %v108 = vld [vmem:[%s76 + $0x7c] sm:$0xf]
  %v125 = vunpack.c.l.b16 %v60
  %v126 = vunpack.c.h.b16 %v60
  %v127 = vunpack.c.l.b16 %v61
  %v128 = vunpack.c.h.b16 %v61
  %v129 = vunpack.c.l.b16 %v62
  %v130 = vunpack.c.h.b16 %v62
  %v131 = vunpack.c.l.b16 %v63
  %v132 = vunpack.c.h.b16 %v63
  %v133 = vunpack.c.l.b16 %v64
  %v134 = vunpack.c.h.b16 %v64
  %v135 = vunpack.c.l.b16 %v65
  %v136 = vunpack.c.h.b16 %v65
  %v137 = vunpack.c.l.b16 %v66
  %v138 = vunpack.c.h.b16 %v66
  %v139 = vunpack.c.l.b16 %v67
  %v140 = vunpack.c.h.b16 %v67
  %v141 = vunpack.c.l.b16 %v68
  %v142 = vunpack.c.h.b16 %v68
  %v143 = vunpack.c.l.b16 %v69
  %v144 = vunpack.c.h.b16 %v69
  %v145 = vunpack.c.l.b16 %v70
  %v146 = vunpack.c.h.b16 %v70
  %v147 = vunpack.c.l.b16 %v71
  %v148 = vunpack.c.h.b16 %v71
  %v149 = vunpack.c.l.b16 %v72
  %v150 = vunpack.c.h.b16 %v72
  %v151 = vunpack.c.l.b16 %v73
  %v152 = vunpack.c.h.b16 %v73
  %v153 = vunpack.c.l.b16 %v74
  %v154 = vunpack.c.h.b16 %v74
  %v155 = vunpack.c.l.b16 %v75
  %v156 = vunpack.c.h.b16 %v75
  %v157 = vpack.c.b16 %v127, %v125
  %v158 = vpack.c.b16 %v128, %v126
  %v159 = vpack.c.b16 %v131, %v129
  %v160 = vpack.c.b16 %v132, %v130
  %v161 = vpack.c.b16 %v135, %v133
  %v162 = vpack.c.b16 %v136, %v134
  %v163 = vpack.c.b16 %v139, %v137
  %v164 = vpack.c.b16 %v140, %v138
  %v165 = vpack.c.b16 %v143, %v141
  %v166 = vpack.c.b16 %v144, %v142
  %v167 = vpack.c.b16 %v147, %v145
  %v168 = vpack.c.b16 %v148, %v146
  %v169 = vpack.c.b16 %v151, %v149
  %v170 = vpack.c.b16 %v152, %v150
  %v171 = vpack.c.b16 %v155, %v153
  %v172 = vpack.c.b16 %v156, %v154
  %v221 = vunpack.c.l.b16 %v77
  %v222 = vunpack.c.l.b16 %v78
  %v223 = vunpack.c.l.b16 %v79
  %v224 = vunpack.c.l.b16 %v80
  %v225 = vunpack.c.l.b16 %v81
  %v226 = vunpack.c.l.b16 %v82
  %v227 = vunpack.c.l.b16 %v83
  %v228 = vunpack.c.l.b16 %v84
  %v229 = vunpack.c.l.b16 %v85
  %v230 = vunpack.c.l.b16 %v86
  %v231 = vunpack.c.l.b16 %v87
  %v232 = vunpack.c.l.b16 %v88
  %v233 = vunpack.c.l.b16 %v89
  %v234 = vunpack.c.l.b16 %v90
  %v235 = vunpack.c.l.b16 %v91
  %v236 = vunpack.c.l.b16 %v92
  %v237 = vunpack.c.l.b16 %v93
  %v238 = vunpack.c.l.b16 %v94
  %v239 = vunpack.c.l.b16 %v95
  %v240 = vunpack.c.l.b16 %v96
  %v241 = vunpack.c.l.b16 %v97
  %v242 = vunpack.c.l.b16 %v98
  %v243 = vunpack.c.l.b16 %v99
  %v244 = vunpack.c.l.b16 %v100
  %v245 = vunpack.c.l.b16 %v101
  %v246 = vunpack.c.l.b16 %v102
  %v247 = vunpack.c.l.b16 %v103
  %v248 = vunpack.c.l.b16 %v104
  %v249 = vunpack.c.l.b16 %v105
  %v250 = vunpack.c.l.b16 %v106
  %v251 = vunpack.c.l.b16 %v107
  %v252 = vunpack.c.l.b16 %v108
  %v253 = vpack.c.b16 %v222, %v221
  %v254 = vpack.c.b16 %v224, %v223
  %v255 = vpack.c.b16 %v226, %v225
  %v256 = vpack.c.b16 %v228, %v227
  %v257 = vpack.c.b16 %v230, %v229
  %v258 = vpack.c.b16 %v232, %v231
  %v259 = vpack.c.b16 %v234, %v233
  %v260 = vpack.c.b16 %v236, %v235
  %v261 = vpack.c.b16 %v238, %v237
  %v262 = vpack.c.b16 %v240, %v239
  %v263 = vpack.c.b16 %v242, %v241
  %v264 = vpack.c.b16 %v244, %v243
  %v265 = vpack.c.b16 %v246, %v245
  %v266 = vpack.c.b16 %v248, %v247
  %v267 = vpack.c.b16 %v250, %v249
  %v268 = vpack.c.b16 %v252, %v251
  %285 = vmatprep.subr.bf16.mxu0 0
  %286 = vmatpush1.bf16.msra.mxu0 %v260
  %287 = vmatprep.subr.bf16.mxu0 0
  %288 = vmatpush1.bf16.msra.mxu0 %v259
  %289 = vmatprep.subr.bf16.mxu0 0
  %290 = vmatpush1.bf16.msra.mxu0 %v258
  %291 = vmatprep.subr.bf16.mxu0 0
  %292 = vmatpush1.bf16.msra.mxu0 %v257
  %293 = vmatprep.subr.bf16.mxu0 0
  %294 = vmatpush1.bf16.msra.mxu0 %v256
  %295 = vmatprep.subr.bf16.mxu0 0
  %296 = vmatpush1.bf16.msra.mxu0 %v255
  %297 = vmatprep.subr.bf16.mxu0 0
  %298 = vmatpush1.bf16.msra.mxu0 %v254
  %299 = vmatprep.subr.bf16.mxu0 0
  %300 = vmatpush1.bf16.msra.mxu0 %v253
  %301 = vmatprep.subr.bf16.mxu0 0
  %302 = vmatpush2.bf16.msra.mxu0 %v268
  %303 = vmatprep.subr.bf16.mxu0 0
  %304 = vmatpush2.bf16.msra.mxu0 %v267
  %305 = vmatprep.subr.bf16.mxu0 0
  %306 = vmatpush2.bf16.msra.mxu0 %v266
  %307 = vmatprep.subr.bf16.mxu0 0
  %308 = vmatpush2.bf16.msra.mxu0 %v265
  %309 = vmatprep.subr.bf16.mxu0 0
  %310 = vmatpush2.bf16.msra.mxu0 %v264
  %311 = vmatprep.subr.bf16.mxu0 0
  %312 = vmatpush2.bf16.msra.mxu0 %v263
  %313 = vmatprep.subr.bf16.mxu0 0
  %314 = vmatpush2.bf16.msra.mxu0 %v262
  %315 = vmatprep.subr.bf16.mxu0 0
  %316 = vmatpush2.bf16.msra.mxu0 %v261
  %317 = vmatprep.mubr.bf16.mxu0 %v158
  %318 = vmatmul.mubr.bf16.gmra.mxu0 %v157
  %v319 = vpop.f32.mrf.mxu0
  %v320 = vadd.f32 0.0, %v319
  %v321 = vpop.f32.mrf.mxu0
  %v322 = vpop.f32.mrf.mxu0
  %v323 = vadd.f32 0.0, %v322
  %v324 = vpop.f32.mrf.mxu0
  %325 = vmatprep.mubr.bf16.mxu0 %v160
  %326 = vmatmul.mubr.bf16.gmra.mxu0 %v159
  %v327 = vpop.f32.mrf.mxu0
  %v328 = vadd.f32 0.0, %v327
  %v329 = vpop.f32.mrf.mxu0
  %v330 = vpop.f32.mrf.mxu0
  %v331 = vadd.f32 0.0, %v330
  %v332 = vpop.f32.mrf.mxu0
  %333 = vmatprep.mubr.bf16.mxu0 %v162
  %334 = vmatmul.mubr.bf16.gmra.mxu0 %v161
  %v335 = vpop.f32.mrf.mxu0
  %v336 = vadd.f32 0.0, %v335
  %v337 = vpop.f32.mrf.mxu0
  %v338 = vpop.f32.mrf.mxu0
  %v339 = vadd.f32 0.0, %v338
  %v340 = vpop.f32.mrf.mxu0
  %341 = vmatprep.mubr.bf16.mxu0 %v164
  %342 = vmatmul.mubr.bf16.gmra.mxu0 %v163
  %v343 = vpop.f32.mrf.mxu0
  %v344 = vadd.f32 0.0, %v343
  %v345 = vpop.f32.mrf.mxu0
  %v346 = vpop.f32.mrf.mxu0
  %v347 = vadd.f32 0.0, %v346
  %v348 = vpop.f32.mrf.mxu0
  %349 = vmatprep.mubr.bf16.mxu0 %v166
  %350 = vmatmul.mubr.bf16.gmra.mxu0 %v165
  %v351 = vpop.f32.mrf.mxu0
  %v352 = vadd.f32 0.0, %v351
  %v353 = vpop.f32.mrf.mxu0
  %v354 = vpop.f32.mrf.mxu0
  %v355 = vadd.f32 0.0, %v354
  %v356 = vpop.f32.mrf.mxu0
  %357 = vmatprep.mubr.bf16.mxu0 %v168
  %358 = vmatmul.mubr.bf16.gmra.mxu0 %v167
  %v359 = vpop.f32.mrf.mxu0
  %v360 = vadd.f32 0.0, %v359
  %v361 = vpop.f32.mrf.mxu0
  %v362 = vpop.f32.mrf.mxu0
  %v363 = vadd.f32 0.0, %v362
  %v364 = vpop.f32.mrf.mxu0
  %365 = vmatprep.mubr.bf16.mxu0 %v170
  %366 = vmatmul.mubr.bf16.gmra.mxu0 %v169
  %v367 = vpop.f32.mrf.mxu0
  %v368 = vadd.f32 0.0, %v367
  %v369 = vpop.f32.mrf.mxu0
  %v370 = vpop.f32.mrf.mxu0
  %v371 = vadd.f32 0.0, %v370
  %v372 = vpop.f32.mrf.mxu0
  %373 = vmatprep.mubr.bf16.mxu0 %v172
  %374 = vmatmul.mubr.bf16.gmra.mxu0 %v171
  %v375 = vpop.f32.mrf.mxu0
  %v376 = vadd.f32 0.0, %v375
  %v377 = vpop.f32.mrf.mxu0
  %v378 = vpop.f32.mrf.mxu0
  %v379 = vadd.f32 0.0, %v378
  %v380 = vpop.f32.mrf.mxu0
  %381 = vdwg.mxu0
  %v398 = vunpack.c.l.b16 %v12
  %v399 = vunpack.c.h.b16 %v12
  %v400 = vunpack.c.l.b16 %v13
  %v401 = vunpack.c.h.b16 %v13
  %v402 = vunpack.c.l.b16 %v14
  %v403 = vunpack.c.h.b16 %v14
  %v404 = vunpack.c.l.b16 %v15
  %v405 = vunpack.c.h.b16 %v15
  %v406 = vunpack.c.l.b16 %v16
  %v407 = vunpack.c.h.b16 %v16
  %v408 = vunpack.c.l.b16 %v17
  %v409 = vunpack.c.h.b16 %v17
  %v410 = vunpack.c.l.b16 %v18
  %v411 = vunpack.c.h.b16 %v18
  %v412 = vunpack.c.l.b16 %v19
  %v413 = vunpack.c.h.b16 %v19
  %v414 = vunpack.c.l.b16 %v20
  %v415 = vunpack.c.h.b16 %v20
  %v416 = vunpack.c.l.b16 %v21
  %v417 = vunpack.c.h.b16 %v21
  %v418 = vunpack.c.l.b16 %v22
  %v419 = vunpack.c.h.b16 %v22
  %v420 = vunpack.c.l.b16 %v23
  %v421 = vunpack.c.h.b16 %v23
  %v422 = vunpack.c.l.b16 %v24
  %v423 = vunpack.c.h.b16 %v24
  %v424 = vunpack.c.l.b16 %v25
  %v425 = vunpack.c.h.b16 %v25
  %v426 = vunpack.c.l.b16 %v26
  %v427 = vunpack.c.h.b16 %v26
  %v428 = vunpack.c.l.b16 %v27
  %v429 = vunpack.c.h.b16 %v27
  %v430 = vpack.c.b16 %v400, %v398
  %v431 = vpack.c.b16 %v401, %v399
  %v432 = vpack.c.b16 %v404, %v402
  %v433 = vpack.c.b16 %v405, %v403
  %v434 = vpack.c.b16 %v408, %v406
  %v435 = vpack.c.b16 %v409, %v407
  %v436 = vpack.c.b16 %v412, %v410
  %v437 = vpack.c.b16 %v413, %v411
  %v438 = vpack.c.b16 %v416, %v414
  %v439 = vpack.c.b16 %v417, %v415
  %v440 = vpack.c.b16 %v420, %v418
  %v441 = vpack.c.b16 %v421, %v419
  %v442 = vpack.c.b16 %v424, %v422
  %v443 = vpack.c.b16 %v425, %v423
  %v444 = vpack.c.b16 %v428, %v426
  %v445 = vpack.c.b16 %v429, %v427
  %v494 = vunpack.c.l.b16 %v28
  %v495 = vunpack.c.l.b16 %v29
  %v496 = vunpack.c.l.b16 %v30
  %v497 = vunpack.c.l.b16 %v31
  %v498 = vunpack.c.l.b16 %v32
  %v499 = vunpack.c.l.b16 %v33
  %v500 = vunpack.c.l.b16 %v34
  %v501 = vunpack.c.l.b16 %v35
  %v502 = vunpack.c.l.b16 %v36
  %v503 = vunpack.c.l.b16 %v37
  %v504 = vunpack.c.l.b16 %v38
  %v505 = vunpack.c.l.b16 %v39
  %v506 = vunpack.c.l.b16 %v40
  %v507 = vunpack.c.l.b16 %v41
  %v508 = vunpack.c.l.b16 %v42
  %v509 = vunpack.c.l.b16 %v43
  %v510 = vunpack.c.l.b16 %v44
  %v511 = vunpack.c.l.b16 %v45
  %v512 = vunpack.c.l.b16 %v46
  %v513 = vunpack.c.l.b16 %v47
  %v514 = vunpack.c.l.b16 %v48
  %v515 = vunpack.c.l.b16 %v49
  %v516 = vunpack.c.l.b16 %v50
  %v517 = vunpack.c.l.b16 %v51
  %v518 = vunpack.c.l.b16 %v52
  %v519 = vunpack.c.l.b16 %v53
  %v520 = vunpack.c.l.b16 %v54
  %v521 = vunpack.c.l.b16 %v55
  %v522 = vunpack.c.l.b16 %v56
  %v523 = vunpack.c.l.b16 %v57
  %v524 = vunpack.c.l.b16 %v58
  %v525 = vunpack.c.l.b16 %v59
  %v526 = vpack.c.b16 %v495, %v494
  %v527 = vpack.c.b16 %v497, %v496
  %v528 = vpack.c.b16 %v499, %v498
  %v529 = vpack.c.b16 %v501, %v500
  %v530 = vpack.c.b16 %v503, %v502
  %v531 = vpack.c.b16 %v505, %v504
  %v532 = vpack.c.b16 %v507, %v506
  %v533 = vpack.c.b16 %v509, %v508
  %v534 = vpack.c.b16 %v511, %v510
  %v535 = vpack.c.b16 %v513, %v512
  %v536 = vpack.c.b16 %v515, %v514
  %v537 = vpack.c.b16 %v517, %v516
  %v538 = vpack.c.b16 %v519, %v518
  %v539 = vpack.c.b16 %v521, %v520
  %v540 = vpack.c.b16 %v523, %v522
  %v541 = vpack.c.b16 %v525, %v524
  %558 = vmatprep.subr.bf16.mxu0 0
  %559 = vmatpush1.bf16.msra.mxu0 %v533
  %560 = vmatprep.subr.bf16.mxu0 0
  %561 = vmatpush1.bf16.msra.mxu0 %v532
  %562 = vmatprep.subr.bf16.mxu0 0
  %563 = vmatpush1.bf16.msra.mxu0 %v531
  %564 = vmatprep.subr.bf16.mxu0 0
  %565 = vmatpush1.bf16.msra.mxu0 %v530
  %566 = vmatprep.subr.bf16.mxu0 0
  %567 = vmatpush1.bf16.msra.mxu0 %v529
  %568 = vmatprep.subr.bf16.mxu0 0
  %569 = vmatpush1.bf16.msra.mxu0 %v528
  %570 = vmatprep.subr.bf16.mxu0 0
  %571 = vmatpush1.bf16.msra.mxu0 %v527
  %572 = vmatprep.subr.bf16.mxu0 0
  %573 = vmatpush1.bf16.msra.mxu0 %v526
  %574 = vmatprep.subr.bf16.mxu0 0
  %575 = vmatpush2.bf16.msra.mxu0 %v541
  %576 = vmatprep.subr.bf16.mxu0 0
  %577 = vmatpush2.bf16.msra.mxu0 %v540
  %578 = vmatprep.subr.bf16.mxu0 0
  %579 = vmatpush2.bf16.msra.mxu0 %v539
  %580 = vmatprep.subr.bf16.mxu0 0
  %581 = vmatpush2.bf16.msra.mxu0 %v538
  %582 = vmatprep.subr.bf16.mxu0 0
  %583 = vmatpush2.bf16.msra.mxu0 %v537
  %584 = vmatprep.subr.bf16.mxu0 0
  %585 = vmatpush2.bf16.msra.mxu0 %v536
  %586 = vmatprep.subr.bf16.mxu0 0
  %587 = vmatpush2.bf16.msra.mxu0 %v535
  %588 = vmatprep.subr.bf16.mxu0 0
  %589 = vmatpush2.bf16.msra.mxu0 %v534
  %590 = vmatprep.mubr.bf16.mxu0 %v431
  %591 = vmatmul.mubr.bf16.gmra.mxu0 %v430
  %v592 = vpop.f32.mrf.mxu0
  %v593 = vadd.f32 %v320, %v592
  %v594 = vpop.f32.mrf.mxu0
  %v595 = vpop.f32.mrf.mxu0
  %v596 = vadd.f32 %v323, %v595
  %v597 = vpop.f32.mrf.mxu0
  %598 = vmatprep.mubr.bf16.mxu0 %v433
  %599 = vmatmul.mubr.bf16.gmra.mxu0 %v432
  %v600 = vpop.f32.mrf.mxu0
  %v601 = vadd.f32 %v328, %v600
  %v602 = vpop.f32.mrf.mxu0
  %v603 = vpop.f32.mrf.mxu0
  %v604 = vadd.f32 %v331, %v603
  %v605 = vpop.f32.mrf.mxu0
  %606 = vmatprep.mubr.bf16.mxu0 %v435
  %607 = vmatmul.mubr.bf16.gmra.mxu0 %v434
  %v608 = vpop.f32.mrf.mxu0
  %v609 = vadd.f32 %v336, %v608
  %v610 = vpop.f32.mrf.mxu0
  %v611 = vpop.f32.mrf.mxu0
  %v612 = vadd.f32 %v339, %v611
  %v613 = vpop.f32.mrf.mxu0
  %614 = vmatprep.mubr.bf16.mxu0 %v437
  %615 = vmatmul.mubr.bf16.gmra.mxu0 %v436
  %v616 = vpop.f32.mrf.mxu0
  %v617 = vadd.f32 %v344, %v616
  %v618 = vpop.f32.mrf.mxu0
  %v619 = vpop.f32.mrf.mxu0
  %v620 = vadd.f32 %v347, %v619
  %v621 = vpop.f32.mrf.mxu0
  %622 = vmatprep.mubr.bf16.mxu0 %v439
  %623 = vmatmul.mubr.bf16.gmra.mxu0 %v438
  %v624 = vpop.f32.mrf.mxu0
  %v625 = vadd.f32 %v352, %v624
  %v626 = vpop.f32.mrf.mxu0
  %v627 = vpop.f32.mrf.mxu0
  %v628 = vadd.f32 %v355, %v627
  %v629 = vpop.f32.mrf.mxu0
  %630 = vmatprep.mubr.bf16.mxu0 %v441
  %631 = vmatmul.mubr.bf16.gmra.mxu0 %v440
  %v632 = vpop.f32.mrf.mxu0
  %v633 = vadd.f32 %v360, %v632
  %v634 = vpop.f32.mrf.mxu0
  %v635 = vpop.f32.mrf.mxu0
  %v636 = vadd.f32 %v363, %v635
  %v637 = vpop.f32.mrf.mxu0
  %638 = vmatprep.mubr.bf16.mxu0 %v443
  %639 = vmatmul.mubr.bf16.gmra.mxu0 %v442
  %v640 = vpop.f32.mrf.mxu0
  %v641 = vadd.f32 %v368, %v640
  %v642 = vpop.f32.mrf.mxu0
  %v643 = vpop.f32.mrf.mxu0
  %v644 = vadd.f32 %v371, %v643
  %v645 = vpop.f32.mrf.mxu0
  %646 = vmatprep.mubr.bf16.mxu0 %v445
  %647 = vmatmul.mubr.bf16.gmra.mxu0 %v444
  %v648 = vpop.f32.mrf.mxu0
  %v649 = vadd.f32 %v376, %v648
  %v650 = vpop.f32.mrf.mxu0
  %v651 = vpop.f32.mrf.mxu0
  %v652 = vadd.f32 %v379, %v651
  %v653 = vpop.f32.mrf.mxu0
  %654 = vdwg.mxu0
  %vm655 = vcmask 523264
  %v656 = vsel %vm655, %v593, 0.0
  %v657 = vsel %vm655, %v596, 0.0
  %v658 = vadd.f32 %v656, %v657
  %v659 = vsel %vm655, %v601, 0.0
  %v660 = vadd.f32 %v658, %v659
  %v661 = vsel %vm655, %v604, 0.0
  %v662 = vadd.f32 %v660, %v661
  %v663 = vsel %vm655, %v609, 0.0
  %v664 = vadd.f32 %v662, %v663
  %v665 = vsel %vm655, %v612, 0.0
  %v666 = vadd.f32 %v664, %v665
  %v667 = vsel %vm655, %v617, 0.0
  %v668 = vadd.f32 %v666, %v667
  %v669 = vsel %vm655, %v620, 0.0
  %v670 = vadd.f32 %v668, %v669
  %v671 = vrot.slane %v670, 4
  %v672 = vadd.f32 %v670, %v671
  %v673 = vrot.slane %v672, 2
  %v674 = vadd.f32 %v672, %v673
  %v675 = vrot.slane %v674, 1
  %v676 = vadd.f32 %v674, %v675
  %v677 = vsel %vm655, %v625, 0.0
  %v678 = vsel %vm655, %v628, 0.0
  %v679 = vadd.f32 %v677, %v678
  %v680 = vsel %vm655, %v633, 0.0
  %v681 = vadd.f32 %v679, %v680
  %v682 = vsel %vm655, %v636, 0.0
  %v683 = vadd.f32 %v681, %v682
  %v684 = vsel %vm655, %v641, 0.0
  %v685 = vadd.f32 %v683, %v684
  %v686 = vsel %vm655, %v644, 0.0
  %v687 = vadd.f32 %v685, %v686
  %v688 = vsel %vm655, %v649, 0.0
  %v689 = vadd.f32 %v687, %v688
  %v690 = vsel %vm655, %v652, 0.0
  %v691 = vadd.f32 %v689, %v690
  %v692 = vrot.slane %v691, 4
  %v693 = vadd.f32 %v691, %v692
  %v694 = vrot.slane %v693, 2
  %v695 = vadd.f32 %v693, %v694
  %v696 = vrot.slane %v695, 1
  %v697 = vadd.f32 %v695, %v696
  %v698 = vrcp.pop 64.0
  %v699 = vmul.f32 %v676, %v698
  %v700 = vmul.f32 %v697, %v698
  %v701 = vsub.f32 %v593, %v699
  %v702 = vsub.f32 %v596, %v699
  %v703 = vsub.f32 %v601, %v699
  %v704 = vsub.f32 %v604, %v699
  %v705 = vsub.f32 %v609, %v699
  %v706 = vsub.f32 %v612, %v699
  %v707 = vsub.f32 %v617, %v699
  %v708 = vsub.f32 %v620, %v699
  %v709 = vsub.f32 %v625, %v700
  %v710 = vsub.f32 %v628, %v700
  %v711 = vsub.f32 %v633, %v700
  %v712 = vsub.f32 %v636, %v700
  %v713 = vsub.f32 %v641, %v700
  %v714 = vsub.f32 %v644, %v700
  %v715 = vsub.f32 %v649, %v700
  %v716 = vsub.f32 %v652, %v700
  %v717 = vmul.f32 %v701, %v701
  %v718 = vmul.f32 %v702, %v702
  %v719 = vmul.f32 %v703, %v703
  %v720 = vmul.f32 %v704, %v704
  %v721 = vmul.f32 %v705, %v705
  %v722 = vmul.f32 %v706, %v706
  %v723 = vmul.f32 %v707, %v707
  %v724 = vmul.f32 %v708, %v708
  %v725 = vmul.f32 %v709, %v709
  %v726 = vmul.f32 %v710, %v710
  %v727 = vmul.f32 %v711, %v711
  %v728 = vmul.f32 %v712, %v712
  %v729 = vmul.f32 %v713, %v713
  %v730 = vmul.f32 %v714, %v714
  %v731 = vmul.f32 %v715, %v715
  %v732 = vmul.f32 %v716, %v716
  %v733 = vsel %vm655, %v717, 0.0
  %v734 = vsel %vm655, %v718, 0.0
  %v735 = vadd.f32 %v733, %v734
  %v736 = vsel %vm655, %v719, 0.0
  %v737 = vadd.f32 %v735, %v736
  %v738 = vsel %vm655, %v720, 0.0
  %v739 = vadd.f32 %v737, %v738
  %v740 = vsel %vm655, %v721, 0.0
  %v741 = vadd.f32 %v739, %v740
  %v742 = vsel %vm655, %v722, 0.0
  %v743 = vadd.f32 %v741, %v742
  %v744 = vsel %vm655, %v723, 0.0
  %v745 = vadd.f32 %v743, %v744
  %v746 = vsel %vm655, %v724, 0.0
  %v747 = vadd.f32 %v745, %v746
  %v748 = vrot.slane %v747, 4
  %v749 = vadd.f32 %v747, %v748
  %v750 = vrot.slane %v749, 2
  %v751 = vadd.f32 %v749, %v750
  %v752 = vrot.slane %v751, 1
  %v753 = vadd.f32 %v751, %v752
  %v754 = vsel %vm655, %v725, 0.0
  %v755 = vsel %vm655, %v726, 0.0
  %v756 = vadd.f32 %v754, %v755
  %v757 = vsel %vm655, %v727, 0.0
  %v758 = vadd.f32 %v756, %v757
  %v759 = vsel %vm655, %v728, 0.0
  %v760 = vadd.f32 %v758, %v759
  %v761 = vsel %vm655, %v729, 0.0
  %v762 = vadd.f32 %v760, %v761
  %v763 = vsel %vm655, %v730, 0.0
  %v764 = vadd.f32 %v762, %v763
  %v765 = vsel %vm655, %v731, 0.0
  %v766 = vadd.f32 %v764, %v765
  %v767 = vsel %vm655, %v732, 0.0
  %v768 = vadd.f32 %v766, %v767
  %v769 = vrot.slane %v768, 4
  %v770 = vadd.f32 %v768, %v769
  %v771 = vrot.slane %v770, 2
  %v772 = vadd.f32 %v770, %v771
  %v773 = vrot.slane %v772, 1
  %v774 = vadd.f32 %v772, %v773
  %v775 = vmul.f32 %v753, %v698
  %v776 = vmul.f32 %v774, %v698
  %v777 = vadd.f32 %v775, 1e-05
  %v778 = vadd.f32 %v776, 1e-05
  %v779 = vrsqrt.pop %v777
  %v780 = vrsqrt.pop %v778
  %v781 = vmul.f32 %v701, %v779
  %v782 = vmul.f32 %v702, %v779
  %v783 = vmul.f32 %v703, %v779
  %v784 = vmul.f32 %v704, %v779
  %v785 = vmul.f32 %v705, %v779
  %v786 = vmul.f32 %v706, %v779
  %v787 = vmul.f32 %v707, %v779
  %v788 = vmul.f32 %v708, %v779
  %v789 = vmul.f32 %v709, %v780
  %v790 = vmul.f32 %v710, %v780
  %v791 = vmul.f32 %v711, %v780
  %v792 = vmul.f32 %v712, %v780
  %v793 = vmul.f32 %v713, %v780
  %v794 = vmul.f32 %v714, %v780
  %v795 = vmul.f32 %v715, %v780
  %v796 = vmul.f32 %v716, %v780
  %vm797 = vcmp.ge.f32.partialorder %v781, 0.0
  %vm798 = vcmp.ge.f32.partialorder %v782, 0.0
  %vm799 = vcmp.ge.f32.partialorder %v783, 0.0
  %vm800 = vcmp.ge.f32.partialorder %v784, 0.0
  %vm801 = vcmp.ge.f32.partialorder %v785, 0.0
  %vm802 = vcmp.ge.f32.partialorder %v786, 0.0
  %vm803 = vcmp.ge.f32.partialorder %v787, 0.0
  %vm804 = vcmp.ge.f32.partialorder %v788, 0.0
  %vm805 = vcmp.ge.f32.partialorder %v789, 0.0
  %vm806 = vcmp.ge.f32.partialorder %v790, 0.0
  %vm807 = vcmp.ge.f32.partialorder %v791, 0.0
  %vm808 = vcmp.ge.f32.partialorder %v792, 0.0
  %vm809 = vcmp.ge.f32.partialorder %v793, 0.0
  %vm810 = vcmp.ge.f32.partialorder %v794, 0.0
  %vm811 = vcmp.ge.f32.partialorder %v795, 0.0
  %vm812 = vcmp.ge.f32.partialorder %v796, 0.0
  %v813 = vmul.f32 %v781, 0.2
  %v814 = vmul.f32 %v782, 0.2
  %v815 = vmul.f32 %v783, 0.2
  %v816 = vmul.f32 %v784, 0.2
  %v817 = vmul.f32 %v785, 0.2
  %v818 = vmul.f32 %v786, 0.2
  %v819 = vmul.f32 %v787, 0.2
  %v820 = vmul.f32 %v788, 0.2
  %v821 = vmul.f32 %v789, 0.2
  %v822 = vmul.f32 %v790, 0.2
  %v823 = vmul.f32 %v791, 0.2
  %v824 = vmul.f32 %v792, 0.2
  %v825 = vmul.f32 %v793, 0.2
  %v826 = vmul.f32 %v794, 0.2
  %v827 = vmul.f32 %v795, 0.2
  %v828 = vmul.f32 %v796, 0.2
  %v829 = vsel %vm797, %v781, %v813
  %v830 = vsel %vm798, %v782, %v814
  %v831 = vsel %vm799, %v783, %v815
  %v832 = vsel %vm800, %v784, %v816
  %v833 = vsel %vm801, %v785, %v817
  %v834 = vsel %vm802, %v786, %v818
  %v835 = vsel %vm803, %v787, %v819
  %v836 = vsel %vm804, %v788, %v820
  %v837 = vsel %vm805, %v789, %v821
  %v838 = vsel %vm806, %v790, %v822
  %v839 = vsel %vm807, %v791, %v823
  %v840 = vsel %vm808, %v792, %v824
  %v841 = vsel %vm809, %v793, %v825
  %v842 = vsel %vm810, %v794, %v826
  %v843 = vsel %vm811, %v795, %v827
  %v844 = vsel %vm812, %v796, %v828
  %v845 = vpack.c.bf16 %v830, %v829
  %v846 = vpack.c.bf16 %v832, %v831
  %v847 = vpack.c.bf16 %v834, %v833
  %v848 = vpack.c.bf16 %v836, %v835
  %v849 = vpack.c.bf16 %v838, %v837
  %v850 = vpack.c.bf16 %v840, %v839
  %v851 = vpack.c.bf16 %v842, %v841
  %v852 = vpack.c.bf16 %v844, %v843
  %v861 = vunpack.c.l.b16 %v845
  %v862 = vunpack.c.h.b16 %v845
  %v863 = vunpack.c.l.b16 %v846
  %v864 = vunpack.c.h.b16 %v846
  %v865 = vunpack.c.l.b16 %v847
  %v866 = vunpack.c.h.b16 %v847
  %v867 = vunpack.c.l.b16 %v848
  %v868 = vunpack.c.h.b16 %v848
  %v869 = vunpack.c.l.b16 %v849
  %v870 = vunpack.c.h.b16 %v849
  %v871 = vunpack.c.l.b16 %v850
  %v872 = vunpack.c.h.b16 %v850
  %v873 = vunpack.c.l.b16 %v851
  %v874 = vunpack.c.h.b16 %v851
  %v875 = vunpack.c.l.b16 %v852
  %v876 = vunpack.c.h.b16 %v852
  %v877 = vpack.c.b16 %v861, %v861
  %v878 = vpack.c.b16 %v862, %v862
  %v879 = vpack.c.b16 %v863, %v863
  %v880 = vpack.c.b16 %v864, %v864
  %v881 = vpack.c.b16 %v865, %v865
  %v882 = vpack.c.b16 %v866, %v866
  %v883 = vpack.c.b16 %v867, %v867
  %v884 = vpack.c.b16 %v868, %v868
  %v885 = vpack.c.b16 %v869, %v869
  %v886 = vpack.c.b16 %v870, %v870
  %v887 = vpack.c.b16 %v871, %v871
  %v888 = vpack.c.b16 %v872, %v872
  %v889 = vpack.c.b16 %v873, %v873
  %v890 = vpack.c.b16 %v874, %v874
  %v891 = vpack.c.b16 %v875, %v875
  %v892 = vpack.c.b16 %v876, %v876
  %vm909 = vcmask 519168
  %910 = vst.msk [vmem:[%s2] sm:$0xf] %vm909, %v877
  %911 = vst.msk [vmem:[%s2 + $0x4] sm:$0xf] %vm909, %v878
  %912 = vst.msk [vmem:[%s2 + $0x8] sm:$0xf] %vm909, %v879
  %913 = vst.msk [vmem:[%s2 + $0xc] sm:$0xf] %vm909, %v880
  %914 = vst.msk [vmem:[%s2 + $0x10] sm:$0xf] %vm909, %v881
  %915 = vst.msk [vmem:[%s2 + $0x14] sm:$0xf] %vm909, %v882
  %916 = vst.msk [vmem:[%s2 + $0x18] sm:$0xf] %vm909, %v883
  %917 = vst.msk [vmem:[%s2 + $0x1c] sm:$0xf] %vm909, %v884
  %918 = vst.msk [vmem:[%s2 + $0x20] sm:$0xf] %vm909, %v885
  %919 = vst.msk [vmem:[%s2 + $0x24] sm:$0xf] %vm909, %v886
  %920 = vst.msk [vmem:[%s2 + $0x28] sm:$0xf] %vm909, %v887
  %921 = vst.msk [vmem:[%s2 + $0x2c] sm:$0xf] %vm909, %v888
  %922 = vst.msk [vmem:[%s2 + $0x30] sm:$0xf] %vm909, %v889
  %923 = vst.msk [vmem:[%s2 + $0x34] sm:$0xf] %vm909, %v890
  %924 = vst.msk [vmem:[%s2 + $0x38] sm:$0xf] %vm909, %v891
  %925 = vst.msk [vmem:[%s2 + $0x3c] sm:$0xf] %vm909, %v892
  // Predicated region
  $region10: #{critic_forward.7} parent=0 // pred_check
    _
  $region11: #{critic_forward.7} parent=0 // pred_check_branch
    %927 = sbr.rel (0) target = $region13
  $region12: #{critic_forward.7} parent=0 // pred_region
    _
  $region13: #{critic_forward.7} parent=0 // pred_fallthru
    _
  // Predicated region
  $region14: #{critic_forward.7} parent=0 // pred_check
    _
  $region15: #{critic_forward.7} parent=0 // pred_check_branch
    %929 = sbr.rel (0) target = $region17
  $region16: #{critic_forward.7} parent=0 // pred_region
    _
  $region17: #{critic_forward.7} parent=0 // pred_fallthru
    _

// kernel: critic_forward.9
$region0: #{critic_forward.9}
  #allocation0 [shape = 'u32[]', space=smem, size = 0x4, offset = 0x4, fixed_abs, tag = 'smem constant byte address 0x4 - core index']
  #allocation1 [shape = 'u32[144,128]{1,0:T(1,128)}', space=vmem, size = 0x12000, scoped, tag = 'internal scratch']
  #allocation2 [shape = 'f32[1,1]{1,0:T(1,128)S(1)}', space=vmem, size = 0x200, scoped, tag = 'scoped memory for critic_forward.9']
  %s0 = inlined_call_operand.vmem [shape: bf16[2,2048], index: 0, kind: input, shape index: {}]
  %s1 = inlined_call_operand.vmem [shape: bf16[1,2048], index: 1, kind: input, shape index: {}]
  %s2 = inlined_call_operand.<no memory space> [shape: f32[1,1], index: 2, kind: input, shape index: {}]
  %s3 = inlined_call_operand.vmem [shape: f32[2,1], index: 3, kind: output, shape index: {}]
  %s4 = sld [smem:[#allocation0]]
  $region22: #{critic_forward.9} parent=0
    _
  %s6 = ssub.s32 1, %s4
  %s7 = scalar_select 0, %s6, %s4
  %v8 = vstv %s2
  %9 = vst [vmem:[#allocation2] sm:$0x1] %v8
  // Predicated region
  $region2: #{critic_forward.9} parent=0 // pred_check
    _
  $region3: #{critic_forward.9} parent=0 // pred_check_branch
    %11 = sbr.rel (0) target = $region5
  $region4: #{critic_forward.9} parent=0 // pred_region
    _
  $region5: #{critic_forward.9} parent=0 // pred_fallthru
    _
  // Predicated region
  $region6: #{critic_forward.9} parent=0 // pred_check
    _
  $region7: #{critic_forward.9} parent=0 // pred_check_branch
    %13 = sbr.rel (0) target = $region9
  $region8: #{critic_forward.9} parent=0 // pred_region
    _
  $region9: #{critic_forward.9} parent=0 // pred_fallthru
    _
  // Predicated region
  $region10: #{critic_forward.9} parent=0 // pred_check
    _
  $region11: #{critic_forward.9} parent=0 // pred_check_branch
    %15 = sbr.rel (0) target = $region13
  $region12: #{critic_forward.9} parent=0 // pred_region
    _
  $region13: #{critic_forward.9} parent=0 // pred_fallthru
    _
  %v16 = vld [vmem:[%s0] sm:$0xff]
  %v17 = vld [vmem:[%s0 + $0x8] sm:$0xff]
  %v18 = vunpack.c.l.bf16 %v16
  %v19 = vunpack.c.h.bf16 %v16
  %v20 = vunpack.c.l.bf16 %v17
  %v21 = vunpack.c.h.bf16 %v17
  %v22 = vld [vmem:[%s1] sm:$0xff]
  %v23 = vld [vmem:[%s1 + $0x8] sm:$0xff]
  %v24 = vunpack.c.l.bf16 %v22
  %v25 = vunpack.c.h.bf16 %v22
  %v26 = vunpack.c.l.bf16 %v23
  %v27 = vunpack.c.h.bf16 %v23
  %v32 = vlaneseq
  %v33 = vshrl.u32 %v32, 7
  %v34 = vsub.s32 0, %v33
  %v35 = vrot.slane %v24, %v34
  %v36 = vlaneseq
  %v37 = vshrl.u32 %v36, 7
  %v38 = vsub.s32 2, %v37
  %v39 = vrot.slane %v24, %v38
  %v40 = vlaneseq
  %v41 = vshrl.u32 %v40, 7
  %v42 = vsub.s32 4, %v41
  %v43 = vrot.slane %v24, %v42
  %v44 = vlaneseq
  %v45 = vshrl.u32 %v44, 7
  %v46 = vsub.s32 6, %v45
  %v47 = vrot.slane %v24, %v46
  %v48 = vlaneseq
  %v49 = vshrl.u32 %v48, 7
  %v50 = vsub.s32 0, %v49
  %v51 = vrot.slane %v25, %v50
  %v52 = vlaneseq
  %v53 = vshrl.u32 %v52, 7
  %v54 = vsub.s32 2, %v53
  %v55 = vrot.slane %v25, %v54
  %v56 = vlaneseq
  %v57 = vshrl.u32 %v56, 7
  %v58 = vsub.s32 4, %v57
  %v59 = vrot.slane %v25, %v58
  %v60 = vlaneseq
  %v61 = vshrl.u32 %v60, 7
  %v62 = vsub.s32 6, %v61
  %v63 = vrot.slane %v25, %v62
  %v64 = vlaneseq
  %v65 = vshrl.u32 %v64, 7
  %v66 = vsub.s32 0, %v65
  %v67 = vrot.slane %v26, %v66
  %v68 = vlaneseq
  %v69 = vshrl.u32 %v68, 7
  %v70 = vsub.s32 2, %v69
  %v71 = vrot.slane %v26, %v70
  %v72 = vlaneseq
  %v73 = vshrl.u32 %v72, 7
  %v74 = vsub.s32 4, %v73
  %v75 = vrot.slane %v26, %v74
  %v76 = vlaneseq
  %v77 = vshrl.u32 %v76, 7
  %v78 = vsub.s32 6, %v77
  %v79 = vrot.slane %v26, %v78
  %v80 = vlaneseq
  %v81 = vshrl.u32 %v80, 7
  %v82 = vsub.s32 0, %v81
  %v83 = vrot.slane %v27, %v82
  %v84 = vlaneseq
  %v85 = vshrl.u32 %v84, 7
  %v86 = vsub.s32 2, %v85
  %v87 = vrot.slane %v27, %v86
  %v88 = vlaneseq
  %v89 = vshrl.u32 %v88, 7
  %v90 = vsub.s32 4, %v89
  %v91 = vrot.slane %v27, %v90
  %v92 = vlaneseq
  %v93 = vshrl.u32 %v92, 7
  %v94 = vsub.s32 6, %v93
  %v95 = vrot.slane %v27, %v94
  %v112 = vlaneseq
  %v113 = vshrl.u32 %v112, 7
  %v114 = vsub.s32 0, %v113
  %v115 = vrot.slane %v35, %v114
  %v116 = vlaneseq
  %v117 = vshrl.u32 %v116, 7
  %v118 = vsub.s32 0, %v117
  %v119 = vrot.slane %v39, %v118
  %v120 = vlaneseq
  %v121 = vshrl.u32 %v120, 7
  %v122 = vsub.s32 0, %v121
  %v123 = vrot.slane %v43, %v122
  %v124 = vlaneseq
  %v125 = vshrl.u32 %v124, 7
  %v126 = vsub.s32 0, %v125
  %v127 = vrot.slane %v47, %v126
  %v128 = vlaneseq
  %v129 = vshrl.u32 %v128, 7
  %v130 = vsub.s32 0, %v129
  %v131 = vrot.slane %v51, %v130
  %v132 = vlaneseq
  %v133 = vshrl.u32 %v132, 7
  %v134 = vsub.s32 0, %v133
  %v135 = vrot.slane %v55, %v134
  %v136 = vlaneseq
  %v137 = vshrl.u32 %v136, 7
  %v138 = vsub.s32 0, %v137
  %v139 = vrot.slane %v59, %v138
  %v140 = vlaneseq
  %v141 = vshrl.u32 %v140, 7
  %v142 = vsub.s32 0, %v141
  %v143 = vrot.slane %v63, %v142
  %v144 = vlaneseq
  %v145 = vshrl.u32 %v144, 7
  %v146 = vsub.s32 0, %v145
  %v147 = vrot.slane %v67, %v146
  %v148 = vlaneseq
  %v149 = vshrl.u32 %v148, 7
  %v150 = vsub.s32 0, %v149
  %v151 = vrot.slane %v71, %v150
  %v152 = vlaneseq
  %v153 = vshrl.u32 %v152, 7
  %v154 = vsub.s32 0, %v153
  %v155 = vrot.slane %v75, %v154
  %v156 = vlaneseq
  %v157 = vshrl.u32 %v156, 7
  %v158 = vsub.s32 0, %v157
  %v159 = vrot.slane %v79, %v158
  %v160 = vlaneseq
  %v161 = vshrl.u32 %v160, 7
  %v162 = vsub.s32 0, %v161
  %v163 = vrot.slane %v83, %v162
  %v164 = vlaneseq
  %v165 = vshrl.u32 %v164, 7
  %v166 = vsub.s32 0, %v165
  %v167 = vrot.slane %v87, %v166
  %v168 = vlaneseq
  %v169 = vshrl.u32 %v168, 7
  %v170 = vsub.s32 0, %v169
  %v171 = vrot.slane %v91, %v170
  %v172 = vlaneseq
  %v173 = vshrl.u32 %v172, 7
  %v174 = vsub.s32 0, %v173
  %v175 = vrot.slane %v95, %v174
  %v192 = vcombine.low %v115, %v119
  %v193 = vcombine.low %v123, %v127
  %v195 = vunpack.c.l.s4 1983009808
  %v196 = vunpack.c.0.s8 %v195
  %v197 = vlaneseq
  %v198 = vshrl.u32 %v197, 7
  %v199 = vsub.s32 %v196, %v198
  %v200 = vrot.slane %v192, %v199
  %v202 = vunpack.c.l.s4 1983009808
  %v203 = vunpack.c.0.s8 %v202
  %v204 = vlaneseq
  %v205 = vshrl.u32 %v204, 7
  %v206 = vsub.s32 %v203, %v205
  %v207 = vrot.slane %v193, %v206
  %v208 = vcombine.low %v200, %v207
  %v209 = vcombine.low %v131, %v135
  %v210 = vcombine.low %v139, %v143
  %v212 = vunpack.c.l.s4 1983009808
  %v213 = vunpack.c.0.s8 %v212
  %v214 = vlaneseq
  %v215 = vshrl.u32 %v214, 7
  %v216 = vsub.s32 %v213, %v215
  %v217 = vrot.slane %v209, %v216
  %v219 = vunpack.c.l.s4 1983009808
  %v220 = vunpack.c.0.s8 %v219
  %v221 = vlaneseq
  %v222 = vshrl.u32 %v221, 7
  %v223 = vsub.s32 %v220, %v222
  %v224 = vrot.slane %v210, %v223
  %v225 = vcombine.low %v217, %v224
  %v226 = vcombine.low %v147, %v151
  %v227 = vcombine.low %v155, %v159
  %v229 = vunpack.c.l.s4 1983009808
  %v230 = vunpack.c.0.s8 %v229
  %v231 = vlaneseq
  %v232 = vshrl.u32 %v231, 7
  %v233 = vsub.s32 %v230, %v232
  %v234 = vrot.slane %v226, %v233
  %v236 = vunpack.c.l.s4 1983009808
  %v237 = vunpack.c.0.s8 %v236
  %v238 = vlaneseq
  %v239 = vshrl.u32 %v238, 7
  %v240 = vsub.s32 %v237, %v239
  %v241 = vrot.slane %v227, %v240
  %v242 = vcombine.low %v234, %v241
  %v243 = vcombine.low %v163, %v167
  %v244 = vcombine.low %v171, %v175
  %v246 = vunpack.c.l.s4 1983009808
  %v247 = vunpack.c.0.s8 %v246
  %v248 = vlaneseq
  %v249 = vshrl.u32 %v248, 7
  %v250 = vsub.s32 %v247, %v249
  %v251 = vrot.slane %v243, %v250
  %v253 = vunpack.c.l.s4 1983009808
  %v254 = vunpack.c.0.s8 %v253
  %v255 = vlaneseq
  %v256 = vshrl.u32 %v255, 7
  %v257 = vsub.s32 %v254, %v256
  %v258 = vrot.slane %v244, %v257
  %v259 = vcombine.low %v251, %v258
  %v264 = vmul.f32 %v18, %v208
  %v265 = vmul.f32 %v19, %v225
  %v266 = vmul.f32 %v20, %v242
  %v267 = vmul.f32 %v21, %v259
  %v272 = vcombine.high %v264, %v264
  %v274 = vunpack.c.l.s4 1983009808
  %v275 = vunpack.c.0.s8 %v274
  %v276 = vlaneseq
  %v277 = vshrl.u32 %v276, 7
  %v278 = vsub.s32 %v275, %v277
  %v279 = vrot.slane %v264, %v278
  %v281 = vunpack.c.l.s4 1983009808
  %v282 = vunpack.c.0.s8 %v281
  %v283 = vlaneseq
  %v284 = vshrl.u32 %v283, 7
  %v285 = vsub.s32 %v282, %v284
  %v286 = vrot.slane %v272, %v285
  %v287 = vcombine.high %v279, %v279
  %v288 = vcombine.high %v286, %v286
  %v289 = vcombine.high %v265, %v265
  %v291 = vunpack.c.l.s4 1983009808
  %v292 = vunpack.c.0.s8 %v291
  %v293 = vlaneseq
  %v294 = vshrl.u32 %v293, 7
  %v295 = vsub.s32 %v292, %v294
  %v296 = vrot.slane %v265, %v295
  %v298 = vunpack.c.l.s4 1983009808
  %v299 = vunpack.c.0.s8 %v298
  %v300 = vlaneseq
  %v301 = vshrl.u32 %v300, 7
  %v302 = vsub.s32 %v299, %v301
  %v303 = vrot.slane %v289, %v302
  %v304 = vcombine.high %v296, %v296
  %v305 = vcombine.high %v303, %v303
  %v306 = vcombine.high %v266, %v266
  %v308 = vunpack.c.l.s4 1983009808
  %v309 = vunpack.c.0.s8 %v308
  %v310 = vlaneseq
  %v311 = vshrl.u32 %v310, 7
  %v312 = vsub.s32 %v309, %v311
  %v313 = vrot.slane %v266, %v312
  %v315 = vunpack.c.l.s4 1983009808
  %v316 = vunpack.c.0.s8 %v315
  %v317 = vlaneseq
  %v318 = vshrl.u32 %v317, 7
  %v319 = vsub.s32 %v316, %v318
  %v320 = vrot.slane %v306, %v319
  %v321 = vcombine.high %v313, %v313
  %v322 = vcombine.high %v320, %v320
  %v323 = vcombine.high %v267, %v267
  %v325 = vunpack.c.l.s4 1983009808
  %v326 = vunpack.c.0.s8 %v325
  %v327 = vlaneseq
  %v328 = vshrl.u32 %v327, 7
  %v329 = vsub.s32 %v326, %v328
  %v330 = vrot.slane %v267, %v329
  %v332 = vunpack.c.l.s4 1983009808
  %v333 = vunpack.c.0.s8 %v332
  %v334 = vlaneseq
  %v335 = vshrl.u32 %v334, 7
  %v336 = vsub.s32 %v333, %v335
  %v337 = vrot.slane %v323, %v336
  %v338 = vcombine.high %v330, %v330
  %v339 = vcombine.high %v337, %v337
  %vm356 = vcmask 1041408
  %v357 = vsel %vm356, %v279, 0.0
  %v358 = vsel %vm356, %v287, 0.0
  %v359 = vadd.f32 %v357, %v358
  %v360 = vsel %vm356, %v286, 0.0
  %v361 = vadd.f32 %v359, %v360
  %v362 = vsel %vm356, %v288, 0.0
  %v363 = vadd.f32 %v361, %v362
  %v364 = vsel %vm356, %v296, 0.0
  %v365 = vadd.f32 %v363, %v364
  %v366 = vsel %vm356, %v304, 0.0
  %v367 = vadd.f32 %v365, %v366
  %v368 = vsel %vm356, %v303, 0.0
  %v369 = vadd.f32 %v367, %v368
  %v370 = vsel %vm356, %v305, 0.0
  %v371 = vadd.f32 %v369, %v370
  %v372 = vsel %vm356, %v313, 0.0
  %v373 = vadd.f32 %v371, %v372
  %v374 = vsel %vm356, %v321, 0.0
  %v375 = vadd.f32 %v373, %v374
  %v376 = vsel %vm356, %v320, 0.0
  %v377 = vadd.f32 %v375, %v376
  %v378 = vsel %vm356, %v322, 0.0
  %v379 = vadd.f32 %v377, %v378
  %v380 = vsel %vm356, %v330, 0.0
  %v381 = vadd.f32 %v379, %v380
  %v382 = vsel %vm356, %v338, 0.0
  %v383 = vadd.f32 %v381, %v382
  %v384 = vsel %vm356, %v337, 0.0
  %v385 = vadd.f32 %v383, %v384
  %v386 = vsel %vm356, %v339, 0.0
  %v387 = vadd.f32 %v385, %v386
  %388 = vadd.xlane.f32.xlu0 %v387
  %v389 = vpop.xlane.xlu0 %388
  %v390 = vld [vmem:[#allocation2] sm:$0x1]
  %v392 = vlaneseq
  %v393 = vshrl.u32 %v392, 7
  %v394 = vsub.s32 0, %v393
  %v395 = vrot.slane %v390, %v394
  %v397 = vadd.f32 %v389, %v395
  %vm398 = vcmask 1024
  %399 = vst.msk [vmem:[%s3] sm:$0x3] %vm398, %v397
  // Predicated region
  $region14: #{critic_forward.9} parent=0 // pred_check
    _
  $region15: #{critic_forward.9} parent=0 // pred_check_branch
    %401 = sbr.rel (0) target = $region17
  $region16: #{critic_forward.9} parent=0 // pred_region
    _
  $region17: #{critic_forward.9} parent=0 // pred_fallthru
    _
  // Predicated region
  $region18: #{critic_forward.9} parent=0 // pred_check
    _
  $region19: #{critic_forward.9} parent=0 // pred_check_branch
    %403 = sbr.rel (0) target = $region21
  $region20: #{critic_forward.9} parent=0 // pred_region
    _
  $region21: #{critic_forward.9} parent=0 // pred_fallthru
    _

// kernel: critic_forward.8
$region0: #{critic_forward.8}
  #allocation0 [shape = 'u32[]', space=smem, size = 0x4, offset = 0x4, fixed_abs, tag = 'smem constant byte address 0x4 - core index']
  #allocation1 [shape = 'u32[144,128]{1,0:T(1,128)}', space=vmem, size = 0x12000, scoped, tag = 'internal scratch']
  %s0 = inlined_call_operand.vmem [shape: bf16[2,32,512], index: 0, kind: input, shape index: {}]
  %s1 = inlined_call_operand.vmem [shape: bf16[2,512,128], index: 1, kind: input, shape index: {}]
  %s2 = inlined_call_operand.vmem [shape: bf16[2,16,128], index: 2, kind: output, shape index: {}]
  %s3 = sld [smem:[#allocation0]]
  $region18: #{critic_forward.8} parent=0
    _
  %s5 = ssub.s32 1, %s3
  %s6 = scalar_select 0, %s5, %s3
  // Predicated region
  $region2: #{critic_forward.8} parent=0 // pred_check
    _
  $region3: #{critic_forward.8} parent=0 // pred_check_branch
    %8 = sbr.rel (0) target = $region5
  $region4: #{critic_forward.8} parent=0 // pred_region
    _
  $region5: #{critic_forward.8} parent=0 // pred_fallthru
    _
  // Predicated region
  $region6: #{critic_forward.8} parent=0 // pred_check
    _
  $region7: #{critic_forward.8} parent=0 // pred_check_branch
    %10 = sbr.rel (0) target = $region9
  $region8: #{critic_forward.8} parent=0 // pred_region
    _
  $region9: #{critic_forward.8} parent=0 // pred_fallthru
    _
  %v12 = vld [vmem:[%s0] sm:$0xff]
  %v13 = vld [vmem:[%s0 + $0x8] sm:$0xff]
  %v14 = vld [vmem:[%s0 + $0x10] sm:$0xff]
  %v15 = vld [vmem:[%s0 + $0x18] sm:$0xff]
  %v16 = vld [vmem:[%s0 + $0x40] sm:$0xff]
  %v17 = vld [vmem:[%s0 + $0x48] sm:$0xff]
  %v18 = vld [vmem:[%s0 + $0x50] sm:$0xff]
  %v19 = vld [vmem:[%s0 + $0x58] sm:$0xff]
  %v20 = vld [vmem:[%s1] sm:$0xf]
  %v21 = vld [vmem:[%s1 + $0x4] sm:$0xf]
  %v22 = vld [vmem:[%s1 + $0x8] sm:$0xf]
  %v23 = vld [vmem:[%s1 + $0xc] sm:$0xf]
  %v24 = vld [vmem:[%s1 + $0x10] sm:$0xf]
  %v25 = vld [vmem:[%s1 + $0x14] sm:$0xf]
  %v26 = vld [vmem:[%s1 + $0x18] sm:$0xf]
  %v27 = vld [vmem:[%s1 + $0x1c] sm:$0xf]
  %v28 = vld [vmem:[%s1 + $0x20] sm:$0xf]
  %v29 = vld [vmem:[%s1 + $0x24] sm:$0xf]
  %v30 = vld [vmem:[%s1 + $0x28] sm:$0xf]
  %v31 = vld [vmem:[%s1 + $0x2c] sm:$0xf]
  %v32 = vld [vmem:[%s1 + $0x30] sm:$0xf]
  %v33 = vld [vmem:[%s1 + $0x34] sm:$0xf]
  %v34 = vld [vmem:[%s1 + $0x38] sm:$0xf]
  %v35 = vld [vmem:[%s1 + $0x3c] sm:$0xf]
  %v36 = vld [vmem:[%s1 + $0x40] sm:$0xf]
  %v37 = vld [vmem:[%s1 + $0x44] sm:$0xf]
  %v38 = vld [vmem:[%s1 + $0x48] sm:$0xf]
  %v39 = vld [vmem:[%s1 + $0x4c] sm:$0xf]
  %v40 = vld [vmem:[%s1 + $0x50] sm:$0xf]
  %v41 = vld [vmem:[%s1 + $0x54] sm:$0xf]
  %v42 = vld [vmem:[%s1 + $0x58] sm:$0xf]
  %v43 = vld [vmem:[%s1 + $0x5c] sm:$0xf]
  %v44 = vld [vmem:[%s1 + $0x60] sm:$0xf]
  %v45 = vld [vmem:[%s1 + $0x64] sm:$0xf]
  %v46 = vld [vmem:[%s1 + $0x68] sm:$0xf]
  %v47 = vld [vmem:[%s1 + $0x6c] sm:$0xf]
  %v48 = vld [vmem:[%s1 + $0x70] sm:$0xf]
  %v49 = vld [vmem:[%s1 + $0x74] sm:$0xf]
  %v50 = vld [vmem:[%s1 + $0x78] sm:$0xf]
  %v51 = vld [vmem:[%s1 + $0x7c] sm:$0xf]
  %v52 = vld [vmem:[%s1 + $0x80] sm:$0xf]
  %v53 = vld [vmem:[%s1 + $0x84] sm:$0xf]
  %v54 = vld [vmem:[%s1 + $0x88] sm:$0xf]
  %v55 = vld [vmem:[%s1 + $0x8c] sm:$0xf]
  %v56 = vld [vmem:[%s1 + $0x90] sm:$0xf]
  %v57 = vld [vmem:[%s1 + $0x94] sm:$0xf]
  %v58 = vld [vmem:[%s1 + $0x98] sm:$0xf]
  %v59 = vld [vmem:[%s1 + $0x9c] sm:$0xf]
  %v60 = vld [vmem:[%s1 + $0xa0] sm:$0xf]
  %v61 = vld [vmem:[%s1 + $0xa4] sm:$0xf]
  %v62 = vld [vmem:[%s1 + $0xa8] sm:$0xf]
  %v63 = vld [vmem:[%s1 + $0xac] sm:$0xf]
  %v64 = vld [vmem:[%s1 + $0xb0] sm:$0xf]
  %v65 = vld [vmem:[%s1 + $0xb4] sm:$0xf]
  %v66 = vld [vmem:[%s1 + $0xb8] sm:$0xf]
  %v67 = vld [vmem:[%s1 + $0xbc] sm:$0xf]
  %v68 = vld [vmem:[%s1 + $0xc0] sm:$0xf]
  %v69 = vld [vmem:[%s1 + $0xc4] sm:$0xf]
  %v70 = vld [vmem:[%s1 + $0xc8] sm:$0xf]
  %v71 = vld [vmem:[%s1 + $0xcc] sm:$0xf]
  %v72 = vld [vmem:[%s1 + $0xd0] sm:$0xf]
  %v73 = vld [vmem:[%s1 + $0xd4] sm:$0xf]
  %v74 = vld [vmem:[%s1 + $0xd8] sm:$0xf]
  %v75 = vld [vmem:[%s1 + $0xdc] sm:$0xf]
  %v76 = vld [vmem:[%s1 + $0xe0] sm:$0xf]
  %v77 = vld [vmem:[%s1 + $0xe4] sm:$0xf]
  %v78 = vld [vmem:[%s1 + $0xe8] sm:$0xf]
  %v79 = vld [vmem:[%s1 + $0xec] sm:$0xf]
  %v80 = vld [vmem:[%s1 + $0xf0] sm:$0xf]
  %v81 = vld [vmem:[%s1 + $0xf4] sm:$0xf]
  %v82 = vld [vmem:[%s1 + $0xf8] sm:$0xf]
  %v83 = vld [vmem:[%s1 + $0xfc] sm:$0xf]
  %v84 = vld [vmem:[%s0 + $0x20] sm:$0xff]
  %v85 = vld [vmem:[%s0 + $0x28] sm:$0xff]
  %v86 = vld [vmem:[%s0 + $0x30] sm:$0xff]
  %v87 = vld [vmem:[%s0 + $0x38] sm:$0xff]
  %v88 = vld [vmem:[%s0 + $0x60] sm:$0xff]
  %v89 = vld [vmem:[%s0 + $0x68] sm:$0xff]
  %v90 = vld [vmem:[%s0 + $0x70] sm:$0xff]
  %v91 = vld [vmem:[%s0 + $0x78] sm:$0xff]
  %s92 = scalar_lea.vmem %s1, 256
  %v93 = vld [vmem:[%s92] sm:$0xf]
  %v94 = vld [vmem:[%s92 + $0x4] sm:$0xf]
  %v95 = vld [vmem:[%s92 + $0x8] sm:$0xf]
  %v96 = vld [vmem:[%s92 + $0xc] sm:$0xf]
  %v97 = vld [vmem:[%s92 + $0x10] sm:$0xf]
  %v98 = vld [vmem:[%s92 + $0x14] sm:$0xf]
  %v99 = vld [vmem:[%s92 + $0x18] sm:$0xf]
  %v100 = vld [vmem:[%s92 + $0x1c] sm:$0xf]
  %v101 = vld [vmem:[%s92 + $0x20] sm:$0xf]
  %v102 = vld [vmem:[%s92 + $0x24] sm:$0xf]
  %v103 = vld [vmem:[%s92 + $0x28] sm:$0xf]
  %v104 = vld [vmem:[%s92 + $0x2c] sm:$0xf]
  %v105 = vld [vmem:[%s92 + $0x30] sm:$0xf]
  %v106 = vld [vmem:[%s92 + $0x34] sm:$0xf]
  %v107 = vld [vmem:[%s92 + $0x38] sm:$0xf]
  %v108 = vld [vmem:[%s92 + $0x3c] sm:$0xf]
  %v109 = vld [vmem:[%s92 + $0x40] sm:$0xf]
  %v110 = vld [vmem:[%s92 + $0x44] sm:$0xf]
  %v111 = vld [vmem:[%s92 + $0x48] sm:$0xf]
  %v112 = vld [vmem:[%s92 + $0x4c] sm:$0xf]
  %v113 = vld [vmem:[%s92 + $0x50] sm:$0xf]
  %v114 = vld [vmem:[%s92 + $0x54] sm:$0xf]
  %v115 = vld [vmem:[%s92 + $0x58] sm:$0xf]
  %v116 = vld [vmem:[%s92 + $0x5c] sm:$0xf]
  %v117 = vld [vmem:[%s92 + $0x60] sm:$0xf]
  %v118 = vld [vmem:[%s92 + $0x64] sm:$0xf]
  %v119 = vld [vmem:[%s92 + $0x68] sm:$0xf]
  %v120 = vld [vmem:[%s92 + $0x6c] sm:$0xf]
  %v121 = vld [vmem:[%s92 + $0x70] sm:$0xf]
  %v122 = vld [vmem:[%s92 + $0x74] sm:$0xf]
  %v123 = vld [vmem:[%s92 + $0x78] sm:$0xf]
  %v124 = vld [vmem:[%s92 + $0x7c] sm:$0xf]
  %v125 = vld [vmem:[%s92 + $0x80] sm:$0xf]
  %v126 = vld [vmem:[%s92 + $0x84] sm:$0xf]
  %v127 = vld [vmem:[%s92 + $0x88] sm:$0xf]
  %v128 = vld [vmem:[%s92 + $0x8c] sm:$0xf]
  %v129 = vld [vmem:[%s92 + $0x90] sm:$0xf]
  %v130 = vld [vmem:[%s92 + $0x94] sm:$0xf]
  %v131 = vld [vmem:[%s92 + $0x98] sm:$0xf]
  %v132 = vld [vmem:[%s92 + $0x9c] sm:$0xf]
  %v133 = vld [vmem:[%s92 + $0xa0] sm:$0xf]
  %v134 = vld [vmem:[%s92 + $0xa4] sm:$0xf]
  %v135 = vld [vmem:[%s92 + $0xa8] sm:$0xf]
  %v136 = vld [vmem:[%s92 + $0xac] sm:$0xf]
  %v137 = vld [vmem:[%s92 + $0xb0] sm:$0xf]
  %v138 = vld [vmem:[%s92 + $0xb4] sm:$0xf]
  %v139 = vld [vmem:[%s92 + $0xb8] sm:$0xf]
  %v140 = vld [vmem:[%s92 + $0xbc] sm:$0xf]
  %v141 = vld [vmem:[%s92 + $0xc0] sm:$0xf]
  %v142 = vld [vmem:[%s92 + $0xc4] sm:$0xf]
  %v143 = vld [vmem:[%s92 + $0xc8] sm:$0xf]
  %v144 = vld [vmem:[%s92 + $0xcc] sm:$0xf]
  %v145 = vld [vmem:[%s92 + $0xd0] sm:$0xf]
  %v146 = vld [vmem:[%s92 + $0xd4] sm:$0xf]
  %v147 = vld [vmem:[%s92 + $0xd8] sm:$0xf]
  %v148 = vld [vmem:[%s92 + $0xdc] sm:$0xf]
  %v149 = vld [vmem:[%s92 + $0xe0] sm:$0xf]
  %v150 = vld [vmem:[%s92 + $0xe4] sm:$0xf]
  %v151 = vld [vmem:[%s92 + $0xe8] sm:$0xf]
  %v152 = vld [vmem:[%s92 + $0xec] sm:$0xf]
  %v153 = vld [vmem:[%s92 + $0xf0] sm:$0xf]
  %v154 = vld [vmem:[%s92 + $0xf4] sm:$0xf]
  %v155 = vld [vmem:[%s92 + $0xf8] sm:$0xf]
  %v156 = vld [vmem:[%s92 + $0xfc] sm:$0xf]
  %v165 = vunpack.c.l.b16 %v84
  %v166 = vunpack.c.h.b16 %v84
  %v167 = vunpack.c.l.b16 %v85
  %v168 = vunpack.c.h.b16 %v85
  %v169 = vunpack.c.l.b16 %v86
  %v170 = vunpack.c.h.b16 %v86
  %v171 = vunpack.c.l.b16 %v87
  %v172 = vunpack.c.h.b16 %v87
  %v173 = vunpack.c.l.b16 %v88
  %v174 = vunpack.c.h.b16 %v88
  %v175 = vunpack.c.l.b16 %v89
  %v176 = vunpack.c.h.b16 %v89
  %v177 = vunpack.c.l.b16 %v90
  %v178 = vunpack.c.h.b16 %v90
  %v179 = vunpack.c.l.b16 %v91
  %v180 = vunpack.c.h.b16 %v91
  %v181 = vpack.c.b16 %v169, %v165
  %v182 = vpack.c.b16 %v170, %v166
  %v183 = vpack.c.b16 %v171, %v167
  %v184 = vpack.c.b16 %v172, %v168
  %v185 = vpack.c.b16 %v177, %v173
  %v186 = vpack.c.b16 %v178, %v174
  %v187 = vpack.c.b16 %v179, %v175
  %v188 = vpack.c.b16 %v180, %v176
  %v261 = vunpack.c.l.b16 %v93
  %v262 = vunpack.c.l.b16 %v94
  %v263 = vunpack.c.l.b16 %v95
  %v264 = vunpack.c.l.b16 %v96
  %v265 = vunpack.c.l.b16 %v97
  %v266 = vunpack.c.l.b16 %v98
  %v267 = vunpack.c.l.b16 %v99
  %v268 = vunpack.c.l.b16 %v100
  %v269 = vunpack.c.l.b16 %v101
  %v270 = vunpack.c.l.b16 %v102
  %v271 = vunpack.c.l.b16 %v103
  %v272 = vunpack.c.l.b16 %v104
  %v273 = vunpack.c.l.b16 %v105
  %v274 = vunpack.c.l.b16 %v106
  %v275 = vunpack.c.l.b16 %v107
  %v276 = vunpack.c.l.b16 %v108
  %v277 = vunpack.c.l.b16 %v109
  %v278 = vunpack.c.l.b16 %v110
  %v279 = vunpack.c.l.b16 %v111
  %v280 = vunpack.c.l.b16 %v112
  %v281 = vunpack.c.l.b16 %v113
  %v282 = vunpack.c.l.b16 %v114
  %v283 = vunpack.c.l.b16 %v115
  %v284 = vunpack.c.l.b16 %v116
  %v285 = vunpack.c.l.b16 %v117
  %v286 = vunpack.c.l.b16 %v118
  %v287 = vunpack.c.l.b16 %v119
  %v288 = vunpack.c.l.b16 %v120
  %v289 = vunpack.c.l.b16 %v121
  %v290 = vunpack.c.l.b16 %v122
  %v291 = vunpack.c.l.b16 %v123
  %v292 = vunpack.c.l.b16 %v124
  %v293 = vunpack.c.l.b16 %v125
  %v294 = vunpack.c.l.b16 %v126
  %v295 = vunpack.c.l.b16 %v127
  %v296 = vunpack.c.l.b16 %v128
  %v297 = vunpack.c.l.b16 %v129
  %v298 = vunpack.c.l.b16 %v130
  %v299 = vunpack.c.l.b16 %v131
  %v300 = vunpack.c.l.b16 %v132
  %v301 = vunpack.c.l.b16 %v133
  %v302 = vunpack.c.l.b16 %v134
  %v303 = vunpack.c.l.b16 %v135
  %v304 = vunpack.c.l.b16 %v136
  %v305 = vunpack.c.l.b16 %v137
  %v306 = vunpack.c.l.b16 %v138
  %v307 = vunpack.c.l.b16 %v139
  %v308 = vunpack.c.l.b16 %v140
  %v309 = vunpack.c.l.b16 %v141
  %v310 = vunpack.c.l.b16 %v142
  %v311 = vunpack.c.l.b16 %v143
  %v312 = vunpack.c.l.b16 %v144
  %v313 = vunpack.c.l.b16 %v145
  %v314 = vunpack.c.l.b16 %v146
  %v315 = vunpack.c.l.b16 %v147
  %v316 = vunpack.c.l.b16 %v148
  %v317 = vunpack.c.l.b16 %v149
  %v318 = vunpack.c.l.b16 %v150
  %v319 = vunpack.c.l.b16 %v151
  %v320 = vunpack.c.l.b16 %v152
  %v321 = vunpack.c.l.b16 %v153
  %v322 = vunpack.c.l.b16 %v154
  %v323 = vunpack.c.l.b16 %v155
  %v324 = vunpack.c.l.b16 %v156
  %v325 = vpack.c.b16 %v262, %v261
  %v326 = vpack.c.b16 %v264, %v263
  %v327 = vpack.c.b16 %v266, %v265
  %v328 = vpack.c.b16 %v268, %v267
  %v329 = vpack.c.b16 %v270, %v269
  %v330 = vpack.c.b16 %v272, %v271
  %v331 = vpack.c.b16 %v274, %v273
  %v332 = vpack.c.b16 %v276, %v275
  %v333 = vpack.c.b16 %v278, %v277
  %v334 = vpack.c.b16 %v280, %v279
  %v335 = vpack.c.b16 %v282, %v281
  %v336 = vpack.c.b16 %v284, %v283
  %v337 = vpack.c.b16 %v286, %v285
  %v338 = vpack.c.b16 %v288, %v287
  %v339 = vpack.c.b16 %v290, %v289
  %v340 = vpack.c.b16 %v292, %v291
  %v341 = vpack.c.b16 %v294, %v293
  %v342 = vpack.c.b16 %v296, %v295
  %v343 = vpack.c.b16 %v298, %v297
  %v344 = vpack.c.b16 %v300, %v299
  %v345 = vpack.c.b16 %v302, %v301
  %v346 = vpack.c.b16 %v304, %v303
  %v347 = vpack.c.b16 %v306, %v305
  %v348 = vpack.c.b16 %v308, %v307
  %v349 = vpack.c.b16 %v310, %v309
  %v350 = vpack.c.b16 %v312, %v311
  %v351 = vpack.c.b16 %v314, %v313
  %v352 = vpack.c.b16 %v316, %v315
  %v353 = vpack.c.b16 %v318, %v317
  %v354 = vpack.c.b16 %v320, %v319
  %v355 = vpack.c.b16 %v322, %v321
  %v356 = vpack.c.b16 %v324, %v323
  %389 = vmatprep.subr.bf16.mxu0 0
  %390 = vmatpush1.bf16.msra.mxu0 %v332
  %391 = vmatprep.subr.bf16.mxu0 0
  %392 = vmatpush1.bf16.msra.mxu0 %v331
  %393 = vmatprep.subr.bf16.mxu0 0
  %394 = vmatpush1.bf16.msra.mxu0 %v330
  %395 = vmatprep.subr.bf16.mxu0 0
  %396 = vmatpush1.bf16.msra.mxu0 %v329
  %397 = vmatprep.subr.bf16.mxu0 0
  %398 = vmatpush1.bf16.msra.mxu0 %v328
  %399 = vmatprep.subr.bf16.mxu0 0
  %400 = vmatpush1.bf16.msra.mxu0 %v327
  %401 = vmatprep.subr.bf16.mxu0 0
  %402 = vmatpush1.bf16.msra.mxu0 %v326
  %403 = vmatprep.subr.bf16.mxu0 0
  %404 = vmatpush1.bf16.msra.mxu0 %v325
  %405 = vmatprep.subr.bf16.mxu0 0
  %406 = vmatpush2.bf16.msra.mxu0 %v340
  %407 = vmatprep.subr.bf16.mxu0 0
  %408 = vmatpush2.bf16.msra.mxu0 %v339
  %409 = vmatprep.subr.bf16.mxu0 0
  %410 = vmatpush2.bf16.msra.mxu0 %v338
  %411 = vmatprep.subr.bf16.mxu0 0
  %412 = vmatpush2.bf16.msra.mxu0 %v337
  %413 = vmatprep.subr.bf16.mxu0 0
  %414 = vmatpush2.bf16.msra.mxu0 %v336
  %415 = vmatprep.subr.bf16.mxu0 0
  %416 = vmatpush2.bf16.msra.mxu0 %v335
  %417 = vmatprep.subr.bf16.mxu0 0
  %418 = vmatpush2.bf16.msra.mxu0 %v334
  %419 = vmatprep.subr.bf16.mxu0 0
  %420 = vmatpush2.bf16.msra.mxu0 %v333
  %421 = vmatprep.mubr.bf16.mxu0 %v182
  %422 = vmatmul.mubr.bf16.gmra.mxu0 %v181
  %v423 = vpop.f32.mrf.mxu0
  %v424 = vadd.f32 0.0, %v423
  %v425 = vpop.f32.mrf.mxu0
  %v426 = vpop.f32.mrf.mxu0
  %v427 = vadd.f32 0.0, %v426
  %v428 = vpop.f32.mrf.mxu0
  %429 = vmatprep.mubr.bf16.mxu0 %v186
  %430 = vmatmul.mubr.bf16.gmra.mxu0 %v185
  %v431 = vpop.f32.mrf.mxu0
  %v432 = vadd.f32 0.0, %v431
  %v433 = vpop.f32.mrf.mxu0
  %v434 = vpop.f32.mrf.mxu0
  %v435 = vadd.f32 0.0, %v434
  %v436 = vpop.f32.mrf.mxu0
  %437 = vdwg.mxu0
  %438 = vmatprep.subr.bf16.mxu0 0
  %439 = vmatpush1.bf16.msra.mxu0 %v348
  %440 = vmatprep.subr.bf16.mxu0 0
  %441 = vmatpush1.bf16.msra.mxu0 %v347
  %442 = vmatprep.subr.bf16.mxu0 0
  %443 = vmatpush1.bf16.msra.mxu0 %v346
  %444 = vmatprep.subr.bf16.mxu0 0
  %445 = vmatpush1.bf16.msra.mxu0 %v345
  %446 = vmatprep.subr.bf16.mxu0 0
  %447 = vmatpush1.bf16.msra.mxu0 %v344
  %448 = vmatprep.subr.bf16.mxu0 0
  %449 = vmatpush1.bf16.msra.mxu0 %v343
  %450 = vmatprep.subr.bf16.mxu0 0
  %451 = vmatpush1.bf16.msra.mxu0 %v342
  %452 = vmatprep.subr.bf16.mxu0 0
  %453 = vmatpush1.bf16.msra.mxu0 %v341
  %454 = vmatprep.subr.bf16.mxu0 0
  %455 = vmatpush2.bf16.msra.mxu0 %v356
  %456 = vmatprep.subr.bf16.mxu0 0
  %457 = vmatpush2.bf16.msra.mxu0 %v355
  %458 = vmatprep.subr.bf16.mxu0 0
  %459 = vmatpush2.bf16.msra.mxu0 %v354
  %460 = vmatprep.subr.bf16.mxu0 0
  %461 = vmatpush2.bf16.msra.mxu0 %v353
  %462 = vmatprep.subr.bf16.mxu0 0
  %463 = vmatpush2.bf16.msra.mxu0 %v352
  %464 = vmatprep.subr.bf16.mxu0 0
  %465 = vmatpush2.bf16.msra.mxu0 %v351
  %466 = vmatprep.subr.bf16.mxu0 0
  %467 = vmatpush2.bf16.msra.mxu0 %v350
  %468 = vmatprep.subr.bf16.mxu0 0
  %469 = vmatpush2.bf16.msra.mxu0 %v349
  %470 = vmatprep.mubr.bf16.mxu0 %v184
  %471 = vmatmul.mubr.bf16.gmra.mxu0 %v183
  %v472 = vpop.f32.mrf.mxu0
  %v473 = vadd.f32 %v424, %v472
  %v474 = vpop.f32.mrf.mxu0
  %v475 = vpop.f32.mrf.mxu0
  %v476 = vadd.f32 %v427, %v475
  %v477 = vpop.f32.mrf.mxu0
  %478 = vmatprep.mubr.bf16.mxu0 %v188
  %479 = vmatmul.mubr.bf16.gmra.mxu0 %v187
  %v480 = vpop.f32.mrf.mxu0
  %v481 = vadd.f32 %v432, %v480
  %v482 = vpop.f32.mrf.mxu0
  %v483 = vpop.f32.mrf.mxu0
  %v484 = vadd.f32 %v435, %v483
  %v485 = vpop.f32.mrf.mxu0
  %486 = vdwg.mxu0
  %v495 = vunpack.c.l.b16 %v12
  %v496 = vunpack.c.h.b16 %v12
  %v497 = vunpack.c.l.b16 %v13
  %v498 = vunpack.c.h.b16 %v13
  %v499 = vunpack.c.l.b16 %v14
  %v500 = vunpack.c.h.b16 %v14
  %v501 = vunpack.c.l.b16 %v15
  %v502 = vunpack.c.h.b16 %v15
  %v503 = vunpack.c.l.b16 %v16
  %v504 = vunpack.c.h.b16 %v16
  %v505 = vunpack.c.l.b16 %v17
  %v506 = vunpack.c.h.b16 %v17
  %v507 = vunpack.c.l.b16 %v18
  %v508 = vunpack.c.h.b16 %v18
  %v509 = vunpack.c.l.b16 %v19
  %v510 = vunpack.c.h.b16 %v19
  %v511 = vpack.c.b16 %v499, %v495
  %v512 = vpack.c.b16 %v500, %v496
  %v513 = vpack.c.b16 %v501, %v497
  %v514 = vpack.c.b16 %v502, %v498
  %v515 = vpack.c.b16 %v507, %v503
  %v516 = vpack.c.b16 %v508, %v504
  %v517 = vpack.c.b16 %v509, %v505
  %v518 = vpack.c.b16 %v510, %v506
  %v591 = vunpack.c.l.b16 %v20
  %v592 = vunpack.c.l.b16 %v21
  %v593 = vunpack.c.l.b16 %v22
  %v594 = vunpack.c.l.b16 %v23
  %v595 = vunpack.c.l.b16 %v24
  %v596 = vunpack.c.l.b16 %v25
  %v597 = vunpack.c.l.b16 %v26
  %v598 = vunpack.c.l.b16 %v27
  %v599 = vunpack.c.l.b16 %v28
  %v600 = vunpack.c.l.b16 %v29
  %v601 = vunpack.c.l.b16 %v30
  %v602 = vunpack.c.l.b16 %v31
  %v603 = vunpack.c.l.b16 %v32
  %v604 = vunpack.c.l.b16 %v33
  %v605 = vunpack.c.l.b16 %v34
  %v606 = vunpack.c.l.b16 %v35
  %v607 = vunpack.c.l.b16 %v36
  %v608 = vunpack.c.l.b16 %v37
  %v609 = vunpack.c.l.b16 %v38
  %v610 = vunpack.c.l.b16 %v39
  %v611 = vunpack.c.l.b16 %v40
  %v612 = vunpack.c.l.b16 %v41
  %v613 = vunpack.c.l.b16 %v42
  %v614 = vunpack.c.l.b16 %v43
  %v615 = vunpack.c.l.b16 %v44
  %v616 = vunpack.c.l.b16 %v45
  %v617 = vunpack.c.l.b16 %v46
  %v618 = vunpack.c.l.b16 %v47
  %v619 = vunpack.c.l.b16 %v48
  %v620 = vunpack.c.l.b16 %v49
  %v621 = vunpack.c.l.b16 %v50
  %v622 = vunpack.c.l.b16 %v51
  %v623 = vunpack.c.l.b16 %v52
  %v624 = vunpack.c.l.b16 %v53
  %v625 = vunpack.c.l.b16 %v54
  %v626 = vunpack.c.l.b16 %v55
  %v627 = vunpack.c.l.b16 %v56
  %v628 = vunpack.c.l.b16 %v57
  %v629 = vunpack.c.l.b16 %v58
  %v630 = vunpack.c.l.b16 %v59
  %v631 = vunpack.c.l.b16 %v60
  %v632 = vunpack.c.l.b16 %v61
  %v633 = vunpack.c.l.b16 %v62
  %v634 = vunpack.c.l.b16 %v63
  %v635 = vunpack.c.l.b16 %v64
  %v636 = vunpack.c.l.b16 %v65
  %v637 = vunpack.c.l.b16 %v66
  %v638 = vunpack.c.l.b16 %v67
  %v639 = vunpack.c.l.b16 %v68
  %v640 = vunpack.c.l.b16 %v69
  %v641 = vunpack.c.l.b16 %v70
  %v642 = vunpack.c.l.b16 %v71
  %v643 = vunpack.c.l.b16 %v72
  %v644 = vunpack.c.l.b16 %v73
  %v645 = vunpack.c.l.b16 %v74
  %v646 = vunpack.c.l.b16 %v75
  %v647 = vunpack.c.l.b16 %v76
  %v648 = vunpack.c.l.b16 %v77
  %v649 = vunpack.c.l.b16 %v78
  %v650 = vunpack.c.l.b16 %v79
  %v651 = vunpack.c.l.b16 %v80
  %v652 = vunpack.c.l.b16 %v81
  %v653 = vunpack.c.l.b16 %v82
  %v654 = vunpack.c.l.b16 %v83
  %v655 = vpack.c.b16 %v592, %v591
  %v656 = vpack.c.b16 %v594, %v593
  %v657 = vpack.c.b16 %v596, %v595
  %v658 = vpack.c.b16 %v598, %v597
  %v659 = vpack.c.b16 %v600, %v599
  %v660 = vpack.c.b16 %v602, %v601
  %v661 = vpack.c.b16 %v604, %v603
  %v662 = vpack.c.b16 %v606, %v605
  %v663 = vpack.c.b16 %v608, %v607
  %v664 = vpack.c.b16 %v610, %v609
  %v665 = vpack.c.b16 %v612, %v611
  %v666 = vpack.c.b16 %v614, %v613
  %v667 = vpack.c.b16 %v616, %v615
  %v668 = vpack.c.b16 %v618, %v617
  %v669 = vpack.c.b16 %v620, %v619
  %v670 = vpack.c.b16 %v622, %v621
  %v671 = vpack.c.b16 %v624, %v623
  %v672 = vpack.c.b16 %v626, %v625
  %v673 = vpack.c.b16 %v628, %v627
  %v674 = vpack.c.b16 %v630, %v629
  %v675 = vpack.c.b16 %v632, %v631
  %v676 = vpack.c.b16 %v634, %v633
  %v677 = vpack.c.b16 %v636, %v635
  %v678 = vpack.c.b16 %v638, %v637
  %v679 = vpack.c.b16 %v640, %v639
  %v680 = vpack.c.b16 %v642, %v641
  %v681 = vpack.c.b16 %v644, %v643
  %v682 = vpack.c.b16 %v646, %v645
  %v683 = vpack.c.b16 %v648, %v647
  %v684 = vpack.c.b16 %v650, %v649
  %v685 = vpack.c.b16 %v652, %v651
  %v686 = vpack.c.b16 %v654, %v653
  %719 = vmatprep.subr.bf16.mxu0 0
  %720 = vmatpush1.bf16.msra.mxu0 %v662
  %721 = vmatprep.subr.bf16.mxu0 0
  %722 = vmatpush1.bf16.msra.mxu0 %v661
  %723 = vmatprep.subr.bf16.mxu0 0
  %724 = vmatpush1.bf16.msra.mxu0 %v660
  %725 = vmatprep.subr.bf16.mxu0 0
  %726 = vmatpush1.bf16.msra.mxu0 %v659
  %727 = vmatprep.subr.bf16.mxu0 0
  %728 = vmatpush1.bf16.msra.mxu0 %v658
  %729 = vmatprep.subr.bf16.mxu0 0
  %730 = vmatpush1.bf16.msra.mxu0 %v657
  %731 = vmatprep.subr.bf16.mxu0 0
  %732 = vmatpush1.bf16.msra.mxu0 %v656
  %733 = vmatprep.subr.bf16.mxu0 0
  %734 = vmatpush1.bf16.msra.mxu0 %v655
  %735 = vmatprep.subr.bf16.mxu0 0
  %736 = vmatpush2.bf16.msra.mxu0 %v670
  %737 = vmatprep.subr.bf16.mxu0 0
  %738 = vmatpush2.bf16.msra.mxu0 %v669
  %739 = vmatprep.subr.bf16.mxu0 0
  %740 = vmatpush2.bf16.msra.mxu0 %v668
  %741 = vmatprep.subr.bf16.mxu0 0
  %742 = vmatpush2.bf16.msra.mxu0 %v667
  %743 = vmatprep.subr.bf16.mxu0 0
  %744 = vmatpush2.bf16.msra.mxu0 %v666
  %745 = vmatprep.subr.bf16.mxu0 0
  %746 = vmatpush2.bf16.msra.mxu0 %v665
  %747 = vmatprep.subr.bf16.mxu0 0
  %748 = vmatpush2.bf16.msra.mxu0 %v664
  %749 = vmatprep.subr.bf16.mxu0 0
  %750 = vmatpush2.bf16.msra.mxu0 %v663
  %751 = vmatprep.mubr.bf16.mxu0 %v512
  %752 = vmatmul.mubr.bf16.gmra.mxu0 %v511
  %v753 = vpop.f32.mrf.mxu0
  %v754 = vadd.f32 %v473, %v753
  %v755 = vpop.f32.mrf.mxu0
  %v756 = vpop.f32.mrf.mxu0
  %v757 = vadd.f32 %v476, %v756
  %v758 = vpop.f32.mrf.mxu0
  %759 = vmatprep.mubr.bf16.mxu0 %v516
  %760 = vmatmul.mubr.bf16.gmra.mxu0 %v515
  %v761 = vpop.f32.mrf.mxu0
  %v762 = vadd.f32 %v481, %v761
  %v763 = vpop.f32.mrf.mxu0
  %v764 = vpop.f32.mrf.mxu0
  %v765 = vadd.f32 %v484, %v764
  %v766 = vpop.f32.mrf.mxu0
  %767 = vdwg.mxu0
  %768 = vmatprep.subr.bf16.mxu0 0
  %769 = vmatpush1.bf16.msra.mxu0 %v678
  %770 = vmatprep.subr.bf16.mxu0 0
  %771 = vmatpush1.bf16.msra.mxu0 %v677
  %772 = vmatprep.subr.bf16.mxu0 0
  %773 = vmatpush1.bf16.msra.mxu0 %v676
  %774 = vmatprep.subr.bf16.mxu0 0
  %775 = vmatpush1.bf16.msra.mxu0 %v675
  %776 = vmatprep.subr.bf16.mxu0 0
  %777 = vmatpush1.bf16.msra.mxu0 %v674
  %778 = vmatprep.subr.bf16.mxu0 0
  %779 = vmatpush1.bf16.msra.mxu0 %v673
  %780 = vmatprep.subr.bf16.mxu0 0
  %781 = vmatpush1.bf16.msra.mxu0 %v672
  %782 = vmatprep.subr.bf16.mxu0 0
  %783 = vmatpush1.bf16.msra.mxu0 %v671
  %784 = vmatprep.subr.bf16.mxu0 0
  %785 = vmatpush2.bf16.msra.mxu0 %v686
  %786 = vmatprep.subr.bf16.mxu0 0
  %787 = vmatpush2.bf16.msra.mxu0 %v685
  %788 = vmatprep.subr.bf16.mxu0 0
  %789 = vmatpush2.bf16.msra.mxu0 %v684
  %790 = vmatprep.subr.bf16.mxu0 0
  %791 = vmatpush2.bf16.msra.mxu0 %v683
  %792 = vmatprep.subr.bf16.mxu0 0
  %793 = vmatpush2.bf16.msra.mxu0 %v682
  %794 = vmatprep.subr.bf16.mxu0 0
  %795 = vmatpush2.bf16.msra.mxu0 %v681
  %796 = vmatprep.subr.bf16.mxu0 0
  %797 = vmatpush2.bf16.msra.mxu0 %v680
  %798 = vmatprep.subr.bf16.mxu0 0
  %799 = vmatpush2.bf16.msra.mxu0 %v679
  %800 = vmatprep.mubr.bf16.mxu0 %v514
  %801 = vmatmul.mubr.bf16.gmra.mxu0 %v513
  %v802 = vpop.f32.mrf.mxu0
  %v803 = vadd.f32 %v754, %v802
  %v804 = vpop.f32.mrf.mxu0
  %v805 = vpop.f32.mrf.mxu0
  %v806 = vadd.f32 %v757, %v805
  %v807 = vpop.f32.mrf.mxu0
  %808 = vmatprep.mubr.bf16.mxu0 %v518
  %809 = vmatmul.mubr.bf16.gmra.mxu0 %v517
  %v810 = vpop.f32.mrf.mxu0
  %v811 = vadd.f32 %v762, %v810
  %v812 = vpop.f32.mrf.mxu0
  %v813 = vpop.f32.mrf.mxu0
  %v814 = vadd.f32 %v765, %v813
  %v815 = vpop.f32.mrf.mxu0
  %816 = vdwg.mxu0
  %v817 = vadd.f32 %v803, %v806
  %v818 = vrot.slane %v817, 4
  %v819 = vadd.f32 %v817, %v818
  %v820 = vrot.slane %v819, 2
  %v821 = vadd.f32 %v819, %v820
  %v822 = vrot.slane %v821, 1
  %v823 = vadd.f32 %v821, %v822
  %v824 = vadd.f32 %v811, %v814
  %v825 = vrot.slane %v824, 4
  %v826 = vadd.f32 %v824, %v825
  %v827 = vrot.slane %v826, 2
  %v828 = vadd.f32 %v826, %v827
  %v829 = vrot.slane %v828, 1
  %v830 = vadd.f32 %v828, %v829
  %v831 = vrcp.pop 16.0
  %v832 = vmul.f32 %v823, %v831
  %v833 = vmul.f32 %v830, %v831
  %v834 = vsub.f32 %v803, %v832
  %v835 = vsub.f32 %v806, %v832
  %v836 = vsub.f32 %v811, %v833
  %v837 = vsub.f32 %v814, %v833
  %v838 = vmul.f32 %v834, %v834
  %v839 = vmul.f32 %v835, %v835
  %v840 = vmul.f32 %v836, %v836
  %v841 = vmul.f32 %v837, %v837
  %v842 = vadd.f32 %v838, %v839
  %v843 = vrot.slane %v842, 4
  %v844 = vadd.f32 %v842, %v843
  %v845 = vrot.slane %v844, 2
  %v846 = vadd.f32 %v844, %v845
  %v847 = vrot.slane %v846, 1
  %v848 = vadd.f32 %v846, %v847
  %v849 = vadd.f32 %v840, %v841
  %v850 = vrot.slane %v849, 4
  %v851 = vadd.f32 %v849, %v850
  %v852 = vrot.slane %v851, 2
  %v853 = vadd.f32 %v851, %v852
  %v854 = vrot.slane %v853, 1
  %v855 = vadd.f32 %v853, %v854
  %v856 = vmul.f32 %v848, %v831
  %v857 = vmul.f32 %v855, %v831
  %v858 = vadd.f32 %v856, 1e-05
  %v859 = vadd.f32 %v857, 1e-05
  %v860 = vrsqrt.pop %v858
  %v861 = vrsqrt.pop %v859
  %v862 = vmul.f32 %v834, %v860
  %v863 = vmul.f32 %v835, %v860
  %v864 = vmul.f32 %v836, %v861
  %v865 = vmul.f32 %v837, %v861
  %vm866 = vcmp.ge.f32.partialorder %v862, 0.0
  %vm867 = vcmp.ge.f32.partialorder %v863, 0.0
  %vm868 = vcmp.ge.f32.partialorder %v864, 0.0
  %vm869 = vcmp.ge.f32.partialorder %v865, 0.0
  %v870 = vmul.f32 %v862, 0.2
  %v871 = vmul.f32 %v863, 0.2
  %v872 = vmul.f32 %v864, 0.2
  %v873 = vmul.f32 %v865, 0.2
  %v874 = vsel %vm866, %v862, %v870
  %v875 = vsel %vm867, %v863, %v871
  %v876 = vsel %vm868, %v864, %v872
  %v877 = vsel %vm869, %v865, %v873
  %v878 = vpack.c.bf16 %v875, %v874
  %v879 = vpack.c.bf16 %v877, %v876
  %v882 = vunpack.c.l.b16 %v878
  %v883 = vunpack.c.h.b16 %v878
  %v884 = vunpack.c.l.b16 %v879
  %v885 = vunpack.c.h.b16 %v879
  %v886 = vpack.c.b16 %v882, %v882
  %v887 = vpack.c.b16 %v883, %v883
  %v888 = vpack.c.b16 %v884, %v884
  %v889 = vpack.c.b16 %v885, %v885
  %894 = vst [vmem:[%s2] sm:$0xf] %v886
  %895 = vst [vmem:[%s2 + $0x4] sm:$0xf] %v887
  %896 = vst [vmem:[%s2 + $0x8] sm:$0xf] %v888
  %897 = vst [vmem:[%s2 + $0xc] sm:$0xf] %v889
  // Predicated region
  $region10: #{critic_forward.8} parent=0 // pred_check
    _
  $region11: #{critic_forward.8} parent=0 // pred_check_branch
    %899 = sbr.rel (0) target = $region13
  $region12: #{critic_forward.8} parent=0 // pred_region
    _
  $region13: #{critic_forward.8} parent=0 // pred_fallthru
    _
  // Predicated region
  $region14: #{critic_forward.8} parent=0 // pred_check
    _
  $region15: #{critic_forward.8} parent=0 // pred_check_branch
    %901 = sbr.rel (0) target = $region17
  $region16: #{critic_forward.8} parent=0 // pred_region
    _
  $region17: #{critic_forward.8} parent=0 // pred_fallthru
    _

</llo_original>
